<compile_context>
chip_gen: v5e
topology: v5e:2x2
jax: 0.10.0
libtpu: 0.0.40
codegen_flags: <defaults>
</compile_context>

<pallas_src>
import jax
import jax.numpy as jnp
import numpy as np
from jax.experimental import pallas as pl
from jax.experimental.pallas import tpu as pltpu

EPS = 1e-5
IN_SIZE = 16          # spatial size; must be divisible by 16 (4 pooling stages)
IN_CHANNELS = 3
OUT_CHANNELS = 5
HIDDEN_SIZE = 32
NUM_CONTEXT = 100
BATCH = 8             # batch is folded onto the sublane axis with W; keep a multiple of 8


# ------------------------------ fused Pallas kernel ------------------------------ #

def _fused_forward_kernel(p1_ref, w1_ref, w234_ref, cpar_ref, film_ref,
                          fcw_ref, fcb_ref, o_ref, a2_ref, a3_ref, a4_ref):
    C = HIDDEN_SIZE
    N = BATCH
    act_refs = (a2_ref, a3_ref, a4_ref)          # padded inputs of blocks 2, 3, 4
    in_spatial = (IN_SIZE // 2, IN_SIZE // 4, IN_SIZE // 8)   # H of blocks 2,3,4 input

    # Zero the padded activation scratch buffers (this is the conv zero-padding).
    a2_ref[...] = jnp.zeros(a2_ref.shape, jnp.float32)
    a3_ref[...] = jnp.zeros(a3_ref.shape, jnp.float32)
    a4_ref[...] = jnp.zeros(a4_ref.shape, jnp.float32)

    def bn_relu(y, block_idx, m):
        # conv bias + BatchNorm2d(momentum=1.0, track_running_stats=False) with
        # single-pass batch statistics (biased variance) + affine + ReLU.
        r = 4 * block_idx
        bias = cpar_ref[r + 0:r + 1, :]
        g = cpar_ref[r + 1:r + 2, :]
        b = cpar_ref[r + 2:r + 3, :]
        y = y + bias
        inv_m = 1.0 / float(m)
        s1 = jnp.sum(y, axis=0, keepdims=True)
        s2 = jnp.sum(y * y, axis=0, keepdims=True)
        mean = s1 * inv_m
        var = s2 * inv_m - mean * mean
        y = (y - mean) * jax.lax.rsqrt(var + EPS)
        return jnp.maximum(y * g + b, 0.0)

    def pool4(phases, apply_film):
        pooled = jnp.maximum(jnp.maximum(phases[0], phases[1]),
                             jnp.maximum(phases[2], phases[3]))
        if apply_film:   # FiLM fused into block3's epilogue
            pooled = pooled * film_ref[0:1, :] + film_ref[1:2, :]
        return pooled

    def store_padded(dst_ref, pooled2d, ho, wo):
        # pooled2d: (ho*wo*N, C), rows ordered (ho, wo, n) -> interior of padded buffer
        dst_ref[1:1 + ho, N:(wo + 1) * N, :] = pooled2d.reshape(ho, wo * N, C)

    # ---------------- block 1: host pool-ordered im2col, one K=27 matmul ----------------
    h1o = IN_SIZE // 2
    m1 = 4 * h1o * h1o * N
    y1 = jnp.dot(p1_ref[...], w1_ref[...], preferred_element_type=jnp.float32)
    y1 = bn_relu(y1, 0, m1)
    q = m1 // 4   # the 4 pooling-window positions are 4 contiguous row groups
    pooled1 = pool4([y1[0:q], y1[q:2 * q], y1[2 * q:3 * q], y1[3 * q:4 * q]], False)
    store_padded(a2_ref, pooled1, h1o, h1o)                       # rows (ho, wo, n)

    # ---------------- blocks 2..4: in-kernel 9-tap conv on VMEM activations -------------
    feat = None
    for bi in range(1, 4):                     # bi=1,2,3 -> block2, block3, block4
        a_ref = act_refs[bi - 1]
        H = in_spatial[bi - 1]
        Ho = H // 2
        M = H * H * N
        acc = jnp.zeros((M, C), jnp.float32)
        for kh in range(3):
            for kw in range(3):
                # shifted window of the padded activation: rows ordered (h, w, n)
                xs = a_ref[kh:kh + H, kw * N:(kw + H) * N, :].reshape(M, C)
                t = (bi - 1) * 9 + kh * 3 + kw
                wt = w234_ref[t * C:(t + 1) * C, :]               # (Cin, Cout)
                acc = acc + jnp.dot(xs, wt, preferred_element_type=jnp.float32)
        y = bn_relu(acc, bi, M)
        # 2x2 max-pool: split rows (h, w, n) into the 4 phases via 8-aligned reshapes
        y3 = y.reshape(Ho, 2 * H * N, C)
        phases = []
        for a in range(2):                                        # h parity
            ya = y3[:, a * H * N:(a + 1) * H * N, :].reshape(Ho * Ho, 2 * N, C)
            for b in range(2):                                    # w parity
                phases.append(ya[:, b * N:(b + 1) * N, :])
        pooled = pool4(phases, apply_film=(bi == 2)).reshape(Ho * Ho * N, C)
        if bi < 3:
            store_padded(act_refs[bi], pooled, Ho, Ho)
        else:
            feat = pooled        # block4 output spatial is 1x1 -> (N, C) features

    # ---------------- final linear head ----------------
    o_ref[...] = jnp.dot(feat, fcw_ref[...],
                         preferred_element_type=jnp.float32) + fcb_ref[...]


def _vmem_specs(n):
    return [pl.BlockSpec(memory_space=pltpu.MemorySpace.VMEM) for _ in range(n)]


# ------------------------------------ JAX glue ------------------------------------ #

def _block1_patches(x_nhwc):
    """(N,H,W,Cin) -> (4*Ho*Wo*N, 9*Cin) im2col; rows ordered (hpar, wpar, ho, wo, n)."""
    n, h, w, c = x_nhwc.shape
    ho, wo = h // 2, w // 2
    xp = jnp.pad(x_nhwc, ((0, 0), (1, 1), (1, 1), (0, 0)))
    taps = [xp[:, kh:kh + h, kw:kw + w, :] for kh in range(3) for kw in range(3)]
    p = jnp.stack(taps, axis=3).reshape(n, h, w, 9 * c)
    p = p.reshape(n, ho, 2, wo, 2, 9 * c).transpose(2, 4, 1, 3, 0, 5)
    return p.reshape(4 * ho * wo * n, 9 * c)


def pack_params(params):
    """One-time packing of PyTorch-layout params into kernel-ready matrices."""
    c = HIDDEN_SIZE

    def im2col_w(w_oihw):   # OIHW -> (kh, kw, cin, cout) -> (9*cin, cout)
        return jnp.transpose(w_oihw, (2, 3, 1, 0)).reshape(-1, w_oihw.shape[0])

    blocks = [params['block1'], params['block2'], params['block3'], params['block4']]
    cpar = jnp.zeros((16, c), jnp.float32)          # 4 rows per block: bias, g, beta, pad
    for i, blk in enumerate(blocks):
        cpar = cpar.at[4 * i + 0].set(blk['b'])
        cpar = cpar.at[4 * i + 1].set(blk['g'])
        cpar = cpar.at[4 * i + 2].set(blk['beta'])
    return dict(
        w1=im2col_w(blocks[0]['w']),                                           # (27, C)
        w234=jnp.concatenate([im2col_w(b['w']) for b in blocks[1:]], axis=0),  # (27*C, C)
        cpar=cpar,
        context=params['context'], film_w=params['film_w'], film_b=params['film_b'],
        fc_wT=params['fc_w'].T, fc_b=params['fc_b'].reshape(1, -1))


@jax.jit
def forward(packed, x_nchw):
    assert x_nchw.shape == (BATCH, IN_CHANNELS, IN_SIZE, IN_SIZE)
    c = HIDDEN_SIZE
    x = jnp.transpose(x_nchw, (0, 2, 3, 1))              # NCHW -> NHWC
    p1 = _block1_patches(x)                              # (2048, 27), only HBM slab
    # FiLM linear (tiny 100->64 matvec): plain JAX, result rides into the kernel as (2, C)
    film = packed['film_w'] @ packed['context'] + packed['film_b']
    film2 = jnp.stack([film[:c], film[c:]])              # row0 = gamma, row1 = beta
    scratch = [pltpu.VMEM((s + 2, (s + 2) * BATCH, c), jnp.float32)
               for s in (IN_SIZE // 2, IN_SIZE // 4, IN_SIZE // 8)]
    return pl.pallas_call(
        _fused_forward_kernel,
        out_shape=jax.ShapeDtypeStruct((BATCH, OUT_CHANNELS), jnp.float32),
        in_specs=_vmem_specs(7),
        out_specs=pl.BlockSpec(memory_space=pltpu.MemorySpace.VMEM),
        scratch_shapes=scratch,
    )(p1, packed['w1'], packed['w234'], packed['cpar'], film2,
      packed['fc_wT'], packed['fc_b'])


def init_params(key):
    ks = jax.random.split(key, 8)

    def block_params(k, cin, cout):
        k1, k2, k3, k4 = jax.random.split(k, 4)
        return dict(
            w=0.1 * jax.random.normal(k1, (cout, cin, 3, 3), jnp.float32),
            b=0.1 * jax.random.normal(k2, (cout,), jnp.float32),
            g=1.0 + 0.1 * jax.random.normal(k3, (cout,), jnp.float32),
            beta=0.1 * jax.random.normal(k4, (cout,), jnp.float32))

    feat = (IN_SIZE // 16) ** 2 * HIDDEN_SIZE
    return dict(
        context=jnp.zeros((NUM_CONTEXT,), jnp.float32),   # as in __init__ (zeros)
        block1=block_params(ks[0], IN_CHANNELS, HIDDEN_SIZE),
        block2=block_params(ks[1], HIDDEN_SIZE, HIDDEN_SIZE),
        block3=block_params(ks[2], HIDDEN_SIZE, HIDDEN_SIZE),
        block4=block_params(ks[3], HIDDEN_SIZE, HIDDEN_SIZE),
        film_w=0.1 * jax.random.normal(ks[4], (2 * HIDDEN_SIZE, NUM_CONTEXT), jnp.float32),
        film_b=0.1 * jax.random.normal(ks[5], (2 * HIDDEN_SIZE,), jnp.float32),
        fc_w=0.1 * jax.random.normal(ks[6], (OUT_CHANNELS, feat), jnp.float32),
        fc_b=0.1 * jax.random.normal(ks[7], (OUT_CHANNELS,), jnp.float32))


# ------------------------ pure-JAX reference (for checking) ------------------------ #

def ref_forward(params, x_nchw):
    def block(x, p):
        y = jax.lax.conv_general_dilated(
            x, p['w'], (1, 1), ((1, 1), (1, 1)),
            dimension_numbers=('NCHW', 'OIHW', 'NCHW')) + p['b'].reshape(1, -1, 1, 1)
        mean = jnp.mean(y, axis=(0, 2, 3), keepdims=True)
        var = jnp.mean((y - mean) ** 2, axis=(0, 2, 3), keepdims=True)
        y = (y - mean) * jax.lax.rsqrt(var + EPS)
        y = y * p['g'].reshape(1, -1, 1, 1) + p['beta'].reshape(1, -1, 1, 1)
        y = jnp.maximum(y, 0.0)
        n, cc, h, w = y.shape
        return y.reshape(n, cc, h // 2, 2, w // 2, 2).max(axis=(3, 5))

    x = block(x_nchw, params['block1'])
    x = block(x, params['block2'])
    x = block(x, params['block3'])
    film = params['film_w'] @ params['context'] + params['film_b']
    gamma = film[:HIDDEN_SIZE].reshape(1, -1, 1, 1)
    beta = film[HIDDEN_SIZE:].reshape(1, -1, 1, 1)
    x = gamma * x + beta
    x = block(x, params['block4'])
    x = x.reshape(x.shape[0], -1)
    return x @ params['fc_w'].T + params['fc_b']


if __name__ == "__main__":
    key = jax.random.PRNGKey(0)
    pkey, xkey = jax.random.split(key)
    params = init_params(pkey)
    packed = pack_params(params)
    x = jax.random.normal(xkey, (BATCH, IN_CHANNELS, IN_SIZE, IN_SIZE), jnp.float32)

    out = jax.block_until_ready(forward(packed, x))
    assert out.shape == (BATCH, OUT_CHANNELS), out.shape

    ref = ref_forward(params, x)
    np.testing.assert_allclose(np.asarray(out), np.asarray(ref),
                               atol=2e-3, rtol=2e-3)
    print("KERNEL_OK")
</pallas_src>

<mosaic_0001>
module attributes {stable_mosaic.version = 11 : i64} {
  func.func @_fused_forward_kernel(%arg0: memref<2048x27xf32, #tpu.memory_space<vmem>>, %arg1: memref<27x32xf32, #tpu.memory_space<vmem>>, %arg2: memref<864x32xf32, #tpu.memory_space<vmem>>, %arg3: memref<16x32xf32, #tpu.memory_space<vmem>>, %arg4: memref<2x32xf32, #tpu.memory_space<vmem>>, %arg5: memref<32x5xf32, #tpu.memory_space<vmem>>, %arg6: memref<1x5xf32, #tpu.memory_space<vmem>>, %arg7: memref<8x5xf32, #tpu.memory_space<vmem>>, %arg8: memref<10x80x32xf32, #tpu.memory_space<vmem>>, %arg9: memref<6x48x32xf32, #tpu.memory_space<vmem>>, %arg10: memref<4x32x32xf32, #tpu.memory_space<vmem>>) attributes {dimension_semantics = [], scalar_prefetch = 0 : i64, scratch_operands = 3 : i64, tpu.core_type = #tpu.core_type<tc>} {
    %cst = arith.constant 0.000000e+00 : f32
    %0 = vector.broadcast %cst : f32 to vector<10x80x32xf32>
    %c0 = arith.constant 0 : index
    %c0_0 = arith.constant 0 : index
    %c0_1 = arith.constant 0 : index
    %1 = vector.load %arg8[%c0, %c0_0, %c0_1] : memref<10x80x32xf32, #tpu.memory_space<vmem>>, vector<10x80x32xf32>
    tpu.vector_store %arg8[%c0, %c0_0, %c0_1], %0 {strides = array<i32>} : memref<10x80x32xf32, #tpu.memory_space<vmem>>, vector<10x80x32xf32>,
    %cst_2 = arith.constant 0.000000e+00 : f32
    %2 = vector.broadcast %cst_2 : f32 to vector<6x48x32xf32>
    %c0_3 = arith.constant 0 : index
    %c0_4 = arith.constant 0 : index
    %c0_5 = arith.constant 0 : index
    %3 = vector.load %arg9[%c0_3, %c0_4, %c0_5] : memref<6x48x32xf32, #tpu.memory_space<vmem>>, vector<6x48x32xf32>
    tpu.vector_store %arg9[%c0_3, %c0_4, %c0_5], %2 {strides = array<i32>} : memref<6x48x32xf32, #tpu.memory_space<vmem>>, vector<6x48x32xf32>,
    %cst_6 = arith.constant 0.000000e+00 : f32
    %4 = vector.broadcast %cst_6 : f32 to vector<4x32x32xf32>
    %c0_7 = arith.constant 0 : index
    %c0_8 = arith.constant 0 : index
    %c0_9 = arith.constant 0 : index
    %5 = vector.load %arg10[%c0_7, %c0_8, %c0_9] : memref<4x32x32xf32, #tpu.memory_space<vmem>>, vector<4x32x32xf32>
    tpu.vector_store %arg10[%c0_7, %c0_8, %c0_9], %4 {strides = array<i32>} : memref<4x32x32xf32, #tpu.memory_space<vmem>>, vector<4x32x32xf32>,
    %c0_10 = arith.constant 0 : index
    %c0_11 = arith.constant 0 : index
    %6 = vector.load %arg0[%c0_10, %c0_11] : memref<2048x27xf32, #tpu.memory_space<vmem>>, vector<2048x27xf32>
    %c0_12 = arith.constant 0 : index
    %c0_13 = arith.constant 0 : index
    %7 = vector.load %arg1[%c0_12, %c0_13] : memref<27x32xf32, #tpu.memory_space<vmem>>, vector<27x32xf32>
    %cst_14 = arith.constant dense<0.000000e+00> : vector<2048x32xf32>
    %8 = tpu.matmul %6, %7, %cst_14 {dimension_numbers = #tpu.dot_dimension_numbers<[1], [0], [0], [1], [0, 0, 1, 1], [], []>} : vector<2048x27xf32>, vector<27x32xf32>, vector<2048x32xf32> -> vector<2048x32xf32>
    %c0_15 = arith.constant 0 : index
    %c0_16 = arith.constant 0 : index
    %9 = vector.load %arg3[%c0_15, %c0_16] : memref<16x32xf32, #tpu.memory_space<vmem>>, vector<1x32xf32>
    %c1 = arith.constant 1 : index
    %c0_17 = arith.constant 0 : index
    %10 = vector.load %arg3[%c1, %c0_17] : memref<16x32xf32, #tpu.memory_space<vmem>>, vector<1x32xf32>
    %c2 = arith.constant 2 : index
    %c0_18 = arith.constant 0 : index
    %11 = vector.load %arg3[%c2, %c0_18] : memref<16x32xf32, #tpu.memory_space<vmem>>, vector<1x32xf32>
    %12 = vector.broadcast %9 : vector<1x32xf32> to vector<2048x32xf32>
    %13 = arith.addf %8, %12 : vector<2048x32xf32>
    %cst_19 = arith.constant dense<0.000000e+00> : vector<32xf32>
    %14 = vector.multi_reduction <add>, %13, %cst_19 [0] : vector<2048x32xf32> to vector<32xf32>
    %15 = vector.shape_cast %14 : vector<32xf32> to vector<1x32xf32>
    %16 = arith.mulf %13, %13 : vector<2048x32xf32>
    %cst_20 = arith.constant dense<0.000000e+00> : vector<32xf32>
    %17 = vector.multi_reduction <add>, %16, %cst_20 [0] : vector<2048x32xf32> to vector<32xf32>
    %18 = vector.shape_cast %17 : vector<32xf32> to vector<1x32xf32>
    %cst_21 = arith.constant 4.8828125E-4 : f32
    %19 = vector.broadcast %cst_21 : f32 to vector<1x32xf32>
    %20 = arith.mulf %15, %19 : vector<1x32xf32>
    %cst_22 = arith.constant 4.8828125E-4 : f32
    %21 = vector.broadcast %cst_22 : f32 to vector<1x32xf32>
    %22 = arith.mulf %18, %21 : vector<1x32xf32>
    %23 = arith.mulf %20, %20 : vector<1x32xf32>
    %24 = arith.subf %22, %23 : vector<1x32xf32>
    %25 = vector.broadcast %20 : vector<1x32xf32> to vector<2048x32xf32>
    %26 = arith.subf %13, %25 : vector<2048x32xf32>
    %cst_23 = arith.constant 9.99999974E-6 : f32
    %27 = vector.broadcast %cst_23 : f32 to vector<1x32xf32>
    %28 = arith.addf %24, %27 : vector<1x32xf32>
    %29 = math.rsqrt %28 : vector<1x32xf32>
    %30 = vector.broadcast %29 : vector<1x32xf32> to vector<2048x32xf32>
    %31 = arith.mulf %26, %30 : vector<2048x32xf32>
    %32 = vector.broadcast %10 : vector<1x32xf32> to vector<2048x32xf32>
    %33 = arith.mulf %31, %32 : vector<2048x32xf32>
    %34 = vector.broadcast %11 : vector<1x32xf32> to vector<2048x32xf32>
    %35 = arith.addf %33, %34 : vector<2048x32xf32>
    %cst_24 = arith.constant 0.000000e+00 : f32
    %36 = vector.broadcast %cst_24 : f32 to vector<2048x32xf32>
    %37 = arith.maximumf %35, %36 : vector<2048x32xf32>
    %38 = vector.extract_strided_slice %37 {offsets = [0, 0], sizes = [512, 32], strides = [1, 1]} : vector<2048x32xf32> to vector<512x32xf32>
    %39 = vector.extract_strided_slice %37 {offsets = [512, 0], sizes = [512, 32], strides = [1, 1]} : vector<2048x32xf32> to vector<512x32xf32>
    %40 = vector.extract_strided_slice %37 {offsets = [1024, 0], sizes = [512, 32], strides = [1, 1]} : vector<2048x32xf32> to vector<512x32xf32>
    %41 = vector.extract_strided_slice %37 {offsets = [1536, 0], sizes = [512, 32], strides = [1, 1]} : vector<2048x32xf32> to vector<512x32xf32>
    %42 = arith.maximumf %38, %39 : vector<512x32xf32>
    %43 = arith.maximumf %40, %41 : vector<512x32xf32>
    %44 = arith.maximumf %42, %43 : vector<512x32xf32>
    %45 = vector.shape_cast %44 : vector<512x32xf32> to vector<8x64x32xf32>
    %c1_25 = arith.constant 1 : index
    %c8 = arith.constant 8 : index
    %c0_26 = arith.constant 0 : index
    %46 = vector.load %arg8[%c1_25, %c8, %c0_26] : memref<10x80x32xf32, #tpu.memory_space<vmem>>, vector<8x64x32xf32>
    tpu.vector_store %arg8[%c1_25, %c8, %c0_26], %45 {strides = array<i32>} : memref<10x80x32xf32, #tpu.memory_space<vmem>>, vector<8x64x32xf32>,
    %cst_27 = arith.constant 0.000000e+00 : f32
    %47 = vector.broadcast %cst_27 : f32 to vector<512x32xf32>
    %c0_28 = arith.constant 0 : index
    %c0_29 = arith.constant 0 : index
    %c0_30 = arith.constant 0 : index
    %48 = vector.load %arg8[%c0_28, %c0_29, %c0_30] : memref<10x80x32xf32, #tpu.memory_space<vmem>>, vector<8x64x32xf32>
    %49 = vector.shape_cast %48 : vector<8x64x32xf32> to vector<512x32xf32>
    %c0_31 = arith.constant 0 : index
    %c0_32 = arith.constant 0 : index
    %50 = vector.load %arg2[%c0_31, %c0_32] : memref<864x32xf32, #tpu.memory_space<vmem>>, vector<32x32xf32>
    %cst_33 = arith.constant dense<0.000000e+00> : vector<512x32xf32>
    %51 = tpu.matmul %49, %50, %cst_33 {dimension_numbers = #tpu.dot_dimension_numbers<[1], [0], [0], [1], [0, 0, 1, 1], [], []>} : vector<512x32xf32>, vector<32x32xf32>, vector<512x32xf32> -> vector<512x32xf32>
    %52 = arith.addf %47, %51 : vector<512x32xf32>
    %c0_34 = arith.constant 0 : index
    %c8_35 = arith.constant 8 : index
    %c0_36 = arith.constant 0 : index
    %53 = vector.load %arg8[%c0_34, %c8_35, %c0_36] : memref<10x80x32xf32, #tpu.memory_space<vmem>>, vector<8x64x32xf32>
    %54 = vector.shape_cast %53 : vector<8x64x32xf32> to vector<512x32xf32>
    %c32 = arith.constant 32 : index
    %c0_37 = arith.constant 0 : index
    %55 = vector.load %arg2[%c32, %c0_37] : memref<864x32xf32, #tpu.memory_space<vmem>>, vector<32x32xf32>
    %cst_38 = arith.constant dense<0.000000e+00> : vector<512x32xf32>
    %56 = tpu.matmul %54, %55, %cst_38 {dimension_numbers = #tpu.dot_dimension_numbers<[1], [0], [0], [1], [0, 0, 1, 1], [], []>} : vector<512x32xf32>, vector<32x32xf32>, vector<512x32xf32> -> vector<512x32xf32>
    %57 = arith.addf %52, %56 : vector<512x32xf32>
    %c0_39 = arith.constant 0 : index
    %c16 = arith.constant 16 : index
    %c0_40 = arith.constant 0 : index
    %58 = vector.load %arg8[%c0_39, %c16, %c0_40] : memref<10x80x32xf32, #tpu.memory_space<vmem>>, vector<8x64x32xf32>
    %59 = vector.shape_cast %58 : vector<8x64x32xf32> to vector<512x32xf32>
    %c64 = arith.constant 64 : index
    %c0_41 = arith.constant 0 : index
    %60 = vector.load %arg2[%c64, %c0_41] : memref<864x32xf32, #tpu.memory_space<vmem>>, vector<32x32xf32>
    %cst_42 = arith.constant dense<0.000000e+00> : vector<512x32xf32>
    %61 = tpu.matmul %59, %60, %cst_42 {dimension_numbers = #tpu.dot_dimension_numbers<[1], [0], [0], [1], [0, 0, 1, 1], [], []>} : vector<512x32xf32>, vector<32x32xf32>, vector<512x32xf32> -> vector<512x32xf32>
    %62 = arith.addf %57, %61 : vector<512x32xf32>
    %c1_43 = arith.constant 1 : index
    %c0_44 = arith.constant 0 : index
    %c0_45 = arith.constant 0 : index
    %63 = vector.load %arg8[%c1_43, %c0_44, %c0_45] : memref<10x80x32xf32, #tpu.memory_space<vmem>>, vector<8x64x32xf32>
    %64 = vector.shape_cast %63 : vector<8x64x32xf32> to vector<512x32xf32>
    %c96 = arith.constant 96 : index
    %c0_46 = arith.constant 0 : index
    %65 = vector.load %arg2[%c96, %c0_46] : memref<864x32xf32, #tpu.memory_space<vmem>>, vector<32x32xf32>
    %cst_47 = arith.constant dense<0.000000e+00> : vector<512x32xf32>
    %66 = tpu.matmul %64, %65, %cst_47 {dimension_numbers = #tpu.dot_dimension_numbers<[1], [0], [0], [1], [0, 0, 1, 1], [], []>} : vector<512x32xf32>, vector<32x32xf32>, vector<512x32xf32> -> vector<512x32xf32>
    %67 = arith.addf %62, %66 : vector<512x32xf32>
    %c1_48 = arith.constant 1 : index
    %c8_49 = arith.constant 8 : index
    %c0_50 = arith.constant 0 : index
    %68 = vector.load %arg8[%c1_48, %c8_49, %c0_50] : memref<10x80x32xf32, #tpu.memory_space<vmem>>, vector<8x64x32xf32>
    %69 = vector.shape_cast %68 : vector<8x64x32xf32> to vector<512x32xf32>
    %c128 = arith.constant 128 : index
    %c0_51 = arith.constant 0 : index
    %70 = vector.load %arg2[%c128, %c0_51] : memref<864x32xf32, #tpu.memory_space<vmem>>, vector<32x32xf32>
    %cst_52 = arith.constant dense<0.000000e+00> : vector<512x32xf32>
    %71 = tpu.matmul %69, %70, %cst_52 {dimension_numbers = #tpu.dot_dimension_numbers<[1], [0], [0], [1], [0, 0, 1, 1], [], []>} : vector<512x32xf32>, vector<32x32xf32>, vector<512x32xf32> -> vector<512x32xf32>
    %72 = arith.addf %67, %71 : vector<512x32xf32>
    %c1_53 = arith.constant 1 : index
    %c16_54 = arith.constant 16 : index
    %c0_55 = arith.constant 0 : index
    %73 = vector.load %arg8[%c1_53, %c16_54, %c0_55] : memref<10x80x32xf32, #tpu.memory_space<vmem>>, vector<8x64x32xf32>
    %74 = vector.shape_cast %73 : vector<8x64x32xf32> to vector<512x32xf32>
    %c160 = arith.constant 160 : index
    %c0_56 = arith.constant 0 : index
    %75 = vector.load %arg2[%c160, %c0_56] : memref<864x32xf32, #tpu.memory_space<vmem>>, vector<32x32xf32>
    %cst_57 = arith.constant dense<0.000000e+00> : vector<512x32xf32>
    %76 = tpu.matmul %74, %75, %cst_57 {dimension_numbers = #tpu.dot_dimension_numbers<[1], [0], [0], [1], [0, 0, 1, 1], [], []>} : vector<512x32xf32>, vector<32x32xf32>, vector<512x32xf32> -> vector<512x32xf32>
    %77 = arith.addf %72, %76 : vector<512x32xf32>
    %c2_58 = arith.constant 2 : index
    %c0_59 = arith.constant 0 : index
    %c0_60 = arith.constant 0 : index
    %78 = vector.load %arg8[%c2_58, %c0_59, %c0_60] : memref<10x80x32xf32, #tpu.memory_space<vmem>>, vector<8x64x32xf32>
    %79 = vector.shape_cast %78 : vector<8x64x32xf32> to vector<512x32xf32>
    %c192 = arith.constant 192 : index
    %c0_61 = arith.constant 0 : index
    %80 = vector.load %arg2[%c192, %c0_61] : memref<864x32xf32, #tpu.memory_space<vmem>>, vector<32x32xf32>
    %cst_62 = arith.constant dense<0.000000e+00> : vector<512x32xf32>
    %81 = tpu.matmul %79, %80, %cst_62 {dimension_numbers = #tpu.dot_dimension_numbers<[1], [0], [0], [1], [0, 0, 1, 1], [], []>} : vector<512x32xf32>, vector<32x32xf32>, vector<512x32xf32> -> vector<512x32xf32>
    %82 = arith.addf %77, %81 : vector<512x32xf32>
    %c2_63 = arith.constant 2 : index
    %c8_64 = arith.constant 8 : index
    %c0_65 = arith.constant 0 : index
    %83 = vector.load %arg8[%c2_63, %c8_64, %c0_65] : memref<10x80x32xf32, #tpu.memory_space<vmem>>, vector<8x64x32xf32>
    %84 = vector.shape_cast %83 : vector<8x64x32xf32> to vector<512x32xf32>
    %c224 = arith.constant 224 : index
    %c0_66 = arith.constant 0 : index
    %85 = vector.load %arg2[%c224, %c0_66] : memref<864x32xf32, #tpu.memory_space<vmem>>, vector<32x32xf32>
    %cst_67 = arith.constant dense<0.000000e+00> : vector<512x32xf32>
    %86 = tpu.matmul %84, %85, %cst_67 {dimension_numbers = #tpu.dot_dimension_numbers<[1], [0], [0], [1], [0, 0, 1, 1], [], []>} : vector<512x32xf32>, vector<32x32xf32>, vector<512x32xf32> -> vector<512x32xf32>
    %87 = arith.addf %82, %86 : vector<512x32xf32>
    %c2_68 = arith.constant 2 : index
    %c16_69 = arith.constant 16 : index
    %c0_70 = arith.constant 0 : index
    %88 = vector.load %arg8[%c2_68, %c16_69, %c0_70] : memref<10x80x32xf32, #tpu.memory_space<vmem>>, vector<8x64x32xf32>
    %89 = vector.shape_cast %88 : vector<8x64x32xf32> to vector<512x32xf32>
    %c256 = arith.constant 256 : index
    %c0_71 = arith.constant 0 : index
    %90 = vector.load %arg2[%c256, %c0_71] : memref<864x32xf32, #tpu.memory_space<vmem>>, vector<32x32xf32>
    %cst_72 = arith.constant dense<0.000000e+00> : vector<512x32xf32>
    %91 = tpu.matmul %89, %90, %cst_72 {dimension_numbers = #tpu.dot_dimension_numbers<[1], [0], [0], [1], [0, 0, 1, 1], [], []>} : vector<512x32xf32>, vector<32x32xf32>, vector<512x32xf32> -> vector<512x32xf32>
    %92 = arith.addf %87, %91 : vector<512x32xf32>
    %c4 = arith.constant 4 : index
    %c0_73 = arith.constant 0 : index
    %93 = vector.load %arg3[%c4, %c0_73] : memref<16x32xf32, #tpu.memory_space<vmem>>, vector<1x32xf32>
    %c5 = arith.constant 5 : index
    %c0_74 = arith.constant 0 : index
    %94 = vector.load %arg3[%c5, %c0_74] : memref<16x32xf32, #tpu.memory_space<vmem>>, vector<1x32xf32>
    %c6 = arith.constant 6 : index
    %c0_75 = arith.constant 0 : index
    %95 = vector.load %arg3[%c6, %c0_75] : memref<16x32xf32, #tpu.memory_space<vmem>>, vector<1x32xf32>
    %96 = vector.broadcast %93 : vector<1x32xf32> to vector<512x32xf32>
    %97 = arith.addf %92, %96 : vector<512x32xf32>
    %cst_76 = arith.constant dense<0.000000e+00> : vector<32xf32>
    %98 = vector.multi_reduction <add>, %97, %cst_76 [0] : vector<512x32xf32> to vector<32xf32>
    %99 = vector.shape_cast %98 : vector<32xf32> to vector<1x32xf32>
    %100 = arith.mulf %97, %97 : vector<512x32xf32>
    %cst_77 = arith.constant dense<0.000000e+00> : vector<32xf32>
    %101 = vector.multi_reduction <add>, %100, %cst_77 [0] : vector<512x32xf32> to vector<32xf32>
    %102 = vector.shape_cast %101 : vector<32xf32> to vector<1x32xf32>
    %cst_78 = arith.constant 0.001953125 : f32
    %103 = vector.broadcast %cst_78 : f32 to vector<1x32xf32>
    %104 = arith.mulf %99, %103 : vector<1x32xf32>
    %cst_79 = arith.constant 0.001953125 : f32
    %105 = vector.broadcast %cst_79 : f32 to vector<1x32xf32>
    %106 = arith.mulf %102, %105 : vector<1x32xf32>
    %107 = arith.mulf %104, %104 : vector<1x32xf32>
    %108 = arith.subf %106, %107 : vector<1x32xf32>
    %109 = vector.broadcast %104 : vector<1x32xf32> to vector<512x32xf32>
    %110 = arith.subf %97, %109 : vector<512x32xf32>
    %cst_80 = arith.constant 9.99999974E-6 : f32
    %111 = vector.broadcast %cst_80 : f32 to vector<1x32xf32>
    %112 = arith.addf %108, %111 : vector<1x32xf32>
    %113 = math.rsqrt %112 : vector<1x32xf32>
    %114 = vector.broadcast %113 : vector<1x32xf32> to vector<512x32xf32>
    %115 = arith.mulf %110, %114 : vector<512x32xf32>
    %116 = vector.broadcast %94 : vector<1x32xf32> to vector<512x32xf32>
    %117 = arith.mulf %115, %116 : vector<512x32xf32>
    %118 = vector.broadcast %95 : vector<1x32xf32> to vector<512x32xf32>
    %119 = arith.addf %117, %118 : vector<512x32xf32>
    %cst_81 = arith.constant 0.000000e+00 : f32
    %120 = vector.broadcast %cst_81 : f32 to vector<512x32xf32>
    %121 = arith.maximumf %119, %120 : vector<512x32xf32>
    %122 = vector.shape_cast %121 : vector<512x32xf32> to vector<4x128x32xf32>
    %123 = vector.extract_strided_slice %122 {offsets = [0, 0, 0], sizes = [4, 64, 32], strides = [1, 1, 1]} : vector<4x128x32xf32> to vector<4x64x32xf32>
    %124 = vector.shape_cast %123 : vector<4x64x32xf32> to vector<16x16x32xf32>
    %125 = vector.extract_strided_slice %124 {offsets = [0, 0, 0], sizes = [16, 8, 32], strides = [1, 1, 1]} : vector<16x16x32xf32> to vector<16x8x32xf32>
    %126 = vector.extract_strided_slice %124 {offsets = [0, 8, 0], sizes = [16, 8, 32], strides = [1, 1, 1]} : vector<16x16x32xf32> to vector<16x8x32xf32>
    %127 = vector.extract_strided_slice %122 {offsets = [0, 64, 0], sizes = [4, 64, 32], strides = [1, 1, 1]} : vector<4x128x32xf32> to vector<4x64x32xf32>
    %128 = vector.shape_cast %127 : vector<4x64x32xf32> to vector<16x16x32xf32>
    %129 = vector.extract_strided_slice %128 {offsets = [0, 0, 0], sizes = [16, 8, 32], strides = [1, 1, 1]} : vector<16x16x32xf32> to vector<16x8x32xf32>
    %130 = vector.extract_strided_slice %128 {offsets = [0, 8, 0], sizes = [16, 8, 32], strides = [1, 1, 1]} : vector<16x16x32xf32> to vector<16x8x32xf32>
    %131 = arith.maximumf %125, %126 : vector<16x8x32xf32>
    %132 = arith.maximumf %129, %130 : vector<16x8x32xf32>
    %133 = arith.maximumf %131, %132 : vector<16x8x32xf32>
    %134 = vector.shape_cast %133 : vector<16x8x32xf32> to vector<128x32xf32>
    %135 = vector.shape_cast %134 : vector<128x32xf32> to vector<4x32x32xf32>
    %c1_82 = arith.constant 1 : index
    %c8_83 = arith.constant 8 : index
    %c0_84 = arith.constant 0 : index
    %136 = vector.load %arg9[%c1_82, %c8_83, %c0_84] : memref<6x48x32xf32, #tpu.memory_space<vmem>>, vector<4x32x32xf32>
    tpu.vector_store %arg9[%c1_82, %c8_83, %c0_84], %135 {strides = array<i32>} : memref<6x48x32xf32, #tpu.memory_space<vmem>>, vector<4x32x32xf32>,
    %cst_85 = arith.constant 0.000000e+00 : f32
    %137 = vector.broadcast %cst_85 : f32 to vector<128x32xf32>
    %c0_86 = arith.constant 0 : index
    %c0_87 = arith.constant 0 : index
    %c0_88 = arith.constant 0 : index
    %138 = vector.load %arg9[%c0_86, %c0_87, %c0_88] : memref<6x48x32xf32, #tpu.memory_space<vmem>>, vector<4x32x32xf32>
    %139 = vector.shape_cast %138 : vector<4x32x32xf32> to vector<128x32xf32>
    %c288 = arith.constant 288 : index
    %c0_89 = arith.constant 0 : index
    %140 = vector.load %arg2[%c288, %c0_89] : memref<864x32xf32, #tpu.memory_space<vmem>>, vector<32x32xf32>
    %cst_90 = arith.constant dense<0.000000e+00> : vector<128x32xf32>
    %141 = tpu.matmul %139, %140, %cst_90 {dimension_numbers = #tpu.dot_dimension_numbers<[1], [0], [0], [1], [0, 0, 1, 1], [], []>} : vector<128x32xf32>, vector<32x32xf32>, vector<128x32xf32> -> vector<128x32xf32>
    %142 = arith.addf %137, %141 : vector<128x32xf32>
    %c0_91 = arith.constant 0 : index
    %c8_92 = arith.constant 8 : index
    %c0_93 = arith.constant 0 : index
    %143 = vector.load %arg9[%c0_91, %c8_92, %c0_93] : memref<6x48x32xf32, #tpu.memory_space<vmem>>, vector<4x32x32xf32>
    %144 = vector.shape_cast %143 : vector<4x32x32xf32> to vector<128x32xf32>
    %c320 = arith.constant 320 : index
    %c0_94 = arith.constant 0 : index
    %145 = vector.load %arg2[%c320, %c0_94] : memref<864x32xf32, #tpu.memory_space<vmem>>, vector<32x32xf32>
    %cst_95 = arith.constant dense<0.000000e+00> : vector<128x32xf32>
    %146 = tpu.matmul %144, %145, %cst_95 {dimension_numbers = #tpu.dot_dimension_numbers<[1], [0], [0], [1], [0, 0, 1, 1], [], []>} : vector<128x32xf32>, vector<32x32xf32>, vector<128x32xf32> -> vector<128x32xf32>
    %147 = arith.addf %142, %146 : vector<128x32xf32>
    %c0_96 = arith.constant 0 : index
    %c16_97 = arith.constant 16 : index
    %c0_98 = arith.constant 0 : index
    %148 = vector.load %arg9[%c0_96, %c16_97, %c0_98] : memref<6x48x32xf32, #tpu.memory_space<vmem>>, vector<4x32x32xf32>
    %149 = vector.shape_cast %148 : vector<4x32x32xf32> to vector<128x32xf32>
    %c352 = arith.constant 352 : index
    %c0_99 = arith.constant 0 : index
    %150 = vector.load %arg2[%c352, %c0_99] : memref<864x32xf32, #tpu.memory_space<vmem>>, vector<32x32xf32>
    %cst_100 = arith.constant dense<0.000000e+00> : vector<128x32xf32>
    %151 = tpu.matmul %149, %150, %cst_100 {dimension_numbers = #tpu.dot_dimension_numbers<[1], [0], [0], [1], [0, 0, 1, 1], [], []>} : vector<128x32xf32>, vector<32x32xf32>, vector<128x32xf32> -> vector<128x32xf32>
    %152 = arith.addf %147, %151 : vector<128x32xf32>
    %c1_101 = arith.constant 1 : index
    %c0_102 = arith.constant 0 : index
    %c0_103 = arith.constant 0 : index
    %153 = vector.load %arg9[%c1_101, %c0_102, %c0_103] : memref<6x48x32xf32, #tpu.memory_space<vmem>>, vector<4x32x32xf32>
    %154 = vector.shape_cast %153 : vector<4x32x32xf32> to vector<128x32xf32>
    %c384 = arith.constant 384 : index
    %c0_104 = arith.constant 0 : index
    %155 = vector.load %arg2[%c384, %c0_104] : memref<864x32xf32, #tpu.memory_space<vmem>>, vector<32x32xf32>
    %cst_105 = arith.constant dense<0.000000e+00> : vector<128x32xf32>
    %156 = tpu.matmul %154, %155, %cst_105 {dimension_numbers = #tpu.dot_dimension_numbers<[1], [0], [0], [1], [0, 0, 1, 1], [], []>} : vector<128x32xf32>, vector<32x32xf32>, vector<128x32xf32> -> vector<128x32xf32>
    %157 = arith.addf %152, %156 : vector<128x32xf32>
    %c1_106 = arith.constant 1 : index
    %c8_107 = arith.constant 8 : index
    %c0_108 = arith.constant 0 : index
    %158 = vector.load %arg9[%c1_106, %c8_107, %c0_108] : memref<6x48x32xf32, #tpu.memory_space<vmem>>, vector<4x32x32xf32>
    %159 = vector.shape_cast %158 : vector<4x32x32xf32> to vector<128x32xf32>
    %c416 = arith.constant 416 : index
    %c0_109 = arith.constant 0 : index
    %160 = vector.load %arg2[%c416, %c0_109] : memref<864x32xf32, #tpu.memory_space<vmem>>, vector<32x32xf32>
    %cst_110 = arith.constant dense<0.000000e+00> : vector<128x32xf32>
    %161 = tpu.matmul %159, %160, %cst_110 {dimension_numbers = #tpu.dot_dimension_numbers<[1], [0], [0], [1], [0, 0, 1, 1], [], []>} : vector<128x32xf32>, vector<32x32xf32>, vector<128x32xf32> -> vector<128x32xf32>
    %162 = arith.addf %157, %161 : vector<128x32xf32>
    %c1_111 = arith.constant 1 : index
    %c16_112 = arith.constant 16 : index
    %c0_113 = arith.constant 0 : index
    %163 = vector.load %arg9[%c1_111, %c16_112, %c0_113] : memref<6x48x32xf32, #tpu.memory_space<vmem>>, vector<4x32x32xf32>
    %164 = vector.shape_cast %163 : vector<4x32x32xf32> to vector<128x32xf32>
    %c448 = arith.constant 448 : index
    %c0_114 = arith.constant 0 : index
    %165 = vector.load %arg2[%c448, %c0_114] : memref<864x32xf32, #tpu.memory_space<vmem>>, vector<32x32xf32>
    %cst_115 = arith.constant dense<0.000000e+00> : vector<128x32xf32>
    %166 = tpu.matmul %164, %165, %cst_115 {dimension_numbers = #tpu.dot_dimension_numbers<[1], [0], [0], [1], [0, 0, 1, 1], [], []>} : vector<128x32xf32>, vector<32x32xf32>, vector<128x32xf32> -> vector<128x32xf32>
    %167 = arith.addf %162, %166 : vector<128x32xf32>
    %c2_116 = arith.constant 2 : index
    %c0_117 = arith.constant 0 : index
    %c0_118 = arith.constant 0 : index
    %168 = vector.load %arg9[%c2_116, %c0_117, %c0_118] : memref<6x48x32xf32, #tpu.memory_space<vmem>>, vector<4x32x32xf32>
    %169 = vector.shape_cast %168 : vector<4x32x32xf32> to vector<128x32xf32>
    %c480 = arith.constant 480 : index
    %c0_119 = arith.constant 0 : index
    %170 = vector.load %arg2[%c480, %c0_119] : memref<864x32xf32, #tpu.memory_space<vmem>>, vector<32x32xf32>
    %cst_120 = arith.constant dense<0.000000e+00> : vector<128x32xf32>
    %171 = tpu.matmul %169, %170, %cst_120 {dimension_numbers = #tpu.dot_dimension_numbers<[1], [0], [0], [1], [0, 0, 1, 1], [], []>} : vector<128x32xf32>, vector<32x32xf32>, vector<128x32xf32> -> vector<128x32xf32>
    %172 = arith.addf %167, %171 : vector<128x32xf32>
    %c2_121 = arith.constant 2 : index
    %c8_122 = arith.constant 8 : index
    %c0_123 = arith.constant 0 : index
    %173 = vector.load %arg9[%c2_121, %c8_122, %c0_123] : memref<6x48x32xf32, #tpu.memory_space<vmem>>, vector<4x32x32xf32>
    %174 = vector.shape_cast %173 : vector<4x32x32xf32> to vector<128x32xf32>
    %c512 = arith.constant 512 : index
    %c0_124 = arith.constant 0 : index
    %175 = vector.load %arg2[%c512, %c0_124] : memref<864x32xf32, #tpu.memory_space<vmem>>, vector<32x32xf32>
    %cst_125 = arith.constant dense<0.000000e+00> : vector<128x32xf32>
    %176 = tpu.matmul %174, %175, %cst_125 {dimension_numbers = #tpu.dot_dimension_numbers<[1], [0], [0], [1], [0, 0, 1, 1], [], []>} : vector<128x32xf32>, vector<32x32xf32>, vector<128x32xf32> -> vector<128x32xf32>
    %177 = arith.addf %172, %176 : vector<128x32xf32>
    %c2_126 = arith.constant 2 : index
    %c16_127 = arith.constant 16 : index
    %c0_128 = arith.constant 0 : index
    %178 = vector.load %arg9[%c2_126, %c16_127, %c0_128] : memref<6x48x32xf32, #tpu.memory_space<vmem>>, vector<4x32x32xf32>
    %179 = vector.shape_cast %178 : vector<4x32x32xf32> to vector<128x32xf32>
    %c544 = arith.constant 544 : index
    %c0_129 = arith.constant 0 : index
    %180 = vector.load %arg2[%c544, %c0_129] : memref<864x32xf32, #tpu.memory_space<vmem>>, vector<32x32xf32>
    %cst_130 = arith.constant dense<0.000000e+00> : vector<128x32xf32>
    %181 = tpu.matmul %179, %180, %cst_130 {dimension_numbers = #tpu.dot_dimension_numbers<[1], [0], [0], [1], [0, 0, 1, 1], [], []>} : vector<128x32xf32>, vector<32x32xf32>, vector<128x32xf32> -> vector<128x32xf32>
    %182 = arith.addf %177, %181 : vector<128x32xf32>
    %c8_131 = arith.constant 8 : index
    %c0_132 = arith.constant 0 : index
    %183 = vector.load %arg3[%c8_131, %c0_132] : memref<16x32xf32, #tpu.memory_space<vmem>>, vector<1x32xf32>
    %c9 = arith.constant 9 : index
    %c0_133 = arith.constant 0 : index
    %184 = vector.load %arg3[%c9, %c0_133] : memref<16x32xf32, #tpu.memory_space<vmem>>, vector<1x32xf32>
    %c10 = arith.constant 10 : index
    %c0_134 = arith.constant 0 : index
    %185 = vector.load %arg3[%c10, %c0_134] : memref<16x32xf32, #tpu.memory_space<vmem>>, vector<1x32xf32>
    %186 = vector.broadcast %183 : vector<1x32xf32> to vector<128x32xf32>
    %187 = arith.addf %182, %186 : vector<128x32xf32>
    %cst_135 = arith.constant dense<0.000000e+00> : vector<32xf32>
    %188 = vector.multi_reduction <add>, %187, %cst_135 [0] : vector<128x32xf32> to vector<32xf32>
    %189 = vector.shape_cast %188 : vector<32xf32> to vector<1x32xf32>
    %190 = arith.mulf %187, %187 : vector<128x32xf32>
    %cst_136 = arith.constant dense<0.000000e+00> : vector<32xf32>
    %191 = vector.multi_reduction <add>, %190, %cst_136 [0] : vector<128x32xf32> to vector<32xf32>
    %192 = vector.shape_cast %191 : vector<32xf32> to vector<1x32xf32>
    %cst_137 = arith.constant 7.812500e-03 : f32
    %193 = vector.broadcast %cst_137 : f32 to vector<1x32xf32>
    %194 = arith.mulf %189, %193 : vector<1x32xf32>
    %cst_138 = arith.constant 7.812500e-03 : f32
    %195 = vector.broadcast %cst_138 : f32 to vector<1x32xf32>
    %196 = arith.mulf %192, %195 : vector<1x32xf32>
    %197 = arith.mulf %194, %194 : vector<1x32xf32>
    %198 = arith.subf %196, %197 : vector<1x32xf32>
    %199 = vector.broadcast %194 : vector<1x32xf32> to vector<128x32xf32>
    %200 = arith.subf %187, %199 : vector<128x32xf32>
    %cst_139 = arith.constant 9.99999974E-6 : f32
    %201 = vector.broadcast %cst_139 : f32 to vector<1x32xf32>
    %202 = arith.addf %198, %201 : vector<1x32xf32>
    %203 = math.rsqrt %202 : vector<1x32xf32>
    %204 = vector.broadcast %203 : vector<1x32xf32> to vector<128x32xf32>
    %205 = arith.mulf %200, %204 : vector<128x32xf32>
    %206 = vector.broadcast %184 : vector<1x32xf32> to vector<128x32xf32>
    %207 = arith.mulf %205, %206 : vector<128x32xf32>
    %208 = vector.broadcast %185 : vector<1x32xf32> to vector<128x32xf32>
    %209 = arith.addf %207, %208 : vector<128x32xf32>
    %cst_140 = arith.constant 0.000000e+00 : f32
    %210 = vector.broadcast %cst_140 : f32 to vector<128x32xf32>
    %211 = arith.maximumf %209, %210 : vector<128x32xf32>
    %212 = vector.shape_cast %211 : vector<128x32xf32> to vector<2x64x32xf32>
    %213 = vector.extract_strided_slice %212 {offsets = [0, 0, 0], sizes = [2, 32, 32], strides = [1, 1, 1]} : vector<2x64x32xf32> to vector<2x32x32xf32>
    %214 = vector.shape_cast %213 : vector<2x32x32xf32> to vector<4x16x32xf32>
    %215 = vector.extract_strided_slice %214 {offsets = [0, 0, 0], sizes = [4, 8, 32], strides = [1, 1, 1]} : vector<4x16x32xf32> to vector<4x8x32xf32>
    %216 = vector.extract_strided_slice %214 {offsets = [0, 8, 0], sizes = [4, 8, 32], strides = [1, 1, 1]} : vector<4x16x32xf32> to vector<4x8x32xf32>
    %217 = vector.extract_strided_slice %212 {offsets = [0, 32, 0], sizes = [2, 32, 32], strides = [1, 1, 1]} : vector<2x64x32xf32> to vector<2x32x32xf32>
    %218 = vector.shape_cast %217 : vector<2x32x32xf32> to vector<4x16x32xf32>
    %219 = vector.extract_strided_slice %218 {offsets = [0, 0, 0], sizes = [4, 8, 32], strides = [1, 1, 1]} : vector<4x16x32xf32> to vector<4x8x32xf32>
    %220 = vector.extract_strided_slice %218 {offsets = [0, 8, 0], sizes = [4, 8, 32], strides = [1, 1, 1]} : vector<4x16x32xf32> to vector<4x8x32xf32>
    %221 = arith.maximumf %215, %216 : vector<4x8x32xf32>
    %222 = arith.maximumf %219, %220 : vector<4x8x32xf32>
    %223 = arith.maximumf %221, %222 : vector<4x8x32xf32>
    %c0_141 = arith.constant 0 : index
    %c0_142 = arith.constant 0 : index
    %224 = vector.load %arg4[%c0_141, %c0_142] : memref<2x32xf32, #tpu.memory_space<vmem>>, vector<1x32xf32>
    %225 = vector.shape_cast %224 : vector<1x32xf32> to vector<1x1x32xf32>
    %226 = vector.broadcast %225 : vector<1x1x32xf32> to vector<4x8x32xf32>
    %227 = arith.mulf %223, %226 : vector<4x8x32xf32>
    %c1_143 = arith.constant 1 : index
    %c0_144 = arith.constant 0 : index
    %228 = vector.load %arg4[%c1_143, %c0_144] : memref<2x32xf32, #tpu.memory_space<vmem>>, vector<1x32xf32>
    %229 = vector.shape_cast %228 : vector<1x32xf32> to vector<1x1x32xf32>
    %230 = vector.broadcast %229 : vector<1x1x32xf32> to vector<4x8x32xf32>
    %231 = arith.addf %227, %230 : vector<4x8x32xf32>
    %232 = vector.shape_cast %231 : vector<4x8x32xf32> to vector<32x32xf32>
    %233 = vector.shape_cast %232 : vector<32x32xf32> to vector<2x16x32xf32>
    %c1_145 = arith.constant 1 : index
    %c8_146 = arith.constant 8 : index
    %c0_147 = arith.constant 0 : index
    %234 = vector.load %arg10[%c1_145, %c8_146, %c0_147] : memref<4x32x32xf32, #tpu.memory_space<vmem>>, vector<2x16x32xf32>
    tpu.vector_store %arg10[%c1_145, %c8_146, %c0_147], %233 {strides = array<i32>} : memref<4x32x32xf32, #tpu.memory_space<vmem>>, vector<2x16x32xf32>,
    %cst_148 = arith.constant 0.000000e+00 : f32
    %235 = vector.broadcast %cst_148 : f32 to vector<32x32xf32>
    %c0_149 = arith.constant 0 : index
    %c0_150 = arith.constant 0 : index
    %c0_151 = arith.constant 0 : index
    %236 = vector.load %arg10[%c0_149, %c0_150, %c0_151] : memref<4x32x32xf32, #tpu.memory_space<vmem>>, vector<2x16x32xf32>
    %237 = vector.shape_cast %236 : vector<2x16x32xf32> to vector<32x32xf32>
    %c576 = arith.constant 576 : index
    %c0_152 = arith.constant 0 : index
    %238 = vector.load %arg2[%c576, %c0_152] : memref<864x32xf32, #tpu.memory_space<vmem>>, vector<32x32xf32>
    %cst_153 = arith.constant dense<0.000000e+00> : vector<32x32xf32>
    %239 = tpu.matmul %237, %238, %cst_153 {dimension_numbers = #tpu.dot_dimension_numbers<[1], [0], [0], [1], [0, 0, 1, 1], [], []>} : vector<32x32xf32>, vector<32x32xf32>, vector<32x32xf32> -> vector<32x32xf32>
    %240 = arith.addf %235, %239 : vector<32x32xf32>
    %c0_154 = arith.constant 0 : index
    %c8_155 = arith.constant 8 : index
    %c0_156 = arith.constant 0 : index
    %241 = vector.load %arg10[%c0_154, %c8_155, %c0_156] : memref<4x32x32xf32, #tpu.memory_space<vmem>>, vector<2x16x32xf32>
    %242 = vector.shape_cast %241 : vector<2x16x32xf32> to vector<32x32xf32>
    %c608 = arith.constant 608 : index
    %c0_157 = arith.constant 0 : index
    %243 = vector.load %arg2[%c608, %c0_157] : memref<864x32xf32, #tpu.memory_space<vmem>>, vector<32x32xf32>
    %cst_158 = arith.constant dense<0.000000e+00> : vector<32x32xf32>
    %244 = tpu.matmul %242, %243, %cst_158 {dimension_numbers = #tpu.dot_dimension_numbers<[1], [0], [0], [1], [0, 0, 1, 1], [], []>} : vector<32x32xf32>, vector<32x32xf32>, vector<32x32xf32> -> vector<32x32xf32>
    %245 = arith.addf %240, %244 : vector<32x32xf32>
    %c0_159 = arith.constant 0 : index
    %c16_160 = arith.constant 16 : index
    %c0_161 = arith.constant 0 : index
    %246 = vector.load %arg10[%c0_159, %c16_160, %c0_161] : memref<4x32x32xf32, #tpu.memory_space<vmem>>, vector<2x16x32xf32>
    %247 = vector.shape_cast %246 : vector<2x16x32xf32> to vector<32x32xf32>
    %c640 = arith.constant 640 : index
    %c0_162 = arith.constant 0 : index
    %248 = vector.load %arg2[%c640, %c0_162] : memref<864x32xf32, #tpu.memory_space<vmem>>, vector<32x32xf32>
    %cst_163 = arith.constant dense<0.000000e+00> : vector<32x32xf32>
    %249 = tpu.matmul %247, %248, %cst_163 {dimension_numbers = #tpu.dot_dimension_numbers<[1], [0], [0], [1], [0, 0, 1, 1], [], []>} : vector<32x32xf32>, vector<32x32xf32>, vector<32x32xf32> -> vector<32x32xf32>
    %250 = arith.addf %245, %249 : vector<32x32xf32>
    %c1_164 = arith.constant 1 : index
    %c0_165 = arith.constant 0 : index
    %c0_166 = arith.constant 0 : index
    %251 = vector.load %arg10[%c1_164, %c0_165, %c0_166] : memref<4x32x32xf32, #tpu.memory_space<vmem>>, vector<2x16x32xf32>
    %252 = vector.shape_cast %251 : vector<2x16x32xf32> to vector<32x32xf32>
    %c672 = arith.constant 672 : index
    %c0_167 = arith.constant 0 : index
    %253 = vector.load %arg2[%c672, %c0_167] : memref<864x32xf32, #tpu.memory_space<vmem>>, vector<32x32xf32>
    %cst_168 = arith.constant dense<0.000000e+00> : vector<32x32xf32>
    %254 = tpu.matmul %252, %253, %cst_168 {dimension_numbers = #tpu.dot_dimension_numbers<[1], [0], [0], [1], [0, 0, 1, 1], [], []>} : vector<32x32xf32>, vector<32x32xf32>, vector<32x32xf32> -> vector<32x32xf32>
    %255 = arith.addf %250, %254 : vector<32x32xf32>
    %c1_169 = arith.constant 1 : index
    %c8_170 = arith.constant 8 : index
    %c0_171 = arith.constant 0 : index
    %256 = vector.load %arg10[%c1_169, %c8_170, %c0_171] : memref<4x32x32xf32, #tpu.memory_space<vmem>>, vector<2x16x32xf32>
    %257 = vector.shape_cast %256 : vector<2x16x32xf32> to vector<32x32xf32>
    %c704 = arith.constant 704 : index
    %c0_172 = arith.constant 0 : index
    %258 = vector.load %arg2[%c704, %c0_172] : memref<864x32xf32, #tpu.memory_space<vmem>>, vector<32x32xf32>
    %cst_173 = arith.constant dense<0.000000e+00> : vector<32x32xf32>
    %259 = tpu.matmul %257, %258, %cst_173 {dimension_numbers = #tpu.dot_dimension_numbers<[1], [0], [0], [1], [0, 0, 1, 1], [], []>} : vector<32x32xf32>, vector<32x32xf32>, vector<32x32xf32> -> vector<32x32xf32>
    %260 = arith.addf %255, %259 : vector<32x32xf32>
    %c1_174 = arith.constant 1 : index
    %c16_175 = arith.constant 16 : index
    %c0_176 = arith.constant 0 : index
    %261 = vector.load %arg10[%c1_174, %c16_175, %c0_176] : memref<4x32x32xf32, #tpu.memory_space<vmem>>, vector<2x16x32xf32>
    %262 = vector.shape_cast %261 : vector<2x16x32xf32> to vector<32x32xf32>
    %c736 = arith.constant 736 : index
    %c0_177 = arith.constant 0 : index
    %263 = vector.load %arg2[%c736, %c0_177] : memref<864x32xf32, #tpu.memory_space<vmem>>, vector<32x32xf32>
    %cst_178 = arith.constant dense<0.000000e+00> : vector<32x32xf32>
    %264 = tpu.matmul %262, %263, %cst_178 {dimension_numbers = #tpu.dot_dimension_numbers<[1], [0], [0], [1], [0, 0, 1, 1], [], []>} : vector<32x32xf32>, vector<32x32xf32>, vector<32x32xf32> -> vector<32x32xf32>
    %265 = arith.addf %260, %264 : vector<32x32xf32>
    %c2_179 = arith.constant 2 : index
    %c0_180 = arith.constant 0 : index
    %c0_181 = arith.constant 0 : index
    %266 = vector.load %arg10[%c2_179, %c0_180, %c0_181] : memref<4x32x32xf32, #tpu.memory_space<vmem>>, vector<2x16x32xf32>
    %267 = vector.shape_cast %266 : vector<2x16x32xf32> to vector<32x32xf32>
    %c768 = arith.constant 768 : index
    %c0_182 = arith.constant 0 : index
    %268 = vector.load %arg2[%c768, %c0_182] : memref<864x32xf32, #tpu.memory_space<vmem>>, vector<32x32xf32>
    %cst_183 = arith.constant dense<0.000000e+00> : vector<32x32xf32>
    %269 = tpu.matmul %267, %268, %cst_183 {dimension_numbers = #tpu.dot_dimension_numbers<[1], [0], [0], [1], [0, 0, 1, 1], [], []>} : vector<32x32xf32>, vector<32x32xf32>, vector<32x32xf32> -> vector<32x32xf32>
    %270 = arith.addf %265, %269 : vector<32x32xf32>
    %c2_184 = arith.constant 2 : index
    %c8_185 = arith.constant 8 : index
    %c0_186 = arith.constant 0 : index
    %271 = vector.load %arg10[%c2_184, %c8_185, %c0_186] : memref<4x32x32xf32, #tpu.memory_space<vmem>>, vector<2x16x32xf32>
    %272 = vector.shape_cast %271 : vector<2x16x32xf32> to vector<32x32xf32>
    %c800 = arith.constant 800 : index
    %c0_187 = arith.constant 0 : index
    %273 = vector.load %arg2[%c800, %c0_187] : memref<864x32xf32, #tpu.memory_space<vmem>>, vector<32x32xf32>
    %cst_188 = arith.constant dense<0.000000e+00> : vector<32x32xf32>
    %274 = tpu.matmul %272, %273, %cst_188 {dimension_numbers = #tpu.dot_dimension_numbers<[1], [0], [0], [1], [0, 0, 1, 1], [], []>} : vector<32x32xf32>, vector<32x32xf32>, vector<32x32xf32> -> vector<32x32xf32>
    %275 = arith.addf %270, %274 : vector<32x32xf32>
    %c2_189 = arith.constant 2 : index
    %c16_190 = arith.constant 16 : index
    %c0_191 = arith.constant 0 : index
    %276 = vector.load %arg10[%c2_189, %c16_190, %c0_191] : memref<4x32x32xf32, #tpu.memory_space<vmem>>, vector<2x16x32xf32>
    %277 = vector.shape_cast %276 : vector<2x16x32xf32> to vector<32x32xf32>
    %c832 = arith.constant 832 : index
    %c0_192 = arith.constant 0 : index
    %278 = vector.load %arg2[%c832, %c0_192] : memref<864x32xf32, #tpu.memory_space<vmem>>, vector<32x32xf32>
    %cst_193 = arith.constant dense<0.000000e+00> : vector<32x32xf32>
    %279 = tpu.matmul %277, %278, %cst_193 {dimension_numbers = #tpu.dot_dimension_numbers<[1], [0], [0], [1], [0, 0, 1, 1], [], []>} : vector<32x32xf32>, vector<32x32xf32>, vector<32x32xf32> -> vector<32x32xf32>
    %280 = arith.addf %275, %279 : vector<32x32xf32>
    %c12 = arith.constant 12 : index
    %c0_194 = arith.constant 0 : index
    %281 = vector.load %arg3[%c12, %c0_194] : memref<16x32xf32, #tpu.memory_space<vmem>>, vector<1x32xf32>
    %c13 = arith.constant 13 : index
    %c0_195 = arith.constant 0 : index
    %282 = vector.load %arg3[%c13, %c0_195] : memref<16x32xf32, #tpu.memory_space<vmem>>, vector<1x32xf32>
    %c14 = arith.constant 14 : index
    %c0_196 = arith.constant 0 : index
    %283 = vector.load %arg3[%c14, %c0_196] : memref<16x32xf32, #tpu.memory_space<vmem>>, vector<1x32xf32>
    %284 = vector.broadcast %281 : vector<1x32xf32> to vector<32x32xf32>
    %285 = arith.addf %280, %284 : vector<32x32xf32>
    %cst_197 = arith.constant dense<0.000000e+00> : vector<32xf32>
    %286 = vector.multi_reduction <add>, %285, %cst_197 [0] : vector<32x32xf32> to vector<32xf32>
    %287 = vector.shape_cast %286 : vector<32xf32> to vector<1x32xf32>
    %288 = arith.mulf %285, %285 : vector<32x32xf32>
    %cst_198 = arith.constant dense<0.000000e+00> : vector<32xf32>
    %289 = vector.multi_reduction <add>, %288, %cst_198 [0] : vector<32x32xf32> to vector<32xf32>
    %290 = vector.shape_cast %289 : vector<32xf32> to vector<1x32xf32>
    %cst_199 = arith.constant 3.125000e-02 : f32
    %291 = vector.broadcast %cst_199 : f32 to vector<1x32xf32>
    %292 = arith.mulf %287, %291 : vector<1x32xf32>
    %cst_200 = arith.constant 3.125000e-02 : f32
    %293 = vector.broadcast %cst_200 : f32 to vector<1x32xf32>
    %294 = arith.mulf %290, %293 : vector<1x32xf32>
    %295 = arith.mulf %292, %292 : vector<1x32xf32>
    %296 = arith.subf %294, %295 : vector<1x32xf32>
    %297 = vector.broadcast %292 : vector<1x32xf32> to vector<32x32xf32>
    %298 = arith.subf %285, %297 : vector<32x32xf32>
    %cst_201 = arith.constant 9.99999974E-6 : f32
    %299 = vector.broadcast %cst_201 : f32 to vector<1x32xf32>
    %300 = arith.addf %296, %299 : vector<1x32xf32>
    %301 = math.rsqrt %300 : vector<1x32xf32>
    %302 = vector.broadcast %301 : vector<1x32xf32> to vector<32x32xf32>
    %303 = arith.mulf %298, %302 : vector<32x32xf32>
    %304 = vector.broadcast %282 : vector<1x32xf32> to vector<32x32xf32>
    %305 = arith.mulf %303, %304 : vector<32x32xf32>
    %306 = vector.broadcast %283 : vector<1x32xf32> to vector<32x32xf32>
    %307 = arith.addf %305, %306 : vector<32x32xf32>
    %cst_202 = arith.constant 0.000000e+00 : f32
    %308 = vector.broadcast %cst_202 : f32 to vector<32x32xf32>
    %309 = arith.maximumf %307, %308 : vector<32x32xf32>
    %310 = vector.shape_cast %309 : vector<32x32xf32> to vector<1x32x32xf32>
    %311 = vector.extract_strided_slice %310 {offsets = [0, 0, 0], sizes = [1, 16, 32], strides = [1, 1, 1]} : vector<1x32x32xf32> to vector<1x16x32xf32>
    %312 = vector.extract_strided_slice %311 {offsets = [0, 0, 0], sizes = [1, 8, 32], strides = [1, 1, 1]} : vector<1x16x32xf32> to vector<1x8x32xf32>
    %313 = vector.extract_strided_slice %311 {offsets = [0, 8, 0], sizes = [1, 8, 32], strides = [1, 1, 1]} : vector<1x16x32xf32> to vector<1x8x32xf32>
    %314 = vector.extract_strided_slice %310 {offsets = [0, 16, 0], sizes = [1, 16, 32], strides = [1, 1, 1]} : vector<1x32x32xf32> to vector<1x16x32xf32>
    %315 = vector.extract_strided_slice %314 {offsets = [0, 0, 0], sizes = [1, 8, 32], strides = [1, 1, 1]} : vector<1x16x32xf32> to vector<1x8x32xf32>
    %316 = vector.extract_strided_slice %314 {offsets = [0, 8, 0], sizes = [1, 8, 32], strides = [1, 1, 1]} : vector<1x16x32xf32> to vector<1x8x32xf32>
    %317 = arith.maximumf %312, %313 : vector<1x8x32xf32>
    %318 = arith.maximumf %315, %316 : vector<1x8x32xf32>
    %319 = arith.maximumf %317, %318 : vector<1x8x32xf32>
    %320 = vector.shape_cast %319 : vector<1x8x32xf32> to vector<8x32xf32>
    %c0_203 = arith.constant 0 : index
    %c0_204 = arith.constant 0 : index
    %321 = vector.load %arg5[%c0_203, %c0_204] : memref<32x5xf32, #tpu.memory_space<vmem>>, vector<32x5xf32>
    %cst_205 = arith.constant dense<0.000000e+00> : vector<8x5xf32>
    %322 = tpu.matmul %320, %321, %cst_205 {dimension_numbers = #tpu.dot_dimension_numbers<[1], [0], [0], [1], [0, 0, 1, 1], [], []>} : vector<8x32xf32>, vector<32x5xf32>, vector<8x5xf32> -> vector<8x5xf32>
    %c0_206 = arith.constant 0 : index
    %c0_207 = arith.constant 0 : index
    %323 = vector.load %arg6[%c0_206, %c0_207] : memref<1x5xf32, #tpu.memory_space<vmem>>, vector<1x5xf32>
    %324 = vector.broadcast %323 : vector<1x5xf32> to vector<8x5xf32>
    %325 = arith.addf %322, %324 : vector<8x5xf32>
    %c0_208 = arith.constant 0 : index
    %c0_209 = arith.constant 0 : index
    %326 = vector.load %arg7[%c0_208, %c0_209] : memref<8x5xf32, #tpu.memory_space<vmem>>, vector<8x5xf32>
    tpu.vector_store %arg7[%c0_208, %c0_209], %325 {strides = array<i32>} : memref<8x5xf32, #tpu.memory_space<vmem>>, vector<8x5xf32>,
    return
  }
}

</mosaic_0001>

<llo_original>
// kernel: forward.1
$region0: #{forward.1}
  #allocation0 [shape = 'u32[]', space=smem, size = 0x4, offset = 0x4, fixed_abs, tag = 'smem constant byte address 0x4 - core index']
  #allocation1 [shape = 'u32[72,128]{1,0:T(1,128)}', space=vmem, size = 0x9000, scoped, tag = 'internal scratch']
  #allocation2 [shape = 'f32[10,80,32]{2,1,0:T(8,128)}', space=vmem, size = 0x64000, scoped, tag = 'scratch operand']
  #allocation3 [shape = 'f32[6,48,32]{2,1,0:T(8,128)}', space=vmem, size = 0x24000, scoped, tag = 'scratch operand']
  #allocation4 [shape = 'f32[4,32,32]{2,1,0:T(8,128)}', space=vmem, size = 0x10000, scoped, tag = 'scratch operand']
  %s0 = inlined_call_operand.vmem [shape: f32[2048,27], index: 0, kind: input, shape index: {}]
  %s1 = inlined_call_operand.vmem [shape: f32[27,32], index: 1, kind: input, shape index: {}]
  %s2 = inlined_call_operand.vmem [shape: f32[864,32], index: 2, kind: input, shape index: {}]
  %s3 = inlined_call_operand.vmem [shape: f32[16,32], index: 3, kind: input, shape index: {}]
  %s4 = inlined_call_operand.vmem [shape: f32[2,32], index: 4, kind: input, shape index: {}]
  %s5 = inlined_call_operand.vmem [shape: f32[32,5], index: 5, kind: input, shape index: {}]
  %s6 = inlined_call_operand.vmem [shape: f32[1,5], index: 6, kind: input, shape index: {}]
  %s7 = inlined_call_operand.hbm [shape: f32[8,5], index: 7, kind: output, shape index: {}]
  %s8 = sld [smem:[#allocation0]]
  $region38: #{forward.1} parent=0
    _
  %s10 = ssub.s32 1, %s8
  %s11 = scalar_select 0, %s10, %s8
  $region1: #{forward.1} parent=0
    #allocation5 [shape = 'u8[4096]{0}', space=vmem, size = 0x1000, scoped, tag = 'output window, operand 0, single buffered']
    #allocation6 [shape = 's32[1]{0}', space=sflag, size = 0x4, scoped, tag = 'scoped memory for forward.1']
    %12 = vsyncpa [#allocation6], 0
    // Predicated region
    $region2: #{forward.1} parent=1 // pred_check
      _
    $region3: #{forward.1} parent=1 // pred_check_branch
      %14 = sbr.rel (0) target = $region5
    $region4: #{forward.1} parent=1 // pred_region
      _
    $region5: #{forward.1} parent=1 // pred_fallthru
      _
    // Predicated region
    $region6: #{forward.1} parent=1 // pred_check
      _
    $region7: #{forward.1} parent=1 // pred_check_branch
      %16 = sbr.rel (0) target = $region9
    $region8: #{forward.1} parent=1 // pred_region
      _
    $region9: #{forward.1} parent=1 // pred_fallthru
      _
    // Predicated region
    $region10: #{forward.1} parent=1 // pred_check
      _
    $region11: #{forward.1} parent=1 // pred_check_branch
      %18 = sbr.rel (0) target = $region13
    $region12: #{forward.1} parent=1 // pred_region
      _
    $region13: #{forward.1} parent=1 // pred_fallthru
      _
    // Predicated region
    $region14: #{forward.1} parent=1 // pred_check
      _
    $region15: #{forward.1} parent=1 // pred_check_branch
      %20 = sbr.rel (0) target = $region17
    $region16: #{forward.1} parent=1 // pred_region
      _
    $region17: #{forward.1} parent=1 // pred_fallthru
      _
    // Predicated region
    $region18: #{forward.1} parent=1 // pred_check
      _
    $region19: #{forward.1} parent=1 // pred_check_branch
      %22 = sbr.rel (0) target = $region21
    $region20: #{forward.1} parent=1 // pred_region
      _
    $region21: #{forward.1} parent=1 // pred_fallthru
      _
    // Predicated region
    $region22: #{forward.1} parent=1 // pred_check
      _
    $region23: #{forward.1} parent=1 // pred_check_branch
      %24 = sbr.rel (0) target = $region25
    $region24: #{forward.1} parent=1 // pred_region
      _
    $region25: #{forward.1} parent=1 // pred_fallthru
      _
    // Predicated region
    $region26: #{forward.1} parent=1 // pred_check
      _
    $region27: #{forward.1} parent=1 // pred_check_branch
      %26 = sbr.rel (0) target = $region29
    $region28: #{forward.1} parent=1 // pred_region
      _
    $region29: #{forward.1} parent=1 // pred_fallthru
      _
    %vm27 = vcmask 261120
    %28 = vst.msk [vmem:[#allocation2] sm:$0xff] %vm27, 0.0
    %29 = vst.msk [vmem:[#allocation2 + $0x8] sm:$0xff] %vm27, 0.0
    %30 = vst.msk [vmem:[#allocation2 + $0x10] sm:$0xff] %vm27, 0.0
    %31 = vst.msk [vmem:[#allocation2 + $0x18] sm:$0xff] %vm27, 0.0
    %32 = vst.msk [vmem:[#allocation2 + $0x20] sm:$0xff] %vm27, 0.0
    %33 = vst.msk [vmem:[#allocation2 + $0x28] sm:$0xff] %vm27, 0.0
    %34 = vst.msk [vmem:[#allocation2 + $0x30] sm:$0xff] %vm27, 0.0
    %35 = vst.msk [vmem:[#allocation2 + $0x38] sm:$0xff] %vm27, 0.0
    %36 = vst.msk [vmem:[#allocation2 + $0x40] sm:$0xff] %vm27, 0.0
    %37 = vst.msk [vmem:[#allocation2 + $0x48] sm:$0xff] %vm27, 0.0
    %38 = vst.msk [vmem:[#allocation2 + $0x50] sm:$0xff] %vm27, 0.0
    %39 = vst.msk [vmem:[#allocation2 + $0x58] sm:$0xff] %vm27, 0.0
    %40 = vst.msk [vmem:[#allocation2 + $0x60] sm:$0xff] %vm27, 0.0
    %41 = vst.msk [vmem:[#allocation2 + $0x68] sm:$0xff] %vm27, 0.0
    %42 = vst.msk [vmem:[#allocation2 + $0x70] sm:$0xff] %vm27, 0.0
    %43 = vst.msk [vmem:[#allocation2 + $0x78] sm:$0xff] %vm27, 0.0
    %44 = vst.msk [vmem:[#allocation2 + $0x80] sm:$0xff] %vm27, 0.0
    %45 = vst.msk [vmem:[#allocation2 + $0x88] sm:$0xff] %vm27, 0.0
    %46 = vst.msk [vmem:[#allocation2 + $0x90] sm:$0xff] %vm27, 0.0
    %47 = vst.msk [vmem:[#allocation2 + $0x98] sm:$0xff] %vm27, 0.0
    %48 = vst.msk [vmem:[#allocation2 + $0xa0] sm:$0xff] %vm27, 0.0
    %49 = vst.msk [vmem:[#allocation2 + $0xa8] sm:$0xff] %vm27, 0.0
    %50 = vst.msk [vmem:[#allocation2 + $0xb0] sm:$0xff] %vm27, 0.0
    %51 = vst.msk [vmem:[#allocation2 + $0xb8] sm:$0xff] %vm27, 0.0
    %52 = vst.msk [vmem:[#allocation2 + $0xc0] sm:$0xff] %vm27, 0.0
    %53 = vst.msk [vmem:[#allocation2 + $0xc8] sm:$0xff] %vm27, 0.0
    %54 = vst.msk [vmem:[#allocation2 + $0xd0] sm:$0xff] %vm27, 0.0
    %55 = vst.msk [vmem:[#allocation2 + $0xd8] sm:$0xff] %vm27, 0.0
    %56 = vst.msk [vmem:[#allocation2 + $0xe0] sm:$0xff] %vm27, 0.0
    %57 = vst.msk [vmem:[#allocation2 + $0xe8] sm:$0xff] %vm27, 0.0
    %58 = vst.msk [vmem:[#allocation2 + $0xf0] sm:$0xff] %vm27, 0.0
    %59 = vst.msk [vmem:[#allocation2 + $0xf8] sm:$0xff] %vm27, 0.0
    %60 = vst.msk [vmem:[#allocation2 + $0x100] sm:$0xff] %vm27, 0.0
    %61 = vst.msk [vmem:[#allocation2 + $0x108] sm:$0xff] %vm27, 0.0
    %62 = vst.msk [vmem:[#allocation2 + $0x110] sm:$0xff] %vm27, 0.0
    %63 = vst.msk [vmem:[#allocation2 + $0x118] sm:$0xff] %vm27, 0.0
    %64 = vst.msk [vmem:[#allocation2 + $0x120] sm:$0xff] %vm27, 0.0
    %65 = vst.msk [vmem:[#allocation2 + $0x128] sm:$0xff] %vm27, 0.0
    %66 = vst.msk [vmem:[#allocation2 + $0x130] sm:$0xff] %vm27, 0.0
    %67 = vst.msk [vmem:[#allocation2 + $0x138] sm:$0xff] %vm27, 0.0
    %68 = vst.msk [vmem:[#allocation2 + $0x140] sm:$0xff] %vm27, 0.0
    %69 = vst.msk [vmem:[#allocation2 + $0x148] sm:$0xff] %vm27, 0.0
    %70 = vst.msk [vmem:[#allocation2 + $0x150] sm:$0xff] %vm27, 0.0
    %71 = vst.msk [vmem:[#allocation2 + $0x158] sm:$0xff] %vm27, 0.0
    %72 = vst.msk [vmem:[#allocation2 + $0x160] sm:$0xff] %vm27, 0.0
    %73 = vst.msk [vmem:[#allocation2 + $0x168] sm:$0xff] %vm27, 0.0
    %74 = vst.msk [vmem:[#allocation2 + $0x170] sm:$0xff] %vm27, 0.0
    %75 = vst.msk [vmem:[#allocation2 + $0x178] sm:$0xff] %vm27, 0.0
    %76 = vst.msk [vmem:[#allocation2 + $0x180] sm:$0xff] %vm27, 0.0
    %77 = vst.msk [vmem:[#allocation2 + $0x188] sm:$0xff] %vm27, 0.0
    %78 = vst.msk [vmem:[#allocation2 + $0x190] sm:$0xff] %vm27, 0.0
    %79 = vst.msk [vmem:[#allocation2 + $0x198] sm:$0xff] %vm27, 0.0
    %80 = vst.msk [vmem:[#allocation2 + $0x1a0] sm:$0xff] %vm27, 0.0
    %81 = vst.msk [vmem:[#allocation2 + $0x1a8] sm:$0xff] %vm27, 0.0
    %82 = vst.msk [vmem:[#allocation2 + $0x1b0] sm:$0xff] %vm27, 0.0
    %83 = vst.msk [vmem:[#allocation2 + $0x1b8] sm:$0xff] %vm27, 0.0
    %84 = vst.msk [vmem:[#allocation2 + $0x1c0] sm:$0xff] %vm27, 0.0
    %85 = vst.msk [vmem:[#allocation2 + $0x1c8] sm:$0xff] %vm27, 0.0
    %86 = vst.msk [vmem:[#allocation2 + $0x1d0] sm:$0xff] %vm27, 0.0
    %87 = vst.msk [vmem:[#allocation2 + $0x1d8] sm:$0xff] %vm27, 0.0
    %88 = vst.msk [vmem:[#allocation2 + $0x1e0] sm:$0xff] %vm27, 0.0
    %89 = vst.msk [vmem:[#allocation2 + $0x1e8] sm:$0xff] %vm27, 0.0
    %90 = vst.msk [vmem:[#allocation2 + $0x1f0] sm:$0xff] %vm27, 0.0
    %91 = vst.msk [vmem:[#allocation2 + $0x1f8] sm:$0xff] %vm27, 0.0
    %92 = vst.msk [vmem:[#allocation2 + $0x200] sm:$0xff] %vm27, 0.0
    %93 = vst.msk [vmem:[#allocation2 + $0x208] sm:$0xff] %vm27, 0.0
    %94 = vst.msk [vmem:[#allocation2 + $0x210] sm:$0xff] %vm27, 0.0
    %95 = vst.msk [vmem:[#allocation2 + $0x218] sm:$0xff] %vm27, 0.0
    %96 = vst.msk [vmem:[#allocation2 + $0x220] sm:$0xff] %vm27, 0.0
    %97 = vst.msk [vmem:[#allocation2 + $0x228] sm:$0xff] %vm27, 0.0
    %98 = vst.msk [vmem:[#allocation2 + $0x230] sm:$0xff] %vm27, 0.0
    %99 = vst.msk [vmem:[#allocation2 + $0x238] sm:$0xff] %vm27, 0.0
    %100 = vst.msk [vmem:[#allocation2 + $0x240] sm:$0xff] %vm27, 0.0
    %101 = vst.msk [vmem:[#allocation2 + $0x248] sm:$0xff] %vm27, 0.0
    %102 = vst.msk [vmem:[#allocation2 + $0x250] sm:$0xff] %vm27, 0.0
    %103 = vst.msk [vmem:[#allocation2 + $0x258] sm:$0xff] %vm27, 0.0
    %104 = vst.msk [vmem:[#allocation2 + $0x260] sm:$0xff] %vm27, 0.0
    %105 = vst.msk [vmem:[#allocation2 + $0x268] sm:$0xff] %vm27, 0.0
    %106 = vst.msk [vmem:[#allocation2 + $0x270] sm:$0xff] %vm27, 0.0
    %107 = vst.msk [vmem:[#allocation2 + $0x278] sm:$0xff] %vm27, 0.0
    %108 = vst.msk [vmem:[#allocation2 + $0x280] sm:$0xff] %vm27, 0.0
    %109 = vst.msk [vmem:[#allocation2 + $0x288] sm:$0xff] %vm27, 0.0
    %110 = vst.msk [vmem:[#allocation2 + $0x290] sm:$0xff] %vm27, 0.0
    %111 = vst.msk [vmem:[#allocation2 + $0x298] sm:$0xff] %vm27, 0.0
    %112 = vst.msk [vmem:[#allocation2 + $0x2a0] sm:$0xff] %vm27, 0.0
    %113 = vst.msk [vmem:[#allocation2 + $0x2a8] sm:$0xff] %vm27, 0.0
    %114 = vst.msk [vmem:[#allocation2 + $0x2b0] sm:$0xff] %vm27, 0.0
    %115 = vst.msk [vmem:[#allocation2 + $0x2b8] sm:$0xff] %vm27, 0.0
    %116 = vst.msk [vmem:[#allocation2 + $0x2c0] sm:$0xff] %vm27, 0.0
    %117 = vst.msk [vmem:[#allocation2 + $0x2c8] sm:$0xff] %vm27, 0.0
    %118 = vst.msk [vmem:[#allocation2 + $0x2d0] sm:$0xff] %vm27, 0.0
    %119 = vst.msk [vmem:[#allocation2 + $0x2d8] sm:$0xff] %vm27, 0.0
    %120 = vst.msk [vmem:[#allocation2 + $0x2e0] sm:$0xff] %vm27, 0.0
    %121 = vst.msk [vmem:[#allocation2 + $0x2e8] sm:$0xff] %vm27, 0.0
    %122 = vst.msk [vmem:[#allocation2 + $0x2f0] sm:$0xff] %vm27, 0.0
    %123 = vst.msk [vmem:[#allocation2 + $0x2f8] sm:$0xff] %vm27, 0.0
    %124 = vst.msk [vmem:[#allocation2 + $0x300] sm:$0xff] %vm27, 0.0
    %125 = vst.msk [vmem:[#allocation2 + $0x308] sm:$0xff] %vm27, 0.0
    %126 = vst.msk [vmem:[#allocation2 + $0x310] sm:$0xff] %vm27, 0.0
    %127 = vst.msk [vmem:[#allocation2 + $0x318] sm:$0xff] %vm27, 0.0
    %128 = vst.msk [vmem:[#allocation3] sm:$0xff] %vm27, 0.0
    %129 = vst.msk [vmem:[#allocation3 + $0x8] sm:$0xff] %vm27, 0.0
    %130 = vst.msk [vmem:[#allocation3 + $0x10] sm:$0xff] %vm27, 0.0
    %131 = vst.msk [vmem:[#allocation3 + $0x18] sm:$0xff] %vm27, 0.0
    %132 = vst.msk [vmem:[#allocation3 + $0x20] sm:$0xff] %vm27, 0.0
    %133 = vst.msk [vmem:[#allocation3 + $0x28] sm:$0xff] %vm27, 0.0
    %134 = vst.msk [vmem:[#allocation3 + $0x30] sm:$0xff] %vm27, 0.0
    %135 = vst.msk [vmem:[#allocation3 + $0x38] sm:$0xff] %vm27, 0.0
    %136 = vst.msk [vmem:[#allocation3 + $0x40] sm:$0xff] %vm27, 0.0
    %137 = vst.msk [vmem:[#allocation3 + $0x48] sm:$0xff] %vm27, 0.0
    %138 = vst.msk [vmem:[#allocation3 + $0x50] sm:$0xff] %vm27, 0.0
    %139 = vst.msk [vmem:[#allocation3 + $0x58] sm:$0xff] %vm27, 0.0
    %140 = vst.msk [vmem:[#allocation3 + $0x60] sm:$0xff] %vm27, 0.0
    %141 = vst.msk [vmem:[#allocation3 + $0x68] sm:$0xff] %vm27, 0.0
    %142 = vst.msk [vmem:[#allocation3 + $0x70] sm:$0xff] %vm27, 0.0
    %143 = vst.msk [vmem:[#allocation3 + $0x78] sm:$0xff] %vm27, 0.0
    %144 = vst.msk [vmem:[#allocation3 + $0x80] sm:$0xff] %vm27, 0.0
    %145 = vst.msk [vmem:[#allocation3 + $0x88] sm:$0xff] %vm27, 0.0
    %146 = vst.msk [vmem:[#allocation3 + $0x90] sm:$0xff] %vm27, 0.0
    %147 = vst.msk [vmem:[#allocation3 + $0x98] sm:$0xff] %vm27, 0.0
    %148 = vst.msk [vmem:[#allocation3 + $0xa0] sm:$0xff] %vm27, 0.0
    %149 = vst.msk [vmem:[#allocation3 + $0xa8] sm:$0xff] %vm27, 0.0
    %150 = vst.msk [vmem:[#allocation3 + $0xb0] sm:$0xff] %vm27, 0.0
    %151 = vst.msk [vmem:[#allocation3 + $0xb8] sm:$0xff] %vm27, 0.0
    %152 = vst.msk [vmem:[#allocation3 + $0xc0] sm:$0xff] %vm27, 0.0
    %153 = vst.msk [vmem:[#allocation3 + $0xc8] sm:$0xff] %vm27, 0.0
    %154 = vst.msk [vmem:[#allocation3 + $0xd0] sm:$0xff] %vm27, 0.0
    %155 = vst.msk [vmem:[#allocation3 + $0xd8] sm:$0xff] %vm27, 0.0
    %156 = vst.msk [vmem:[#allocation3 + $0xe0] sm:$0xff] %vm27, 0.0
    %157 = vst.msk [vmem:[#allocation3 + $0xe8] sm:$0xff] %vm27, 0.0
    %158 = vst.msk [vmem:[#allocation3 + $0xf0] sm:$0xff] %vm27, 0.0
    %159 = vst.msk [vmem:[#allocation3 + $0xf8] sm:$0xff] %vm27, 0.0
    %160 = vst.msk [vmem:[#allocation3 + $0x100] sm:$0xff] %vm27, 0.0
    %161 = vst.msk [vmem:[#allocation3 + $0x108] sm:$0xff] %vm27, 0.0
    %162 = vst.msk [vmem:[#allocation3 + $0x110] sm:$0xff] %vm27, 0.0
    %163 = vst.msk [vmem:[#allocation3 + $0x118] sm:$0xff] %vm27, 0.0
    %164 = vst.msk [vmem:[#allocation4] sm:$0xff] %vm27, 0.0
    %165 = vst.msk [vmem:[#allocation4 + $0x8] sm:$0xff] %vm27, 0.0
    %166 = vst.msk [vmem:[#allocation4 + $0x10] sm:$0xff] %vm27, 0.0
    %167 = vst.msk [vmem:[#allocation4 + $0x18] sm:$0xff] %vm27, 0.0
    %168 = vst.msk [vmem:[#allocation4 + $0x20] sm:$0xff] %vm27, 0.0
    %169 = vst.msk [vmem:[#allocation4 + $0x28] sm:$0xff] %vm27, 0.0
    %170 = vst.msk [vmem:[#allocation4 + $0x30] sm:$0xff] %vm27, 0.0
    %171 = vst.msk [vmem:[#allocation4 + $0x38] sm:$0xff] %vm27, 0.0
    %172 = vst.msk [vmem:[#allocation4 + $0x40] sm:$0xff] %vm27, 0.0
    %173 = vst.msk [vmem:[#allocation4 + $0x48] sm:$0xff] %vm27, 0.0
    %174 = vst.msk [vmem:[#allocation4 + $0x50] sm:$0xff] %vm27, 0.0
    %175 = vst.msk [vmem:[#allocation4 + $0x58] sm:$0xff] %vm27, 0.0
    %176 = vst.msk [vmem:[#allocation4 + $0x60] sm:$0xff] %vm27, 0.0
    %177 = vst.msk [vmem:[#allocation4 + $0x68] sm:$0xff] %vm27, 0.0
    %178 = vst.msk [vmem:[#allocation4 + $0x70] sm:$0xff] %vm27, 0.0
    %179 = vst.msk [vmem:[#allocation4 + $0x78] sm:$0xff] %vm27, 0.0
    %v180 = vld [vmem:[%s0] sm:$0xff]
    %v181 = vld [vmem:[%s0 + $0x8] sm:$0xff]
    %v182 = vld [vmem:[%s0 + $0x10] sm:$0xff]
    %v183 = vld [vmem:[%s0 + $0x18] sm:$0xff]
    %v184 = vld [vmem:[%s0 + $0x20] sm:$0xff]
    %v185 = vld [vmem:[%s0 + $0x28] sm:$0xff]
    %v186 = vld [vmem:[%s0 + $0x30] sm:$0xff]
    %v187 = vld [vmem:[%s0 + $0x38] sm:$0xff]
    %v188 = vld [vmem:[%s0 + $0x40] sm:$0xff]
    %v189 = vld [vmem:[%s0 + $0x48] sm:$0xff]
    %v190 = vld [vmem:[%s0 + $0x50] sm:$0xff]
    %v191 = vld [vmem:[%s0 + $0x58] sm:$0xff]
    %v192 = vld [vmem:[%s0 + $0x60] sm:$0xff]
    %v193 = vld [vmem:[%s0 + $0x68] sm:$0xff]
    %v194 = vld [vmem:[%s0 + $0x70] sm:$0xff]
    %v195 = vld [vmem:[%s0 + $0x78] sm:$0xff]
    %v196 = vld [vmem:[%s0 + $0x80] sm:$0xff]
    %v197 = vld [vmem:[%s0 + $0x88] sm:$0xff]
    %v198 = vld [vmem:[%s0 + $0x90] sm:$0xff]
    %v199 = vld [vmem:[%s0 + $0x98] sm:$0xff]
    %v200 = vld [vmem:[%s0 + $0xa0] sm:$0xff]
    %v201 = vld [vmem:[%s0 + $0xa8] sm:$0xff]
    %v202 = vld [vmem:[%s0 + $0xb0] sm:$0xff]
    %v203 = vld [vmem:[%s0 + $0xb8] sm:$0xff]
    %v204 = vld [vmem:[%s0 + $0xc0] sm:$0xff]
    %v205 = vld [vmem:[%s0 + $0xc8] sm:$0xff]
    %v206 = vld [vmem:[%s0 + $0xd0] sm:$0xff]
    %v207 = vld [vmem:[%s0 + $0xd8] sm:$0xff]
    %v208 = vld [vmem:[%s0 + $0xe0] sm:$0xff]
    %v209 = vld [vmem:[%s0 + $0xe8] sm:$0xff]
    %v210 = vld [vmem:[%s0 + $0xf0] sm:$0xff]
    %v211 = vld [vmem:[%s0 + $0xf8] sm:$0xff]
    %v212 = vld [vmem:[%s0 + $0x100] sm:$0xff]
    %v213 = vld [vmem:[%s0 + $0x108] sm:$0xff]
    %v214 = vld [vmem:[%s0 + $0x110] sm:$0xff]
    %v215 = vld [vmem:[%s0 + $0x118] sm:$0xff]
    %v216 = vld [vmem:[%s0 + $0x120] sm:$0xff]
    %v217 = vld [vmem:[%s0 + $0x128] sm:$0xff]
    %v218 = vld [vmem:[%s0 + $0x130] sm:$0xff]
    %v219 = vld [vmem:[%s0 + $0x138] sm:$0xff]
    %v220 = vld [vmem:[%s0 + $0x140] sm:$0xff]
    %v221 = vld [vmem:[%s0 + $0x148] sm:$0xff]
    %v222 = vld [vmem:[%s0 + $0x150] sm:$0xff]
    %v223 = vld [vmem:[%s0 + $0x158] sm:$0xff]
    %v224 = vld [vmem:[%s0 + $0x160] sm:$0xff]
    %v225 = vld [vmem:[%s0 + $0x168] sm:$0xff]
    %v226 = vld [vmem:[%s0 + $0x170] sm:$0xff]
    %v227 = vld [vmem:[%s0 + $0x178] sm:$0xff]
    %v228 = vld [vmem:[%s0 + $0x180] sm:$0xff]
    %v229 = vld [vmem:[%s0 + $0x188] sm:$0xff]
    %v230 = vld [vmem:[%s0 + $0x190] sm:$0xff]
    %v231 = vld [vmem:[%s0 + $0x198] sm:$0xff]
    %v232 = vld [vmem:[%s0 + $0x1a0] sm:$0xff]
    %v233 = vld [vmem:[%s0 + $0x1a8] sm:$0xff]
    %v234 = vld [vmem:[%s0 + $0x1b0] sm:$0xff]
    %v235 = vld [vmem:[%s0 + $0x1b8] sm:$0xff]
    %v236 = vld [vmem:[%s0 + $0x1c0] sm:$0xff]
    %v237 = vld [vmem:[%s0 + $0x1c8] sm:$0xff]
    %v238 = vld [vmem:[%s0 + $0x1d0] sm:$0xff]
    %v239 = vld [vmem:[%s0 + $0x1d8] sm:$0xff]
    %v240 = vld [vmem:[%s0 + $0x1e0] sm:$0xff]
    %v241 = vld [vmem:[%s0 + $0x1e8] sm:$0xff]
    %v242 = vld [vmem:[%s0 + $0x1f0] sm:$0xff]
    %v243 = vld [vmem:[%s0 + $0x1f8] sm:$0xff]
    %v244 = vld [vmem:[%s0 + $0x200] sm:$0xff]
    %v245 = vld [vmem:[%s0 + $0x208] sm:$0xff]
    %v246 = vld [vmem:[%s0 + $0x210] sm:$0xff]
    %v247 = vld [vmem:[%s0 + $0x218] sm:$0xff]
    %v248 = vld [vmem:[%s0 + $0x220] sm:$0xff]
    %v249 = vld [vmem:[%s0 + $0x228] sm:$0xff]
    %v250 = vld [vmem:[%s0 + $0x230] sm:$0xff]
    %v251 = vld [vmem:[%s0 + $0x238] sm:$0xff]
    %v252 = vld [vmem:[%s0 + $0x240] sm:$0xff]
    %v253 = vld [vmem:[%s0 + $0x248] sm:$0xff]
    %v254 = vld [vmem:[%s0 + $0x250] sm:$0xff]
    %v255 = vld [vmem:[%s0 + $0x258] sm:$0xff]
    %v256 = vld [vmem:[%s0 + $0x260] sm:$0xff]
    %v257 = vld [vmem:[%s0 + $0x268] sm:$0xff]
    %v258 = vld [vmem:[%s0 + $0x270] sm:$0xff]
    %v259 = vld [vmem:[%s0 + $0x278] sm:$0xff]
    %v260 = vld [vmem:[%s0 + $0x280] sm:$0xff]
    %v261 = vld [vmem:[%s0 + $0x288] sm:$0xff]
    %v262 = vld [vmem:[%s0 + $0x290] sm:$0xff]
    %v263 = vld [vmem:[%s0 + $0x298] sm:$0xff]
    %v264 = vld [vmem:[%s0 + $0x2a0] sm:$0xff]
    %v265 = vld [vmem:[%s0 + $0x2a8] sm:$0xff]
    %v266 = vld [vmem:[%s0 + $0x2b0] sm:$0xff]
    %v267 = vld [vmem:[%s0 + $0x2b8] sm:$0xff]
    %v268 = vld [vmem:[%s0 + $0x2c0] sm:$0xff]
    %v269 = vld [vmem:[%s0 + $0x2c8] sm:$0xff]
    %v270 = vld [vmem:[%s0 + $0x2d0] sm:$0xff]
    %v271 = vld [vmem:[%s0 + $0x2d8] sm:$0xff]
    %v272 = vld [vmem:[%s0 + $0x2e0] sm:$0xff]
    %v273 = vld [vmem:[%s0 + $0x2e8] sm:$0xff]
    %v274 = vld [vmem:[%s0 + $0x2f0] sm:$0xff]
    %v275 = vld [vmem:[%s0 + $0x2f8] sm:$0xff]
    %v276 = vld [vmem:[%s0 + $0x300] sm:$0xff]
    %v277 = vld [vmem:[%s0 + $0x308] sm:$0xff]
    %v278 = vld [vmem:[%s0 + $0x310] sm:$0xff]
    %v279 = vld [vmem:[%s0 + $0x318] sm:$0xff]
    %v280 = vld [vmem:[%s0 + $0x320] sm:$0xff]
    %v281 = vld [vmem:[%s0 + $0x328] sm:$0xff]
    %v282 = vld [vmem:[%s0 + $0x330] sm:$0xff]
    %v283 = vld [vmem:[%s0 + $0x338] sm:$0xff]
    %v284 = vld [vmem:[%s0 + $0x340] sm:$0xff]
    %v285 = vld [vmem:[%s0 + $0x348] sm:$0xff]
    %v286 = vld [vmem:[%s0 + $0x350] sm:$0xff]
    %v287 = vld [vmem:[%s0 + $0x358] sm:$0xff]
    %v288 = vld [vmem:[%s0 + $0x360] sm:$0xff]
    %v289 = vld [vmem:[%s0 + $0x368] sm:$0xff]
    %v290 = vld [vmem:[%s0 + $0x370] sm:$0xff]
    %v291 = vld [vmem:[%s0 + $0x378] sm:$0xff]
    %v292 = vld [vmem:[%s0 + $0x380] sm:$0xff]
    %v293 = vld [vmem:[%s0 + $0x388] sm:$0xff]
    %v294 = vld [vmem:[%s0 + $0x390] sm:$0xff]
    %v295 = vld [vmem:[%s0 + $0x398] sm:$0xff]
    %v296 = vld [vmem:[%s0 + $0x3a0] sm:$0xff]
    %v297 = vld [vmem:[%s0 + $0x3a8] sm:$0xff]
    %v298 = vld [vmem:[%s0 + $0x3b0] sm:$0xff]
    %v299 = vld [vmem:[%s0 + $0x3b8] sm:$0xff]
    %v300 = vld [vmem:[%s0 + $0x3c0] sm:$0xff]
    %v301 = vld [vmem:[%s0 + $0x3c8] sm:$0xff]
    %v302 = vld [vmem:[%s0 + $0x3d0] sm:$0xff]
    %v303 = vld [vmem:[%s0 + $0x3d8] sm:$0xff]
    %v304 = vld [vmem:[%s0 + $0x3e0] sm:$0xff]
    %v305 = vld [vmem:[%s0 + $0x3e8] sm:$0xff]
    %v306 = vld [vmem:[%s0 + $0x3f0] sm:$0xff]
    %v307 = vld [vmem:[%s0 + $0x3f8] sm:$0xff]
    %v308 = vld [vmem:[%s0 + $0x400] sm:$0xff]
    %v309 = vld [vmem:[%s0 + $0x408] sm:$0xff]
    %v310 = vld [vmem:[%s0 + $0x410] sm:$0xff]
    %v311 = vld [vmem:[%s0 + $0x418] sm:$0xff]
    %v312 = vld [vmem:[%s0 + $0x420] sm:$0xff]
    %v313 = vld [vmem:[%s0 + $0x428] sm:$0xff]
    %v314 = vld [vmem:[%s0 + $0x430] sm:$0xff]
    %v315 = vld [vmem:[%s0 + $0x438] sm:$0xff]
    %v316 = vld [vmem:[%s0 + $0x440] sm:$0xff]
    %v317 = vld [vmem:[%s0 + $0x448] sm:$0xff]
    %v318 = vld [vmem:[%s0 + $0x450] sm:$0xff]
    %v319 = vld [vmem:[%s0 + $0x458] sm:$0xff]
    %v320 = vld [vmem:[%s0 + $0x460] sm:$0xff]
    %v321 = vld [vmem:[%s0 + $0x468] sm:$0xff]
    %v322 = vld [vmem:[%s0 + $0x470] sm:$0xff]
    %v323 = vld [vmem:[%s0 + $0x478] sm:$0xff]
    %v324 = vld [vmem:[%s0 + $0x480] sm:$0xff]
    %v325 = vld [vmem:[%s0 + $0x488] sm:$0xff]
    %v326 = vld [vmem:[%s0 + $0x490] sm:$0xff]
    %v327 = vld [vmem:[%s0 + $0x498] sm:$0xff]
    %v328 = vld [vmem:[%s0 + $0x4a0] sm:$0xff]
    %v329 = vld [vmem:[%s0 + $0x4a8] sm:$0xff]
    %v330 = vld [vmem:[%s0 + $0x4b0] sm:$0xff]
    %v331 = vld [vmem:[%s0 + $0x4b8] sm:$0xff]
    %v332 = vld [vmem:[%s0 + $0x4c0] sm:$0xff]
    %v333 = vld [vmem:[%s0 + $0x4c8] sm:$0xff]
    %v334 = vld [vmem:[%s0 + $0x4d0] sm:$0xff]
    %v335 = vld [vmem:[%s0 + $0x4d8] sm:$0xff]
    %v336 = vld [vmem:[%s0 + $0x4e0] sm:$0xff]
    %v337 = vld [vmem:[%s0 + $0x4e8] sm:$0xff]
    %v338 = vld [vmem:[%s0 + $0x4f0] sm:$0xff]
    %v339 = vld [vmem:[%s0 + $0x4f8] sm:$0xff]
    %v340 = vld [vmem:[%s0 + $0x500] sm:$0xff]
    %v341 = vld [vmem:[%s0 + $0x508] sm:$0xff]
    %v342 = vld [vmem:[%s0 + $0x510] sm:$0xff]
    %v343 = vld [vmem:[%s0 + $0x518] sm:$0xff]
    %v344 = vld [vmem:[%s0 + $0x520] sm:$0xff]
    %v345 = vld [vmem:[%s0 + $0x528] sm:$0xff]
    %v346 = vld [vmem:[%s0 + $0x530] sm:$0xff]
    %v347 = vld [vmem:[%s0 + $0x538] sm:$0xff]
    %v348 = vld [vmem:[%s0 + $0x540] sm:$0xff]
    %v349 = vld [vmem:[%s0 + $0x548] sm:$0xff]
    %v350 = vld [vmem:[%s0 + $0x550] sm:$0xff]
    %v351 = vld [vmem:[%s0 + $0x558] sm:$0xff]
    %v352 = vld [vmem:[%s0 + $0x560] sm:$0xff]
    %v353 = vld [vmem:[%s0 + $0x568] sm:$0xff]
    %v354 = vld [vmem:[%s0 + $0x570] sm:$0xff]
    %v355 = vld [vmem:[%s0 + $0x578] sm:$0xff]
    %v356 = vld [vmem:[%s0 + $0x580] sm:$0xff]
    %v357 = vld [vmem:[%s0 + $0x588] sm:$0xff]
    %v358 = vld [vmem:[%s0 + $0x590] sm:$0xff]
    %v359 = vld [vmem:[%s0 + $0x598] sm:$0xff]
    %v360 = vld [vmem:[%s0 + $0x5a0] sm:$0xff]
    %v361 = vld [vmem:[%s0 + $0x5a8] sm:$0xff]
    %v362 = vld [vmem:[%s0 + $0x5b0] sm:$0xff]
    %v363 = vld [vmem:[%s0 + $0x5b8] sm:$0xff]
    %v364 = vld [vmem:[%s0 + $0x5c0] sm:$0xff]
    %v365 = vld [vmem:[%s0 + $0x5c8] sm:$0xff]
    %v366 = vld [vmem:[%s0 + $0x5d0] sm:$0xff]
    %v367 = vld [vmem:[%s0 + $0x5d8] sm:$0xff]
    %v368 = vld [vmem:[%s0 + $0x5e0] sm:$0xff]
    %v369 = vld [vmem:[%s0 + $0x5e8] sm:$0xff]
    %v370 = vld [vmem:[%s0 + $0x5f0] sm:$0xff]
    %v371 = vld [vmem:[%s0 + $0x5f8] sm:$0xff]
    %v372 = vld [vmem:[%s0 + $0x600] sm:$0xff]
    %v373 = vld [vmem:[%s0 + $0x608] sm:$0xff]
    %v374 = vld [vmem:[%s0 + $0x610] sm:$0xff]
    %v375 = vld [vmem:[%s0 + $0x618] sm:$0xff]
    %v376 = vld [vmem:[%s0 + $0x620] sm:$0xff]
    %v377 = vld [vmem:[%s0 + $0x628] sm:$0xff]
    %v378 = vld [vmem:[%s0 + $0x630] sm:$0xff]
    %v379 = vld [vmem:[%s0 + $0x638] sm:$0xff]
    %v380 = vld [vmem:[%s0 + $0x640] sm:$0xff]
    %v381 = vld [vmem:[%s0 + $0x648] sm:$0xff]
    %v382 = vld [vmem:[%s0 + $0x650] sm:$0xff]
    %v383 = vld [vmem:[%s0 + $0x658] sm:$0xff]
    %v384 = vld [vmem:[%s0 + $0x660] sm:$0xff]
    %v385 = vld [vmem:[%s0 + $0x668] sm:$0xff]
    %v386 = vld [vmem:[%s0 + $0x670] sm:$0xff]
    %v387 = vld [vmem:[%s0 + $0x678] sm:$0xff]
    %v388 = vld [vmem:[%s0 + $0x680] sm:$0xff]
    %v389 = vld [vmem:[%s0 + $0x688] sm:$0xff]
    %v390 = vld [vmem:[%s0 + $0x690] sm:$0xff]
    %v391 = vld [vmem:[%s0 + $0x698] sm:$0xff]
    %v392 = vld [vmem:[%s0 + $0x6a0] sm:$0xff]
    %v393 = vld [vmem:[%s0 + $0x6a8] sm:$0xff]
    %v394 = vld [vmem:[%s0 + $0x6b0] sm:$0xff]
    %v395 = vld [vmem:[%s0 + $0x6b8] sm:$0xff]
    %v396 = vld [vmem:[%s0 + $0x6c0] sm:$0xff]
    %v397 = vld [vmem:[%s0 + $0x6c8] sm:$0xff]
    %v398 = vld [vmem:[%s0 + $0x6d0] sm:$0xff]
    %v399 = vld [vmem:[%s0 + $0x6d8] sm:$0xff]
    %v400 = vld [vmem:[%s0 + $0x6e0] sm:$0xff]
    %v401 = vld [vmem:[%s0 + $0x6e8] sm:$0xff]
    %v402 = vld [vmem:[%s0 + $0x6f0] sm:$0xff]
    %v403 = vld [vmem:[%s0 + $0x6f8] sm:$0xff]
    %v404 = vld [vmem:[%s0 + $0x700] sm:$0xff]
    %v405 = vld [vmem:[%s0 + $0x708] sm:$0xff]
    %v406 = vld [vmem:[%s0 + $0x710] sm:$0xff]
    %v407 = vld [vmem:[%s0 + $0x718] sm:$0xff]
    %v408 = vld [vmem:[%s0 + $0x720] sm:$0xff]
    %v409 = vld [vmem:[%s0 + $0x728] sm:$0xff]
    %v410 = vld [vmem:[%s0 + $0x730] sm:$0xff]
    %v411 = vld [vmem:[%s0 + $0x738] sm:$0xff]
    %v412 = vld [vmem:[%s0 + $0x740] sm:$0xff]
    %v413 = vld [vmem:[%s0 + $0x748] sm:$0xff]
    %v414 = vld [vmem:[%s0 + $0x750] sm:$0xff]
    %v415 = vld [vmem:[%s0 + $0x758] sm:$0xff]
    %v416 = vld [vmem:[%s0 + $0x760] sm:$0xff]
    %v417 = vld [vmem:[%s0 + $0x768] sm:$0xff]
    %v418 = vld [vmem:[%s0 + $0x770] sm:$0xff]
    %v419 = vld [vmem:[%s0 + $0x778] sm:$0xff]
    %v420 = vld [vmem:[%s0 + $0x780] sm:$0xff]
    %v421 = vld [vmem:[%s0 + $0x788] sm:$0xff]
    %v422 = vld [vmem:[%s0 + $0x790] sm:$0xff]
    %v423 = vld [vmem:[%s0 + $0x798] sm:$0xff]
    %v424 = vld [vmem:[%s0 + $0x7a0] sm:$0xff]
    %v425 = vld [vmem:[%s0 + $0x7a8] sm:$0xff]
    %v426 = vld [vmem:[%s0 + $0x7b0] sm:$0xff]
    %v427 = vld [vmem:[%s0 + $0x7b8] sm:$0xff]
    %v428 = vld [vmem:[%s0 + $0x7c0] sm:$0xff]
    %v429 = vld [vmem:[%s0 + $0x7c8] sm:$0xff]
    %v430 = vld [vmem:[%s0 + $0x7d0] sm:$0xff]
    %v431 = vld [vmem:[%s0 + $0x7d8] sm:$0xff]
    %v432 = vld [vmem:[%s0 + $0x7e0] sm:$0xff]
    %v433 = vld [vmem:[%s0 + $0x7e8] sm:$0xff]
    %v434 = vld [vmem:[%s0 + $0x7f0] sm:$0xff]
    %v435 = vld [vmem:[%s0 + $0x7f8] sm:$0xff]
    %v436 = vld [vmem:[%s1] sm:$0xff]
    %v437 = vld [vmem:[%s1 + $0x8] sm:$0xff]
    %v438 = vld [vmem:[%s1 + $0x10] sm:$0xff]
    %v439 = vld [vmem:[%s1 + $0x18] sm:$0x7]
    %v440 = vld [vmem:[%s3] sm:$0x1]
    %v441 = vld [vmem:[%s3 + $0x1] sm:$0x1]
    %v442 = vld [vmem:[%s3 + $0x2] sm:$0x1]
    %v443 = vperm.slane %v440, 0
    %vm444 = vcmask 220160
    %v446 = vsel %vm444, %v180, 0
    %v449 = vsel %vm444, %v181, 0
    %v452 = vsel %vm444, %v182, 0
    %v455 = vsel %vm444, %v183, 0
    %v458 = vsel %vm444, %v184, 0
    %v461 = vsel %vm444, %v185, 0
    %v464 = vsel %vm444, %v186, 0
    %v467 = vsel %vm444, %v187, 0
    %v470 = vsel %vm444, %v188, 0
    %v473 = vsel %vm444, %v189, 0
    %v476 = vsel %vm444, %v190, 0
    %v479 = vsel %vm444, %v191, 0
    %v482 = vsel %vm444, %v192, 0
    %v485 = vsel %vm444, %v193, 0
    %v488 = vsel %vm444, %v194, 0
    %v491 = vsel %vm444, %v195, 0
    %v494 = vsel %vm444, %v196, 0
    %v497 = vsel %vm444, %v197, 0
    %v500 = vsel %vm444, %v198, 0
    %v503 = vsel %vm444, %v199, 0
    %v506 = vsel %vm444, %v200, 0
    %v509 = vsel %vm444, %v201, 0
    %v512 = vsel %vm444, %v202, 0
    %v515 = vsel %vm444, %v203, 0
    %v518 = vsel %vm444, %v204, 0
    %v521 = vsel %vm444, %v205, 0
    %v524 = vsel %vm444, %v206, 0
    %v527 = vsel %vm444, %v207, 0
    %v530 = vsel %vm444, %v208, 0
    %v533 = vsel %vm444, %v209, 0
    %v536 = vsel %vm444, %v210, 0
    %v539 = vsel %vm444, %v211, 0
    %v542 = vsel %vm444, %v212, 0
    %v545 = vsel %vm444, %v213, 0
    %v548 = vsel %vm444, %v214, 0
    %v551 = vsel %vm444, %v215, 0
    %v554 = vsel %vm444, %v216, 0
    %v557 = vsel %vm444, %v217, 0
    %v560 = vsel %vm444, %v218, 0
    %v563 = vsel %vm444, %v219, 0
    %v566 = vsel %vm444, %v220, 0
    %v569 = vsel %vm444, %v221, 0
    %v572 = vsel %vm444, %v222, 0
    %v575 = vsel %vm444, %v223, 0
    %v578 = vsel %vm444, %v224, 0
    %v581 = vsel %vm444, %v225, 0
    %v584 = vsel %vm444, %v226, 0
    %v587 = vsel %vm444, %v227, 0
    %v590 = vsel %vm444, %v228, 0
    %v593 = vsel %vm444, %v229, 0
    %v596 = vsel %vm444, %v230, 0
    %v599 = vsel %vm444, %v231, 0
    %v602 = vsel %vm444, %v232, 0
    %v605 = vsel %vm444, %v233, 0
    %v608 = vsel %vm444, %v234, 0
    %v611 = vsel %vm444, %v235, 0
    %v614 = vsel %vm444, %v236, 0
    %v617 = vsel %vm444, %v237, 0
    %v620 = vsel %vm444, %v238, 0
    %v623 = vsel %vm444, %v239, 0
    %v626 = vsel %vm444, %v240, 0
    %v629 = vsel %vm444, %v241, 0
    %v632 = vsel %vm444, %v242, 0
    %v635 = vsel %vm444, %v243, 0
    %v638 = vsel %vm444, %v244, 0
    %v641 = vsel %vm444, %v245, 0
    %v644 = vsel %vm444, %v246, 0
    %v647 = vsel %vm444, %v247, 0
    %v650 = vsel %vm444, %v248, 0
    %v653 = vsel %vm444, %v249, 0
    %v656 = vsel %vm444, %v250, 0
    %v659 = vsel %vm444, %v251, 0
    %v662 = vsel %vm444, %v252, 0
    %v665 = vsel %vm444, %v253, 0
    %v668 = vsel %vm444, %v254, 0
    %v671 = vsel %vm444, %v255, 0
    %v674 = vsel %vm444, %v256, 0
    %v677 = vsel %vm444, %v257, 0
    %v680 = vsel %vm444, %v258, 0
    %v683 = vsel %vm444, %v259, 0
    %v686 = vsel %vm444, %v260, 0
    %v689 = vsel %vm444, %v261, 0
    %v692 = vsel %vm444, %v262, 0
    %v695 = vsel %vm444, %v263, 0
    %v698 = vsel %vm444, %v264, 0
    %v701 = vsel %vm444, %v265, 0
    %v704 = vsel %vm444, %v266, 0
    %v707 = vsel %vm444, %v267, 0
    %v710 = vsel %vm444, %v268, 0
    %v713 = vsel %vm444, %v269, 0
    %v716 = vsel %vm444, %v270, 0
    %v719 = vsel %vm444, %v271, 0
    %v722 = vsel %vm444, %v272, 0
    %v725 = vsel %vm444, %v273, 0
    %v728 = vsel %vm444, %v274, 0
    %v731 = vsel %vm444, %v275, 0
    %v734 = vsel %vm444, %v276, 0
    %v737 = vsel %vm444, %v277, 0
    %v740 = vsel %vm444, %v278, 0
    %v743 = vsel %vm444, %v279, 0
    %v746 = vsel %vm444, %v280, 0
    %v749 = vsel %vm444, %v281, 0
    %v752 = vsel %vm444, %v282, 0
    %v755 = vsel %vm444, %v283, 0
    %v758 = vsel %vm444, %v284, 0
    %v761 = vsel %vm444, %v285, 0
    %v764 = vsel %vm444, %v286, 0
    %v767 = vsel %vm444, %v287, 0
    %v770 = vsel %vm444, %v288, 0
    %v773 = vsel %vm444, %v289, 0
    %v776 = vsel %vm444, %v290, 0
    %v779 = vsel %vm444, %v291, 0
    %v782 = vsel %vm444, %v292, 0
    %v785 = vsel %vm444, %v293, 0
    %v788 = vsel %vm444, %v294, 0
    %v791 = vsel %vm444, %v295, 0
    %v794 = vsel %vm444, %v296, 0
    %v797 = vsel %vm444, %v297, 0
    %v800 = vsel %vm444, %v298, 0
    %v803 = vsel %vm444, %v299, 0
    %v806 = vsel %vm444, %v300, 0
    %v809 = vsel %vm444, %v301, 0
    %v812 = vsel %vm444, %v302, 0
    %v815 = vsel %vm444, %v303, 0
    %v818 = vsel %vm444, %v304, 0
    %v821 = vsel %vm444, %v305, 0
    %v824 = vsel %vm444, %v306, 0
    %v827 = vsel %vm444, %v307, 0
    %v830 = vsel %vm444, %v308, 0
    %v833 = vsel %vm444, %v309, 0
    %v836 = vsel %vm444, %v310, 0
    %v839 = vsel %vm444, %v311, 0
    %v842 = vsel %vm444, %v312, 0
    %v845 = vsel %vm444, %v313, 0
    %v848 = vsel %vm444, %v314, 0
    %v851 = vsel %vm444, %v315, 0
    %v854 = vsel %vm444, %v316, 0
    %v857 = vsel %vm444, %v317, 0
    %v860 = vsel %vm444, %v318, 0
    %v863 = vsel %vm444, %v319, 0
    %v866 = vsel %vm444, %v320, 0
    %v869 = vsel %vm444, %v321, 0
    %v872 = vsel %vm444, %v322, 0
    %v875 = vsel %vm444, %v323, 0
    %v878 = vsel %vm444, %v324, 0
    %v881 = vsel %vm444, %v325, 0
    %v884 = vsel %vm444, %v326, 0
    %v887 = vsel %vm444, %v327, 0
    %v890 = vsel %vm444, %v328, 0
    %v893 = vsel %vm444, %v329, 0
    %v896 = vsel %vm444, %v330, 0
    %v899 = vsel %vm444, %v331, 0
    %v902 = vsel %vm444, %v332, 0
    %v905 = vsel %vm444, %v333, 0
    %v908 = vsel %vm444, %v334, 0
    %v911 = vsel %vm444, %v335, 0
    %v914 = vsel %vm444, %v336, 0
    %v917 = vsel %vm444, %v337, 0
    %v920 = vsel %vm444, %v338, 0
    %v923 = vsel %vm444, %v339, 0
    %v926 = vsel %vm444, %v340, 0
    %v929 = vsel %vm444, %v341, 0
    %v932 = vsel %vm444, %v342, 0
    %v935 = vsel %vm444, %v343, 0
    %v938 = vsel %vm444, %v344, 0
    %v941 = vsel %vm444, %v345, 0
    %v944 = vsel %vm444, %v346, 0
    %v947 = vsel %vm444, %v347, 0
    %v950 = vsel %vm444, %v348, 0
    %v953 = vsel %vm444, %v349, 0
    %v956 = vsel %vm444, %v350, 0
    %v959 = vsel %vm444, %v351, 0
    %v962 = vsel %vm444, %v352, 0
    %v965 = vsel %vm444, %v353, 0
    %v968 = vsel %vm444, %v354, 0
    %v971 = vsel %vm444, %v355, 0
    %v974 = vsel %vm444, %v356, 0
    %v977 = vsel %vm444, %v357, 0
    %v980 = vsel %vm444, %v358, 0
    %v983 = vsel %vm444, %v359, 0
    %v986 = vsel %vm444, %v360, 0
    %v989 = vsel %vm444, %v361, 0
    %v992 = vsel %vm444, %v362, 0
    %v995 = vsel %vm444, %v363, 0
    %v998 = vsel %vm444, %v364, 0
    %v1001 = vsel %vm444, %v365, 0
    %v1004 = vsel %vm444, %v366, 0
    %v1007 = vsel %vm444, %v367, 0
    %v1010 = vsel %vm444, %v368, 0
    %v1013 = vsel %vm444, %v369, 0
    %v1016 = vsel %vm444, %v370, 0
    %v1019 = vsel %vm444, %v371, 0
    %v1022 = vsel %vm444, %v372, 0
    %v1025 = vsel %vm444, %v373, 0
    %v1028 = vsel %vm444, %v374, 0
    %v1031 = vsel %vm444, %v375, 0
    %v1034 = vsel %vm444, %v376, 0
    %v1037 = vsel %vm444, %v377, 0
    %v1040 = vsel %vm444, %v378, 0
    %v1043 = vsel %vm444, %v379, 0
    %v1046 = vsel %vm444, %v380, 0
    %v1049 = vsel %vm444, %v381, 0
    %v1052 = vsel %vm444, %v382, 0
    %v1055 = vsel %vm444, %v383, 0
    %v1058 = vsel %vm444, %v384, 0
    %v1061 = vsel %vm444, %v385, 0
    %v1064 = vsel %vm444, %v386, 0
    %v1067 = vsel %vm444, %v387, 0
    %v1070 = vsel %vm444, %v388, 0
    %v1073 = vsel %vm444, %v389, 0
    %v1076 = vsel %vm444, %v390, 0
    %v1079 = vsel %vm444, %v391, 0
    %v1082 = vsel %vm444, %v392, 0
    %v1085 = vsel %vm444, %v393, 0
    %v1088 = vsel %vm444, %v394, 0
    %v1091 = vsel %vm444, %v395, 0
    %v1094 = vsel %vm444, %v396, 0
    %v1097 = vsel %vm444, %v397, 0
    %v1100 = vsel %vm444, %v398, 0
    %v1103 = vsel %vm444, %v399, 0
    %v1106 = vsel %vm444, %v400, 0
    %v1109 = vsel %vm444, %v401, 0
    %v1112 = vsel %vm444, %v402, 0
    %v1115 = vsel %vm444, %v403, 0
    %v1118 = vsel %vm444, %v404, 0
    %v1121 = vsel %vm444, %v405, 0
    %v1124 = vsel %vm444, %v406, 0
    %v1127 = vsel %vm444, %v407, 0
    %v1130 = vsel %vm444, %v408, 0
    %v1133 = vsel %vm444, %v409, 0
    %v1136 = vsel %vm444, %v410, 0
    %v1139 = vsel %vm444, %v411, 0
    %v1142 = vsel %vm444, %v412, 0
    %v1145 = vsel %vm444, %v413, 0
    %v1148 = vsel %vm444, %v414, 0
    %v1151 = vsel %vm444, %v415, 0
    %v1154 = vsel %vm444, %v416, 0
    %v1157 = vsel %vm444, %v417, 0
    %v1160 = vsel %vm444, %v418, 0
    %v1163 = vsel %vm444, %v419, 0
    %v1166 = vsel %vm444, %v420, 0
    %v1169 = vsel %vm444, %v421, 0
    %v1172 = vsel %vm444, %v422, 0
    %v1175 = vsel %vm444, %v423, 0
    %v1178 = vsel %vm444, %v424, 0
    %v1181 = vsel %vm444, %v425, 0
    %v1184 = vsel %vm444, %v426, 0
    %v1187 = vsel %vm444, %v427, 0
    %v1190 = vsel %vm444, %v428, 0
    %v1193 = vsel %vm444, %v429, 0
    %v1196 = vsel %vm444, %v430, 0
    %v1199 = vsel %vm444, %v431, 0
    %v1202 = vsel %vm444, %v432, 0
    %v1205 = vsel %vm444, %v433, 0
    %v1208 = vsel %vm444, %v434, 0
    %v1211 = vsel %vm444, %v435, 0
    %vm1213 = vcmask 1042432
    %v1215 = vsel %vm1213, %v439, 0
    %1217 = vmatpush.msra.mxu0 0.0
    %1218 = vmatpush.msra.mxu0 0.0
    %1219 = vmatpush.msra.mxu0 0.0
    %1220 = vmatpush.msra.mxu0 0.0
    %1221 = vmatpush.msra.mxu0 0.0
    %1222 = vmatpush.msra.mxu0 0.0
    %1223 = vmatpush.msra.mxu0 0.0
    %1224 = vmatpush.msra.mxu0 0.0
    %1225 = vmatpush.msra.mxu0 0.0
    %1226 = vmatpush.msra.mxu0 0.0
    %1227 = vmatpush.msra.mxu0 0.0
    %1228 = vmatpush.msra.mxu0 0.0
    %1229 = vmatpush.msra.mxu0 %v1215
    %1230 = vmatpush.msra.mxu0 %v438
    %1231 = vmatpush.msra.mxu0 %v437
    %1232 = vmatpush.msra.mxu0 %v436
    %1233 = vmatmul.f32.gmra.mxu0 %v446
    %v1234 = vpop.f32.mrf.mxu0
    %v1235 = vadd.f32 %v443, %v1234
    %1236 = vmatmul.f32.gmra.mxu0 %v449
    %v1237 = vpop.f32.mrf.mxu0
    %v1238 = vadd.f32 %v443, %v1237
    %1239 = vmatmul.f32.gmra.mxu0 %v452
    %v1240 = vpop.f32.mrf.mxu0
    %v1241 = vadd.f32 %v443, %v1240
    %1242 = vmatmul.f32.gmra.mxu0 %v455
    %v1243 = vpop.f32.mrf.mxu0
    %v1244 = vadd.f32 %v443, %v1243
    %1245 = vmatmul.f32.gmra.mxu0 %v458
    %v1246 = vpop.f32.mrf.mxu0
    %v1247 = vadd.f32 %v443, %v1246
    %1248 = vmatmul.f32.gmra.mxu0 %v461
    %v1249 = vpop.f32.mrf.mxu0
    %v1250 = vadd.f32 %v443, %v1249
    %1251 = vmatmul.f32.gmra.mxu0 %v464
    %v1252 = vpop.f32.mrf.mxu0
    %v1253 = vadd.f32 %v443, %v1252
    %1254 = vmatmul.f32.gmra.mxu0 %v467
    %v1255 = vpop.f32.mrf.mxu0
    %v1256 = vadd.f32 %v443, %v1255
    %1257 = vmatmul.f32.gmra.mxu0 %v470
    %v1258 = vpop.f32.mrf.mxu0
    %v1259 = vadd.f32 %v443, %v1258
    %1260 = vmatmul.f32.gmra.mxu0 %v473
    %v1261 = vpop.f32.mrf.mxu0
    %v1262 = vadd.f32 %v443, %v1261
    %1263 = vmatmul.f32.gmra.mxu0 %v476
    %v1264 = vpop.f32.mrf.mxu0
    %v1265 = vadd.f32 %v443, %v1264
    %1266 = vmatmul.f32.gmra.mxu0 %v479
    %v1267 = vpop.f32.mrf.mxu0
    %v1268 = vadd.f32 %v443, %v1267
    %1269 = vmatmul.f32.gmra.mxu0 %v482
    %v1270 = vpop.f32.mrf.mxu0
    %v1271 = vadd.f32 %v443, %v1270
    %1272 = vmatmul.f32.gmra.mxu0 %v485
    %v1273 = vpop.f32.mrf.mxu0
    %v1274 = vadd.f32 %v443, %v1273
    %1275 = vmatmul.f32.gmra.mxu0 %v488
    %v1276 = vpop.f32.mrf.mxu0
    %v1277 = vadd.f32 %v443, %v1276
    %1278 = vmatmul.f32.gmra.mxu0 %v491
    %v1279 = vpop.f32.mrf.mxu0
    %v1280 = vadd.f32 %v443, %v1279
    %1281 = vmatmul.f32.gmra.mxu0 %v494
    %v1282 = vpop.f32.mrf.mxu0
    %v1283 = vadd.f32 %v443, %v1282
    %1284 = vmatmul.f32.gmra.mxu0 %v497
    %v1285 = vpop.f32.mrf.mxu0
    %v1286 = vadd.f32 %v443, %v1285
    %1287 = vmatmul.f32.gmra.mxu0 %v500
    %v1288 = vpop.f32.mrf.mxu0
    %v1289 = vadd.f32 %v443, %v1288
    %1290 = vmatmul.f32.gmra.mxu0 %v503
    %v1291 = vpop.f32.mrf.mxu0
    %v1292 = vadd.f32 %v443, %v1291
    %1293 = vmatmul.f32.gmra.mxu0 %v506
    %v1294 = vpop.f32.mrf.mxu0
    %v1295 = vadd.f32 %v443, %v1294
    %1296 = vmatmul.f32.gmra.mxu0 %v509
    %v1297 = vpop.f32.mrf.mxu0
    %v1298 = vadd.f32 %v443, %v1297
    %1299 = vmatmul.f32.gmra.mxu0 %v512
    %v1300 = vpop.f32.mrf.mxu0
    %v1301 = vadd.f32 %v443, %v1300
    %1302 = vmatmul.f32.gmra.mxu0 %v515
    %v1303 = vpop.f32.mrf.mxu0
    %v1304 = vadd.f32 %v443, %v1303
    %1305 = vmatmul.f32.gmra.mxu0 %v518
    %v1306 = vpop.f32.mrf.mxu0
    %v1307 = vadd.f32 %v443, %v1306
    %1308 = vmatmul.f32.gmra.mxu0 %v521
    %v1309 = vpop.f32.mrf.mxu0
    %v1310 = vadd.f32 %v443, %v1309
    %1311 = vmatmul.f32.gmra.mxu0 %v524
    %v1312 = vpop.f32.mrf.mxu0
    %v1313 = vadd.f32 %v443, %v1312
    %1314 = vmatmul.f32.gmra.mxu0 %v527
    %v1315 = vpop.f32.mrf.mxu0
    %v1316 = vadd.f32 %v443, %v1315
    %1317 = vmatmul.f32.gmra.mxu0 %v530
    %v1318 = vpop.f32.mrf.mxu0
    %v1319 = vadd.f32 %v443, %v1318
    %1320 = vmatmul.f32.gmra.mxu0 %v533
    %v1321 = vpop.f32.mrf.mxu0
    %v1322 = vadd.f32 %v443, %v1321
    %1323 = vmatmul.f32.gmra.mxu0 %v536
    %v1324 = vpop.f32.mrf.mxu0
    %v1325 = vadd.f32 %v443, %v1324
    %1326 = vmatmul.f32.gmra.mxu0 %v539
    %v1327 = vpop.f32.mrf.mxu0
    %v1328 = vadd.f32 %v443, %v1327
    %1329 = vmatmul.f32.gmra.mxu0 %v542
    %v1330 = vpop.f32.mrf.mxu0
    %v1331 = vadd.f32 %v443, %v1330
    %1332 = vmatmul.f32.gmra.mxu0 %v545
    %v1333 = vpop.f32.mrf.mxu0
    %v1334 = vadd.f32 %v443, %v1333
    %1335 = vmatmul.f32.gmra.mxu0 %v548
    %v1336 = vpop.f32.mrf.mxu0
    %v1337 = vadd.f32 %v443, %v1336
    %1338 = vmatmul.f32.gmra.mxu0 %v551
    %v1339 = vpop.f32.mrf.mxu0
    %v1340 = vadd.f32 %v443, %v1339
    %1341 = vmatmul.f32.gmra.mxu0 %v554
    %v1342 = vpop.f32.mrf.mxu0
    %v1343 = vadd.f32 %v443, %v1342
    %1344 = vmatmul.f32.gmra.mxu0 %v557
    %v1345 = vpop.f32.mrf.mxu0
    %v1346 = vadd.f32 %v443, %v1345
    %1347 = vmatmul.f32.gmra.mxu0 %v560
    %v1348 = vpop.f32.mrf.mxu0
    %v1349 = vadd.f32 %v443, %v1348
    %1350 = vmatmul.f32.gmra.mxu0 %v563
    %v1351 = vpop.f32.mrf.mxu0
    %v1352 = vadd.f32 %v443, %v1351
    %1353 = vmatmul.f32.gmra.mxu0 %v566
    %v1354 = vpop.f32.mrf.mxu0
    %v1355 = vadd.f32 %v443, %v1354
    %1356 = vmatmul.f32.gmra.mxu0 %v569
    %v1357 = vpop.f32.mrf.mxu0
    %v1358 = vadd.f32 %v443, %v1357
    %1359 = vmatmul.f32.gmra.mxu0 %v572
    %v1360 = vpop.f32.mrf.mxu0
    %v1361 = vadd.f32 %v443, %v1360
    %1362 = vmatmul.f32.gmra.mxu0 %v575
    %v1363 = vpop.f32.mrf.mxu0
    %v1364 = vadd.f32 %v443, %v1363
    %1365 = vmatmul.f32.gmra.mxu0 %v578
    %v1366 = vpop.f32.mrf.mxu0
    %v1367 = vadd.f32 %v443, %v1366
    %1368 = vmatmul.f32.gmra.mxu0 %v581
    %v1369 = vpop.f32.mrf.mxu0
    %v1370 = vadd.f32 %v443, %v1369
    %1371 = vmatmul.f32.gmra.mxu0 %v584
    %v1372 = vpop.f32.mrf.mxu0
    %v1373 = vadd.f32 %v443, %v1372
    %1374 = vmatmul.f32.gmra.mxu0 %v587
    %v1375 = vpop.f32.mrf.mxu0
    %v1376 = vadd.f32 %v443, %v1375
    %1377 = vmatmul.f32.gmra.mxu0 %v590
    %v1378 = vpop.f32.mrf.mxu0
    %v1379 = vadd.f32 %v443, %v1378
    %1380 = vmatmul.f32.gmra.mxu0 %v593
    %v1381 = vpop.f32.mrf.mxu0
    %v1382 = vadd.f32 %v443, %v1381
    %1383 = vmatmul.f32.gmra.mxu0 %v596
    %v1384 = vpop.f32.mrf.mxu0
    %v1385 = vadd.f32 %v443, %v1384
    %1386 = vmatmul.f32.gmra.mxu0 %v599
    %v1387 = vpop.f32.mrf.mxu0
    %v1388 = vadd.f32 %v443, %v1387
    %1389 = vmatmul.f32.gmra.mxu0 %v602
    %v1390 = vpop.f32.mrf.mxu0
    %v1391 = vadd.f32 %v443, %v1390
    %1392 = vmatmul.f32.gmra.mxu0 %v605
    %v1393 = vpop.f32.mrf.mxu0
    %v1394 = vadd.f32 %v443, %v1393
    %1395 = vmatmul.f32.gmra.mxu0 %v608
    %v1396 = vpop.f32.mrf.mxu0
    %v1397 = vadd.f32 %v443, %v1396
    %1398 = vmatmul.f32.gmra.mxu0 %v611
    %v1399 = vpop.f32.mrf.mxu0
    %v1400 = vadd.f32 %v443, %v1399
    %1401 = vmatmul.f32.gmra.mxu0 %v614
    %v1402 = vpop.f32.mrf.mxu0
    %v1403 = vadd.f32 %v443, %v1402
    %1404 = vmatmul.f32.gmra.mxu0 %v617
    %v1405 = vpop.f32.mrf.mxu0
    %v1406 = vadd.f32 %v443, %v1405
    %1407 = vmatmul.f32.gmra.mxu0 %v620
    %v1408 = vpop.f32.mrf.mxu0
    %v1409 = vadd.f32 %v443, %v1408
    %1410 = vmatmul.f32.gmra.mxu0 %v623
    %v1411 = vpop.f32.mrf.mxu0
    %v1412 = vadd.f32 %v443, %v1411
    %1413 = vmatmul.f32.gmra.mxu0 %v626
    %v1414 = vpop.f32.mrf.mxu0
    %v1415 = vadd.f32 %v443, %v1414
    %1416 = vmatmul.f32.gmra.mxu0 %v629
    %v1417 = vpop.f32.mrf.mxu0
    %v1418 = vadd.f32 %v443, %v1417
    %1419 = vmatmul.f32.gmra.mxu0 %v632
    %v1420 = vpop.f32.mrf.mxu0
    %v1421 = vadd.f32 %v443, %v1420
    %1422 = vmatmul.f32.gmra.mxu0 %v635
    %v1423 = vpop.f32.mrf.mxu0
    %v1424 = vadd.f32 %v443, %v1423
    %1425 = vmatmul.f32.gmra.mxu0 %v638
    %v1426 = vpop.f32.mrf.mxu0
    %v1427 = vadd.f32 %v443, %v1426
    %1428 = vmatmul.f32.gmra.mxu0 %v641
    %v1429 = vpop.f32.mrf.mxu0
    %v1430 = vadd.f32 %v443, %v1429
    %1431 = vmatmul.f32.gmra.mxu0 %v644
    %v1432 = vpop.f32.mrf.mxu0
    %v1433 = vadd.f32 %v443, %v1432
    %1434 = vmatmul.f32.gmra.mxu0 %v647
    %v1435 = vpop.f32.mrf.mxu0
    %v1436 = vadd.f32 %v443, %v1435
    %1437 = vmatmul.f32.gmra.mxu0 %v650
    %v1438 = vpop.f32.mrf.mxu0
    %v1439 = vadd.f32 %v443, %v1438
    %1440 = vmatmul.f32.gmra.mxu0 %v653
    %v1441 = vpop.f32.mrf.mxu0
    %v1442 = vadd.f32 %v443, %v1441
    %1443 = vmatmul.f32.gmra.mxu0 %v656
    %v1444 = vpop.f32.mrf.mxu0
    %v1445 = vadd.f32 %v443, %v1444
    %1446 = vmatmul.f32.gmra.mxu0 %v659
    %v1447 = vpop.f32.mrf.mxu0
    %v1448 = vadd.f32 %v443, %v1447
    %1449 = vmatmul.f32.gmra.mxu0 %v662
    %v1450 = vpop.f32.mrf.mxu0
    %v1451 = vadd.f32 %v443, %v1450
    %1452 = vmatmul.f32.gmra.mxu0 %v665
    %v1453 = vpop.f32.mrf.mxu0
    %v1454 = vadd.f32 %v443, %v1453
    %1455 = vmatmul.f32.gmra.mxu0 %v668
    %v1456 = vpop.f32.mrf.mxu0
    %v1457 = vadd.f32 %v443, %v1456
    %1458 = vmatmul.f32.gmra.mxu0 %v671
    %v1459 = vpop.f32.mrf.mxu0
    %v1460 = vadd.f32 %v443, %v1459
    %1461 = vmatmul.f32.gmra.mxu0 %v674
    %v1462 = vpop.f32.mrf.mxu0
    %v1463 = vadd.f32 %v443, %v1462
    %1464 = vmatmul.f32.gmra.mxu0 %v677
    %v1465 = vpop.f32.mrf.mxu0
    %v1466 = vadd.f32 %v443, %v1465
    %1467 = vmatmul.f32.gmra.mxu0 %v680
    %v1468 = vpop.f32.mrf.mxu0
    %v1469 = vadd.f32 %v443, %v1468
    %1470 = vmatmul.f32.gmra.mxu0 %v683
    %v1471 = vpop.f32.mrf.mxu0
    %v1472 = vadd.f32 %v443, %v1471
    %1473 = vmatmul.f32.gmra.mxu0 %v686
    %v1474 = vpop.f32.mrf.mxu0
    %v1475 = vadd.f32 %v443, %v1474
    %1476 = vmatmul.f32.gmra.mxu0 %v689
    %v1477 = vpop.f32.mrf.mxu0
    %v1478 = vadd.f32 %v443, %v1477
    %1479 = vmatmul.f32.gmra.mxu0 %v692
    %v1480 = vpop.f32.mrf.mxu0
    %v1481 = vadd.f32 %v443, %v1480
    %1482 = vmatmul.f32.gmra.mxu0 %v695
    %v1483 = vpop.f32.mrf.mxu0
    %v1484 = vadd.f32 %v443, %v1483
    %1485 = vmatmul.f32.gmra.mxu0 %v698
    %v1486 = vpop.f32.mrf.mxu0
    %v1487 = vadd.f32 %v443, %v1486
    %1488 = vmatmul.f32.gmra.mxu0 %v701
    %v1489 = vpop.f32.mrf.mxu0
    %v1490 = vadd.f32 %v443, %v1489
    %1491 = vmatmul.f32.gmra.mxu0 %v704
    %v1492 = vpop.f32.mrf.mxu0
    %v1493 = vadd.f32 %v443, %v1492
    %1494 = vmatmul.f32.gmra.mxu0 %v707
    %v1495 = vpop.f32.mrf.mxu0
    %v1496 = vadd.f32 %v443, %v1495
    %1497 = vmatmul.f32.gmra.mxu0 %v710
    %v1498 = vpop.f32.mrf.mxu0
    %v1499 = vadd.f32 %v443, %v1498
    %1500 = vmatmul.f32.gmra.mxu0 %v713
    %v1501 = vpop.f32.mrf.mxu0
    %v1502 = vadd.f32 %v443, %v1501
    %1503 = vmatmul.f32.gmra.mxu0 %v716
    %v1504 = vpop.f32.mrf.mxu0
    %v1505 = vadd.f32 %v443, %v1504
    %1506 = vmatmul.f32.gmra.mxu0 %v719
    %v1507 = vpop.f32.mrf.mxu0
    %v1508 = vadd.f32 %v443, %v1507
    %1509 = vmatmul.f32.gmra.mxu0 %v722
    %v1510 = vpop.f32.mrf.mxu0
    %v1511 = vadd.f32 %v443, %v1510
    %1512 = vmatmul.f32.gmra.mxu0 %v725
    %v1513 = vpop.f32.mrf.mxu0
    %v1514 = vadd.f32 %v443, %v1513
    %1515 = vmatmul.f32.gmra.mxu0 %v728
    %v1516 = vpop.f32.mrf.mxu0
    %v1517 = vadd.f32 %v443, %v1516
    %1518 = vmatmul.f32.gmra.mxu0 %v731
    %v1519 = vpop.f32.mrf.mxu0
    %v1520 = vadd.f32 %v443, %v1519
    %1521 = vmatmul.f32.gmra.mxu0 %v734
    %v1522 = vpop.f32.mrf.mxu0
    %v1523 = vadd.f32 %v443, %v1522
    %1524 = vmatmul.f32.gmra.mxu0 %v737
    %v1525 = vpop.f32.mrf.mxu0
    %v1526 = vadd.f32 %v443, %v1525
    %1527 = vmatmul.f32.gmra.mxu0 %v740
    %v1528 = vpop.f32.mrf.mxu0
    %v1529 = vadd.f32 %v443, %v1528
    %1530 = vmatmul.f32.gmra.mxu0 %v743
    %v1531 = vpop.f32.mrf.mxu0
    %v1532 = vadd.f32 %v443, %v1531
    %1533 = vmatmul.f32.gmra.mxu0 %v746
    %v1534 = vpop.f32.mrf.mxu0
    %v1535 = vadd.f32 %v443, %v1534
    %1536 = vmatmul.f32.gmra.mxu0 %v749
    %v1537 = vpop.f32.mrf.mxu0
    %v1538 = vadd.f32 %v443, %v1537
    %1539 = vmatmul.f32.gmra.mxu0 %v752
    %v1540 = vpop.f32.mrf.mxu0
    %v1541 = vadd.f32 %v443, %v1540
    %1542 = vmatmul.f32.gmra.mxu0 %v755
    %v1543 = vpop.f32.mrf.mxu0
    %v1544 = vadd.f32 %v443, %v1543
    %1545 = vmatmul.f32.gmra.mxu0 %v758
    %v1546 = vpop.f32.mrf.mxu0
    %v1547 = vadd.f32 %v443, %v1546
    %1548 = vmatmul.f32.gmra.mxu0 %v761
    %v1549 = vpop.f32.mrf.mxu0
    %v1550 = vadd.f32 %v443, %v1549
    %1551 = vmatmul.f32.gmra.mxu0 %v764
    %v1552 = vpop.f32.mrf.mxu0
    %v1553 = vadd.f32 %v443, %v1552
    %1554 = vmatmul.f32.gmra.mxu0 %v767
    %v1555 = vpop.f32.mrf.mxu0
    %v1556 = vadd.f32 %v443, %v1555
    %1557 = vmatmul.f32.gmra.mxu0 %v770
    %v1558 = vpop.f32.mrf.mxu0
    %v1559 = vadd.f32 %v443, %v1558
    %1560 = vmatmul.f32.gmra.mxu0 %v773
    %v1561 = vpop.f32.mrf.mxu0
    %v1562 = vadd.f32 %v443, %v1561
    %1563 = vmatmul.f32.gmra.mxu0 %v776
    %v1564 = vpop.f32.mrf.mxu0
    %v1565 = vadd.f32 %v443, %v1564
    %1566 = vmatmul.f32.gmra.mxu0 %v779
    %v1567 = vpop.f32.mrf.mxu0
    %v1568 = vadd.f32 %v443, %v1567
    %1569 = vmatmul.f32.gmra.mxu0 %v782
    %v1570 = vpop.f32.mrf.mxu0
    %v1571 = vadd.f32 %v443, %v1570
    %1572 = vmatmul.f32.gmra.mxu0 %v785
    %v1573 = vpop.f32.mrf.mxu0
    %v1574 = vadd.f32 %v443, %v1573
    %1575 = vmatmul.f32.gmra.mxu0 %v788
    %v1576 = vpop.f32.mrf.mxu0
    %v1577 = vadd.f32 %v443, %v1576
    %1578 = vmatmul.f32.gmra.mxu0 %v791
    %v1579 = vpop.f32.mrf.mxu0
    %v1580 = vadd.f32 %v443, %v1579
    %1581 = vmatmul.f32.gmra.mxu0 %v794
    %v1582 = vpop.f32.mrf.mxu0
    %v1583 = vadd.f32 %v443, %v1582
    %1584 = vmatmul.f32.gmra.mxu0 %v797
    %v1585 = vpop.f32.mrf.mxu0
    %v1586 = vadd.f32 %v443, %v1585
    %1587 = vmatmul.f32.gmra.mxu0 %v800
    %v1588 = vpop.f32.mrf.mxu0
    %v1589 = vadd.f32 %v443, %v1588
    %1590 = vmatmul.f32.gmra.mxu0 %v803
    %v1591 = vpop.f32.mrf.mxu0
    %v1592 = vadd.f32 %v443, %v1591
    %1593 = vmatmul.f32.gmra.mxu0 %v806
    %v1594 = vpop.f32.mrf.mxu0
    %v1595 = vadd.f32 %v443, %v1594
    %1596 = vmatmul.f32.gmra.mxu0 %v809
    %v1597 = vpop.f32.mrf.mxu0
    %v1598 = vadd.f32 %v443, %v1597
    %1599 = vmatmul.f32.gmra.mxu0 %v812
    %v1600 = vpop.f32.mrf.mxu0
    %v1601 = vadd.f32 %v443, %v1600
    %1602 = vmatmul.f32.gmra.mxu0 %v815
    %v1603 = vpop.f32.mrf.mxu0
    %v1604 = vadd.f32 %v443, %v1603
    %1605 = vmatmul.f32.gmra.mxu0 %v818
    %v1606 = vpop.f32.mrf.mxu0
    %v1607 = vadd.f32 %v443, %v1606
    %1608 = vmatmul.f32.gmra.mxu0 %v821
    %v1609 = vpop.f32.mrf.mxu0
    %v1610 = vadd.f32 %v443, %v1609
    %1611 = vmatmul.f32.gmra.mxu0 %v824
    %v1612 = vpop.f32.mrf.mxu0
    %v1613 = vadd.f32 %v443, %v1612
    %1614 = vmatmul.f32.gmra.mxu0 %v827
    %v1615 = vpop.f32.mrf.mxu0
    %v1616 = vadd.f32 %v443, %v1615
    %1617 = vmatmul.f32.gmra.mxu0 %v830
    %v1618 = vpop.f32.mrf.mxu0
    %v1619 = vadd.f32 %v443, %v1618
    %1620 = vmatmul.f32.gmra.mxu0 %v833
    %v1621 = vpop.f32.mrf.mxu0
    %v1622 = vadd.f32 %v443, %v1621
    %1623 = vmatmul.f32.gmra.mxu0 %v836
    %v1624 = vpop.f32.mrf.mxu0
    %v1625 = vadd.f32 %v443, %v1624
    %1626 = vmatmul.f32.gmra.mxu0 %v839
    %v1627 = vpop.f32.mrf.mxu0
    %v1628 = vadd.f32 %v443, %v1627
    %1629 = vmatmul.f32.gmra.mxu0 %v842
    %v1630 = vpop.f32.mrf.mxu0
    %v1631 = vadd.f32 %v443, %v1630
    %1632 = vmatmul.f32.gmra.mxu0 %v845
    %v1633 = vpop.f32.mrf.mxu0
    %v1634 = vadd.f32 %v443, %v1633
    %1635 = vmatmul.f32.gmra.mxu0 %v848
    %v1636 = vpop.f32.mrf.mxu0
    %v1637 = vadd.f32 %v443, %v1636
    %1638 = vmatmul.f32.gmra.mxu0 %v851
    %v1639 = vpop.f32.mrf.mxu0
    %v1640 = vadd.f32 %v443, %v1639
    %1641 = vmatmul.f32.gmra.mxu0 %v854
    %v1642 = vpop.f32.mrf.mxu0
    %v1643 = vadd.f32 %v443, %v1642
    %1644 = vmatmul.f32.gmra.mxu0 %v857
    %v1645 = vpop.f32.mrf.mxu0
    %v1646 = vadd.f32 %v443, %v1645
    %1647 = vmatmul.f32.gmra.mxu0 %v860
    %v1648 = vpop.f32.mrf.mxu0
    %v1649 = vadd.f32 %v443, %v1648
    %1650 = vmatmul.f32.gmra.mxu0 %v863
    %v1651 = vpop.f32.mrf.mxu0
    %v1652 = vadd.f32 %v443, %v1651
    %1653 = vmatmul.f32.gmra.mxu0 %v866
    %v1654 = vpop.f32.mrf.mxu0
    %v1655 = vadd.f32 %v443, %v1654
    %1656 = vmatmul.f32.gmra.mxu0 %v869
    %v1657 = vpop.f32.mrf.mxu0
    %v1658 = vadd.f32 %v443, %v1657
    %1659 = vmatmul.f32.gmra.mxu0 %v872
    %v1660 = vpop.f32.mrf.mxu0
    %v1661 = vadd.f32 %v443, %v1660
    %1662 = vmatmul.f32.gmra.mxu0 %v875
    %v1663 = vpop.f32.mrf.mxu0
    %v1664 = vadd.f32 %v443, %v1663
    %1665 = vmatmul.f32.gmra.mxu0 %v878
    %v1666 = vpop.f32.mrf.mxu0
    %v1667 = vadd.f32 %v443, %v1666
    %1668 = vmatmul.f32.gmra.mxu0 %v881
    %v1669 = vpop.f32.mrf.mxu0
    %v1670 = vadd.f32 %v443, %v1669
    %1671 = vmatmul.f32.gmra.mxu0 %v884
    %v1672 = vpop.f32.mrf.mxu0
    %v1673 = vadd.f32 %v443, %v1672
    %1674 = vmatmul.f32.gmra.mxu0 %v887
    %v1675 = vpop.f32.mrf.mxu0
    %v1676 = vadd.f32 %v443, %v1675
    %1677 = vmatmul.f32.gmra.mxu0 %v890
    %v1678 = vpop.f32.mrf.mxu0
    %v1679 = vadd.f32 %v443, %v1678
    %1680 = vmatmul.f32.gmra.mxu0 %v893
    %v1681 = vpop.f32.mrf.mxu0
    %v1682 = vadd.f32 %v443, %v1681
    %1683 = vmatmul.f32.gmra.mxu0 %v896
    %v1684 = vpop.f32.mrf.mxu0
    %v1685 = vadd.f32 %v443, %v1684
    %1686 = vmatmul.f32.gmra.mxu0 %v899
    %v1687 = vpop.f32.mrf.mxu0
    %v1688 = vadd.f32 %v443, %v1687
    %1689 = vmatmul.f32.gmra.mxu0 %v902
    %v1690 = vpop.f32.mrf.mxu0
    %v1691 = vadd.f32 %v443, %v1690
    %1692 = vmatmul.f32.gmra.mxu0 %v905
    %v1693 = vpop.f32.mrf.mxu0
    %v1694 = vadd.f32 %v443, %v1693
    %1695 = vmatmul.f32.gmra.mxu0 %v908
    %v1696 = vpop.f32.mrf.mxu0
    %v1697 = vadd.f32 %v443, %v1696
    %1698 = vmatmul.f32.gmra.mxu0 %v911
    %v1699 = vpop.f32.mrf.mxu0
    %v1700 = vadd.f32 %v443, %v1699
    %1701 = vmatmul.f32.gmra.mxu0 %v914
    %v1702 = vpop.f32.mrf.mxu0
    %v1703 = vadd.f32 %v443, %v1702
    %1704 = vmatmul.f32.gmra.mxu0 %v917
    %v1705 = vpop.f32.mrf.mxu0
    %v1706 = vadd.f32 %v443, %v1705
    %1707 = vmatmul.f32.gmra.mxu0 %v920
    %v1708 = vpop.f32.mrf.mxu0
    %v1709 = vadd.f32 %v443, %v1708
    %1710 = vmatmul.f32.gmra.mxu0 %v923
    %v1711 = vpop.f32.mrf.mxu0
    %v1712 = vadd.f32 %v443, %v1711
    %1713 = vmatmul.f32.gmra.mxu0 %v926
    %v1714 = vpop.f32.mrf.mxu0
    %v1715 = vadd.f32 %v443, %v1714
    %1716 = vmatmul.f32.gmra.mxu0 %v929
    %v1717 = vpop.f32.mrf.mxu0
    %v1718 = vadd.f32 %v443, %v1717
    %1719 = vmatmul.f32.gmra.mxu0 %v932
    %v1720 = vpop.f32.mrf.mxu0
    %v1721 = vadd.f32 %v443, %v1720
    %1722 = vmatmul.f32.gmra.mxu0 %v935
    %v1723 = vpop.f32.mrf.mxu0
    %v1724 = vadd.f32 %v443, %v1723
    %1725 = vmatmul.f32.gmra.mxu0 %v938
    %v1726 = vpop.f32.mrf.mxu0
    %v1727 = vadd.f32 %v443, %v1726
    %1728 = vmatmul.f32.gmra.mxu0 %v941
    %v1729 = vpop.f32.mrf.mxu0
    %v1730 = vadd.f32 %v443, %v1729
    %1731 = vmatmul.f32.gmra.mxu0 %v944
    %v1732 = vpop.f32.mrf.mxu0
    %v1733 = vadd.f32 %v443, %v1732
    %1734 = vmatmul.f32.gmra.mxu0 %v947
    %v1735 = vpop.f32.mrf.mxu0
    %v1736 = vadd.f32 %v443, %v1735
    %1737 = vmatmul.f32.gmra.mxu0 %v950
    %v1738 = vpop.f32.mrf.mxu0
    %v1739 = vadd.f32 %v443, %v1738
    %1740 = vmatmul.f32.gmra.mxu0 %v953
    %v1741 = vpop.f32.mrf.mxu0
    %v1742 = vadd.f32 %v443, %v1741
    %1743 = vmatmul.f32.gmra.mxu0 %v956
    %v1744 = vpop.f32.mrf.mxu0
    %v1745 = vadd.f32 %v443, %v1744
    %1746 = vmatmul.f32.gmra.mxu0 %v959
    %v1747 = vpop.f32.mrf.mxu0
    %v1748 = vadd.f32 %v443, %v1747
    %1749 = vmatmul.f32.gmra.mxu0 %v962
    %v1750 = vpop.f32.mrf.mxu0
    %v1751 = vadd.f32 %v443, %v1750
    %1752 = vmatmul.f32.gmra.mxu0 %v965
    %v1753 = vpop.f32.mrf.mxu0
    %v1754 = vadd.f32 %v443, %v1753
    %1755 = vmatmul.f32.gmra.mxu0 %v968
    %v1756 = vpop.f32.mrf.mxu0
    %v1757 = vadd.f32 %v443, %v1756
    %1758 = vmatmul.f32.gmra.mxu0 %v971
    %v1759 = vpop.f32.mrf.mxu0
    %v1760 = vadd.f32 %v443, %v1759
    %1761 = vmatmul.f32.gmra.mxu0 %v974
    %v1762 = vpop.f32.mrf.mxu0
    %v1763 = vadd.f32 %v443, %v1762
    %1764 = vmatmul.f32.gmra.mxu0 %v977
    %v1765 = vpop.f32.mrf.mxu0
    %v1766 = vadd.f32 %v443, %v1765
    %1767 = vmatmul.f32.gmra.mxu0 %v980
    %v1768 = vpop.f32.mrf.mxu0
    %v1769 = vadd.f32 %v443, %v1768
    %1770 = vmatmul.f32.gmra.mxu0 %v983
    %v1771 = vpop.f32.mrf.mxu0
    %v1772 = vadd.f32 %v443, %v1771
    %1773 = vmatmul.f32.gmra.mxu0 %v986
    %v1774 = vpop.f32.mrf.mxu0
    %v1775 = vadd.f32 %v443, %v1774
    %1776 = vmatmul.f32.gmra.mxu0 %v989
    %v1777 = vpop.f32.mrf.mxu0
    %v1778 = vadd.f32 %v443, %v1777
    %1779 = vmatmul.f32.gmra.mxu0 %v992
    %v1780 = vpop.f32.mrf.mxu0
    %v1781 = vadd.f32 %v443, %v1780
    %1782 = vmatmul.f32.gmra.mxu0 %v995
    %v1783 = vpop.f32.mrf.mxu0
    %v1784 = vadd.f32 %v443, %v1783
    %1785 = vmatmul.f32.gmra.mxu0 %v998
    %v1786 = vpop.f32.mrf.mxu0
    %v1787 = vadd.f32 %v443, %v1786
    %1788 = vmatmul.f32.gmra.mxu0 %v1001
    %v1789 = vpop.f32.mrf.mxu0
    %v1790 = vadd.f32 %v443, %v1789
    %1791 = vmatmul.f32.gmra.mxu0 %v1004
    %v1792 = vpop.f32.mrf.mxu0
    %v1793 = vadd.f32 %v443, %v1792
    %1794 = vmatmul.f32.gmra.mxu0 %v1007
    %v1795 = vpop.f32.mrf.mxu0
    %v1796 = vadd.f32 %v443, %v1795
    %1797 = vmatmul.f32.gmra.mxu0 %v1010
    %v1798 = vpop.f32.mrf.mxu0
    %v1799 = vadd.f32 %v443, %v1798
    %1800 = vmatmul.f32.gmra.mxu0 %v1013
    %v1801 = vpop.f32.mrf.mxu0
    %v1802 = vadd.f32 %v443, %v1801
    %1803 = vmatmul.f32.gmra.mxu0 %v1016
    %v1804 = vpop.f32.mrf.mxu0
    %v1805 = vadd.f32 %v443, %v1804
    %1806 = vmatmul.f32.gmra.mxu0 %v1019
    %v1807 = vpop.f32.mrf.mxu0
    %v1808 = vadd.f32 %v443, %v1807
    %1809 = vmatmul.f32.gmra.mxu0 %v1022
    %v1810 = vpop.f32.mrf.mxu0
    %v1811 = vadd.f32 %v443, %v1810
    %1812 = vmatmul.f32.gmra.mxu0 %v1025
    %v1813 = vpop.f32.mrf.mxu0
    %v1814 = vadd.f32 %v443, %v1813
    %1815 = vmatmul.f32.gmra.mxu0 %v1028
    %v1816 = vpop.f32.mrf.mxu0
    %v1817 = vadd.f32 %v443, %v1816
    %1818 = vmatmul.f32.gmra.mxu0 %v1031
    %v1819 = vpop.f32.mrf.mxu0
    %v1820 = vadd.f32 %v443, %v1819
    %1821 = vmatmul.f32.gmra.mxu0 %v1034
    %v1822 = vpop.f32.mrf.mxu0
    %v1823 = vadd.f32 %v443, %v1822
    %1824 = vmatmul.f32.gmra.mxu0 %v1037
    %v1825 = vpop.f32.mrf.mxu0
    %v1826 = vadd.f32 %v443, %v1825
    %1827 = vmatmul.f32.gmra.mxu0 %v1040
    %v1828 = vpop.f32.mrf.mxu0
    %v1829 = vadd.f32 %v443, %v1828
    %1830 = vmatmul.f32.gmra.mxu0 %v1043
    %v1831 = vpop.f32.mrf.mxu0
    %v1832 = vadd.f32 %v443, %v1831
    %1833 = vmatmul.f32.gmra.mxu0 %v1046
    %v1834 = vpop.f32.mrf.mxu0
    %v1835 = vadd.f32 %v443, %v1834
    %1836 = vmatmul.f32.gmra.mxu0 %v1049
    %v1837 = vpop.f32.mrf.mxu0
    %v1838 = vadd.f32 %v443, %v1837
    %1839 = vmatmul.f32.gmra.mxu0 %v1052
    %v1840 = vpop.f32.mrf.mxu0
    %v1841 = vadd.f32 %v443, %v1840
    %1842 = vmatmul.f32.gmra.mxu0 %v1055
    %v1843 = vpop.f32.mrf.mxu0
    %v1844 = vadd.f32 %v443, %v1843
    %1845 = vmatmul.f32.gmra.mxu0 %v1058
    %v1846 = vpop.f32.mrf.mxu0
    %v1847 = vadd.f32 %v443, %v1846
    %1848 = vmatmul.f32.gmra.mxu0 %v1061
    %v1849 = vpop.f32.mrf.mxu0
    %v1850 = vadd.f32 %v443, %v1849
    %1851 = vmatmul.f32.gmra.mxu0 %v1064
    %v1852 = vpop.f32.mrf.mxu0
    %v1853 = vadd.f32 %v443, %v1852
    %1854 = vmatmul.f32.gmra.mxu0 %v1067
    %v1855 = vpop.f32.mrf.mxu0
    %v1856 = vadd.f32 %v443, %v1855
    %1857 = vmatmul.f32.gmra.mxu0 %v1070
    %v1858 = vpop.f32.mrf.mxu0
    %v1859 = vadd.f32 %v443, %v1858
    %1860 = vmatmul.f32.gmra.mxu0 %v1073
    %v1861 = vpop.f32.mrf.mxu0
    %v1862 = vadd.f32 %v443, %v1861
    %1863 = vmatmul.f32.gmra.mxu0 %v1076
    %v1864 = vpop.f32.mrf.mxu0
    %v1865 = vadd.f32 %v443, %v1864
    %1866 = vmatmul.f32.gmra.mxu0 %v1079
    %v1867 = vpop.f32.mrf.mxu0
    %v1868 = vadd.f32 %v443, %v1867
    %1869 = vmatmul.f32.gmra.mxu0 %v1082
    %v1870 = vpop.f32.mrf.mxu0
    %v1871 = vadd.f32 %v443, %v1870
    %1872 = vmatmul.f32.gmra.mxu0 %v1085
    %v1873 = vpop.f32.mrf.mxu0
    %v1874 = vadd.f32 %v443, %v1873
    %1875 = vmatmul.f32.gmra.mxu0 %v1088
    %v1876 = vpop.f32.mrf.mxu0
    %v1877 = vadd.f32 %v443, %v1876
    %1878 = vmatmul.f32.gmra.mxu0 %v1091
    %v1879 = vpop.f32.mrf.mxu0
    %v1880 = vadd.f32 %v443, %v1879
    %1881 = vmatmul.f32.gmra.mxu0 %v1094
    %v1882 = vpop.f32.mrf.mxu0
    %v1883 = vadd.f32 %v443, %v1882
    %1884 = vmatmul.f32.gmra.mxu0 %v1097
    %v1885 = vpop.f32.mrf.mxu0
    %v1886 = vadd.f32 %v443, %v1885
    %1887 = vmatmul.f32.gmra.mxu0 %v1100
    %v1888 = vpop.f32.mrf.mxu0
    %v1889 = vadd.f32 %v443, %v1888
    %1890 = vmatmul.f32.gmra.mxu0 %v1103
    %v1891 = vpop.f32.mrf.mxu0
    %v1892 = vadd.f32 %v443, %v1891
    %1893 = vmatmul.f32.gmra.mxu0 %v1106
    %v1894 = vpop.f32.mrf.mxu0
    %v1895 = vadd.f32 %v443, %v1894
    %1896 = vmatmul.f32.gmra.mxu0 %v1109
    %v1897 = vpop.f32.mrf.mxu0
    %v1898 = vadd.f32 %v443, %v1897
    %1899 = vmatmul.f32.gmra.mxu0 %v1112
    %v1900 = vpop.f32.mrf.mxu0
    %v1901 = vadd.f32 %v443, %v1900
    %1902 = vmatmul.f32.gmra.mxu0 %v1115
    %v1903 = vpop.f32.mrf.mxu0
    %v1904 = vadd.f32 %v443, %v1903
    %1905 = vmatmul.f32.gmra.mxu0 %v1118
    %v1906 = vpop.f32.mrf.mxu0
    %v1907 = vadd.f32 %v443, %v1906
    %1908 = vmatmul.f32.gmra.mxu0 %v1121
    %v1909 = vpop.f32.mrf.mxu0
    %v1910 = vadd.f32 %v443, %v1909
    %1911 = vmatmul.f32.gmra.mxu0 %v1124
    %v1912 = vpop.f32.mrf.mxu0
    %v1913 = vadd.f32 %v443, %v1912
    %1914 = vmatmul.f32.gmra.mxu0 %v1127
    %v1915 = vpop.f32.mrf.mxu0
    %v1916 = vadd.f32 %v443, %v1915
    %1917 = vmatmul.f32.gmra.mxu0 %v1130
    %v1918 = vpop.f32.mrf.mxu0
    %v1919 = vadd.f32 %v443, %v1918
    %1920 = vmatmul.f32.gmra.mxu0 %v1133
    %v1921 = vpop.f32.mrf.mxu0
    %v1922 = vadd.f32 %v443, %v1921
    %1923 = vmatmul.f32.gmra.mxu0 %v1136
    %v1924 = vpop.f32.mrf.mxu0
    %v1925 = vadd.f32 %v443, %v1924
    %1926 = vmatmul.f32.gmra.mxu0 %v1139
    %v1927 = vpop.f32.mrf.mxu0
    %v1928 = vadd.f32 %v443, %v1927
    %1929 = vmatmul.f32.gmra.mxu0 %v1142
    %v1930 = vpop.f32.mrf.mxu0
    %v1931 = vadd.f32 %v443, %v1930
    %1932 = vmatmul.f32.gmra.mxu0 %v1145
    %v1933 = vpop.f32.mrf.mxu0
    %v1934 = vadd.f32 %v443, %v1933
    %1935 = vmatmul.f32.gmra.mxu0 %v1148
    %v1936 = vpop.f32.mrf.mxu0
    %v1937 = vadd.f32 %v443, %v1936
    %1938 = vmatmul.f32.gmra.mxu0 %v1151
    %v1939 = vpop.f32.mrf.mxu0
    %v1940 = vadd.f32 %v443, %v1939
    %1941 = vmatmul.f32.gmra.mxu0 %v1154
    %v1942 = vpop.f32.mrf.mxu0
    %v1943 = vadd.f32 %v443, %v1942
    %1944 = vmatmul.f32.gmra.mxu0 %v1157
    %v1945 = vpop.f32.mrf.mxu0
    %v1946 = vadd.f32 %v443, %v1945
    %1947 = vmatmul.f32.gmra.mxu0 %v1160
    %v1948 = vpop.f32.mrf.mxu0
    %v1949 = vadd.f32 %v443, %v1948
    %1950 = vmatmul.f32.gmra.mxu0 %v1163
    %v1951 = vpop.f32.mrf.mxu0
    %v1952 = vadd.f32 %v443, %v1951
    %1953 = vmatmul.f32.gmra.mxu0 %v1166
    %v1954 = vpop.f32.mrf.mxu0
    %v1955 = vadd.f32 %v443, %v1954
    %1956 = vmatmul.f32.gmra.mxu0 %v1169
    %v1957 = vpop.f32.mrf.mxu0
    %v1958 = vadd.f32 %v443, %v1957
    %1959 = vmatmul.f32.gmra.mxu0 %v1172
    %v1960 = vpop.f32.mrf.mxu0
    %v1961 = vadd.f32 %v443, %v1960
    %1962 = vmatmul.f32.gmra.mxu0 %v1175
    %v1963 = vpop.f32.mrf.mxu0
    %v1964 = vadd.f32 %v443, %v1963
    %1965 = vmatmul.f32.gmra.mxu0 %v1178
    %v1966 = vpop.f32.mrf.mxu0
    %v1967 = vadd.f32 %v443, %v1966
    %1968 = vmatmul.f32.gmra.mxu0 %v1181
    %v1969 = vpop.f32.mrf.mxu0
    %v1970 = vadd.f32 %v443, %v1969
    %1971 = vmatmul.f32.gmra.mxu0 %v1184
    %v1972 = vpop.f32.mrf.mxu0
    %v1973 = vadd.f32 %v443, %v1972
    %1974 = vmatmul.f32.gmra.mxu0 %v1187
    %v1975 = vpop.f32.mrf.mxu0
    %v1976 = vadd.f32 %v443, %v1975
    %1977 = vmatmul.f32.gmra.mxu0 %v1190
    %v1978 = vpop.f32.mrf.mxu0
    %v1979 = vadd.f32 %v443, %v1978
    %1980 = vmatmul.f32.gmra.mxu0 %v1193
    %v1981 = vpop.f32.mrf.mxu0
    %v1982 = vadd.f32 %v443, %v1981
    %1983 = vmatmul.f32.gmra.mxu0 %v1196
    %v1984 = vpop.f32.mrf.mxu0
    %v1985 = vadd.f32 %v443, %v1984
    %1986 = vmatmul.f32.gmra.mxu0 %v1199
    %v1987 = vpop.f32.mrf.mxu0
    %v1988 = vadd.f32 %v443, %v1987
    %1989 = vmatmul.f32.gmra.mxu0 %v1202
    %v1990 = vpop.f32.mrf.mxu0
    %v1991 = vadd.f32 %v443, %v1990
    %1992 = vmatmul.f32.gmra.mxu0 %v1205
    %v1993 = vpop.f32.mrf.mxu0
    %v1994 = vadd.f32 %v443, %v1993
    %1995 = vmatmul.f32.gmra.mxu0 %v1208
    %v1996 = vpop.f32.mrf.mxu0
    %v1997 = vadd.f32 %v443, %v1996
    %1998 = vmatmul.f32.gmra.mxu0 %v1211
    %v1999 = vpop.f32.mrf.mxu0
    %v2000 = vadd.f32 %v443, %v1999
    %2001 = vdwg.mxu0
    %v2002 = vsel %vm27, %v1235, 0.0
    %v2003 = vsel %vm27, %v1238, 0.0
    %v2004 = vadd.f32 %v2002, %v2003
    %v2005 = vsel %vm27, %v1241, 0.0
    %v2006 = vadd.f32 %v2004, %v2005
    %v2007 = vsel %vm27, %v1244, 0.0
    %v2008 = vadd.f32 %v2006, %v2007
    %v2009 = vsel %vm27, %v1247, 0.0
    %v2010 = vadd.f32 %v2008, %v2009
    %v2011 = vsel %vm27, %v1250, 0.0
    %v2012 = vadd.f32 %v2010, %v2011
    %v2013 = vsel %vm27, %v1253, 0.0
    %v2014 = vadd.f32 %v2012, %v2013
    %v2015 = vsel %vm27, %v1256, 0.0
    %v2016 = vadd.f32 %v2014, %v2015
    %v2017 = vsel %vm27, %v1259, 0.0
    %v2018 = vadd.f32 %v2016, %v2017
    %v2019 = vsel %vm27, %v1262, 0.0
    %v2020 = vadd.f32 %v2018, %v2019
    %v2021 = vsel %vm27, %v1265, 0.0
    %v2022 = vadd.f32 %v2020, %v2021
    %v2023 = vsel %vm27, %v1268, 0.0
    %v2024 = vadd.f32 %v2022, %v2023
    %v2025 = vsel %vm27, %v1271, 0.0
    %v2026 = vadd.f32 %v2024, %v2025
    %v2027 = vsel %vm27, %v1274, 0.0
    %v2028 = vadd.f32 %v2026, %v2027
    %v2029 = vsel %vm27, %v1277, 0.0
    %v2030 = vadd.f32 %v2028, %v2029
    %v2031 = vsel %vm27, %v1280, 0.0
    %v2032 = vadd.f32 %v2030, %v2031
    %v2033 = vsel %vm27, %v1283, 0.0
    %v2034 = vadd.f32 %v2032, %v2033
    %v2035 = vsel %vm27, %v1286, 0.0
    %v2036 = vadd.f32 %v2034, %v2035
    %v2037 = vsel %vm27, %v1289, 0.0
    %v2038 = vadd.f32 %v2036, %v2037
    %v2039 = vsel %vm27, %v1292, 0.0
    %v2040 = vadd.f32 %v2038, %v2039
    %v2041 = vsel %vm27, %v1295, 0.0
    %v2042 = vadd.f32 %v2040, %v2041
    %v2043 = vsel %vm27, %v1298, 0.0
    %v2044 = vadd.f32 %v2042, %v2043
    %v2045 = vsel %vm27, %v1301, 0.0
    %v2046 = vadd.f32 %v2044, %v2045
    %v2047 = vsel %vm27, %v1304, 0.0
    %v2048 = vadd.f32 %v2046, %v2047
    %v2049 = vsel %vm27, %v1307, 0.0
    %v2050 = vadd.f32 %v2048, %v2049
    %v2051 = vsel %vm27, %v1310, 0.0
    %v2052 = vadd.f32 %v2050, %v2051
    %v2053 = vsel %vm27, %v1313, 0.0
    %v2054 = vadd.f32 %v2052, %v2053
    %v2055 = vsel %vm27, %v1316, 0.0
    %v2056 = vadd.f32 %v2054, %v2055
    %v2057 = vsel %vm27, %v1319, 0.0
    %v2058 = vadd.f32 %v2056, %v2057
    %v2059 = vsel %vm27, %v1322, 0.0
    %v2060 = vadd.f32 %v2058, %v2059
    %v2061 = vsel %vm27, %v1325, 0.0
    %v2062 = vadd.f32 %v2060, %v2061
    %v2063 = vsel %vm27, %v1328, 0.0
    %v2064 = vadd.f32 %v2062, %v2063
    %v2065 = vsel %vm27, %v1331, 0.0
    %v2066 = vadd.f32 %v2064, %v2065
    %v2067 = vsel %vm27, %v1334, 0.0
    %v2068 = vadd.f32 %v2066, %v2067
    %v2069 = vsel %vm27, %v1337, 0.0
    %v2070 = vadd.f32 %v2068, %v2069
    %v2071 = vsel %vm27, %v1340, 0.0
    %v2072 = vadd.f32 %v2070, %v2071
    %v2073 = vsel %vm27, %v1343, 0.0
    %v2074 = vadd.f32 %v2072, %v2073
    %v2075 = vsel %vm27, %v1346, 0.0
    %v2076 = vadd.f32 %v2074, %v2075
    %v2077 = vsel %vm27, %v1349, 0.0
    %v2078 = vadd.f32 %v2076, %v2077
    %v2079 = vsel %vm27, %v1352, 0.0
    %v2080 = vadd.f32 %v2078, %v2079
    %v2081 = vsel %vm27, %v1355, 0.0
    %v2082 = vadd.f32 %v2080, %v2081
    %v2083 = vsel %vm27, %v1358, 0.0
    %v2084 = vadd.f32 %v2082, %v2083
    %v2085 = vsel %vm27, %v1361, 0.0
    %v2086 = vadd.f32 %v2084, %v2085
    %v2087 = vsel %vm27, %v1364, 0.0
    %v2088 = vadd.f32 %v2086, %v2087
    %v2089 = vsel %vm27, %v1367, 0.0
    %v2090 = vadd.f32 %v2088, %v2089
    %v2091 = vsel %vm27, %v1370, 0.0
    %v2092 = vadd.f32 %v2090, %v2091
    %v2093 = vsel %vm27, %v1373, 0.0
    %v2094 = vadd.f32 %v2092, %v2093
    %v2095 = vsel %vm27, %v1376, 0.0
    %v2096 = vadd.f32 %v2094, %v2095
    %v2097 = vsel %vm27, %v1379, 0.0
    %v2098 = vadd.f32 %v2096, %v2097
    %v2099 = vsel %vm27, %v1382, 0.0
    %v2100 = vadd.f32 %v2098, %v2099
    %v2101 = vsel %vm27, %v1385, 0.0
    %v2102 = vadd.f32 %v2100, %v2101
    %v2103 = vsel %vm27, %v1388, 0.0
    %v2104 = vadd.f32 %v2102, %v2103
    %v2105 = vsel %vm27, %v1391, 0.0
    %v2106 = vadd.f32 %v2104, %v2105
    %v2107 = vsel %vm27, %v1394, 0.0
    %v2108 = vadd.f32 %v2106, %v2107
    %v2109 = vsel %vm27, %v1397, 0.0
    %v2110 = vadd.f32 %v2108, %v2109
    %v2111 = vsel %vm27, %v1400, 0.0
    %v2112 = vadd.f32 %v2110, %v2111
    %v2113 = vsel %vm27, %v1403, 0.0
    %v2114 = vadd.f32 %v2112, %v2113
    %v2115 = vsel %vm27, %v1406, 0.0
    %v2116 = vadd.f32 %v2114, %v2115
    %v2117 = vsel %vm27, %v1409, 0.0
    %v2118 = vadd.f32 %v2116, %v2117
    %v2119 = vsel %vm27, %v1412, 0.0
    %v2120 = vadd.f32 %v2118, %v2119
    %v2121 = vsel %vm27, %v1415, 0.0
    %v2122 = vadd.f32 %v2120, %v2121
    %v2123 = vsel %vm27, %v1418, 0.0
    %v2124 = vadd.f32 %v2122, %v2123
    %v2125 = vsel %vm27, %v1421, 0.0
    %v2126 = vadd.f32 %v2124, %v2125
    %v2127 = vsel %vm27, %v1424, 0.0
    %v2128 = vadd.f32 %v2126, %v2127
    %v2129 = vsel %vm27, %v1427, 0.0
    %v2130 = vadd.f32 %v2128, %v2129
    %v2131 = vsel %vm27, %v1430, 0.0
    %v2132 = vadd.f32 %v2130, %v2131
    %v2133 = vsel %vm27, %v1433, 0.0
    %v2134 = vadd.f32 %v2132, %v2133
    %v2135 = vsel %vm27, %v1436, 0.0
    %v2136 = vadd.f32 %v2134, %v2135
    %v2137 = vsel %vm27, %v1439, 0.0
    %v2138 = vadd.f32 %v2136, %v2137
    %v2139 = vsel %vm27, %v1442, 0.0
    %v2140 = vadd.f32 %v2138, %v2139
    %v2141 = vsel %vm27, %v1445, 0.0
    %v2142 = vadd.f32 %v2140, %v2141
    %v2143 = vsel %vm27, %v1448, 0.0
    %v2144 = vadd.f32 %v2142, %v2143
    %v2145 = vsel %vm27, %v1451, 0.0
    %v2146 = vadd.f32 %v2144, %v2145
    %v2147 = vsel %vm27, %v1454, 0.0
    %v2148 = vadd.f32 %v2146, %v2147
    %v2149 = vsel %vm27, %v1457, 0.0
    %v2150 = vadd.f32 %v2148, %v2149
    %v2151 = vsel %vm27, %v1460, 0.0
    %v2152 = vadd.f32 %v2150, %v2151
    %v2153 = vsel %vm27, %v1463, 0.0
    %v2154 = vadd.f32 %v2152, %v2153
    %v2155 = vsel %vm27, %v1466, 0.0
    %v2156 = vadd.f32 %v2154, %v2155
    %v2157 = vsel %vm27, %v1469, 0.0
    %v2158 = vadd.f32 %v2156, %v2157
    %v2159 = vsel %vm27, %v1472, 0.0
    %v2160 = vadd.f32 %v2158, %v2159
    %v2161 = vsel %vm27, %v1475, 0.0
    %v2162 = vadd.f32 %v2160, %v2161
    %v2163 = vsel %vm27, %v1478, 0.0
    %v2164 = vadd.f32 %v2162, %v2163
    %v2165 = vsel %vm27, %v1481, 0.0
    %v2166 = vadd.f32 %v2164, %v2165
    %v2167 = vsel %vm27, %v1484, 0.0
    %v2168 = vadd.f32 %v2166, %v2167
    %v2169 = vsel %vm27, %v1487, 0.0
    %v2170 = vadd.f32 %v2168, %v2169
    %v2171 = vsel %vm27, %v1490, 0.0
    %v2172 = vadd.f32 %v2170, %v2171
    %v2173 = vsel %vm27, %v1493, 0.0
    %v2174 = vadd.f32 %v2172, %v2173
    %v2175 = vsel %vm27, %v1496, 0.0
    %v2176 = vadd.f32 %v2174, %v2175
    %v2177 = vsel %vm27, %v1499, 0.0
    %v2178 = vadd.f32 %v2176, %v2177
    %v2179 = vsel %vm27, %v1502, 0.0
    %v2180 = vadd.f32 %v2178, %v2179
    %v2181 = vsel %vm27, %v1505, 0.0
    %v2182 = vadd.f32 %v2180, %v2181
    %v2183 = vsel %vm27, %v1508, 0.0
    %v2184 = vadd.f32 %v2182, %v2183
    %v2185 = vsel %vm27, %v1511, 0.0
    %v2186 = vadd.f32 %v2184, %v2185
    %v2187 = vsel %vm27, %v1514, 0.0
    %v2188 = vadd.f32 %v2186, %v2187
    %v2189 = vsel %vm27, %v1517, 0.0
    %v2190 = vadd.f32 %v2188, %v2189
    %v2191 = vsel %vm27, %v1520, 0.0
    %v2192 = vadd.f32 %v2190, %v2191
    %v2193 = vsel %vm27, %v1523, 0.0
    %v2194 = vadd.f32 %v2192, %v2193
    %v2195 = vsel %vm27, %v1526, 0.0
    %v2196 = vadd.f32 %v2194, %v2195
    %v2197 = vsel %vm27, %v1529, 0.0
    %v2198 = vadd.f32 %v2196, %v2197
    %v2199 = vsel %vm27, %v1532, 0.0
    %v2200 = vadd.f32 %v2198, %v2199
    %v2201 = vsel %vm27, %v1535, 0.0
    %v2202 = vadd.f32 %v2200, %v2201
    %v2203 = vsel %vm27, %v1538, 0.0
    %v2204 = vadd.f32 %v2202, %v2203
    %v2205 = vsel %vm27, %v1541, 0.0
    %v2206 = vadd.f32 %v2204, %v2205
    %v2207 = vsel %vm27, %v1544, 0.0
    %v2208 = vadd.f32 %v2206, %v2207
    %v2209 = vsel %vm27, %v1547, 0.0
    %v2210 = vadd.f32 %v2208, %v2209
    %v2211 = vsel %vm27, %v1550, 0.0
    %v2212 = vadd.f32 %v2210, %v2211
    %v2213 = vsel %vm27, %v1553, 0.0
    %v2214 = vadd.f32 %v2212, %v2213
    %v2215 = vsel %vm27, %v1556, 0.0
    %v2216 = vadd.f32 %v2214, %v2215
    %v2217 = vsel %vm27, %v1559, 0.0
    %v2218 = vadd.f32 %v2216, %v2217
    %v2219 = vsel %vm27, %v1562, 0.0
    %v2220 = vadd.f32 %v2218, %v2219
    %v2221 = vsel %vm27, %v1565, 0.0
    %v2222 = vadd.f32 %v2220, %v2221
    %v2223 = vsel %vm27, %v1568, 0.0
    %v2224 = vadd.f32 %v2222, %v2223
    %v2225 = vsel %vm27, %v1571, 0.0
    %v2226 = vadd.f32 %v2224, %v2225
    %v2227 = vsel %vm27, %v1574, 0.0
    %v2228 = vadd.f32 %v2226, %v2227
    %v2229 = vsel %vm27, %v1577, 0.0
    %v2230 = vadd.f32 %v2228, %v2229
    %v2231 = vsel %vm27, %v1580, 0.0
    %v2232 = vadd.f32 %v2230, %v2231
    %v2233 = vsel %vm27, %v1583, 0.0
    %v2234 = vadd.f32 %v2232, %v2233
    %v2235 = vsel %vm27, %v1586, 0.0
    %v2236 = vadd.f32 %v2234, %v2235
    %v2237 = vsel %vm27, %v1589, 0.0
    %v2238 = vadd.f32 %v2236, %v2237
    %v2239 = vsel %vm27, %v1592, 0.0
    %v2240 = vadd.f32 %v2238, %v2239
    %v2241 = vsel %vm27, %v1595, 0.0
    %v2242 = vadd.f32 %v2240, %v2241
    %v2243 = vsel %vm27, %v1598, 0.0
    %v2244 = vadd.f32 %v2242, %v2243
    %v2245 = vsel %vm27, %v1601, 0.0
    %v2246 = vadd.f32 %v2244, %v2245
    %v2247 = vsel %vm27, %v1604, 0.0
    %v2248 = vadd.f32 %v2246, %v2247
    %v2249 = vsel %vm27, %v1607, 0.0
    %v2250 = vadd.f32 %v2248, %v2249
    %v2251 = vsel %vm27, %v1610, 0.0
    %v2252 = vadd.f32 %v2250, %v2251
    %v2253 = vsel %vm27, %v1613, 0.0
    %v2254 = vadd.f32 %v2252, %v2253
    %v2255 = vsel %vm27, %v1616, 0.0
    %v2256 = vadd.f32 %v2254, %v2255
    %v2257 = vsel %vm27, %v1619, 0.0
    %v2258 = vadd.f32 %v2256, %v2257
    %v2259 = vsel %vm27, %v1622, 0.0
    %v2260 = vadd.f32 %v2258, %v2259
    %v2261 = vsel %vm27, %v1625, 0.0
    %v2262 = vadd.f32 %v2260, %v2261
    %v2263 = vsel %vm27, %v1628, 0.0
    %v2264 = vadd.f32 %v2262, %v2263
    %v2265 = vsel %vm27, %v1631, 0.0
    %v2266 = vadd.f32 %v2264, %v2265
    %v2267 = vsel %vm27, %v1634, 0.0
    %v2268 = vadd.f32 %v2266, %v2267
    %v2269 = vsel %vm27, %v1637, 0.0
    %v2270 = vadd.f32 %v2268, %v2269
    %v2271 = vsel %vm27, %v1640, 0.0
    %v2272 = vadd.f32 %v2270, %v2271
    %v2273 = vsel %vm27, %v1643, 0.0
    %v2274 = vadd.f32 %v2272, %v2273
    %v2275 = vsel %vm27, %v1646, 0.0
    %v2276 = vadd.f32 %v2274, %v2275
    %v2277 = vsel %vm27, %v1649, 0.0
    %v2278 = vadd.f32 %v2276, %v2277
    %v2279 = vsel %vm27, %v1652, 0.0
    %v2280 = vadd.f32 %v2278, %v2279
    %v2281 = vsel %vm27, %v1655, 0.0
    %v2282 = vadd.f32 %v2280, %v2281
    %v2283 = vsel %vm27, %v1658, 0.0
    %v2284 = vadd.f32 %v2282, %v2283
    %v2285 = vsel %vm27, %v1661, 0.0
    %v2286 = vadd.f32 %v2284, %v2285
    %v2287 = vsel %vm27, %v1664, 0.0
    %v2288 = vadd.f32 %v2286, %v2287
    %v2289 = vsel %vm27, %v1667, 0.0
    %v2290 = vadd.f32 %v2288, %v2289
    %v2291 = vsel %vm27, %v1670, 0.0
    %v2292 = vadd.f32 %v2290, %v2291
    %v2293 = vsel %vm27, %v1673, 0.0
    %v2294 = vadd.f32 %v2292, %v2293
    %v2295 = vsel %vm27, %v1676, 0.0
    %v2296 = vadd.f32 %v2294, %v2295
    %v2297 = vsel %vm27, %v1679, 0.0
    %v2298 = vadd.f32 %v2296, %v2297
    %v2299 = vsel %vm27, %v1682, 0.0
    %v2300 = vadd.f32 %v2298, %v2299
    %v2301 = vsel %vm27, %v1685, 0.0
    %v2302 = vadd.f32 %v2300, %v2301
    %v2303 = vsel %vm27, %v1688, 0.0
    %v2304 = vadd.f32 %v2302, %v2303
    %v2305 = vsel %vm27, %v1691, 0.0
    %v2306 = vadd.f32 %v2304, %v2305
    %v2307 = vsel %vm27, %v1694, 0.0
    %v2308 = vadd.f32 %v2306, %v2307
    %v2309 = vsel %vm27, %v1697, 0.0
    %v2310 = vadd.f32 %v2308, %v2309
    %v2311 = vsel %vm27, %v1700, 0.0
    %v2312 = vadd.f32 %v2310, %v2311
    %v2313 = vsel %vm27, %v1703, 0.0
    %v2314 = vadd.f32 %v2312, %v2313
    %v2315 = vsel %vm27, %v1706, 0.0
    %v2316 = vadd.f32 %v2314, %v2315
    %v2317 = vsel %vm27, %v1709, 0.0
    %v2318 = vadd.f32 %v2316, %v2317
    %v2319 = vsel %vm27, %v1712, 0.0
    %v2320 = vadd.f32 %v2318, %v2319
    %v2321 = vsel %vm27, %v1715, 0.0
    %v2322 = vadd.f32 %v2320, %v2321
    %v2323 = vsel %vm27, %v1718, 0.0
    %v2324 = vadd.f32 %v2322, %v2323
    %v2325 = vsel %vm27, %v1721, 0.0
    %v2326 = vadd.f32 %v2324, %v2325
    %v2327 = vsel %vm27, %v1724, 0.0
    %v2328 = vadd.f32 %v2326, %v2327
    %v2329 = vsel %vm27, %v1727, 0.0
    %v2330 = vadd.f32 %v2328, %v2329
    %v2331 = vsel %vm27, %v1730, 0.0
    %v2332 = vadd.f32 %v2330, %v2331
    %v2333 = vsel %vm27, %v1733, 0.0
    %v2334 = vadd.f32 %v2332, %v2333
    %v2335 = vsel %vm27, %v1736, 0.0
    %v2336 = vadd.f32 %v2334, %v2335
    %v2337 = vsel %vm27, %v1739, 0.0
    %v2338 = vadd.f32 %v2336, %v2337
    %v2339 = vsel %vm27, %v1742, 0.0
    %v2340 = vadd.f32 %v2338, %v2339
    %v2341 = vsel %vm27, %v1745, 0.0
    %v2342 = vadd.f32 %v2340, %v2341
    %v2343 = vsel %vm27, %v1748, 0.0
    %v2344 = vadd.f32 %v2342, %v2343
    %v2345 = vsel %vm27, %v1751, 0.0
    %v2346 = vadd.f32 %v2344, %v2345
    %v2347 = vsel %vm27, %v1754, 0.0
    %v2348 = vadd.f32 %v2346, %v2347
    %v2349 = vsel %vm27, %v1757, 0.0
    %v2350 = vadd.f32 %v2348, %v2349
    %v2351 = vsel %vm27, %v1760, 0.0
    %v2352 = vadd.f32 %v2350, %v2351
    %v2353 = vsel %vm27, %v1763, 0.0
    %v2354 = vadd.f32 %v2352, %v2353
    %v2355 = vsel %vm27, %v1766, 0.0
    %v2356 = vadd.f32 %v2354, %v2355
    %v2357 = vsel %vm27, %v1769, 0.0
    %v2358 = vadd.f32 %v2356, %v2357
    %v2359 = vsel %vm27, %v1772, 0.0
    %v2360 = vadd.f32 %v2358, %v2359
    %v2361 = vsel %vm27, %v1775, 0.0
    %v2362 = vadd.f32 %v2360, %v2361
    %v2363 = vsel %vm27, %v1778, 0.0
    %v2364 = vadd.f32 %v2362, %v2363
    %v2365 = vsel %vm27, %v1781, 0.0
    %v2366 = vadd.f32 %v2364, %v2365
    %v2367 = vsel %vm27, %v1784, 0.0
    %v2368 = vadd.f32 %v2366, %v2367
    %v2369 = vsel %vm27, %v1787, 0.0
    %v2370 = vadd.f32 %v2368, %v2369
    %v2371 = vsel %vm27, %v1790, 0.0
    %v2372 = vadd.f32 %v2370, %v2371
    %v2373 = vsel %vm27, %v1793, 0.0
    %v2374 = vadd.f32 %v2372, %v2373
    %v2375 = vsel %vm27, %v1796, 0.0
    %v2376 = vadd.f32 %v2374, %v2375
    %v2377 = vsel %vm27, %v1799, 0.0
    %v2378 = vadd.f32 %v2376, %v2377
    %v2379 = vsel %vm27, %v1802, 0.0
    %v2380 = vadd.f32 %v2378, %v2379
    %v2381 = vsel %vm27, %v1805, 0.0
    %v2382 = vadd.f32 %v2380, %v2381
    %v2383 = vsel %vm27, %v1808, 0.0
    %v2384 = vadd.f32 %v2382, %v2383
    %v2385 = vsel %vm27, %v1811, 0.0
    %v2386 = vadd.f32 %v2384, %v2385
    %v2387 = vsel %vm27, %v1814, 0.0
    %v2388 = vadd.f32 %v2386, %v2387
    %v2389 = vsel %vm27, %v1817, 0.0
    %v2390 = vadd.f32 %v2388, %v2389
    %v2391 = vsel %vm27, %v1820, 0.0
    %v2392 = vadd.f32 %v2390, %v2391
    %v2393 = vsel %vm27, %v1823, 0.0
    %v2394 = vadd.f32 %v2392, %v2393
    %v2395 = vsel %vm27, %v1826, 0.0
    %v2396 = vadd.f32 %v2394, %v2395
    %v2397 = vsel %vm27, %v1829, 0.0
    %v2398 = vadd.f32 %v2396, %v2397
    %v2399 = vsel %vm27, %v1832, 0.0
    %v2400 = vadd.f32 %v2398, %v2399
    %v2401 = vsel %vm27, %v1835, 0.0
    %v2402 = vadd.f32 %v2400, %v2401
    %v2403 = vsel %vm27, %v1838, 0.0
    %v2404 = vadd.f32 %v2402, %v2403
    %v2405 = vsel %vm27, %v1841, 0.0
    %v2406 = vadd.f32 %v2404, %v2405
    %v2407 = vsel %vm27, %v1844, 0.0
    %v2408 = vadd.f32 %v2406, %v2407
    %v2409 = vsel %vm27, %v1847, 0.0
    %v2410 = vadd.f32 %v2408, %v2409
    %v2411 = vsel %vm27, %v1850, 0.0
    %v2412 = vadd.f32 %v2410, %v2411
    %v2413 = vsel %vm27, %v1853, 0.0
    %v2414 = vadd.f32 %v2412, %v2413
    %v2415 = vsel %vm27, %v1856, 0.0
    %v2416 = vadd.f32 %v2414, %v2415
    %v2417 = vsel %vm27, %v1859, 0.0
    %v2418 = vadd.f32 %v2416, %v2417
    %v2419 = vsel %vm27, %v1862, 0.0
    %v2420 = vadd.f32 %v2418, %v2419
    %v2421 = vsel %vm27, %v1865, 0.0
    %v2422 = vadd.f32 %v2420, %v2421
    %v2423 = vsel %vm27, %v1868, 0.0
    %v2424 = vadd.f32 %v2422, %v2423
    %v2425 = vsel %vm27, %v1871, 0.0
    %v2426 = vadd.f32 %v2424, %v2425
    %v2427 = vsel %vm27, %v1874, 0.0
    %v2428 = vadd.f32 %v2426, %v2427
    %v2429 = vsel %vm27, %v1877, 0.0
    %v2430 = vadd.f32 %v2428, %v2429
    %v2431 = vsel %vm27, %v1880, 0.0
    %v2432 = vadd.f32 %v2430, %v2431
    %v2433 = vsel %vm27, %v1883, 0.0
    %v2434 = vadd.f32 %v2432, %v2433
    %v2435 = vsel %vm27, %v1886, 0.0
    %v2436 = vadd.f32 %v2434, %v2435
    %v2437 = vsel %vm27, %v1889, 0.0
    %v2438 = vadd.f32 %v2436, %v2437
    %v2439 = vsel %vm27, %v1892, 0.0
    %v2440 = vadd.f32 %v2438, %v2439
    %v2441 = vsel %vm27, %v1895, 0.0
    %v2442 = vadd.f32 %v2440, %v2441
    %v2443 = vsel %vm27, %v1898, 0.0
    %v2444 = vadd.f32 %v2442, %v2443
    %v2445 = vsel %vm27, %v1901, 0.0
    %v2446 = vadd.f32 %v2444, %v2445
    %v2447 = vsel %vm27, %v1904, 0.0
    %v2448 = vadd.f32 %v2446, %v2447
    %v2449 = vsel %vm27, %v1907, 0.0
    %v2450 = vadd.f32 %v2448, %v2449
    %v2451 = vsel %vm27, %v1910, 0.0
    %v2452 = vadd.f32 %v2450, %v2451
    %v2453 = vsel %vm27, %v1913, 0.0
    %v2454 = vadd.f32 %v2452, %v2453
    %v2455 = vsel %vm27, %v1916, 0.0
    %v2456 = vadd.f32 %v2454, %v2455
    %v2457 = vsel %vm27, %v1919, 0.0
    %v2458 = vadd.f32 %v2456, %v2457
    %v2459 = vsel %vm27, %v1922, 0.0
    %v2460 = vadd.f32 %v2458, %v2459
    %v2461 = vsel %vm27, %v1925, 0.0
    %v2462 = vadd.f32 %v2460, %v2461
    %v2463 = vsel %vm27, %v1928, 0.0
    %v2464 = vadd.f32 %v2462, %v2463
    %v2465 = vsel %vm27, %v1931, 0.0
    %v2466 = vadd.f32 %v2464, %v2465
    %v2467 = vsel %vm27, %v1934, 0.0
    %v2468 = vadd.f32 %v2466, %v2467
    %v2469 = vsel %vm27, %v1937, 0.0
    %v2470 = vadd.f32 %v2468, %v2469
    %v2471 = vsel %vm27, %v1940, 0.0
    %v2472 = vadd.f32 %v2470, %v2471
    %v2473 = vsel %vm27, %v1943, 0.0
    %v2474 = vadd.f32 %v2472, %v2473
    %v2475 = vsel %vm27, %v1946, 0.0
    %v2476 = vadd.f32 %v2474, %v2475
    %v2477 = vsel %vm27, %v1949, 0.0
    %v2478 = vadd.f32 %v2476, %v2477
    %v2479 = vsel %vm27, %v1952, 0.0
    %v2480 = vadd.f32 %v2478, %v2479
    %v2481 = vsel %vm27, %v1955, 0.0
    %v2482 = vadd.f32 %v2480, %v2481
    %v2483 = vsel %vm27, %v1958, 0.0
    %v2484 = vadd.f32 %v2482, %v2483
    %v2485 = vsel %vm27, %v1961, 0.0
    %v2486 = vadd.f32 %v2484, %v2485
    %v2487 = vsel %vm27, %v1964, 0.0
    %v2488 = vadd.f32 %v2486, %v2487
    %v2489 = vsel %vm27, %v1967, 0.0
    %v2490 = vadd.f32 %v2488, %v2489
    %v2491 = vsel %vm27, %v1970, 0.0
    %v2492 = vadd.f32 %v2490, %v2491
    %v2493 = vsel %vm27, %v1973, 0.0
    %v2494 = vadd.f32 %v2492, %v2493
    %v2495 = vsel %vm27, %v1976, 0.0
    %v2496 = vadd.f32 %v2494, %v2495
    %v2497 = vsel %vm27, %v1979, 0.0
    %v2498 = vadd.f32 %v2496, %v2497
    %v2499 = vsel %vm27, %v1982, 0.0
    %v2500 = vadd.f32 %v2498, %v2499
    %v2501 = vsel %vm27, %v1985, 0.0
    %v2502 = vadd.f32 %v2500, %v2501
    %v2503 = vsel %vm27, %v1988, 0.0
    %v2504 = vadd.f32 %v2502, %v2503
    %v2505 = vsel %vm27, %v1991, 0.0
    %v2506 = vadd.f32 %v2504, %v2505
    %v2507 = vsel %vm27, %v1994, 0.0
    %v2508 = vadd.f32 %v2506, %v2507
    %v2509 = vsel %vm27, %v1997, 0.0
    %v2510 = vadd.f32 %v2508, %v2509
    %v2511 = vsel %vm27, %v2000, 0.0
    %v2512 = vadd.f32 %v2510, %v2511
    %v2513 = vrot.slane %v2512, 4
    %v2514 = vadd.f32 %v2512, %v2513
    %v2515 = vrot.slane %v2514, 2
    %v2516 = vadd.f32 %v2514, %v2515
    %v2517 = vrot.slane %v2516, 1
    %v2518 = vadd.f32 %v2516, %v2517
    %v2519 = vmul.f32 %v1235, %v1235
    %v2520 = vmul.f32 %v1238, %v1238
    %v2521 = vmul.f32 %v1241, %v1241
    %v2522 = vmul.f32 %v1244, %v1244
    %v2523 = vmul.f32 %v1247, %v1247
    %v2524 = vmul.f32 %v1250, %v1250
    %v2525 = vmul.f32 %v1253, %v1253
    %v2526 = vmul.f32 %v1256, %v1256
    %v2527 = vmul.f32 %v1259, %v1259
    %v2528 = vmul.f32 %v1262, %v1262
    %v2529 = vmul.f32 %v1265, %v1265
    %v2530 = vmul.f32 %v1268, %v1268
    %v2531 = vmul.f32 %v1271, %v1271
    %v2532 = vmul.f32 %v1274, %v1274
    %v2533 = vmul.f32 %v1277, %v1277
    %v2534 = vmul.f32 %v1280, %v1280
    %v2535 = vmul.f32 %v1283, %v1283
    %v2536 = vmul.f32 %v1286, %v1286
    %v2537 = vmul.f32 %v1289, %v1289
    %v2538 = vmul.f32 %v1292, %v1292
    %v2539 = vmul.f32 %v1295, %v1295
    %v2540 = vmul.f32 %v1298, %v1298
    %v2541 = vmul.f32 %v1301, %v1301
    %v2542 = vmul.f32 %v1304, %v1304
    %v2543 = vmul.f32 %v1307, %v1307
    %v2544 = vmul.f32 %v1310, %v1310
    %v2545 = vmul.f32 %v1313, %v1313
    %v2546 = vmul.f32 %v1316, %v1316
    %v2547 = vmul.f32 %v1319, %v1319
    %v2548 = vmul.f32 %v1322, %v1322
    %v2549 = vmul.f32 %v1325, %v1325
    %v2550 = vmul.f32 %v1328, %v1328
    %v2551 = vmul.f32 %v1331, %v1331
    %v2552 = vmul.f32 %v1334, %v1334
    %v2553 = vmul.f32 %v1337, %v1337
    %v2554 = vmul.f32 %v1340, %v1340
    %v2555 = vmul.f32 %v1343, %v1343
    %v2556 = vmul.f32 %v1346, %v1346
    %v2557 = vmul.f32 %v1349, %v1349
    %v2558 = vmul.f32 %v1352, %v1352
    %v2559 = vmul.f32 %v1355, %v1355
    %v2560 = vmul.f32 %v1358, %v1358
    %v2561 = vmul.f32 %v1361, %v1361
    %v2562 = vmul.f32 %v1364, %v1364
    %v2563 = vmul.f32 %v1367, %v1367
    %v2564 = vmul.f32 %v1370, %v1370
    %v2565 = vmul.f32 %v1373, %v1373
    %v2566 = vmul.f32 %v1376, %v1376
    %v2567 = vmul.f32 %v1379, %v1379
    %v2568 = vmul.f32 %v1382, %v1382
    %v2569 = vmul.f32 %v1385, %v1385
    %v2570 = vmul.f32 %v1388, %v1388
    %v2571 = vmul.f32 %v1391, %v1391
    %v2572 = vmul.f32 %v1394, %v1394
    %v2573 = vmul.f32 %v1397, %v1397
    %v2574 = vmul.f32 %v1400, %v1400
    %v2575 = vmul.f32 %v1403, %v1403
    %v2576 = vmul.f32 %v1406, %v1406
    %v2577 = vmul.f32 %v1409, %v1409
    %v2578 = vmul.f32 %v1412, %v1412
    %v2579 = vmul.f32 %v1415, %v1415
    %v2580 = vmul.f32 %v1418, %v1418
    %v2581 = vmul.f32 %v1421, %v1421
    %v2582 = vmul.f32 %v1424, %v1424
    %v2583 = vmul.f32 %v1427, %v1427
    %v2584 = vmul.f32 %v1430, %v1430
    %v2585 = vmul.f32 %v1433, %v1433
    %v2586 = vmul.f32 %v1436, %v1436
    %v2587 = vmul.f32 %v1439, %v1439
    %v2588 = vmul.f32 %v1442, %v1442
    %v2589 = vmul.f32 %v1445, %v1445
    %v2590 = vmul.f32 %v1448, %v1448
    %v2591 = vmul.f32 %v1451, %v1451
    %v2592 = vmul.f32 %v1454, %v1454
    %v2593 = vmul.f32 %v1457, %v1457
    %v2594 = vmul.f32 %v1460, %v1460
    %v2595 = vmul.f32 %v1463, %v1463
    %v2596 = vmul.f32 %v1466, %v1466
    %v2597 = vmul.f32 %v1469, %v1469
    %v2598 = vmul.f32 %v1472, %v1472
    %v2599 = vmul.f32 %v1475, %v1475
    %v2600 = vmul.f32 %v1478, %v1478
    %v2601 = vmul.f32 %v1481, %v1481
    %v2602 = vmul.f32 %v1484, %v1484
    %v2603 = vmul.f32 %v1487, %v1487
    %v2604 = vmul.f32 %v1490, %v1490
    %v2605 = vmul.f32 %v1493, %v1493
    %v2606 = vmul.f32 %v1496, %v1496
    %v2607 = vmul.f32 %v1499, %v1499
    %v2608 = vmul.f32 %v1502, %v1502
    %v2609 = vmul.f32 %v1505, %v1505
    %v2610 = vmul.f32 %v1508, %v1508
    %v2611 = vmul.f32 %v1511, %v1511
    %v2612 = vmul.f32 %v1514, %v1514
    %v2613 = vmul.f32 %v1517, %v1517
    %v2614 = vmul.f32 %v1520, %v1520
    %v2615 = vmul.f32 %v1523, %v1523
    %v2616 = vmul.f32 %v1526, %v1526
    %v2617 = vmul.f32 %v1529, %v1529
    %v2618 = vmul.f32 %v1532, %v1532
    %v2619 = vmul.f32 %v1535, %v1535
    %v2620 = vmul.f32 %v1538, %v1538
    %v2621 = vmul.f32 %v1541, %v1541
    %v2622 = vmul.f32 %v1544, %v1544
    %v2623 = vmul.f32 %v1547, %v1547
    %v2624 = vmul.f32 %v1550, %v1550
    %v2625 = vmul.f32 %v1553, %v1553
    %v2626 = vmul.f32 %v1556, %v1556
    %v2627 = vmul.f32 %v1559, %v1559
    %v2628 = vmul.f32 %v1562, %v1562
    %v2629 = vmul.f32 %v1565, %v1565
    %v2630 = vmul.f32 %v1568, %v1568
    %v2631 = vmul.f32 %v1571, %v1571
    %v2632 = vmul.f32 %v1574, %v1574
    %v2633 = vmul.f32 %v1577, %v1577
    %v2634 = vmul.f32 %v1580, %v1580
    %v2635 = vmul.f32 %v1583, %v1583
    %v2636 = vmul.f32 %v1586, %v1586
    %v2637 = vmul.f32 %v1589, %v1589
    %v2638 = vmul.f32 %v1592, %v1592
    %v2639 = vmul.f32 %v1595, %v1595
    %v2640 = vmul.f32 %v1598, %v1598
    %v2641 = vmul.f32 %v1601, %v1601
    %v2642 = vmul.f32 %v1604, %v1604
    %v2643 = vmul.f32 %v1607, %v1607
    %v2644 = vmul.f32 %v1610, %v1610
    %v2645 = vmul.f32 %v1613, %v1613
    %v2646 = vmul.f32 %v1616, %v1616
    %v2647 = vmul.f32 %v1619, %v1619
    %v2648 = vmul.f32 %v1622, %v1622
    %v2649 = vmul.f32 %v1625, %v1625
    %v2650 = vmul.f32 %v1628, %v1628
    %v2651 = vmul.f32 %v1631, %v1631
    %v2652 = vmul.f32 %v1634, %v1634
    %v2653 = vmul.f32 %v1637, %v1637
    %v2654 = vmul.f32 %v1640, %v1640
    %v2655 = vmul.f32 %v1643, %v1643
    %v2656 = vmul.f32 %v1646, %v1646
    %v2657 = vmul.f32 %v1649, %v1649
    %v2658 = vmul.f32 %v1652, %v1652
    %v2659 = vmul.f32 %v1655, %v1655
    %v2660 = vmul.f32 %v1658, %v1658
    %v2661 = vmul.f32 %v1661, %v1661
    %v2662 = vmul.f32 %v1664, %v1664
    %v2663 = vmul.f32 %v1667, %v1667
    %v2664 = vmul.f32 %v1670, %v1670
    %v2665 = vmul.f32 %v1673, %v1673
    %v2666 = vmul.f32 %v1676, %v1676
    %v2667 = vmul.f32 %v1679, %v1679
    %v2668 = vmul.f32 %v1682, %v1682
    %v2669 = vmul.f32 %v1685, %v1685
    %v2670 = vmul.f32 %v1688, %v1688
    %v2671 = vmul.f32 %v1691, %v1691
    %v2672 = vmul.f32 %v1694, %v1694
    %v2673 = vmul.f32 %v1697, %v1697
    %v2674 = vmul.f32 %v1700, %v1700
    %v2675 = vmul.f32 %v1703, %v1703
    %v2676 = vmul.f32 %v1706, %v1706
    %v2677 = vmul.f32 %v1709, %v1709
    %v2678 = vmul.f32 %v1712, %v1712
    %v2679 = vmul.f32 %v1715, %v1715
    %v2680 = vmul.f32 %v1718, %v1718
    %v2681 = vmul.f32 %v1721, %v1721
    %v2682 = vmul.f32 %v1724, %v1724
    %v2683 = vmul.f32 %v1727, %v1727
    %v2684 = vmul.f32 %v1730, %v1730
    %v2685 = vmul.f32 %v1733, %v1733
    %v2686 = vmul.f32 %v1736, %v1736
    %v2687 = vmul.f32 %v1739, %v1739
    %v2688 = vmul.f32 %v1742, %v1742
    %v2689 = vmul.f32 %v1745, %v1745
    %v2690 = vmul.f32 %v1748, %v1748
    %v2691 = vmul.f32 %v1751, %v1751
    %v2692 = vmul.f32 %v1754, %v1754
    %v2693 = vmul.f32 %v1757, %v1757
    %v2694 = vmul.f32 %v1760, %v1760
    %v2695 = vmul.f32 %v1763, %v1763
    %v2696 = vmul.f32 %v1766, %v1766
    %v2697 = vmul.f32 %v1769, %v1769
    %v2698 = vmul.f32 %v1772, %v1772
    %v2699 = vmul.f32 %v1775, %v1775
    %v2700 = vmul.f32 %v1778, %v1778
    %v2701 = vmul.f32 %v1781, %v1781
    %v2702 = vmul.f32 %v1784, %v1784
    %v2703 = vmul.f32 %v1787, %v1787
    %v2704 = vmul.f32 %v1790, %v1790
    %v2705 = vmul.f32 %v1793, %v1793
    %v2706 = vmul.f32 %v1796, %v1796
    %v2707 = vmul.f32 %v1799, %v1799
    %v2708 = vmul.f32 %v1802, %v1802
    %v2709 = vmul.f32 %v1805, %v1805
    %v2710 = vmul.f32 %v1808, %v1808
    %v2711 = vmul.f32 %v1811, %v1811
    %v2712 = vmul.f32 %v1814, %v1814
    %v2713 = vmul.f32 %v1817, %v1817
    %v2714 = vmul.f32 %v1820, %v1820
    %v2715 = vmul.f32 %v1823, %v1823
    %v2716 = vmul.f32 %v1826, %v1826
    %v2717 = vmul.f32 %v1829, %v1829
    %v2718 = vmul.f32 %v1832, %v1832
    %v2719 = vmul.f32 %v1835, %v1835
    %v2720 = vmul.f32 %v1838, %v1838
    %v2721 = vmul.f32 %v1841, %v1841
    %v2722 = vmul.f32 %v1844, %v1844
    %v2723 = vmul.f32 %v1847, %v1847
    %v2724 = vmul.f32 %v1850, %v1850
    %v2725 = vmul.f32 %v1853, %v1853
    %v2726 = vmul.f32 %v1856, %v1856
    %v2727 = vmul.f32 %v1859, %v1859
    %v2728 = vmul.f32 %v1862, %v1862
    %v2729 = vmul.f32 %v1865, %v1865
    %v2730 = vmul.f32 %v1868, %v1868
    %v2731 = vmul.f32 %v1871, %v1871
    %v2732 = vmul.f32 %v1874, %v1874
    %v2733 = vmul.f32 %v1877, %v1877
    %v2734 = vmul.f32 %v1880, %v1880
    %v2735 = vmul.f32 %v1883, %v1883
    %v2736 = vmul.f32 %v1886, %v1886
    %v2737 = vmul.f32 %v1889, %v1889
    %v2738 = vmul.f32 %v1892, %v1892
    %v2739 = vmul.f32 %v1895, %v1895
    %v2740 = vmul.f32 %v1898, %v1898
    %v2741 = vmul.f32 %v1901, %v1901
    %v2742 = vmul.f32 %v1904, %v1904
    %v2743 = vmul.f32 %v1907, %v1907
    %v2744 = vmul.f32 %v1910, %v1910
    %v2745 = vmul.f32 %v1913, %v1913
    %v2746 = vmul.f32 %v1916, %v1916
    %v2747 = vmul.f32 %v1919, %v1919
    %v2748 = vmul.f32 %v1922, %v1922
    %v2749 = vmul.f32 %v1925, %v1925
    %v2750 = vmul.f32 %v1928, %v1928
    %v2751 = vmul.f32 %v1931, %v1931
    %v2752 = vmul.f32 %v1934, %v1934
    %v2753 = vmul.f32 %v1937, %v1937
    %v2754 = vmul.f32 %v1940, %v1940
    %v2755 = vmul.f32 %v1943, %v1943
    %v2756 = vmul.f32 %v1946, %v1946
    %v2757 = vmul.f32 %v1949, %v1949
    %v2758 = vmul.f32 %v1952, %v1952
    %v2759 = vmul.f32 %v1955, %v1955
    %v2760 = vmul.f32 %v1958, %v1958
    %v2761 = vmul.f32 %v1961, %v1961
    %v2762 = vmul.f32 %v1964, %v1964
    %v2763 = vmul.f32 %v1967, %v1967
    %v2764 = vmul.f32 %v1970, %v1970
    %v2765 = vmul.f32 %v1973, %v1973
    %v2766 = vmul.f32 %v1976, %v1976
    %v2767 = vmul.f32 %v1979, %v1979
    %v2768 = vmul.f32 %v1982, %v1982
    %v2769 = vmul.f32 %v1985, %v1985
    %v2770 = vmul.f32 %v1988, %v1988
    %v2771 = vmul.f32 %v1991, %v1991
    %v2772 = vmul.f32 %v1994, %v1994
    %v2773 = vmul.f32 %v1997, %v1997
    %v2774 = vmul.f32 %v2000, %v2000
    %v2775 = vsel %vm27, %v2519, 0.0
    %v2776 = vsel %vm27, %v2520, 0.0
    %v2777 = vadd.f32 %v2775, %v2776
    %v2778 = vsel %vm27, %v2521, 0.0
    %v2779 = vadd.f32 %v2777, %v2778
    %v2780 = vsel %vm27, %v2522, 0.0
    %v2781 = vadd.f32 %v2779, %v2780
    %v2782 = vsel %vm27, %v2523, 0.0
    %v2783 = vadd.f32 %v2781, %v2782
    %v2784 = vsel %vm27, %v2524, 0.0
    %v2785 = vadd.f32 %v2783, %v2784
    %v2786 = vsel %vm27, %v2525, 0.0
    %v2787 = vadd.f32 %v2785, %v2786
    %v2788 = vsel %vm27, %v2526, 0.0
    %v2789 = vadd.f32 %v2787, %v2788
    %v2790 = vsel %vm27, %v2527, 0.0
    %v2791 = vadd.f32 %v2789, %v2790
    %v2792 = vsel %vm27, %v2528, 0.0
    %v2793 = vadd.f32 %v2791, %v2792
    %v2794 = vsel %vm27, %v2529, 0.0
    %v2795 = vadd.f32 %v2793, %v2794
    %v2796 = vsel %vm27, %v2530, 0.0
    %v2797 = vadd.f32 %v2795, %v2796
    %v2798 = vsel %vm27, %v2531, 0.0
    %v2799 = vadd.f32 %v2797, %v2798
    %v2800 = vsel %vm27, %v2532, 0.0
    %v2801 = vadd.f32 %v2799, %v2800
    %v2802 = vsel %vm27, %v2533, 0.0
    %v2803 = vadd.f32 %v2801, %v2802
    %v2804 = vsel %vm27, %v2534, 0.0
    %v2805 = vadd.f32 %v2803, %v2804
    %v2806 = vsel %vm27, %v2535, 0.0
    %v2807 = vadd.f32 %v2805, %v2806
    %v2808 = vsel %vm27, %v2536, 0.0
    %v2809 = vadd.f32 %v2807, %v2808
    %v2810 = vsel %vm27, %v2537, 0.0
    %v2811 = vadd.f32 %v2809, %v2810
    %v2812 = vsel %vm27, %v2538, 0.0
    %v2813 = vadd.f32 %v2811, %v2812
    %v2814 = vsel %vm27, %v2539, 0.0
    %v2815 = vadd.f32 %v2813, %v2814
    %v2816 = vsel %vm27, %v2540, 0.0
    %v2817 = vadd.f32 %v2815, %v2816
    %v2818 = vsel %vm27, %v2541, 0.0
    %v2819 = vadd.f32 %v2817, %v2818
    %v2820 = vsel %vm27, %v2542, 0.0
    %v2821 = vadd.f32 %v2819, %v2820
    %v2822 = vsel %vm27, %v2543, 0.0
    %v2823 = vadd.f32 %v2821, %v2822
    %v2824 = vsel %vm27, %v2544, 0.0
    %v2825 = vadd.f32 %v2823, %v2824
    %v2826 = vsel %vm27, %v2545, 0.0
    %v2827 = vadd.f32 %v2825, %v2826
    %v2828 = vsel %vm27, %v2546, 0.0
    %v2829 = vadd.f32 %v2827, %v2828
    %v2830 = vsel %vm27, %v2547, 0.0
    %v2831 = vadd.f32 %v2829, %v2830
    %v2832 = vsel %vm27, %v2548, 0.0
    %v2833 = vadd.f32 %v2831, %v2832
    %v2834 = vsel %vm27, %v2549, 0.0
    %v2835 = vadd.f32 %v2833, %v2834
    %v2836 = vsel %vm27, %v2550, 0.0
    %v2837 = vadd.f32 %v2835, %v2836
    %v2838 = vsel %vm27, %v2551, 0.0
    %v2839 = vadd.f32 %v2837, %v2838
    %v2840 = vsel %vm27, %v2552, 0.0
    %v2841 = vadd.f32 %v2839, %v2840
    %v2842 = vsel %vm27, %v2553, 0.0
    %v2843 = vadd.f32 %v2841, %v2842
    %v2844 = vsel %vm27, %v2554, 0.0
    %v2845 = vadd.f32 %v2843, %v2844
    %v2846 = vsel %vm27, %v2555, 0.0
    %v2847 = vadd.f32 %v2845, %v2846
    %v2848 = vsel %vm27, %v2556, 0.0
    %v2849 = vadd.f32 %v2847, %v2848
    %v2850 = vsel %vm27, %v2557, 0.0
    %v2851 = vadd.f32 %v2849, %v2850
    %v2852 = vsel %vm27, %v2558, 0.0
    %v2853 = vadd.f32 %v2851, %v2852
    %v2854 = vsel %vm27, %v2559, 0.0
    %v2855 = vadd.f32 %v2853, %v2854
    %v2856 = vsel %vm27, %v2560, 0.0
    %v2857 = vadd.f32 %v2855, %v2856
    %v2858 = vsel %vm27, %v2561, 0.0
    %v2859 = vadd.f32 %v2857, %v2858
    %v2860 = vsel %vm27, %v2562, 0.0
    %v2861 = vadd.f32 %v2859, %v2860
    %v2862 = vsel %vm27, %v2563, 0.0
    %v2863 = vadd.f32 %v2861, %v2862
    %v2864 = vsel %vm27, %v2564, 0.0
    %v2865 = vadd.f32 %v2863, %v2864
    %v2866 = vsel %vm27, %v2565, 0.0
    %v2867 = vadd.f32 %v2865, %v2866
    %v2868 = vsel %vm27, %v2566, 0.0
    %v2869 = vadd.f32 %v2867, %v2868
    %v2870 = vsel %vm27, %v2567, 0.0
    %v2871 = vadd.f32 %v2869, %v2870
    %v2872 = vsel %vm27, %v2568, 0.0
    %v2873 = vadd.f32 %v2871, %v2872
    %v2874 = vsel %vm27, %v2569, 0.0
    %v2875 = vadd.f32 %v2873, %v2874
    %v2876 = vsel %vm27, %v2570, 0.0
    %v2877 = vadd.f32 %v2875, %v2876
    %v2878 = vsel %vm27, %v2571, 0.0
    %v2879 = vadd.f32 %v2877, %v2878
    %v2880 = vsel %vm27, %v2572, 0.0
    %v2881 = vadd.f32 %v2879, %v2880
    %v2882 = vsel %vm27, %v2573, 0.0
    %v2883 = vadd.f32 %v2881, %v2882
    %v2884 = vsel %vm27, %v2574, 0.0
    %v2885 = vadd.f32 %v2883, %v2884
    %v2886 = vsel %vm27, %v2575, 0.0
    %v2887 = vadd.f32 %v2885, %v2886
    %v2888 = vsel %vm27, %v2576, 0.0
    %v2889 = vadd.f32 %v2887, %v2888
    %v2890 = vsel %vm27, %v2577, 0.0
    %v2891 = vadd.f32 %v2889, %v2890
    %v2892 = vsel %vm27, %v2578, 0.0
    %v2893 = vadd.f32 %v2891, %v2892
    %v2894 = vsel %vm27, %v2579, 0.0
    %v2895 = vadd.f32 %v2893, %v2894
    %v2896 = vsel %vm27, %v2580, 0.0
    %v2897 = vadd.f32 %v2895, %v2896
    %v2898 = vsel %vm27, %v2581, 0.0
    %v2899 = vadd.f32 %v2897, %v2898
    %v2900 = vsel %vm27, %v2582, 0.0
    %v2901 = vadd.f32 %v2899, %v2900
    %v2902 = vsel %vm27, %v2583, 0.0
    %v2903 = vadd.f32 %v2901, %v2902
    %v2904 = vsel %vm27, %v2584, 0.0
    %v2905 = vadd.f32 %v2903, %v2904
    %v2906 = vsel %vm27, %v2585, 0.0
    %v2907 = vadd.f32 %v2905, %v2906
    %v2908 = vsel %vm27, %v2586, 0.0
    %v2909 = vadd.f32 %v2907, %v2908
    %v2910 = vsel %vm27, %v2587, 0.0
    %v2911 = vadd.f32 %v2909, %v2910
    %v2912 = vsel %vm27, %v2588, 0.0
    %v2913 = vadd.f32 %v2911, %v2912
    %v2914 = vsel %vm27, %v2589, 0.0
    %v2915 = vadd.f32 %v2913, %v2914
    %v2916 = vsel %vm27, %v2590, 0.0
    %v2917 = vadd.f32 %v2915, %v2916
    %v2918 = vsel %vm27, %v2591, 0.0
    %v2919 = vadd.f32 %v2917, %v2918
    %v2920 = vsel %vm27, %v2592, 0.0
    %v2921 = vadd.f32 %v2919, %v2920
    %v2922 = vsel %vm27, %v2593, 0.0
    %v2923 = vadd.f32 %v2921, %v2922
    %v2924 = vsel %vm27, %v2594, 0.0
    %v2925 = vadd.f32 %v2923, %v2924
    %v2926 = vsel %vm27, %v2595, 0.0
    %v2927 = vadd.f32 %v2925, %v2926
    %v2928 = vsel %vm27, %v2596, 0.0
    %v2929 = vadd.f32 %v2927, %v2928
    %v2930 = vsel %vm27, %v2597, 0.0
    %v2931 = vadd.f32 %v2929, %v2930
    %v2932 = vsel %vm27, %v2598, 0.0
    %v2933 = vadd.f32 %v2931, %v2932
    %v2934 = vsel %vm27, %v2599, 0.0
    %v2935 = vadd.f32 %v2933, %v2934
    %v2936 = vsel %vm27, %v2600, 0.0
    %v2937 = vadd.f32 %v2935, %v2936
    %v2938 = vsel %vm27, %v2601, 0.0
    %v2939 = vadd.f32 %v2937, %v2938
    %v2940 = vsel %vm27, %v2602, 0.0
    %v2941 = vadd.f32 %v2939, %v2940
    %v2942 = vsel %vm27, %v2603, 0.0
    %v2943 = vadd.f32 %v2941, %v2942
    %v2944 = vsel %vm27, %v2604, 0.0
    %v2945 = vadd.f32 %v2943, %v2944
    %v2946 = vsel %vm27, %v2605, 0.0
    %v2947 = vadd.f32 %v2945, %v2946
    %v2948 = vsel %vm27, %v2606, 0.0
    %v2949 = vadd.f32 %v2947, %v2948
    %v2950 = vsel %vm27, %v2607, 0.0
    %v2951 = vadd.f32 %v2949, %v2950
    %v2952 = vsel %vm27, %v2608, 0.0
    %v2953 = vadd.f32 %v2951, %v2952
    %v2954 = vsel %vm27, %v2609, 0.0
    %v2955 = vadd.f32 %v2953, %v2954
    %v2956 = vsel %vm27, %v2610, 0.0
    %v2957 = vadd.f32 %v2955, %v2956
    %v2958 = vsel %vm27, %v2611, 0.0
    %v2959 = vadd.f32 %v2957, %v2958
    %v2960 = vsel %vm27, %v2612, 0.0
    %v2961 = vadd.f32 %v2959, %v2960
    %v2962 = vsel %vm27, %v2613, 0.0
    %v2963 = vadd.f32 %v2961, %v2962
    %v2964 = vsel %vm27, %v2614, 0.0
    %v2965 = vadd.f32 %v2963, %v2964
    %v2966 = vsel %vm27, %v2615, 0.0
    %v2967 = vadd.f32 %v2965, %v2966
    %v2968 = vsel %vm27, %v2616, 0.0
    %v2969 = vadd.f32 %v2967, %v2968
    %v2970 = vsel %vm27, %v2617, 0.0
    %v2971 = vadd.f32 %v2969, %v2970
    %v2972 = vsel %vm27, %v2618, 0.0
    %v2973 = vadd.f32 %v2971, %v2972
    %v2974 = vsel %vm27, %v2619, 0.0
    %v2975 = vadd.f32 %v2973, %v2974
    %v2976 = vsel %vm27, %v2620, 0.0
    %v2977 = vadd.f32 %v2975, %v2976
    %v2978 = vsel %vm27, %v2621, 0.0
    %v2979 = vadd.f32 %v2977, %v2978
    %v2980 = vsel %vm27, %v2622, 0.0
    %v2981 = vadd.f32 %v2979, %v2980
    %v2982 = vsel %vm27, %v2623, 0.0
    %v2983 = vadd.f32 %v2981, %v2982
    %v2984 = vsel %vm27, %v2624, 0.0
    %v2985 = vadd.f32 %v2983, %v2984
    %v2986 = vsel %vm27, %v2625, 0.0
    %v2987 = vadd.f32 %v2985, %v2986
    %v2988 = vsel %vm27, %v2626, 0.0
    %v2989 = vadd.f32 %v2987, %v2988
    %v2990 = vsel %vm27, %v2627, 0.0
    %v2991 = vadd.f32 %v2989, %v2990
    %v2992 = vsel %vm27, %v2628, 0.0
    %v2993 = vadd.f32 %v2991, %v2992
    %v2994 = vsel %vm27, %v2629, 0.0
    %v2995 = vadd.f32 %v2993, %v2994
    %v2996 = vsel %vm27, %v2630, 0.0
    %v2997 = vadd.f32 %v2995, %v2996
    %v2998 = vsel %vm27, %v2631, 0.0
    %v2999 = vadd.f32 %v2997, %v2998
    %v3000 = vsel %vm27, %v2632, 0.0
    %v3001 = vadd.f32 %v2999, %v3000
    %v3002 = vsel %vm27, %v2633, 0.0
    %v3003 = vadd.f32 %v3001, %v3002
    %v3004 = vsel %vm27, %v2634, 0.0
    %v3005 = vadd.f32 %v3003, %v3004
    %v3006 = vsel %vm27, %v2635, 0.0
    %v3007 = vadd.f32 %v3005, %v3006
    %v3008 = vsel %vm27, %v2636, 0.0
    %v3009 = vadd.f32 %v3007, %v3008
    %v3010 = vsel %vm27, %v2637, 0.0
    %v3011 = vadd.f32 %v3009, %v3010
    %v3012 = vsel %vm27, %v2638, 0.0
    %v3013 = vadd.f32 %v3011, %v3012
    %v3014 = vsel %vm27, %v2639, 0.0
    %v3015 = vadd.f32 %v3013, %v3014
    %v3016 = vsel %vm27, %v2640, 0.0
    %v3017 = vadd.f32 %v3015, %v3016
    %v3018 = vsel %vm27, %v2641, 0.0
    %v3019 = vadd.f32 %v3017, %v3018
    %v3020 = vsel %vm27, %v2642, 0.0
    %v3021 = vadd.f32 %v3019, %v3020
    %v3022 = vsel %vm27, %v2643, 0.0
    %v3023 = vadd.f32 %v3021, %v3022
    %v3024 = vsel %vm27, %v2644, 0.0
    %v3025 = vadd.f32 %v3023, %v3024
    %v3026 = vsel %vm27, %v2645, 0.0
    %v3027 = vadd.f32 %v3025, %v3026
    %v3028 = vsel %vm27, %v2646, 0.0
    %v3029 = vadd.f32 %v3027, %v3028
    %v3030 = vsel %vm27, %v2647, 0.0
    %v3031 = vadd.f32 %v3029, %v3030
    %v3032 = vsel %vm27, %v2648, 0.0
    %v3033 = vadd.f32 %v3031, %v3032
    %v3034 = vsel %vm27, %v2649, 0.0
    %v3035 = vadd.f32 %v3033, %v3034
    %v3036 = vsel %vm27, %v2650, 0.0
    %v3037 = vadd.f32 %v3035, %v3036
    %v3038 = vsel %vm27, %v2651, 0.0
    %v3039 = vadd.f32 %v3037, %v3038
    %v3040 = vsel %vm27, %v2652, 0.0
    %v3041 = vadd.f32 %v3039, %v3040
    %v3042 = vsel %vm27, %v2653, 0.0
    %v3043 = vadd.f32 %v3041, %v3042
    %v3044 = vsel %vm27, %v2654, 0.0
    %v3045 = vadd.f32 %v3043, %v3044
    %v3046 = vsel %vm27, %v2655, 0.0
    %v3047 = vadd.f32 %v3045, %v3046
    %v3048 = vsel %vm27, %v2656, 0.0
    %v3049 = vadd.f32 %v3047, %v3048
    %v3050 = vsel %vm27, %v2657, 0.0
    %v3051 = vadd.f32 %v3049, %v3050
    %v3052 = vsel %vm27, %v2658, 0.0
    %v3053 = vadd.f32 %v3051, %v3052
    %v3054 = vsel %vm27, %v2659, 0.0
    %v3055 = vadd.f32 %v3053, %v3054
    %v3056 = vsel %vm27, %v2660, 0.0
    %v3057 = vadd.f32 %v3055, %v3056
    %v3058 = vsel %vm27, %v2661, 0.0
    %v3059 = vadd.f32 %v3057, %v3058
    %v3060 = vsel %vm27, %v2662, 0.0
    %v3061 = vadd.f32 %v3059, %v3060
    %v3062 = vsel %vm27, %v2663, 0.0
    %v3063 = vadd.f32 %v3061, %v3062
    %v3064 = vsel %vm27, %v2664, 0.0
    %v3065 = vadd.f32 %v3063, %v3064
    %v3066 = vsel %vm27, %v2665, 0.0
    %v3067 = vadd.f32 %v3065, %v3066
    %v3068 = vsel %vm27, %v2666, 0.0
    %v3069 = vadd.f32 %v3067, %v3068
    %v3070 = vsel %vm27, %v2667, 0.0
    %v3071 = vadd.f32 %v3069, %v3070
    %v3072 = vsel %vm27, %v2668, 0.0
    %v3073 = vadd.f32 %v3071, %v3072
    %v3074 = vsel %vm27, %v2669, 0.0
    %v3075 = vadd.f32 %v3073, %v3074
    %v3076 = vsel %vm27, %v2670, 0.0
    %v3077 = vadd.f32 %v3075, %v3076
    %v3078 = vsel %vm27, %v2671, 0.0
    %v3079 = vadd.f32 %v3077, %v3078
    %v3080 = vsel %vm27, %v2672, 0.0
    %v3081 = vadd.f32 %v3079, %v3080
    %v3082 = vsel %vm27, %v2673, 0.0
    %v3083 = vadd.f32 %v3081, %v3082
    %v3084 = vsel %vm27, %v2674, 0.0
    %v3085 = vadd.f32 %v3083, %v3084
    %v3086 = vsel %vm27, %v2675, 0.0
    %v3087 = vadd.f32 %v3085, %v3086
    %v3088 = vsel %vm27, %v2676, 0.0
    %v3089 = vadd.f32 %v3087, %v3088
    %v3090 = vsel %vm27, %v2677, 0.0
    %v3091 = vadd.f32 %v3089, %v3090
    %v3092 = vsel %vm27, %v2678, 0.0
    %v3093 = vadd.f32 %v3091, %v3092
    %v3094 = vsel %vm27, %v2679, 0.0
    %v3095 = vadd.f32 %v3093, %v3094
    %v3096 = vsel %vm27, %v2680, 0.0
    %v3097 = vadd.f32 %v3095, %v3096
    %v3098 = vsel %vm27, %v2681, 0.0
    %v3099 = vadd.f32 %v3097, %v3098
    %v3100 = vsel %vm27, %v2682, 0.0
    %v3101 = vadd.f32 %v3099, %v3100
    %v3102 = vsel %vm27, %v2683, 0.0
    %v3103 = vadd.f32 %v3101, %v3102
    %v3104 = vsel %vm27, %v2684, 0.0
    %v3105 = vadd.f32 %v3103, %v3104
    %v3106 = vsel %vm27, %v2685, 0.0
    %v3107 = vadd.f32 %v3105, %v3106
    %v3108 = vsel %vm27, %v2686, 0.0
    %v3109 = vadd.f32 %v3107, %v3108
    %v3110 = vsel %vm27, %v2687, 0.0
    %v3111 = vadd.f32 %v3109, %v3110
    %v3112 = vsel %vm27, %v2688, 0.0
    %v3113 = vadd.f32 %v3111, %v3112
    %v3114 = vsel %vm27, %v2689, 0.0
    %v3115 = vadd.f32 %v3113, %v3114
    %v3116 = vsel %vm27, %v2690, 0.0
    %v3117 = vadd.f32 %v3115, %v3116
    %v3118 = vsel %vm27, %v2691, 0.0
    %v3119 = vadd.f32 %v3117, %v3118
    %v3120 = vsel %vm27, %v2692, 0.0
    %v3121 = vadd.f32 %v3119, %v3120
    %v3122 = vsel %vm27, %v2693, 0.0
    %v3123 = vadd.f32 %v3121, %v3122
    %v3124 = vsel %vm27, %v2694, 0.0
    %v3125 = vadd.f32 %v3123, %v3124
    %v3126 = vsel %vm27, %v2695, 0.0
    %v3127 = vadd.f32 %v3125, %v3126
    %v3128 = vsel %vm27, %v2696, 0.0
    %v3129 = vadd.f32 %v3127, %v3128
    %v3130 = vsel %vm27, %v2697, 0.0
    %v3131 = vadd.f32 %v3129, %v3130
    %v3132 = vsel %vm27, %v2698, 0.0
    %v3133 = vadd.f32 %v3131, %v3132
    %v3134 = vsel %vm27, %v2699, 0.0
    %v3135 = vadd.f32 %v3133, %v3134
    %v3136 = vsel %vm27, %v2700, 0.0
    %v3137 = vadd.f32 %v3135, %v3136
    %v3138 = vsel %vm27, %v2701, 0.0
    %v3139 = vadd.f32 %v3137, %v3138
    %v3140 = vsel %vm27, %v2702, 0.0
    %v3141 = vadd.f32 %v3139, %v3140
    %v3142 = vsel %vm27, %v2703, 0.0
    %v3143 = vadd.f32 %v3141, %v3142
    %v3144 = vsel %vm27, %v2704, 0.0
    %v3145 = vadd.f32 %v3143, %v3144
    %v3146 = vsel %vm27, %v2705, 0.0
    %v3147 = vadd.f32 %v3145, %v3146
    %v3148 = vsel %vm27, %v2706, 0.0
    %v3149 = vadd.f32 %v3147, %v3148
    %v3150 = vsel %vm27, %v2707, 0.0
    %v3151 = vadd.f32 %v3149, %v3150
    %v3152 = vsel %vm27, %v2708, 0.0
    %v3153 = vadd.f32 %v3151, %v3152
    %v3154 = vsel %vm27, %v2709, 0.0
    %v3155 = vadd.f32 %v3153, %v3154
    %v3156 = vsel %vm27, %v2710, 0.0
    %v3157 = vadd.f32 %v3155, %v3156
    %v3158 = vsel %vm27, %v2711, 0.0
    %v3159 = vadd.f32 %v3157, %v3158
    %v3160 = vsel %vm27, %v2712, 0.0
    %v3161 = vadd.f32 %v3159, %v3160
    %v3162 = vsel %vm27, %v2713, 0.0
    %v3163 = vadd.f32 %v3161, %v3162
    %v3164 = vsel %vm27, %v2714, 0.0
    %v3165 = vadd.f32 %v3163, %v3164
    %v3166 = vsel %vm27, %v2715, 0.0
    %v3167 = vadd.f32 %v3165, %v3166
    %v3168 = vsel %vm27, %v2716, 0.0
    %v3169 = vadd.f32 %v3167, %v3168
    %v3170 = vsel %vm27, %v2717, 0.0
    %v3171 = vadd.f32 %v3169, %v3170
    %v3172 = vsel %vm27, %v2718, 0.0
    %v3173 = vadd.f32 %v3171, %v3172
    %v3174 = vsel %vm27, %v2719, 0.0
    %v3175 = vadd.f32 %v3173, %v3174
    %v3176 = vsel %vm27, %v2720, 0.0
    %v3177 = vadd.f32 %v3175, %v3176
    %v3178 = vsel %vm27, %v2721, 0.0
    %v3179 = vadd.f32 %v3177, %v3178
    %v3180 = vsel %vm27, %v2722, 0.0
    %v3181 = vadd.f32 %v3179, %v3180
    %v3182 = vsel %vm27, %v2723, 0.0
    %v3183 = vadd.f32 %v3181, %v3182
    %v3184 = vsel %vm27, %v2724, 0.0
    %v3185 = vadd.f32 %v3183, %v3184
    %v3186 = vsel %vm27, %v2725, 0.0
    %v3187 = vadd.f32 %v3185, %v3186
    %v3188 = vsel %vm27, %v2726, 0.0
    %v3189 = vadd.f32 %v3187, %v3188
    %v3190 = vsel %vm27, %v2727, 0.0
    %v3191 = vadd.f32 %v3189, %v3190
    %v3192 = vsel %vm27, %v2728, 0.0
    %v3193 = vadd.f32 %v3191, %v3192
    %v3194 = vsel %vm27, %v2729, 0.0
    %v3195 = vadd.f32 %v3193, %v3194
    %v3196 = vsel %vm27, %v2730, 0.0
    %v3197 = vadd.f32 %v3195, %v3196
    %v3198 = vsel %vm27, %v2731, 0.0
    %v3199 = vadd.f32 %v3197, %v3198
    %v3200 = vsel %vm27, %v2732, 0.0
    %v3201 = vadd.f32 %v3199, %v3200
    %v3202 = vsel %vm27, %v2733, 0.0
    %v3203 = vadd.f32 %v3201, %v3202
    %v3204 = vsel %vm27, %v2734, 0.0
    %v3205 = vadd.f32 %v3203, %v3204
    %v3206 = vsel %vm27, %v2735, 0.0
    %v3207 = vadd.f32 %v3205, %v3206
    %v3208 = vsel %vm27, %v2736, 0.0
    %v3209 = vadd.f32 %v3207, %v3208
    %v3210 = vsel %vm27, %v2737, 0.0
    %v3211 = vadd.f32 %v3209, %v3210
    %v3212 = vsel %vm27, %v2738, 0.0
    %v3213 = vadd.f32 %v3211, %v3212
    %v3214 = vsel %vm27, %v2739, 0.0
    %v3215 = vadd.f32 %v3213, %v3214
    %v3216 = vsel %vm27, %v2740, 0.0
    %v3217 = vadd.f32 %v3215, %v3216
    %v3218 = vsel %vm27, %v2741, 0.0
    %v3219 = vadd.f32 %v3217, %v3218
    %v3220 = vsel %vm27, %v2742, 0.0
    %v3221 = vadd.f32 %v3219, %v3220
    %v3222 = vsel %vm27, %v2743, 0.0
    %v3223 = vadd.f32 %v3221, %v3222
    %v3224 = vsel %vm27, %v2744, 0.0
    %v3225 = vadd.f32 %v3223, %v3224
    %v3226 = vsel %vm27, %v2745, 0.0
    %v3227 = vadd.f32 %v3225, %v3226
    %v3228 = vsel %vm27, %v2746, 0.0
    %v3229 = vadd.f32 %v3227, %v3228
    %v3230 = vsel %vm27, %v2747, 0.0
    %v3231 = vadd.f32 %v3229, %v3230
    %v3232 = vsel %vm27, %v2748, 0.0
    %v3233 = vadd.f32 %v3231, %v3232
    %v3234 = vsel %vm27, %v2749, 0.0
    %v3235 = vadd.f32 %v3233, %v3234
    %v3236 = vsel %vm27, %v2750, 0.0
    %v3237 = vadd.f32 %v3235, %v3236
    %v3238 = vsel %vm27, %v2751, 0.0
    %v3239 = vadd.f32 %v3237, %v3238
    %v3240 = vsel %vm27, %v2752, 0.0
    %v3241 = vadd.f32 %v3239, %v3240
    %v3242 = vsel %vm27, %v2753, 0.0
    %v3243 = vadd.f32 %v3241, %v3242
    %v3244 = vsel %vm27, %v2754, 0.0
    %v3245 = vadd.f32 %v3243, %v3244
    %v3246 = vsel %vm27, %v2755, 0.0
    %v3247 = vadd.f32 %v3245, %v3246
    %v3248 = vsel %vm27, %v2756, 0.0
    %v3249 = vadd.f32 %v3247, %v3248
    %v3250 = vsel %vm27, %v2757, 0.0
    %v3251 = vadd.f32 %v3249, %v3250
    %v3252 = vsel %vm27, %v2758, 0.0
    %v3253 = vadd.f32 %v3251, %v3252
    %v3254 = vsel %vm27, %v2759, 0.0
    %v3255 = vadd.f32 %v3253, %v3254
    %v3256 = vsel %vm27, %v2760, 0.0
    %v3257 = vadd.f32 %v3255, %v3256
    %v3258 = vsel %vm27, %v2761, 0.0
    %v3259 = vadd.f32 %v3257, %v3258
    %v3260 = vsel %vm27, %v2762, 0.0
    %v3261 = vadd.f32 %v3259, %v3260
    %v3262 = vsel %vm27, %v2763, 0.0
    %v3263 = vadd.f32 %v3261, %v3262
    %v3264 = vsel %vm27, %v2764, 0.0
    %v3265 = vadd.f32 %v3263, %v3264
    %v3266 = vsel %vm27, %v2765, 0.0
    %v3267 = vadd.f32 %v3265, %v3266
    %v3268 = vsel %vm27, %v2766, 0.0
    %v3269 = vadd.f32 %v3267, %v3268
    %v3270 = vsel %vm27, %v2767, 0.0
    %v3271 = vadd.f32 %v3269, %v3270
    %v3272 = vsel %vm27, %v2768, 0.0
    %v3273 = vadd.f32 %v3271, %v3272
    %v3274 = vsel %vm27, %v2769, 0.0
    %v3275 = vadd.f32 %v3273, %v3274
    %v3276 = vsel %vm27, %v2770, 0.0
    %v3277 = vadd.f32 %v3275, %v3276
    %v3278 = vsel %vm27, %v2771, 0.0
    %v3279 = vadd.f32 %v3277, %v3278
    %v3280 = vsel %vm27, %v2772, 0.0
    %v3281 = vadd.f32 %v3279, %v3280
    %v3282 = vsel %vm27, %v2773, 0.0
    %v3283 = vadd.f32 %v3281, %v3282
    %v3284 = vsel %vm27, %v2774, 0.0
    %v3285 = vadd.f32 %v3283, %v3284
    %v3286 = vrot.slane %v3285, 4
    %v3287 = vadd.f32 %v3285, %v3286
    %v3288 = vrot.slane %v3287, 2
    %v3289 = vadd.f32 %v3287, %v3288
    %v3290 = vrot.slane %v3289, 1
    %v3291 = vadd.f32 %v3289, %v3290
    %v3292 = vmul.f32 %v2518, 0.00048828125
    %v3293 = vmul.f32 %v3291, 0.00048828125
    %v3294 = vmul.f32 %v3292, %v3292
    %v3295 = vsub.f32 %v3293, %v3294
    %v3296 = vsub.f32 %v1235, %v3292
    %v3297 = vsub.f32 %v1238, %v3292
    %v3298 = vsub.f32 %v1241, %v3292
    %v3299 = vsub.f32 %v1244, %v3292
    %v3300 = vsub.f32 %v1247, %v3292
    %v3301 = vsub.f32 %v1250, %v3292
    %v3302 = vsub.f32 %v1253, %v3292
    %v3303 = vsub.f32 %v1256, %v3292
    %v3304 = vsub.f32 %v1259, %v3292
    %v3305 = vsub.f32 %v1262, %v3292
    %v3306 = vsub.f32 %v1265, %v3292
    %v3307 = vsub.f32 %v1268, %v3292
    %v3308 = vsub.f32 %v1271, %v3292
    %v3309 = vsub.f32 %v1274, %v3292
    %v3310 = vsub.f32 %v1277, %v3292
    %v3311 = vsub.f32 %v1280, %v3292
    %v3312 = vsub.f32 %v1283, %v3292
    %v3313 = vsub.f32 %v1286, %v3292
    %v3314 = vsub.f32 %v1289, %v3292
    %v3315 = vsub.f32 %v1292, %v3292
    %v3316 = vsub.f32 %v1295, %v3292
    %v3317 = vsub.f32 %v1298, %v3292
    %v3318 = vsub.f32 %v1301, %v3292
    %v3319 = vsub.f32 %v1304, %v3292
    %v3320 = vsub.f32 %v1307, %v3292
    %v3321 = vsub.f32 %v1310, %v3292
    %v3322 = vsub.f32 %v1313, %v3292
    %v3323 = vsub.f32 %v1316, %v3292
    %v3324 = vsub.f32 %v1319, %v3292
    %v3325 = vsub.f32 %v1322, %v3292
    %v3326 = vsub.f32 %v1325, %v3292
    %v3327 = vsub.f32 %v1328, %v3292
    %v3328 = vsub.f32 %v1331, %v3292
    %v3329 = vsub.f32 %v1334, %v3292
    %v3330 = vsub.f32 %v1337, %v3292
    %v3331 = vsub.f32 %v1340, %v3292
    %v3332 = vsub.f32 %v1343, %v3292
    %v3333 = vsub.f32 %v1346, %v3292
    %v3334 = vsub.f32 %v1349, %v3292
    %v3335 = vsub.f32 %v1352, %v3292
    %v3336 = vsub.f32 %v1355, %v3292
    %v3337 = vsub.f32 %v1358, %v3292
    %v3338 = vsub.f32 %v1361, %v3292
    %v3339 = vsub.f32 %v1364, %v3292
    %v3340 = vsub.f32 %v1367, %v3292
    %v3341 = vsub.f32 %v1370, %v3292
    %v3342 = vsub.f32 %v1373, %v3292
    %v3343 = vsub.f32 %v1376, %v3292
    %v3344 = vsub.f32 %v1379, %v3292
    %v3345 = vsub.f32 %v1382, %v3292
    %v3346 = vsub.f32 %v1385, %v3292
    %v3347 = vsub.f32 %v1388, %v3292
    %v3348 = vsub.f32 %v1391, %v3292
    %v3349 = vsub.f32 %v1394, %v3292
    %v3350 = vsub.f32 %v1397, %v3292
    %v3351 = vsub.f32 %v1400, %v3292
    %v3352 = vsub.f32 %v1403, %v3292
    %v3353 = vsub.f32 %v1406, %v3292
    %v3354 = vsub.f32 %v1409, %v3292
    %v3355 = vsub.f32 %v1412, %v3292
    %v3356 = vsub.f32 %v1415, %v3292
    %v3357 = vsub.f32 %v1418, %v3292
    %v3358 = vsub.f32 %v1421, %v3292
    %v3359 = vsub.f32 %v1424, %v3292
    %v3360 = vsub.f32 %v1427, %v3292
    %v3361 = vsub.f32 %v1430, %v3292
    %v3362 = vsub.f32 %v1433, %v3292
    %v3363 = vsub.f32 %v1436, %v3292
    %v3364 = vsub.f32 %v1439, %v3292
    %v3365 = vsub.f32 %v1442, %v3292
    %v3366 = vsub.f32 %v1445, %v3292
    %v3367 = vsub.f32 %v1448, %v3292
    %v3368 = vsub.f32 %v1451, %v3292
    %v3369 = vsub.f32 %v1454, %v3292
    %v3370 = vsub.f32 %v1457, %v3292
    %v3371 = vsub.f32 %v1460, %v3292
    %v3372 = vsub.f32 %v1463, %v3292
    %v3373 = vsub.f32 %v1466, %v3292
    %v3374 = vsub.f32 %v1469, %v3292
    %v3375 = vsub.f32 %v1472, %v3292
    %v3376 = vsub.f32 %v1475, %v3292
    %v3377 = vsub.f32 %v1478, %v3292
    %v3378 = vsub.f32 %v1481, %v3292
    %v3379 = vsub.f32 %v1484, %v3292
    %v3380 = vsub.f32 %v1487, %v3292
    %v3381 = vsub.f32 %v1490, %v3292
    %v3382 = vsub.f32 %v1493, %v3292
    %v3383 = vsub.f32 %v1496, %v3292
    %v3384 = vsub.f32 %v1499, %v3292
    %v3385 = vsub.f32 %v1502, %v3292
    %v3386 = vsub.f32 %v1505, %v3292
    %v3387 = vsub.f32 %v1508, %v3292
    %v3388 = vsub.f32 %v1511, %v3292
    %v3389 = vsub.f32 %v1514, %v3292
    %v3390 = vsub.f32 %v1517, %v3292
    %v3391 = vsub.f32 %v1520, %v3292
    %v3392 = vsub.f32 %v1523, %v3292
    %v3393 = vsub.f32 %v1526, %v3292
    %v3394 = vsub.f32 %v1529, %v3292
    %v3395 = vsub.f32 %v1532, %v3292
    %v3396 = vsub.f32 %v1535, %v3292
    %v3397 = vsub.f32 %v1538, %v3292
    %v3398 = vsub.f32 %v1541, %v3292
    %v3399 = vsub.f32 %v1544, %v3292
    %v3400 = vsub.f32 %v1547, %v3292
    %v3401 = vsub.f32 %v1550, %v3292
    %v3402 = vsub.f32 %v1553, %v3292
    %v3403 = vsub.f32 %v1556, %v3292
    %v3404 = vsub.f32 %v1559, %v3292
    %v3405 = vsub.f32 %v1562, %v3292
    %v3406 = vsub.f32 %v1565, %v3292
    %v3407 = vsub.f32 %v1568, %v3292
    %v3408 = vsub.f32 %v1571, %v3292
    %v3409 = vsub.f32 %v1574, %v3292
    %v3410 = vsub.f32 %v1577, %v3292
    %v3411 = vsub.f32 %v1580, %v3292
    %v3412 = vsub.f32 %v1583, %v3292
    %v3413 = vsub.f32 %v1586, %v3292
    %v3414 = vsub.f32 %v1589, %v3292
    %v3415 = vsub.f32 %v1592, %v3292
    %v3416 = vsub.f32 %v1595, %v3292
    %v3417 = vsub.f32 %v1598, %v3292
    %v3418 = vsub.f32 %v1601, %v3292
    %v3419 = vsub.f32 %v1604, %v3292
    %v3420 = vsub.f32 %v1607, %v3292
    %v3421 = vsub.f32 %v1610, %v3292
    %v3422 = vsub.f32 %v1613, %v3292
    %v3423 = vsub.f32 %v1616, %v3292
    %v3424 = vsub.f32 %v1619, %v3292
    %v3425 = vsub.f32 %v1622, %v3292
    %v3426 = vsub.f32 %v1625, %v3292
    %v3427 = vsub.f32 %v1628, %v3292
    %v3428 = vsub.f32 %v1631, %v3292
    %v3429 = vsub.f32 %v1634, %v3292
    %v3430 = vsub.f32 %v1637, %v3292
    %v3431 = vsub.f32 %v1640, %v3292
    %v3432 = vsub.f32 %v1643, %v3292
    %v3433 = vsub.f32 %v1646, %v3292
    %v3434 = vsub.f32 %v1649, %v3292
    %v3435 = vsub.f32 %v1652, %v3292
    %v3436 = vsub.f32 %v1655, %v3292
    %v3437 = vsub.f32 %v1658, %v3292
    %v3438 = vsub.f32 %v1661, %v3292
    %v3439 = vsub.f32 %v1664, %v3292
    %v3440 = vsub.f32 %v1667, %v3292
    %v3441 = vsub.f32 %v1670, %v3292
    %v3442 = vsub.f32 %v1673, %v3292
    %v3443 = vsub.f32 %v1676, %v3292
    %v3444 = vsub.f32 %v1679, %v3292
    %v3445 = vsub.f32 %v1682, %v3292
    %v3446 = vsub.f32 %v1685, %v3292
    %v3447 = vsub.f32 %v1688, %v3292
    %v3448 = vsub.f32 %v1691, %v3292
    %v3449 = vsub.f32 %v1694, %v3292
    %v3450 = vsub.f32 %v1697, %v3292
    %v3451 = vsub.f32 %v1700, %v3292
    %v3452 = vsub.f32 %v1703, %v3292
    %v3453 = vsub.f32 %v1706, %v3292
    %v3454 = vsub.f32 %v1709, %v3292
    %v3455 = vsub.f32 %v1712, %v3292
    %v3456 = vsub.f32 %v1715, %v3292
    %v3457 = vsub.f32 %v1718, %v3292
    %v3458 = vsub.f32 %v1721, %v3292
    %v3459 = vsub.f32 %v1724, %v3292
    %v3460 = vsub.f32 %v1727, %v3292
    %v3461 = vsub.f32 %v1730, %v3292
    %v3462 = vsub.f32 %v1733, %v3292
    %v3463 = vsub.f32 %v1736, %v3292
    %v3464 = vsub.f32 %v1739, %v3292
    %v3465 = vsub.f32 %v1742, %v3292
    %v3466 = vsub.f32 %v1745, %v3292
    %v3467 = vsub.f32 %v1748, %v3292
    %v3468 = vsub.f32 %v1751, %v3292
    %v3469 = vsub.f32 %v1754, %v3292
    %v3470 = vsub.f32 %v1757, %v3292
    %v3471 = vsub.f32 %v1760, %v3292
    %v3472 = vsub.f32 %v1763, %v3292
    %v3473 = vsub.f32 %v1766, %v3292
    %v3474 = vsub.f32 %v1769, %v3292
    %v3475 = vsub.f32 %v1772, %v3292
    %v3476 = vsub.f32 %v1775, %v3292
    %v3477 = vsub.f32 %v1778, %v3292
    %v3478 = vsub.f32 %v1781, %v3292
    %v3479 = vsub.f32 %v1784, %v3292
    %v3480 = vsub.f32 %v1787, %v3292
    %v3481 = vsub.f32 %v1790, %v3292
    %v3482 = vsub.f32 %v1793, %v3292
    %v3483 = vsub.f32 %v1796, %v3292
    %v3484 = vsub.f32 %v1799, %v3292
    %v3485 = vsub.f32 %v1802, %v3292
    %v3486 = vsub.f32 %v1805, %v3292
    %v3487 = vsub.f32 %v1808, %v3292
    %v3488 = vsub.f32 %v1811, %v3292
    %v3489 = vsub.f32 %v1814, %v3292
    %v3490 = vsub.f32 %v1817, %v3292
    %v3491 = vsub.f32 %v1820, %v3292
    %v3492 = vsub.f32 %v1823, %v3292
    %v3493 = vsub.f32 %v1826, %v3292
    %v3494 = vsub.f32 %v1829, %v3292
    %v3495 = vsub.f32 %v1832, %v3292
    %v3496 = vsub.f32 %v1835, %v3292
    %v3497 = vsub.f32 %v1838, %v3292
    %v3498 = vsub.f32 %v1841, %v3292
    %v3499 = vsub.f32 %v1844, %v3292
    %v3500 = vsub.f32 %v1847, %v3292
    %v3501 = vsub.f32 %v1850, %v3292
    %v3502 = vsub.f32 %v1853, %v3292
    %v3503 = vsub.f32 %v1856, %v3292
    %v3504 = vsub.f32 %v1859, %v3292
    %v3505 = vsub.f32 %v1862, %v3292
    %v3506 = vsub.f32 %v1865, %v3292
    %v3507 = vsub.f32 %v1868, %v3292
    %v3508 = vsub.f32 %v1871, %v3292
    %v3509 = vsub.f32 %v1874, %v3292
    %v3510 = vsub.f32 %v1877, %v3292
    %v3511 = vsub.f32 %v1880, %v3292
    %v3512 = vsub.f32 %v1883, %v3292
    %v3513 = vsub.f32 %v1886, %v3292
    %v3514 = vsub.f32 %v1889, %v3292
    %v3515 = vsub.f32 %v1892, %v3292
    %v3516 = vsub.f32 %v1895, %v3292
    %v3517 = vsub.f32 %v1898, %v3292
    %v3518 = vsub.f32 %v1901, %v3292
    %v3519 = vsub.f32 %v1904, %v3292
    %v3520 = vsub.f32 %v1907, %v3292
    %v3521 = vsub.f32 %v1910, %v3292
    %v3522 = vsub.f32 %v1913, %v3292
    %v3523 = vsub.f32 %v1916, %v3292
    %v3524 = vsub.f32 %v1919, %v3292
    %v3525 = vsub.f32 %v1922, %v3292
    %v3526 = vsub.f32 %v1925, %v3292
    %v3527 = vsub.f32 %v1928, %v3292
    %v3528 = vsub.f32 %v1931, %v3292
    %v3529 = vsub.f32 %v1934, %v3292
    %v3530 = vsub.f32 %v1937, %v3292
    %v3531 = vsub.f32 %v1940, %v3292
    %v3532 = vsub.f32 %v1943, %v3292
    %v3533 = vsub.f32 %v1946, %v3292
    %v3534 = vsub.f32 %v1949, %v3292
    %v3535 = vsub.f32 %v1952, %v3292
    %v3536 = vsub.f32 %v1955, %v3292
    %v3537 = vsub.f32 %v1958, %v3292
    %v3538 = vsub.f32 %v1961, %v3292
    %v3539 = vsub.f32 %v1964, %v3292
    %v3540 = vsub.f32 %v1967, %v3292
    %v3541 = vsub.f32 %v1970, %v3292
    %v3542 = vsub.f32 %v1973, %v3292
    %v3543 = vsub.f32 %v1976, %v3292
    %v3544 = vsub.f32 %v1979, %v3292
    %v3545 = vsub.f32 %v1982, %v3292
    %v3546 = vsub.f32 %v1985, %v3292
    %v3547 = vsub.f32 %v1988, %v3292
    %v3548 = vsub.f32 %v1991, %v3292
    %v3549 = vsub.f32 %v1994, %v3292
    %v3550 = vsub.f32 %v1997, %v3292
    %v3551 = vsub.f32 %v2000, %v3292
    %v3552 = vadd.f32 %v3295, 1e-05
    %v3553 = vrsqrt.pop %v3552
    %v3554 = vmul.f32 %v3553, %v3552
    %v3555 = vmul.f32 %v3554, %v3553
    %v3556 = vmul.f32 0.5, %v3555
    %v3557 = vsub.f32 1.5, %v3556
    %v3558 = vmul.f32 %v3553, %v3557
    %vm3559 = vweird.f32 %v3552
    %vm3560 = vweird.f32 %v3553
    %vm3561 = vmor %vm3559, %vm3560
    %v3562 = vsel %vm3561, %v3553, %v3558
    %v3563 = vmul.f32 %v3296, %v3562
    %v3564 = vmul.f32 %v3297, %v3562
    %v3565 = vmul.f32 %v3298, %v3562
    %v3566 = vmul.f32 %v3299, %v3562
    %v3567 = vmul.f32 %v3300, %v3562
    %v3568 = vmul.f32 %v3301, %v3562
    %v3569 = vmul.f32 %v3302, %v3562
    %v3570 = vmul.f32 %v3303, %v3562
    %v3571 = vmul.f32 %v3304, %v3562
    %v3572 = vmul.f32 %v3305, %v3562
    %v3573 = vmul.f32 %v3306, %v3562
    %v3574 = vmul.f32 %v3307, %v3562
    %v3575 = vmul.f32 %v3308, %v3562
    %v3576 = vmul.f32 %v3309, %v3562
    %v3577 = vmul.f32 %v3310, %v3562
    %v3578 = vmul.f32 %v3311, %v3562
    %v3579 = vmul.f32 %v3312, %v3562
    %v3580 = vmul.f32 %v3313, %v3562
    %v3581 = vmul.f32 %v3314, %v3562
    %v3582 = vmul.f32 %v3315, %v3562
    %v3583 = vmul.f32 %v3316, %v3562
    %v3584 = vmul.f32 %v3317, %v3562
    %v3585 = vmul.f32 %v3318, %v3562
    %v3586 = vmul.f32 %v3319, %v3562
    %v3587 = vmul.f32 %v3320, %v3562
    %v3588 = vmul.f32 %v3321, %v3562
    %v3589 = vmul.f32 %v3322, %v3562
    %v3590 = vmul.f32 %v3323, %v3562
    %v3591 = vmul.f32 %v3324, %v3562
    %v3592 = vmul.f32 %v3325, %v3562
    %v3593 = vmul.f32 %v3326, %v3562
    %v3594 = vmul.f32 %v3327, %v3562
    %v3595 = vmul.f32 %v3328, %v3562
    %v3596 = vmul.f32 %v3329, %v3562
    %v3597 = vmul.f32 %v3330, %v3562
    %v3598 = vmul.f32 %v3331, %v3562
    %v3599 = vmul.f32 %v3332, %v3562
    %v3600 = vmul.f32 %v3333, %v3562
    %v3601 = vmul.f32 %v3334, %v3562
    %v3602 = vmul.f32 %v3335, %v3562
    %v3603 = vmul.f32 %v3336, %v3562
    %v3604 = vmul.f32 %v3337, %v3562
    %v3605 = vmul.f32 %v3338, %v3562
    %v3606 = vmul.f32 %v3339, %v3562
    %v3607 = vmul.f32 %v3340, %v3562
    %v3608 = vmul.f32 %v3341, %v3562
    %v3609 = vmul.f32 %v3342, %v3562
    %v3610 = vmul.f32 %v3343, %v3562
    %v3611 = vmul.f32 %v3344, %v3562
    %v3612 = vmul.f32 %v3345, %v3562
    %v3613 = vmul.f32 %v3346, %v3562
    %v3614 = vmul.f32 %v3347, %v3562
    %v3615 = vmul.f32 %v3348, %v3562
    %v3616 = vmul.f32 %v3349, %v3562
    %v3617 = vmul.f32 %v3350, %v3562
    %v3618 = vmul.f32 %v3351, %v3562
    %v3619 = vmul.f32 %v3352, %v3562
    %v3620 = vmul.f32 %v3353, %v3562
    %v3621 = vmul.f32 %v3354, %v3562
    %v3622 = vmul.f32 %v3355, %v3562
    %v3623 = vmul.f32 %v3356, %v3562
    %v3624 = vmul.f32 %v3357, %v3562
    %v3625 = vmul.f32 %v3358, %v3562
    %v3626 = vmul.f32 %v3359, %v3562
    %v3627 = vmul.f32 %v3360, %v3562
    %v3628 = vmul.f32 %v3361, %v3562
    %v3629 = vmul.f32 %v3362, %v3562
    %v3630 = vmul.f32 %v3363, %v3562
    %v3631 = vmul.f32 %v3364, %v3562
    %v3632 = vmul.f32 %v3365, %v3562
    %v3633 = vmul.f32 %v3366, %v3562
    %v3634 = vmul.f32 %v3367, %v3562
    %v3635 = vmul.f32 %v3368, %v3562
    %v3636 = vmul.f32 %v3369, %v3562
    %v3637 = vmul.f32 %v3370, %v3562
    %v3638 = vmul.f32 %v3371, %v3562
    %v3639 = vmul.f32 %v3372, %v3562
    %v3640 = vmul.f32 %v3373, %v3562
    %v3641 = vmul.f32 %v3374, %v3562
    %v3642 = vmul.f32 %v3375, %v3562
    %v3643 = vmul.f32 %v3376, %v3562
    %v3644 = vmul.f32 %v3377, %v3562
    %v3645 = vmul.f32 %v3378, %v3562
    %v3646 = vmul.f32 %v3379, %v3562
    %v3647 = vmul.f32 %v3380, %v3562
    %v3648 = vmul.f32 %v3381, %v3562
    %v3649 = vmul.f32 %v3382, %v3562
    %v3650 = vmul.f32 %v3383, %v3562
    %v3651 = vmul.f32 %v3384, %v3562
    %v3652 = vmul.f32 %v3385, %v3562
    %v3653 = vmul.f32 %v3386, %v3562
    %v3654 = vmul.f32 %v3387, %v3562
    %v3655 = vmul.f32 %v3388, %v3562
    %v3656 = vmul.f32 %v3389, %v3562
    %v3657 = vmul.f32 %v3390, %v3562
    %v3658 = vmul.f32 %v3391, %v3562
    %v3659 = vmul.f32 %v3392, %v3562
    %v3660 = vmul.f32 %v3393, %v3562
    %v3661 = vmul.f32 %v3394, %v3562
    %v3662 = vmul.f32 %v3395, %v3562
    %v3663 = vmul.f32 %v3396, %v3562
    %v3664 = vmul.f32 %v3397, %v3562
    %v3665 = vmul.f32 %v3398, %v3562
    %v3666 = vmul.f32 %v3399, %v3562
    %v3667 = vmul.f32 %v3400, %v3562
    %v3668 = vmul.f32 %v3401, %v3562
    %v3669 = vmul.f32 %v3402, %v3562
    %v3670 = vmul.f32 %v3403, %v3562
    %v3671 = vmul.f32 %v3404, %v3562
    %v3672 = vmul.f32 %v3405, %v3562
    %v3673 = vmul.f32 %v3406, %v3562
    %v3674 = vmul.f32 %v3407, %v3562
    %v3675 = vmul.f32 %v3408, %v3562
    %v3676 = vmul.f32 %v3409, %v3562
    %v3677 = vmul.f32 %v3410, %v3562
    %v3678 = vmul.f32 %v3411, %v3562
    %v3679 = vmul.f32 %v3412, %v3562
    %v3680 = vmul.f32 %v3413, %v3562
    %v3681 = vmul.f32 %v3414, %v3562
    %v3682 = vmul.f32 %v3415, %v3562
    %v3683 = vmul.f32 %v3416, %v3562
    %v3684 = vmul.f32 %v3417, %v3562
    %v3685 = vmul.f32 %v3418, %v3562
    %v3686 = vmul.f32 %v3419, %v3562
    %v3687 = vmul.f32 %v3420, %v3562
    %v3688 = vmul.f32 %v3421, %v3562
    %v3689 = vmul.f32 %v3422, %v3562
    %v3690 = vmul.f32 %v3423, %v3562
    %v3691 = vmul.f32 %v3424, %v3562
    %v3692 = vmul.f32 %v3425, %v3562
    %v3693 = vmul.f32 %v3426, %v3562
    %v3694 = vmul.f32 %v3427, %v3562
    %v3695 = vmul.f32 %v3428, %v3562
    %v3696 = vmul.f32 %v3429, %v3562
    %v3697 = vmul.f32 %v3430, %v3562
    %v3698 = vmul.f32 %v3431, %v3562
    %v3699 = vmul.f32 %v3432, %v3562
    %v3700 = vmul.f32 %v3433, %v3562
    %v3701 = vmul.f32 %v3434, %v3562
    %v3702 = vmul.f32 %v3435, %v3562
    %v3703 = vmul.f32 %v3436, %v3562
    %v3704 = vmul.f32 %v3437, %v3562
    %v3705 = vmul.f32 %v3438, %v3562
    %v3706 = vmul.f32 %v3439, %v3562
    %v3707 = vmul.f32 %v3440, %v3562
    %v3708 = vmul.f32 %v3441, %v3562
    %v3709 = vmul.f32 %v3442, %v3562
    %v3710 = vmul.f32 %v3443, %v3562
    %v3711 = vmul.f32 %v3444, %v3562
    %v3712 = vmul.f32 %v3445, %v3562
    %v3713 = vmul.f32 %v3446, %v3562
    %v3714 = vmul.f32 %v3447, %v3562
    %v3715 = vmul.f32 %v3448, %v3562
    %v3716 = vmul.f32 %v3449, %v3562
    %v3717 = vmul.f32 %v3450, %v3562
    %v3718 = vmul.f32 %v3451, %v3562
    %v3719 = vmul.f32 %v3452, %v3562
    %v3720 = vmul.f32 %v3453, %v3562
    %v3721 = vmul.f32 %v3454, %v3562
    %v3722 = vmul.f32 %v3455, %v3562
    %v3723 = vmul.f32 %v3456, %v3562
    %v3724 = vmul.f32 %v3457, %v3562
    %v3725 = vmul.f32 %v3458, %v3562
    %v3726 = vmul.f32 %v3459, %v3562
    %v3727 = vmul.f32 %v3460, %v3562
    %v3728 = vmul.f32 %v3461, %v3562
    %v3729 = vmul.f32 %v3462, %v3562
    %v3730 = vmul.f32 %v3463, %v3562
    %v3731 = vmul.f32 %v3464, %v3562
    %v3732 = vmul.f32 %v3465, %v3562
    %v3733 = vmul.f32 %v3466, %v3562
    %v3734 = vmul.f32 %v3467, %v3562
    %v3735 = vmul.f32 %v3468, %v3562
    %v3736 = vmul.f32 %v3469, %v3562
    %v3737 = vmul.f32 %v3470, %v3562
    %v3738 = vmul.f32 %v3471, %v3562
    %v3739 = vmul.f32 %v3472, %v3562
    %v3740 = vmul.f32 %v3473, %v3562
    %v3741 = vmul.f32 %v3474, %v3562
    %v3742 = vmul.f32 %v3475, %v3562
    %v3743 = vmul.f32 %v3476, %v3562
    %v3744 = vmul.f32 %v3477, %v3562
    %v3745 = vmul.f32 %v3478, %v3562
    %v3746 = vmul.f32 %v3479, %v3562
    %v3747 = vmul.f32 %v3480, %v3562
    %v3748 = vmul.f32 %v3481, %v3562
    %v3749 = vmul.f32 %v3482, %v3562
    %v3750 = vmul.f32 %v3483, %v3562
    %v3751 = vmul.f32 %v3484, %v3562
    %v3752 = vmul.f32 %v3485, %v3562
    %v3753 = vmul.f32 %v3486, %v3562
    %v3754 = vmul.f32 %v3487, %v3562
    %v3755 = vmul.f32 %v3488, %v3562
    %v3756 = vmul.f32 %v3489, %v3562
    %v3757 = vmul.f32 %v3490, %v3562
    %v3758 = vmul.f32 %v3491, %v3562
    %v3759 = vmul.f32 %v3492, %v3562
    %v3760 = vmul.f32 %v3493, %v3562
    %v3761 = vmul.f32 %v3494, %v3562
    %v3762 = vmul.f32 %v3495, %v3562
    %v3763 = vmul.f32 %v3496, %v3562
    %v3764 = vmul.f32 %v3497, %v3562
    %v3765 = vmul.f32 %v3498, %v3562
    %v3766 = vmul.f32 %v3499, %v3562
    %v3767 = vmul.f32 %v3500, %v3562
    %v3768 = vmul.f32 %v3501, %v3562
    %v3769 = vmul.f32 %v3502, %v3562
    %v3770 = vmul.f32 %v3503, %v3562
    %v3771 = vmul.f32 %v3504, %v3562
    %v3772 = vmul.f32 %v3505, %v3562
    %v3773 = vmul.f32 %v3506, %v3562
    %v3774 = vmul.f32 %v3507, %v3562
    %v3775 = vmul.f32 %v3508, %v3562
    %v3776 = vmul.f32 %v3509, %v3562
    %v3777 = vmul.f32 %v3510, %v3562
    %v3778 = vmul.f32 %v3511, %v3562
    %v3779 = vmul.f32 %v3512, %v3562
    %v3780 = vmul.f32 %v3513, %v3562
    %v3781 = vmul.f32 %v3514, %v3562
    %v3782 = vmul.f32 %v3515, %v3562
    %v3783 = vmul.f32 %v3516, %v3562
    %v3784 = vmul.f32 %v3517, %v3562
    %v3785 = vmul.f32 %v3518, %v3562
    %v3786 = vmul.f32 %v3519, %v3562
    %v3787 = vmul.f32 %v3520, %v3562
    %v3788 = vmul.f32 %v3521, %v3562
    %v3789 = vmul.f32 %v3522, %v3562
    %v3790 = vmul.f32 %v3523, %v3562
    %v3791 = vmul.f32 %v3524, %v3562
    %v3792 = vmul.f32 %v3525, %v3562
    %v3793 = vmul.f32 %v3526, %v3562
    %v3794 = vmul.f32 %v3527, %v3562
    %v3795 = vmul.f32 %v3528, %v3562
    %v3796 = vmul.f32 %v3529, %v3562
    %v3797 = vmul.f32 %v3530, %v3562
    %v3798 = vmul.f32 %v3531, %v3562
    %v3799 = vmul.f32 %v3532, %v3562
    %v3800 = vmul.f32 %v3533, %v3562
    %v3801 = vmul.f32 %v3534, %v3562
    %v3802 = vmul.f32 %v3535, %v3562
    %v3803 = vmul.f32 %v3536, %v3562
    %v3804 = vmul.f32 %v3537, %v3562
    %v3805 = vmul.f32 %v3538, %v3562
    %v3806 = vmul.f32 %v3539, %v3562
    %v3807 = vmul.f32 %v3540, %v3562
    %v3808 = vmul.f32 %v3541, %v3562
    %v3809 = vmul.f32 %v3542, %v3562
    %v3810 = vmul.f32 %v3543, %v3562
    %v3811 = vmul.f32 %v3544, %v3562
    %v3812 = vmul.f32 %v3545, %v3562
    %v3813 = vmul.f32 %v3546, %v3562
    %v3814 = vmul.f32 %v3547, %v3562
    %v3815 = vmul.f32 %v3548, %v3562
    %v3816 = vmul.f32 %v3549, %v3562
    %v3817 = vmul.f32 %v3550, %v3562
    %v3818 = vmul.f32 %v3551, %v3562
    %v3819 = vperm.slane %v441, 0
    %v3820 = vmul.f32 %v3563, %v3819
    %v3821 = vmul.f32 %v3564, %v3819
    %v3822 = vmul.f32 %v3565, %v3819
    %v3823 = vmul.f32 %v3566, %v3819
    %v3824 = vmul.f32 %v3567, %v3819
    %v3825 = vmul.f32 %v3568, %v3819
    %v3826 = vmul.f32 %v3569, %v3819
    %v3827 = vmul.f32 %v3570, %v3819
    %v3828 = vmul.f32 %v3571, %v3819
    %v3829 = vmul.f32 %v3572, %v3819
    %v3830 = vmul.f32 %v3573, %v3819
    %v3831 = vmul.f32 %v3574, %v3819
    %v3832 = vmul.f32 %v3575, %v3819
    %v3833 = vmul.f32 %v3576, %v3819
    %v3834 = vmul.f32 %v3577, %v3819
    %v3835 = vmul.f32 %v3578, %v3819
    %v3836 = vmul.f32 %v3579, %v3819
    %v3837 = vmul.f32 %v3580, %v3819
    %v3838 = vmul.f32 %v3581, %v3819
    %v3839 = vmul.f32 %v3582, %v3819
    %v3840 = vmul.f32 %v3583, %v3819
    %v3841 = vmul.f32 %v3584, %v3819
    %v3842 = vmul.f32 %v3585, %v3819
    %v3843 = vmul.f32 %v3586, %v3819
    %v3844 = vmul.f32 %v3587, %v3819
    %v3845 = vmul.f32 %v3588, %v3819
    %v3846 = vmul.f32 %v3589, %v3819
    %v3847 = vmul.f32 %v3590, %v3819
    %v3848 = vmul.f32 %v3591, %v3819
    %v3849 = vmul.f32 %v3592, %v3819
    %v3850 = vmul.f32 %v3593, %v3819
    %v3851 = vmul.f32 %v3594, %v3819
    %v3852 = vmul.f32 %v3595, %v3819
    %v3853 = vmul.f32 %v3596, %v3819
    %v3854 = vmul.f32 %v3597, %v3819
    %v3855 = vmul.f32 %v3598, %v3819
    %v3856 = vmul.f32 %v3599, %v3819
    %v3857 = vmul.f32 %v3600, %v3819
    %v3858 = vmul.f32 %v3601, %v3819
    %v3859 = vmul.f32 %v3602, %v3819
    %v3860 = vmul.f32 %v3603, %v3819
    %v3861 = vmul.f32 %v3604, %v3819
    %v3862 = vmul.f32 %v3605, %v3819
    %v3863 = vmul.f32 %v3606, %v3819
    %v3864 = vmul.f32 %v3607, %v3819
    %v3865 = vmul.f32 %v3608, %v3819
    %v3866 = vmul.f32 %v3609, %v3819
    %v3867 = vmul.f32 %v3610, %v3819
    %v3868 = vmul.f32 %v3611, %v3819
    %v3869 = vmul.f32 %v3612, %v3819
    %v3870 = vmul.f32 %v3613, %v3819
    %v3871 = vmul.f32 %v3614, %v3819
    %v3872 = vmul.f32 %v3615, %v3819
    %v3873 = vmul.f32 %v3616, %v3819
    %v3874 = vmul.f32 %v3617, %v3819
    %v3875 = vmul.f32 %v3618, %v3819
    %v3876 = vmul.f32 %v3619, %v3819
    %v3877 = vmul.f32 %v3620, %v3819
    %v3878 = vmul.f32 %v3621, %v3819
    %v3879 = vmul.f32 %v3622, %v3819
    %v3880 = vmul.f32 %v3623, %v3819
    %v3881 = vmul.f32 %v3624, %v3819
    %v3882 = vmul.f32 %v3625, %v3819
    %v3883 = vmul.f32 %v3626, %v3819
    %v3884 = vmul.f32 %v3627, %v3819
    %v3885 = vmul.f32 %v3628, %v3819
    %v3886 = vmul.f32 %v3629, %v3819
    %v3887 = vmul.f32 %v3630, %v3819
    %v3888 = vmul.f32 %v3631, %v3819
    %v3889 = vmul.f32 %v3632, %v3819
    %v3890 = vmul.f32 %v3633, %v3819
    %v3891 = vmul.f32 %v3634, %v3819
    %v3892 = vmul.f32 %v3635, %v3819
    %v3893 = vmul.f32 %v3636, %v3819
    %v3894 = vmul.f32 %v3637, %v3819
    %v3895 = vmul.f32 %v3638, %v3819
    %v3896 = vmul.f32 %v3639, %v3819
    %v3897 = vmul.f32 %v3640, %v3819
    %v3898 = vmul.f32 %v3641, %v3819
    %v3899 = vmul.f32 %v3642, %v3819
    %v3900 = vmul.f32 %v3643, %v3819
    %v3901 = vmul.f32 %v3644, %v3819
    %v3902 = vmul.f32 %v3645, %v3819
    %v3903 = vmul.f32 %v3646, %v3819
    %v3904 = vmul.f32 %v3647, %v3819
    %v3905 = vmul.f32 %v3648, %v3819
    %v3906 = vmul.f32 %v3649, %v3819
    %v3907 = vmul.f32 %v3650, %v3819
    %v3908 = vmul.f32 %v3651, %v3819
    %v3909 = vmul.f32 %v3652, %v3819
    %v3910 = vmul.f32 %v3653, %v3819
    %v3911 = vmul.f32 %v3654, %v3819
    %v3912 = vmul.f32 %v3655, %v3819
    %v3913 = vmul.f32 %v3656, %v3819
    %v3914 = vmul.f32 %v3657, %v3819
    %v3915 = vmul.f32 %v3658, %v3819
    %v3916 = vmul.f32 %v3659, %v3819
    %v3917 = vmul.f32 %v3660, %v3819
    %v3918 = vmul.f32 %v3661, %v3819
    %v3919 = vmul.f32 %v3662, %v3819
    %v3920 = vmul.f32 %v3663, %v3819
    %v3921 = vmul.f32 %v3664, %v3819
    %v3922 = vmul.f32 %v3665, %v3819
    %v3923 = vmul.f32 %v3666, %v3819
    %v3924 = vmul.f32 %v3667, %v3819
    %v3925 = vmul.f32 %v3668, %v3819
    %v3926 = vmul.f32 %v3669, %v3819
    %v3927 = vmul.f32 %v3670, %v3819
    %v3928 = vmul.f32 %v3671, %v3819
    %v3929 = vmul.f32 %v3672, %v3819
    %v3930 = vmul.f32 %v3673, %v3819
    %v3931 = vmul.f32 %v3674, %v3819
    %v3932 = vmul.f32 %v3675, %v3819
    %v3933 = vmul.f32 %v3676, %v3819
    %v3934 = vmul.f32 %v3677, %v3819
    %v3935 = vmul.f32 %v3678, %v3819
    %v3936 = vmul.f32 %v3679, %v3819
    %v3937 = vmul.f32 %v3680, %v3819
    %v3938 = vmul.f32 %v3681, %v3819
    %v3939 = vmul.f32 %v3682, %v3819
    %v3940 = vmul.f32 %v3683, %v3819
    %v3941 = vmul.f32 %v3684, %v3819
    %v3942 = vmul.f32 %v3685, %v3819
    %v3943 = vmul.f32 %v3686, %v3819
    %v3944 = vmul.f32 %v3687, %v3819
    %v3945 = vmul.f32 %v3688, %v3819
    %v3946 = vmul.f32 %v3689, %v3819
    %v3947 = vmul.f32 %v3690, %v3819
    %v3948 = vmul.f32 %v3691, %v3819
    %v3949 = vmul.f32 %v3692, %v3819
    %v3950 = vmul.f32 %v3693, %v3819
    %v3951 = vmul.f32 %v3694, %v3819
    %v3952 = vmul.f32 %v3695, %v3819
    %v3953 = vmul.f32 %v3696, %v3819
    %v3954 = vmul.f32 %v3697, %v3819
    %v3955 = vmul.f32 %v3698, %v3819
    %v3956 = vmul.f32 %v3699, %v3819
    %v3957 = vmul.f32 %v3700, %v3819
    %v3958 = vmul.f32 %v3701, %v3819
    %v3959 = vmul.f32 %v3702, %v3819
    %v3960 = vmul.f32 %v3703, %v3819
    %v3961 = vmul.f32 %v3704, %v3819
    %v3962 = vmul.f32 %v3705, %v3819
    %v3963 = vmul.f32 %v3706, %v3819
    %v3964 = vmul.f32 %v3707, %v3819
    %v3965 = vmul.f32 %v3708, %v3819
    %v3966 = vmul.f32 %v3709, %v3819
    %v3967 = vmul.f32 %v3710, %v3819
    %v3968 = vmul.f32 %v3711, %v3819
    %v3969 = vmul.f32 %v3712, %v3819
    %v3970 = vmul.f32 %v3713, %v3819
    %v3971 = vmul.f32 %v3714, %v3819
    %v3972 = vmul.f32 %v3715, %v3819
    %v3973 = vmul.f32 %v3716, %v3819
    %v3974 = vmul.f32 %v3717, %v3819
    %v3975 = vmul.f32 %v3718, %v3819
    %v3976 = vmul.f32 %v3719, %v3819
    %v3977 = vmul.f32 %v3720, %v3819
    %v3978 = vmul.f32 %v3721, %v3819
    %v3979 = vmul.f32 %v3722, %v3819
    %v3980 = vmul.f32 %v3723, %v3819
    %v3981 = vmul.f32 %v3724, %v3819
    %v3982 = vmul.f32 %v3725, %v3819
    %v3983 = vmul.f32 %v3726, %v3819
    %v3984 = vmul.f32 %v3727, %v3819
    %v3985 = vmul.f32 %v3728, %v3819
    %v3986 = vmul.f32 %v3729, %v3819
    %v3987 = vmul.f32 %v3730, %v3819
    %v3988 = vmul.f32 %v3731, %v3819
    %v3989 = vmul.f32 %v3732, %v3819
    %v3990 = vmul.f32 %v3733, %v3819
    %v3991 = vmul.f32 %v3734, %v3819
    %v3992 = vmul.f32 %v3735, %v3819
    %v3993 = vmul.f32 %v3736, %v3819
    %v3994 = vmul.f32 %v3737, %v3819
    %v3995 = vmul.f32 %v3738, %v3819
    %v3996 = vmul.f32 %v3739, %v3819
    %v3997 = vmul.f32 %v3740, %v3819
    %v3998 = vmul.f32 %v3741, %v3819
    %v3999 = vmul.f32 %v3742, %v3819
    %v4000 = vmul.f32 %v3743, %v3819
    %v4001 = vmul.f32 %v3744, %v3819
    %v4002 = vmul.f32 %v3745, %v3819
    %v4003 = vmul.f32 %v3746, %v3819
    %v4004 = vmul.f32 %v3747, %v3819
    %v4005 = vmul.f32 %v3748, %v3819
    %v4006 = vmul.f32 %v3749, %v3819
    %v4007 = vmul.f32 %v3750, %v3819
    %v4008 = vmul.f32 %v3751, %v3819
    %v4009 = vmul.f32 %v3752, %v3819
    %v4010 = vmul.f32 %v3753, %v3819
    %v4011 = vmul.f32 %v3754, %v3819
    %v4012 = vmul.f32 %v3755, %v3819
    %v4013 = vmul.f32 %v3756, %v3819
    %v4014 = vmul.f32 %v3757, %v3819
    %v4015 = vmul.f32 %v3758, %v3819
    %v4016 = vmul.f32 %v3759, %v3819
    %v4017 = vmul.f32 %v3760, %v3819
    %v4018 = vmul.f32 %v3761, %v3819
    %v4019 = vmul.f32 %v3762, %v3819
    %v4020 = vmul.f32 %v3763, %v3819
    %v4021 = vmul.f32 %v3764, %v3819
    %v4022 = vmul.f32 %v3765, %v3819
    %v4023 = vmul.f32 %v3766, %v3819
    %v4024 = vmul.f32 %v3767, %v3819
    %v4025 = vmul.f32 %v3768, %v3819
    %v4026 = vmul.f32 %v3769, %v3819
    %v4027 = vmul.f32 %v3770, %v3819
    %v4028 = vmul.f32 %v3771, %v3819
    %v4029 = vmul.f32 %v3772, %v3819
    %v4030 = vmul.f32 %v3773, %v3819
    %v4031 = vmul.f32 %v3774, %v3819
    %v4032 = vmul.f32 %v3775, %v3819
    %v4033 = vmul.f32 %v3776, %v3819
    %v4034 = vmul.f32 %v3777, %v3819
    %v4035 = vmul.f32 %v3778, %v3819
    %v4036 = vmul.f32 %v3779, %v3819
    %v4037 = vmul.f32 %v3780, %v3819
    %v4038 = vmul.f32 %v3781, %v3819
    %v4039 = vmul.f32 %v3782, %v3819
    %v4040 = vmul.f32 %v3783, %v3819
    %v4041 = vmul.f32 %v3784, %v3819
    %v4042 = vmul.f32 %v3785, %v3819
    %v4043 = vmul.f32 %v3786, %v3819
    %v4044 = vmul.f32 %v3787, %v3819
    %v4045 = vmul.f32 %v3788, %v3819
    %v4046 = vmul.f32 %v3789, %v3819
    %v4047 = vmul.f32 %v3790, %v3819
    %v4048 = vmul.f32 %v3791, %v3819
    %v4049 = vmul.f32 %v3792, %v3819
    %v4050 = vmul.f32 %v3793, %v3819
    %v4051 = vmul.f32 %v3794, %v3819
    %v4052 = vmul.f32 %v3795, %v3819
    %v4053 = vmul.f32 %v3796, %v3819
    %v4054 = vmul.f32 %v3797, %v3819
    %v4055 = vmul.f32 %v3798, %v3819
    %v4056 = vmul.f32 %v3799, %v3819
    %v4057 = vmul.f32 %v3800, %v3819
    %v4058 = vmul.f32 %v3801, %v3819
    %v4059 = vmul.f32 %v3802, %v3819
    %v4060 = vmul.f32 %v3803, %v3819
    %v4061 = vmul.f32 %v3804, %v3819
    %v4062 = vmul.f32 %v3805, %v3819
    %v4063 = vmul.f32 %v3806, %v3819
    %v4064 = vmul.f32 %v3807, %v3819
    %v4065 = vmul.f32 %v3808, %v3819
    %v4066 = vmul.f32 %v3809, %v3819
    %v4067 = vmul.f32 %v3810, %v3819
    %v4068 = vmul.f32 %v3811, %v3819
    %v4069 = vmul.f32 %v3812, %v3819
    %v4070 = vmul.f32 %v3813, %v3819
    %v4071 = vmul.f32 %v3814, %v3819
    %v4072 = vmul.f32 %v3815, %v3819
    %v4073 = vmul.f32 %v3816, %v3819
    %v4074 = vmul.f32 %v3817, %v3819
    %v4075 = vmul.f32 %v3818, %v3819
    %v4076 = vperm.slane %v442, 0
    %v4077 = vadd.f32 %v3820, %v4076
    %v4078 = vadd.f32 %v3821, %v4076
    %v4079 = vadd.f32 %v3822, %v4076
    %v4080 = vadd.f32 %v3823, %v4076
    %v4081 = vadd.f32 %v3824, %v4076
    %v4082 = vadd.f32 %v3825, %v4076
    %v4083 = vadd.f32 %v3826, %v4076
    %v4084 = vadd.f32 %v3827, %v4076
    %v4085 = vadd.f32 %v3828, %v4076
    %v4086 = vadd.f32 %v3829, %v4076
    %v4087 = vadd.f32 %v3830, %v4076
    %v4088 = vadd.f32 %v3831, %v4076
    %v4089 = vadd.f32 %v3832, %v4076
    %v4090 = vadd.f32 %v3833, %v4076
    %v4091 = vadd.f32 %v3834, %v4076
    %v4092 = vadd.f32 %v3835, %v4076
    %v4093 = vadd.f32 %v3836, %v4076
    %v4094 = vadd.f32 %v3837, %v4076
    %v4095 = vadd.f32 %v3838, %v4076
    %v4096 = vadd.f32 %v3839, %v4076
    %v4097 = vadd.f32 %v3840, %v4076
    %v4098 = vadd.f32 %v3841, %v4076
    %v4099 = vadd.f32 %v3842, %v4076
    %v4100 = vadd.f32 %v3843, %v4076
    %v4101 = vadd.f32 %v3844, %v4076
    %v4102 = vadd.f32 %v3845, %v4076
    %v4103 = vadd.f32 %v3846, %v4076
    %v4104 = vadd.f32 %v3847, %v4076
    %v4105 = vadd.f32 %v3848, %v4076
    %v4106 = vadd.f32 %v3849, %v4076
    %v4107 = vadd.f32 %v3850, %v4076
    %v4108 = vadd.f32 %v3851, %v4076
    %v4109 = vadd.f32 %v3852, %v4076
    %v4110 = vadd.f32 %v3853, %v4076
    %v4111 = vadd.f32 %v3854, %v4076
    %v4112 = vadd.f32 %v3855, %v4076
    %v4113 = vadd.f32 %v3856, %v4076
    %v4114 = vadd.f32 %v3857, %v4076
    %v4115 = vadd.f32 %v3858, %v4076
    %v4116 = vadd.f32 %v3859, %v4076
    %v4117 = vadd.f32 %v3860, %v4076
    %v4118 = vadd.f32 %v3861, %v4076
    %v4119 = vadd.f32 %v3862, %v4076
    %v4120 = vadd.f32 %v3863, %v4076
    %v4121 = vadd.f32 %v3864, %v4076
    %v4122 = vadd.f32 %v3865, %v4076
    %v4123 = vadd.f32 %v3866, %v4076
    %v4124 = vadd.f32 %v3867, %v4076
    %v4125 = vadd.f32 %v3868, %v4076
    %v4126 = vadd.f32 %v3869, %v4076
    %v4127 = vadd.f32 %v3870, %v4076
    %v4128 = vadd.f32 %v3871, %v4076
    %v4129 = vadd.f32 %v3872, %v4076
    %v4130 = vadd.f32 %v3873, %v4076
    %v4131 = vadd.f32 %v3874, %v4076
    %v4132 = vadd.f32 %v3875, %v4076
    %v4133 = vadd.f32 %v3876, %v4076
    %v4134 = vadd.f32 %v3877, %v4076
    %v4135 = vadd.f32 %v3878, %v4076
    %v4136 = vadd.f32 %v3879, %v4076
    %v4137 = vadd.f32 %v3880, %v4076
    %v4138 = vadd.f32 %v3881, %v4076
    %v4139 = vadd.f32 %v3882, %v4076
    %v4140 = vadd.f32 %v3883, %v4076
    %v4141 = vadd.f32 %v3884, %v4076
    %v4142 = vadd.f32 %v3885, %v4076
    %v4143 = vadd.f32 %v3886, %v4076
    %v4144 = vadd.f32 %v3887, %v4076
    %v4145 = vadd.f32 %v3888, %v4076
    %v4146 = vadd.f32 %v3889, %v4076
    %v4147 = vadd.f32 %v3890, %v4076
    %v4148 = vadd.f32 %v3891, %v4076
    %v4149 = vadd.f32 %v3892, %v4076
    %v4150 = vadd.f32 %v3893, %v4076
    %v4151 = vadd.f32 %v3894, %v4076
    %v4152 = vadd.f32 %v3895, %v4076
    %v4153 = vadd.f32 %v3896, %v4076
    %v4154 = vadd.f32 %v3897, %v4076
    %v4155 = vadd.f32 %v3898, %v4076
    %v4156 = vadd.f32 %v3899, %v4076
    %v4157 = vadd.f32 %v3900, %v4076
    %v4158 = vadd.f32 %v3901, %v4076
    %v4159 = vadd.f32 %v3902, %v4076
    %v4160 = vadd.f32 %v3903, %v4076
    %v4161 = vadd.f32 %v3904, %v4076
    %v4162 = vadd.f32 %v3905, %v4076
    %v4163 = vadd.f32 %v3906, %v4076
    %v4164 = vadd.f32 %v3907, %v4076
    %v4165 = vadd.f32 %v3908, %v4076
    %v4166 = vadd.f32 %v3909, %v4076
    %v4167 = vadd.f32 %v3910, %v4076
    %v4168 = vadd.f32 %v3911, %v4076
    %v4169 = vadd.f32 %v3912, %v4076
    %v4170 = vadd.f32 %v3913, %v4076
    %v4171 = vadd.f32 %v3914, %v4076
    %v4172 = vadd.f32 %v3915, %v4076
    %v4173 = vadd.f32 %v3916, %v4076
    %v4174 = vadd.f32 %v3917, %v4076
    %v4175 = vadd.f32 %v3918, %v4076
    %v4176 = vadd.f32 %v3919, %v4076
    %v4177 = vadd.f32 %v3920, %v4076
    %v4178 = vadd.f32 %v3921, %v4076
    %v4179 = vadd.f32 %v3922, %v4076
    %v4180 = vadd.f32 %v3923, %v4076
    %v4181 = vadd.f32 %v3924, %v4076
    %v4182 = vadd.f32 %v3925, %v4076
    %v4183 = vadd.f32 %v3926, %v4076
    %v4184 = vadd.f32 %v3927, %v4076
    %v4185 = vadd.f32 %v3928, %v4076
    %v4186 = vadd.f32 %v3929, %v4076
    %v4187 = vadd.f32 %v3930, %v4076
    %v4188 = vadd.f32 %v3931, %v4076
    %v4189 = vadd.f32 %v3932, %v4076
    %v4190 = vadd.f32 %v3933, %v4076
    %v4191 = vadd.f32 %v3934, %v4076
    %v4192 = vadd.f32 %v3935, %v4076
    %v4193 = vadd.f32 %v3936, %v4076
    %v4194 = vadd.f32 %v3937, %v4076
    %v4195 = vadd.f32 %v3938, %v4076
    %v4196 = vadd.f32 %v3939, %v4076
    %v4197 = vadd.f32 %v3940, %v4076
    %v4198 = vadd.f32 %v3941, %v4076
    %v4199 = vadd.f32 %v3942, %v4076
    %v4200 = vadd.f32 %v3943, %v4076
    %v4201 = vadd.f32 %v3944, %v4076
    %v4202 = vadd.f32 %v3945, %v4076
    %v4203 = vadd.f32 %v3946, %v4076
    %v4204 = vadd.f32 %v3947, %v4076
    %v4205 = vadd.f32 %v3948, %v4076
    %v4206 = vadd.f32 %v3949, %v4076
    %v4207 = vadd.f32 %v3950, %v4076
    %v4208 = vadd.f32 %v3951, %v4076
    %v4209 = vadd.f32 %v3952, %v4076
    %v4210 = vadd.f32 %v3953, %v4076
    %v4211 = vadd.f32 %v3954, %v4076
    %v4212 = vadd.f32 %v3955, %v4076
    %v4213 = vadd.f32 %v3956, %v4076
    %v4214 = vadd.f32 %v3957, %v4076
    %v4215 = vadd.f32 %v3958, %v4076
    %v4216 = vadd.f32 %v3959, %v4076
    %v4217 = vadd.f32 %v3960, %v4076
    %v4218 = vadd.f32 %v3961, %v4076
    %v4219 = vadd.f32 %v3962, %v4076
    %v4220 = vadd.f32 %v3963, %v4076
    %v4221 = vadd.f32 %v3964, %v4076
    %v4222 = vadd.f32 %v3965, %v4076
    %v4223 = vadd.f32 %v3966, %v4076
    %v4224 = vadd.f32 %v3967, %v4076
    %v4225 = vadd.f32 %v3968, %v4076
    %v4226 = vadd.f32 %v3969, %v4076
    %v4227 = vadd.f32 %v3970, %v4076
    %v4228 = vadd.f32 %v3971, %v4076
    %v4229 = vadd.f32 %v3972, %v4076
    %v4230 = vadd.f32 %v3973, %v4076
    %v4231 = vadd.f32 %v3974, %v4076
    %v4232 = vadd.f32 %v3975, %v4076
    %v4233 = vadd.f32 %v3976, %v4076
    %v4234 = vadd.f32 %v3977, %v4076
    %v4235 = vadd.f32 %v3978, %v4076
    %v4236 = vadd.f32 %v3979, %v4076
    %v4237 = vadd.f32 %v3980, %v4076
    %v4238 = vadd.f32 %v3981, %v4076
    %v4239 = vadd.f32 %v3982, %v4076
    %v4240 = vadd.f32 %v3983, %v4076
    %v4241 = vadd.f32 %v3984, %v4076
    %v4242 = vadd.f32 %v3985, %v4076
    %v4243 = vadd.f32 %v3986, %v4076
    %v4244 = vadd.f32 %v3987, %v4076
    %v4245 = vadd.f32 %v3988, %v4076
    %v4246 = vadd.f32 %v3989, %v4076
    %v4247 = vadd.f32 %v3990, %v4076
    %v4248 = vadd.f32 %v3991, %v4076
    %v4249 = vadd.f32 %v3992, %v4076
    %v4250 = vadd.f32 %v3993, %v4076
    %v4251 = vadd.f32 %v3994, %v4076
    %v4252 = vadd.f32 %v3995, %v4076
    %v4253 = vadd.f32 %v3996, %v4076
    %v4254 = vadd.f32 %v3997, %v4076
    %v4255 = vadd.f32 %v3998, %v4076
    %v4256 = vadd.f32 %v3999, %v4076
    %v4257 = vadd.f32 %v4000, %v4076
    %v4258 = vadd.f32 %v4001, %v4076
    %v4259 = vadd.f32 %v4002, %v4076
    %v4260 = vadd.f32 %v4003, %v4076
    %v4261 = vadd.f32 %v4004, %v4076
    %v4262 = vadd.f32 %v4005, %v4076
    %v4263 = vadd.f32 %v4006, %v4076
    %v4264 = vadd.f32 %v4007, %v4076
    %v4265 = vadd.f32 %v4008, %v4076
    %v4266 = vadd.f32 %v4009, %v4076
    %v4267 = vadd.f32 %v4010, %v4076
    %v4268 = vadd.f32 %v4011, %v4076
    %v4269 = vadd.f32 %v4012, %v4076
    %v4270 = vadd.f32 %v4013, %v4076
    %v4271 = vadd.f32 %v4014, %v4076
    %v4272 = vadd.f32 %v4015, %v4076
    %v4273 = vadd.f32 %v4016, %v4076
    %v4274 = vadd.f32 %v4017, %v4076
    %v4275 = vadd.f32 %v4018, %v4076
    %v4276 = vadd.f32 %v4019, %v4076
    %v4277 = vadd.f32 %v4020, %v4076
    %v4278 = vadd.f32 %v4021, %v4076
    %v4279 = vadd.f32 %v4022, %v4076
    %v4280 = vadd.f32 %v4023, %v4076
    %v4281 = vadd.f32 %v4024, %v4076
    %v4282 = vadd.f32 %v4025, %v4076
    %v4283 = vadd.f32 %v4026, %v4076
    %v4284 = vadd.f32 %v4027, %v4076
    %v4285 = vadd.f32 %v4028, %v4076
    %v4286 = vadd.f32 %v4029, %v4076
    %v4287 = vadd.f32 %v4030, %v4076
    %v4288 = vadd.f32 %v4031, %v4076
    %v4289 = vadd.f32 %v4032, %v4076
    %v4290 = vadd.f32 %v4033, %v4076
    %v4291 = vadd.f32 %v4034, %v4076
    %v4292 = vadd.f32 %v4035, %v4076
    %v4293 = vadd.f32 %v4036, %v4076
    %v4294 = vadd.f32 %v4037, %v4076
    %v4295 = vadd.f32 %v4038, %v4076
    %v4296 = vadd.f32 %v4039, %v4076
    %v4297 = vadd.f32 %v4040, %v4076
    %v4298 = vadd.f32 %v4041, %v4076
    %v4299 = vadd.f32 %v4042, %v4076
    %v4300 = vadd.f32 %v4043, %v4076
    %v4301 = vadd.f32 %v4044, %v4076
    %v4302 = vadd.f32 %v4045, %v4076
    %v4303 = vadd.f32 %v4046, %v4076
    %v4304 = vadd.f32 %v4047, %v4076
    %v4305 = vadd.f32 %v4048, %v4076
    %v4306 = vadd.f32 %v4049, %v4076
    %v4307 = vadd.f32 %v4050, %v4076
    %v4308 = vadd.f32 %v4051, %v4076
    %v4309 = vadd.f32 %v4052, %v4076
    %v4310 = vadd.f32 %v4053, %v4076
    %v4311 = vadd.f32 %v4054, %v4076
    %v4312 = vadd.f32 %v4055, %v4076
    %v4313 = vadd.f32 %v4056, %v4076
    %v4314 = vadd.f32 %v4057, %v4076
    %v4315 = vadd.f32 %v4058, %v4076
    %v4316 = vadd.f32 %v4059, %v4076
    %v4317 = vadd.f32 %v4060, %v4076
    %v4318 = vadd.f32 %v4061, %v4076
    %v4319 = vadd.f32 %v4062, %v4076
    %v4320 = vadd.f32 %v4063, %v4076
    %v4321 = vadd.f32 %v4064, %v4076
    %v4322 = vadd.f32 %v4065, %v4076
    %v4323 = vadd.f32 %v4066, %v4076
    %v4324 = vadd.f32 %v4067, %v4076
    %v4325 = vadd.f32 %v4068, %v4076
    %v4326 = vadd.f32 %v4069, %v4076
    %v4327 = vadd.f32 %v4070, %v4076
    %v4328 = vadd.f32 %v4071, %v4076
    %v4329 = vadd.f32 %v4072, %v4076
    %v4330 = vadd.f32 %v4073, %v4076
    %v4331 = vadd.f32 %v4074, %v4076
    %v4332 = vadd.f32 %v4075, %v4076
    %v4333 = vmax.f32 %v4077, 0.0
    %v4334 = vmax.f32 %v4078, 0.0
    %v4335 = vmax.f32 %v4079, 0.0
    %v4336 = vmax.f32 %v4080, 0.0
    %v4337 = vmax.f32 %v4081, 0.0
    %v4338 = vmax.f32 %v4082, 0.0
    %v4339 = vmax.f32 %v4083, 0.0
    %v4340 = vmax.f32 %v4084, 0.0
    %v4341 = vmax.f32 %v4085, 0.0
    %v4342 = vmax.f32 %v4086, 0.0
    %v4343 = vmax.f32 %v4087, 0.0
    %v4344 = vmax.f32 %v4088, 0.0
    %v4345 = vmax.f32 %v4089, 0.0
    %v4346 = vmax.f32 %v4090, 0.0
    %v4347 = vmax.f32 %v4091, 0.0
    %v4348 = vmax.f32 %v4092, 0.0
    %v4349 = vmax.f32 %v4093, 0.0
    %v4350 = vmax.f32 %v4094, 0.0
    %v4351 = vmax.f32 %v4095, 0.0
    %v4352 = vmax.f32 %v4096, 0.0
    %v4353 = vmax.f32 %v4097, 0.0
    %v4354 = vmax.f32 %v4098, 0.0
    %v4355 = vmax.f32 %v4099, 0.0
    %v4356 = vmax.f32 %v4100, 0.0
    %v4357 = vmax.f32 %v4101, 0.0
    %v4358 = vmax.f32 %v4102, 0.0
    %v4359 = vmax.f32 %v4103, 0.0
    %v4360 = vmax.f32 %v4104, 0.0
    %v4361 = vmax.f32 %v4105, 0.0
    %v4362 = vmax.f32 %v4106, 0.0
    %v4363 = vmax.f32 %v4107, 0.0
    %v4364 = vmax.f32 %v4108, 0.0
    %v4365 = vmax.f32 %v4109, 0.0
    %v4366 = vmax.f32 %v4110, 0.0
    %v4367 = vmax.f32 %v4111, 0.0
    %v4368 = vmax.f32 %v4112, 0.0
    %v4369 = vmax.f32 %v4113, 0.0
    %v4370 = vmax.f32 %v4114, 0.0
    %v4371 = vmax.f32 %v4115, 0.0
    %v4372 = vmax.f32 %v4116, 0.0
    %v4373 = vmax.f32 %v4117, 0.0
    %v4374 = vmax.f32 %v4118, 0.0
    %v4375 = vmax.f32 %v4119, 0.0
    %v4376 = vmax.f32 %v4120, 0.0
    %v4377 = vmax.f32 %v4121, 0.0
    %v4378 = vmax.f32 %v4122, 0.0
    %v4379 = vmax.f32 %v4123, 0.0
    %v4380 = vmax.f32 %v4124, 0.0
    %v4381 = vmax.f32 %v4125, 0.0
    %v4382 = vmax.f32 %v4126, 0.0
    %v4383 = vmax.f32 %v4127, 0.0
    %v4384 = vmax.f32 %v4128, 0.0
    %v4385 = vmax.f32 %v4129, 0.0
    %v4386 = vmax.f32 %v4130, 0.0
    %v4387 = vmax.f32 %v4131, 0.0
    %v4388 = vmax.f32 %v4132, 0.0
    %v4389 = vmax.f32 %v4133, 0.0
    %v4390 = vmax.f32 %v4134, 0.0
    %v4391 = vmax.f32 %v4135, 0.0
    %v4392 = vmax.f32 %v4136, 0.0
    %v4393 = vmax.f32 %v4137, 0.0
    %v4394 = vmax.f32 %v4138, 0.0
    %v4395 = vmax.f32 %v4139, 0.0
    %v4396 = vmax.f32 %v4140, 0.0
    %v4397 = vmax.f32 %v4141, 0.0
    %v4398 = vmax.f32 %v4142, 0.0
    %v4399 = vmax.f32 %v4143, 0.0
    %v4400 = vmax.f32 %v4144, 0.0
    %v4401 = vmax.f32 %v4145, 0.0
    %v4402 = vmax.f32 %v4146, 0.0
    %v4403 = vmax.f32 %v4147, 0.0
    %v4404 = vmax.f32 %v4148, 0.0
    %v4405 = vmax.f32 %v4149, 0.0
    %v4406 = vmax.f32 %v4150, 0.0
    %v4407 = vmax.f32 %v4151, 0.0
    %v4408 = vmax.f32 %v4152, 0.0
    %v4409 = vmax.f32 %v4153, 0.0
    %v4410 = vmax.f32 %v4154, 0.0
    %v4411 = vmax.f32 %v4155, 0.0
    %v4412 = vmax.f32 %v4156, 0.0
    %v4413 = vmax.f32 %v4157, 0.0
    %v4414 = vmax.f32 %v4158, 0.0
    %v4415 = vmax.f32 %v4159, 0.0
    %v4416 = vmax.f32 %v4160, 0.0
    %v4417 = vmax.f32 %v4161, 0.0
    %v4418 = vmax.f32 %v4162, 0.0
    %v4419 = vmax.f32 %v4163, 0.0
    %v4420 = vmax.f32 %v4164, 0.0
    %v4421 = vmax.f32 %v4165, 0.0
    %v4422 = vmax.f32 %v4166, 0.0
    %v4423 = vmax.f32 %v4167, 0.0
    %v4424 = vmax.f32 %v4168, 0.0
    %v4425 = vmax.f32 %v4169, 0.0
    %v4426 = vmax.f32 %v4170, 0.0
    %v4427 = vmax.f32 %v4171, 0.0
    %v4428 = vmax.f32 %v4172, 0.0
    %v4429 = vmax.f32 %v4173, 0.0
    %v4430 = vmax.f32 %v4174, 0.0
    %v4431 = vmax.f32 %v4175, 0.0
    %v4432 = vmax.f32 %v4176, 0.0
    %v4433 = vmax.f32 %v4177, 0.0
    %v4434 = vmax.f32 %v4178, 0.0
    %v4435 = vmax.f32 %v4179, 0.0
    %v4436 = vmax.f32 %v4180, 0.0
    %v4437 = vmax.f32 %v4181, 0.0
    %v4438 = vmax.f32 %v4182, 0.0
    %v4439 = vmax.f32 %v4183, 0.0
    %v4440 = vmax.f32 %v4184, 0.0
    %v4441 = vmax.f32 %v4185, 0.0
    %v4442 = vmax.f32 %v4186, 0.0
    %v4443 = vmax.f32 %v4187, 0.0
    %v4444 = vmax.f32 %v4188, 0.0
    %v4445 = vmax.f32 %v4189, 0.0
    %v4446 = vmax.f32 %v4190, 0.0
    %v4447 = vmax.f32 %v4191, 0.0
    %v4448 = vmax.f32 %v4192, 0.0
    %v4449 = vmax.f32 %v4193, 0.0
    %v4450 = vmax.f32 %v4194, 0.0
    %v4451 = vmax.f32 %v4195, 0.0
    %v4452 = vmax.f32 %v4196, 0.0
    %v4453 = vmax.f32 %v4197, 0.0
    %v4454 = vmax.f32 %v4198, 0.0
    %v4455 = vmax.f32 %v4199, 0.0
    %v4456 = vmax.f32 %v4200, 0.0
    %v4457 = vmax.f32 %v4201, 0.0
    %v4458 = vmax.f32 %v4202, 0.0
    %v4459 = vmax.f32 %v4203, 0.0
    %v4460 = vmax.f32 %v4204, 0.0
    %v4461 = vmax.f32 %v4205, 0.0
    %v4462 = vmax.f32 %v4206, 0.0
    %v4463 = vmax.f32 %v4207, 0.0
    %v4464 = vmax.f32 %v4208, 0.0
    %v4465 = vmax.f32 %v4209, 0.0
    %v4466 = vmax.f32 %v4210, 0.0
    %v4467 = vmax.f32 %v4211, 0.0
    %v4468 = vmax.f32 %v4212, 0.0
    %v4469 = vmax.f32 %v4213, 0.0
    %v4470 = vmax.f32 %v4214, 0.0
    %v4471 = vmax.f32 %v4215, 0.0
    %v4472 = vmax.f32 %v4216, 0.0
    %v4473 = vmax.f32 %v4217, 0.0
    %v4474 = vmax.f32 %v4218, 0.0
    %v4475 = vmax.f32 %v4219, 0.0
    %v4476 = vmax.f32 %v4220, 0.0
    %v4477 = vmax.f32 %v4221, 0.0
    %v4478 = vmax.f32 %v4222, 0.0
    %v4479 = vmax.f32 %v4223, 0.0
    %v4480 = vmax.f32 %v4224, 0.0
    %v4481 = vmax.f32 %v4225, 0.0
    %v4482 = vmax.f32 %v4226, 0.0
    %v4483 = vmax.f32 %v4227, 0.0
    %v4484 = vmax.f32 %v4228, 0.0
    %v4485 = vmax.f32 %v4229, 0.0
    %v4486 = vmax.f32 %v4230, 0.0
    %v4487 = vmax.f32 %v4231, 0.0
    %v4488 = vmax.f32 %v4232, 0.0
    %v4489 = vmax.f32 %v4233, 0.0
    %v4490 = vmax.f32 %v4234, 0.0
    %v4491 = vmax.f32 %v4235, 0.0
    %v4492 = vmax.f32 %v4236, 0.0
    %v4493 = vmax.f32 %v4237, 0.0
    %v4494 = vmax.f32 %v4238, 0.0
    %v4495 = vmax.f32 %v4239, 0.0
    %v4496 = vmax.f32 %v4240, 0.0
    %v4497 = vmax.f32 %v4241, 0.0
    %v4498 = vmax.f32 %v4242, 0.0
    %v4499 = vmax.f32 %v4243, 0.0
    %v4500 = vmax.f32 %v4244, 0.0
    %v4501 = vmax.f32 %v4245, 0.0
    %v4502 = vmax.f32 %v4246, 0.0
    %v4503 = vmax.f32 %v4247, 0.0
    %v4504 = vmax.f32 %v4248, 0.0
    %v4505 = vmax.f32 %v4249, 0.0
    %v4506 = vmax.f32 %v4250, 0.0
    %v4507 = vmax.f32 %v4251, 0.0
    %v4508 = vmax.f32 %v4252, 0.0
    %v4509 = vmax.f32 %v4253, 0.0
    %v4510 = vmax.f32 %v4254, 0.0
    %v4511 = vmax.f32 %v4255, 0.0
    %v4512 = vmax.f32 %v4256, 0.0
    %v4513 = vmax.f32 %v4257, 0.0
    %v4514 = vmax.f32 %v4258, 0.0
    %v4515 = vmax.f32 %v4259, 0.0
    %v4516 = vmax.f32 %v4260, 0.0
    %v4517 = vmax.f32 %v4261, 0.0
    %v4518 = vmax.f32 %v4262, 0.0
    %v4519 = vmax.f32 %v4263, 0.0
    %v4520 = vmax.f32 %v4264, 0.0
    %v4521 = vmax.f32 %v4265, 0.0
    %v4522 = vmax.f32 %v4266, 0.0
    %v4523 = vmax.f32 %v4267, 0.0
    %v4524 = vmax.f32 %v4268, 0.0
    %v4525 = vmax.f32 %v4269, 0.0
    %v4526 = vmax.f32 %v4270, 0.0
    %v4527 = vmax.f32 %v4271, 0.0
    %v4528 = vmax.f32 %v4272, 0.0
    %v4529 = vmax.f32 %v4273, 0.0
    %v4530 = vmax.f32 %v4274, 0.0
    %v4531 = vmax.f32 %v4275, 0.0
    %v4532 = vmax.f32 %v4276, 0.0
    %v4533 = vmax.f32 %v4277, 0.0
    %v4534 = vmax.f32 %v4278, 0.0
    %v4535 = vmax.f32 %v4279, 0.0
    %v4536 = vmax.f32 %v4280, 0.0
    %v4537 = vmax.f32 %v4281, 0.0
    %v4538 = vmax.f32 %v4282, 0.0
    %v4539 = vmax.f32 %v4283, 0.0
    %v4540 = vmax.f32 %v4284, 0.0
    %v4541 = vmax.f32 %v4285, 0.0
    %v4542 = vmax.f32 %v4286, 0.0
    %v4543 = vmax.f32 %v4287, 0.0
    %v4544 = vmax.f32 %v4288, 0.0
    %v4545 = vmax.f32 %v4289, 0.0
    %v4546 = vmax.f32 %v4290, 0.0
    %v4547 = vmax.f32 %v4291, 0.0
    %v4548 = vmax.f32 %v4292, 0.0
    %v4549 = vmax.f32 %v4293, 0.0
    %v4550 = vmax.f32 %v4294, 0.0
    %v4551 = vmax.f32 %v4295, 0.0
    %v4552 = vmax.f32 %v4296, 0.0
    %v4553 = vmax.f32 %v4297, 0.0
    %v4554 = vmax.f32 %v4298, 0.0
    %v4555 = vmax.f32 %v4299, 0.0
    %v4556 = vmax.f32 %v4300, 0.0
    %v4557 = vmax.f32 %v4301, 0.0
    %v4558 = vmax.f32 %v4302, 0.0
    %v4559 = vmax.f32 %v4303, 0.0
    %v4560 = vmax.f32 %v4304, 0.0
    %v4561 = vmax.f32 %v4305, 0.0
    %v4562 = vmax.f32 %v4306, 0.0
    %v4563 = vmax.f32 %v4307, 0.0
    %v4564 = vmax.f32 %v4308, 0.0
    %v4565 = vmax.f32 %v4309, 0.0
    %v4566 = vmax.f32 %v4310, 0.0
    %v4567 = vmax.f32 %v4311, 0.0
    %v4568 = vmax.f32 %v4312, 0.0
    %v4569 = vmax.f32 %v4313, 0.0
    %v4570 = vmax.f32 %v4314, 0.0
    %v4571 = vmax.f32 %v4315, 0.0
    %v4572 = vmax.f32 %v4316, 0.0
    %v4573 = vmax.f32 %v4317, 0.0
    %v4574 = vmax.f32 %v4318, 0.0
    %v4575 = vmax.f32 %v4319, 0.0
    %v4576 = vmax.f32 %v4320, 0.0
    %v4577 = vmax.f32 %v4321, 0.0
    %v4578 = vmax.f32 %v4322, 0.0
    %v4579 = vmax.f32 %v4323, 0.0
    %v4580 = vmax.f32 %v4324, 0.0
    %v4581 = vmax.f32 %v4325, 0.0
    %v4582 = vmax.f32 %v4326, 0.0
    %v4583 = vmax.f32 %v4327, 0.0
    %v4584 = vmax.f32 %v4328, 0.0
    %v4585 = vmax.f32 %v4329, 0.0
    %v4586 = vmax.f32 %v4330, 0.0
    %v4587 = vmax.f32 %v4331, 0.0
    %v4588 = vmax.f32 %v4332, 0.0
    %v4589 = vmax.f32 %v4333, %v4397
    %v4590 = vmax.f32 %v4334, %v4398
    %v4591 = vmax.f32 %v4335, %v4399
    %v4592 = vmax.f32 %v4336, %v4400
    %v4593 = vmax.f32 %v4337, %v4401
    %v4594 = vmax.f32 %v4338, %v4402
    %v4595 = vmax.f32 %v4339, %v4403
    %v4596 = vmax.f32 %v4340, %v4404
    %v4597 = vmax.f32 %v4341, %v4405
    %v4598 = vmax.f32 %v4342, %v4406
    %v4599 = vmax.f32 %v4343, %v4407
    %v4600 = vmax.f32 %v4344, %v4408
    %v4601 = vmax.f32 %v4345, %v4409
    %v4602 = vmax.f32 %v4346, %v4410
    %v4603 = vmax.f32 %v4347, %v4411
    %v4604 = vmax.f32 %v4348, %v4412
    %v4605 = vmax.f32 %v4349, %v4413
    %v4606 = vmax.f32 %v4350, %v4414
    %v4607 = vmax.f32 %v4351, %v4415
    %v4608 = vmax.f32 %v4352, %v4416
    %v4609 = vmax.f32 %v4353, %v4417
    %v4610 = vmax.f32 %v4354, %v4418
    %v4611 = vmax.f32 %v4355, %v4419
    %v4612 = vmax.f32 %v4356, %v4420
    %v4613 = vmax.f32 %v4357, %v4421
    %v4614 = vmax.f32 %v4358, %v4422
    %v4615 = vmax.f32 %v4359, %v4423
    %v4616 = vmax.f32 %v4360, %v4424
    %v4617 = vmax.f32 %v4361, %v4425
    %v4618 = vmax.f32 %v4362, %v4426
    %v4619 = vmax.f32 %v4363, %v4427
    %v4620 = vmax.f32 %v4364, %v4428
    %v4621 = vmax.f32 %v4365, %v4429
    %v4622 = vmax.f32 %v4366, %v4430
    %v4623 = vmax.f32 %v4367, %v4431
    %v4624 = vmax.f32 %v4368, %v4432
    %v4625 = vmax.f32 %v4369, %v4433
    %v4626 = vmax.f32 %v4370, %v4434
    %v4627 = vmax.f32 %v4371, %v4435
    %v4628 = vmax.f32 %v4372, %v4436
    %v4629 = vmax.f32 %v4373, %v4437
    %v4630 = vmax.f32 %v4374, %v4438
    %v4631 = vmax.f32 %v4375, %v4439
    %v4632 = vmax.f32 %v4376, %v4440
    %v4633 = vmax.f32 %v4377, %v4441
    %v4634 = vmax.f32 %v4378, %v4442
    %v4635 = vmax.f32 %v4379, %v4443
    %v4636 = vmax.f32 %v4380, %v4444
    %v4637 = vmax.f32 %v4381, %v4445
    %v4638 = vmax.f32 %v4382, %v4446
    %v4639 = vmax.f32 %v4383, %v4447
    %v4640 = vmax.f32 %v4384, %v4448
    %v4641 = vmax.f32 %v4385, %v4449
    %v4642 = vmax.f32 %v4386, %v4450
    %v4643 = vmax.f32 %v4387, %v4451
    %v4644 = vmax.f32 %v4388, %v4452
    %v4645 = vmax.f32 %v4389, %v4453
    %v4646 = vmax.f32 %v4390, %v4454
    %v4647 = vmax.f32 %v4391, %v4455
    %v4648 = vmax.f32 %v4392, %v4456
    %v4649 = vmax.f32 %v4393, %v4457
    %v4650 = vmax.f32 %v4394, %v4458
    %v4651 = vmax.f32 %v4395, %v4459
    %v4652 = vmax.f32 %v4396, %v4460
    %v4653 = vmax.f32 %v4461, %v4525
    %v4654 = vmax.f32 %v4462, %v4526
    %v4655 = vmax.f32 %v4463, %v4527
    %v4656 = vmax.f32 %v4464, %v4528
    %v4657 = vmax.f32 %v4465, %v4529
    %v4658 = vmax.f32 %v4466, %v4530
    %v4659 = vmax.f32 %v4467, %v4531
    %v4660 = vmax.f32 %v4468, %v4532
    %v4661 = vmax.f32 %v4469, %v4533
    %v4662 = vmax.f32 %v4470, %v4534
    %v4663 = vmax.f32 %v4471, %v4535
    %v4664 = vmax.f32 %v4472, %v4536
    %v4665 = vmax.f32 %v4473, %v4537
    %v4666 = vmax.f32 %v4474, %v4538
    %v4667 = vmax.f32 %v4475, %v4539
    %v4668 = vmax.f32 %v4476, %v4540
    %v4669 = vmax.f32 %v4477, %v4541
    %v4670 = vmax.f32 %v4478, %v4542
    %v4671 = vmax.f32 %v4479, %v4543
    %v4672 = vmax.f32 %v4480, %v4544
    %v4673 = vmax.f32 %v4481, %v4545
    %v4674 = vmax.f32 %v4482, %v4546
    %v4675 = vmax.f32 %v4483, %v4547
    %v4676 = vmax.f32 %v4484, %v4548
    %v4677 = vmax.f32 %v4485, %v4549
    %v4678 = vmax.f32 %v4486, %v4550
    %v4679 = vmax.f32 %v4487, %v4551
    %v4680 = vmax.f32 %v4488, %v4552
    %v4681 = vmax.f32 %v4489, %v4553
    %v4682 = vmax.f32 %v4490, %v4554
    %v4683 = vmax.f32 %v4491, %v4555
    %v4684 = vmax.f32 %v4492, %v4556
    %v4685 = vmax.f32 %v4493, %v4557
    %v4686 = vmax.f32 %v4494, %v4558
    %v4687 = vmax.f32 %v4495, %v4559
    %v4688 = vmax.f32 %v4496, %v4560
    %v4689 = vmax.f32 %v4497, %v4561
    %v4690 = vmax.f32 %v4498, %v4562
    %v4691 = vmax.f32 %v4499, %v4563
    %v4692 = vmax.f32 %v4500, %v4564
    %v4693 = vmax.f32 %v4501, %v4565
    %v4694 = vmax.f32 %v4502, %v4566
    %v4695 = vmax.f32 %v4503, %v4567
    %v4696 = vmax.f32 %v4504, %v4568
    %v4697 = vmax.f32 %v4505, %v4569
    %v4698 = vmax.f32 %v4506, %v4570
    %v4699 = vmax.f32 %v4507, %v4571
    %v4700 = vmax.f32 %v4508, %v4572
    %v4701 = vmax.f32 %v4509, %v4573
    %v4702 = vmax.f32 %v4510, %v4574
    %v4703 = vmax.f32 %v4511, %v4575
    %v4704 = vmax.f32 %v4512, %v4576
    %v4705 = vmax.f32 %v4513, %v4577
    %v4706 = vmax.f32 %v4514, %v4578
    %v4707 = vmax.f32 %v4515, %v4579
    %v4708 = vmax.f32 %v4516, %v4580
    %v4709 = vmax.f32 %v4517, %v4581
    %v4710 = vmax.f32 %v4518, %v4582
    %v4711 = vmax.f32 %v4519, %v4583
    %v4712 = vmax.f32 %v4520, %v4584
    %v4713 = vmax.f32 %v4521, %v4585
    %v4714 = vmax.f32 %v4522, %v4586
    %v4715 = vmax.f32 %v4523, %v4587
    %v4716 = vmax.f32 %v4524, %v4588
    %v4717 = vmax.f32 %v4589, %v4653
    %v4718 = vmax.f32 %v4590, %v4654
    %v4719 = vmax.f32 %v4591, %v4655
    %v4720 = vmax.f32 %v4592, %v4656
    %v4721 = vmax.f32 %v4593, %v4657
    %v4722 = vmax.f32 %v4594, %v4658
    %v4723 = vmax.f32 %v4595, %v4659
    %v4724 = vmax.f32 %v4596, %v4660
    %v4725 = vmax.f32 %v4597, %v4661
    %v4726 = vmax.f32 %v4598, %v4662
    %v4727 = vmax.f32 %v4599, %v4663
    %v4728 = vmax.f32 %v4600, %v4664
    %v4729 = vmax.f32 %v4601, %v4665
    %v4730 = vmax.f32 %v4602, %v4666
    %v4731 = vmax.f32 %v4603, %v4667
    %v4732 = vmax.f32 %v4604, %v4668
    %v4733 = vmax.f32 %v4605, %v4669
    %v4734 = vmax.f32 %v4606, %v4670
    %v4735 = vmax.f32 %v4607, %v4671
    %v4736 = vmax.f32 %v4608, %v4672
    %v4737 = vmax.f32 %v4609, %v4673
    %v4738 = vmax.f32 %v4610, %v4674
    %v4739 = vmax.f32 %v4611, %v4675
    %v4740 = vmax.f32 %v4612, %v4676
    %v4741 = vmax.f32 %v4613, %v4677
    %v4742 = vmax.f32 %v4614, %v4678
    %v4743 = vmax.f32 %v4615, %v4679
    %v4744 = vmax.f32 %v4616, %v4680
    %v4745 = vmax.f32 %v4617, %v4681
    %v4746 = vmax.f32 %v4618, %v4682
    %v4747 = vmax.f32 %v4619, %v4683
    %v4748 = vmax.f32 %v4620, %v4684
    %v4749 = vmax.f32 %v4621, %v4685
    %v4750 = vmax.f32 %v4622, %v4686
    %v4751 = vmax.f32 %v4623, %v4687
    %v4752 = vmax.f32 %v4624, %v4688
    %v4753 = vmax.f32 %v4625, %v4689
    %v4754 = vmax.f32 %v4626, %v4690
    %v4755 = vmax.f32 %v4627, %v4691
    %v4756 = vmax.f32 %v4628, %v4692
    %v4757 = vmax.f32 %v4629, %v4693
    %v4758 = vmax.f32 %v4630, %v4694
    %v4759 = vmax.f32 %v4631, %v4695
    %v4760 = vmax.f32 %v4632, %v4696
    %v4761 = vmax.f32 %v4633, %v4697
    %v4762 = vmax.f32 %v4634, %v4698
    %v4763 = vmax.f32 %v4635, %v4699
    %v4764 = vmax.f32 %v4636, %v4700
    %v4765 = vmax.f32 %v4637, %v4701
    %v4766 = vmax.f32 %v4638, %v4702
    %v4767 = vmax.f32 %v4639, %v4703
    %v4768 = vmax.f32 %v4640, %v4704
    %v4769 = vmax.f32 %v4641, %v4705
    %v4770 = vmax.f32 %v4642, %v4706
    %v4771 = vmax.f32 %v4643, %v4707
    %v4772 = vmax.f32 %v4644, %v4708
    %v4773 = vmax.f32 %v4645, %v4709
    %v4774 = vmax.f32 %v4646, %v4710
    %v4775 = vmax.f32 %v4647, %v4711
    %v4776 = vmax.f32 %v4648, %v4712
    %v4777 = vmax.f32 %v4649, %v4713
    %v4778 = vmax.f32 %v4650, %v4714
    %v4779 = vmax.f32 %v4651, %v4715
    %v4780 = vmax.f32 %v4652, %v4716
    %s4781 = scalar_lea.vmem [#allocation2], 80
    %4782 = vst.msk [vmem:[%s4781 + $0x8] sm:$0xff] %vm27, %v4717
    %4783 = vst.msk [vmem:[%s4781 + $0x10] sm:$0xff] %vm27, %v4718
    %4784 = vst.msk [vmem:[%s4781 + $0x18] sm:$0xff] %vm27, %v4719
    %4785 = vst.msk [vmem:[%s4781 + $0x20] sm:$0xff] %vm27, %v4720
    %4786 = vst.msk [vmem:[%s4781 + $0x28] sm:$0xff] %vm27, %v4721
    %4787 = vst.msk [vmem:[%s4781 + $0x30] sm:$0xff] %vm27, %v4722
    %4788 = vst.msk [vmem:[%s4781 + $0x38] sm:$0xff] %vm27, %v4723
    %4789 = vst.msk [vmem:[%s4781 + $0x40] sm:$0xff] %vm27, %v4724
    %4790 = vst.msk [vmem:[%s4781 + $0x58] sm:$0xff] %vm27, %v4725
    %4791 = vst.msk [vmem:[%s4781 + $0x60] sm:$0xff] %vm27, %v4726
    %4792 = vst.msk [vmem:[%s4781 + $0x68] sm:$0xff] %vm27, %v4727
    %4793 = vst.msk [vmem:[%s4781 + $0x70] sm:$0xff] %vm27, %v4728
    %4794 = vst.msk [vmem:[%s4781 + $0x78] sm:$0xff] %vm27, %v4729
    %4795 = vst.msk [vmem:[%s4781 + $0x80] sm:$0xff] %vm27, %v4730
    %4796 = vst.msk [vmem:[%s4781 + $0x88] sm:$0xff] %vm27, %v4731
    %4797 = vst.msk [vmem:[%s4781 + $0x90] sm:$0xff] %vm27, %v4732
    %4798 = vst.msk [vmem:[%s4781 + $0xa8] sm:$0xff] %vm27, %v4733
    %4799 = vst.msk [vmem:[%s4781 + $0xb0] sm:$0xff] %vm27, %v4734
    %4800 = vst.msk [vmem:[%s4781 + $0xb8] sm:$0xff] %vm27, %v4735
    %4801 = vst.msk [vmem:[%s4781 + $0xc0] sm:$0xff] %vm27, %v4736
    %4802 = vst.msk [vmem:[%s4781 + $0xc8] sm:$0xff] %vm27, %v4737
    %4803 = vst.msk [vmem:[%s4781 + $0xd0] sm:$0xff] %vm27, %v4738
    %4804 = vst.msk [vmem:[%s4781 + $0xd8] sm:$0xff] %vm27, %v4739
    %4805 = vst.msk [vmem:[%s4781 + $0xe0] sm:$0xff] %vm27, %v4740
    %4806 = vst.msk [vmem:[%s4781 + $0xf8] sm:$0xff] %vm27, %v4741
    %4807 = vst.msk [vmem:[%s4781 + $0x100] sm:$0xff] %vm27, %v4742
    %4808 = vst.msk [vmem:[%s4781 + $0x108] sm:$0xff] %vm27, %v4743
    %4809 = vst.msk [vmem:[%s4781 + $0x110] sm:$0xff] %vm27, %v4744
    %4810 = vst.msk [vmem:[%s4781 + $0x118] sm:$0xff] %vm27, %v4745
    %4811 = vst.msk [vmem:[%s4781 + $0x120] sm:$0xff] %vm27, %v4746
    %4812 = vst.msk [vmem:[%s4781 + $0x128] sm:$0xff] %vm27, %v4747
    %4813 = vst.msk [vmem:[%s4781 + $0x130] sm:$0xff] %vm27, %v4748
    %4814 = vst.msk [vmem:[%s4781 + $0x148] sm:$0xff] %vm27, %v4749
    %4815 = vst.msk [vmem:[%s4781 + $0x150] sm:$0xff] %vm27, %v4750
    %4816 = vst.msk [vmem:[%s4781 + $0x158] sm:$0xff] %vm27, %v4751
    %4817 = vst.msk [vmem:[%s4781 + $0x160] sm:$0xff] %vm27, %v4752
    %4818 = vst.msk [vmem:[%s4781 + $0x168] sm:$0xff] %vm27, %v4753
    %4819 = vst.msk [vmem:[%s4781 + $0x170] sm:$0xff] %vm27, %v4754
    %4820 = vst.msk [vmem:[%s4781 + $0x178] sm:$0xff] %vm27, %v4755
    %4821 = vst.msk [vmem:[%s4781 + $0x180] sm:$0xff] %vm27, %v4756
    %4822 = vst.msk [vmem:[%s4781 + $0x198] sm:$0xff] %vm27, %v4757
    %4823 = vst.msk [vmem:[%s4781 + $0x1a0] sm:$0xff] %vm27, %v4758
    %4824 = vst.msk [vmem:[%s4781 + $0x1a8] sm:$0xff] %vm27, %v4759
    %4825 = vst.msk [vmem:[%s4781 + $0x1b0] sm:$0xff] %vm27, %v4760
    %4826 = vst.msk [vmem:[%s4781 + $0x1b8] sm:$0xff] %vm27, %v4761
    %4827 = vst.msk [vmem:[%s4781 + $0x1c0] sm:$0xff] %vm27, %v4762
    %4828 = vst.msk [vmem:[%s4781 + $0x1c8] sm:$0xff] %vm27, %v4763
    %4829 = vst.msk [vmem:[%s4781 + $0x1d0] sm:$0xff] %vm27, %v4764
    %4830 = vst.msk [vmem:[%s4781 + $0x1e8] sm:$0xff] %vm27, %v4765
    %4831 = vst.msk [vmem:[%s4781 + $0x1f0] sm:$0xff] %vm27, %v4766
    %4832 = vst.msk [vmem:[%s4781 + $0x1f8] sm:$0xff] %vm27, %v4767
    %4833 = vst.msk [vmem:[%s4781 + $0x200] sm:$0xff] %vm27, %v4768
    %4834 = vst.msk [vmem:[%s4781 + $0x208] sm:$0xff] %vm27, %v4769
    %4835 = vst.msk [vmem:[%s4781 + $0x210] sm:$0xff] %vm27, %v4770
    %4836 = vst.msk [vmem:[%s4781 + $0x218] sm:$0xff] %vm27, %v4771
    %4837 = vst.msk [vmem:[%s4781 + $0x220] sm:$0xff] %vm27, %v4772
    %4838 = vst.msk [vmem:[%s4781 + $0x238] sm:$0xff] %vm27, %v4773
    %4839 = vst.msk [vmem:[%s4781 + $0x240] sm:$0xff] %vm27, %v4774
    %4840 = vst.msk [vmem:[%s4781 + $0x248] sm:$0xff] %vm27, %v4775
    %4841 = vst.msk [vmem:[%s4781 + $0x250] sm:$0xff] %vm27, %v4776
    %4842 = vst.msk [vmem:[%s4781 + $0x258] sm:$0xff] %vm27, %v4777
    %4843 = vst.msk [vmem:[%s4781 + $0x260] sm:$0xff] %vm27, %v4778
    %4844 = vst.msk [vmem:[%s4781 + $0x268] sm:$0xff] %vm27, %v4779
    %4845 = vst.msk [vmem:[%s4781 + $0x270] sm:$0xff] %vm27, %v4780
    %v4846 = vld [vmem:[#allocation2] sm:$0xff]
    %v4847 = vld [vmem:[#allocation2 + $0x8] sm:$0xff]
    %v4848 = vld [vmem:[#allocation2 + $0x10] sm:$0xff]
    %v4849 = vld [vmem:[#allocation2 + $0x18] sm:$0xff]
    %v4850 = vld [vmem:[#allocation2 + $0x20] sm:$0xff]
    %v4851 = vld [vmem:[#allocation2 + $0x28] sm:$0xff]
    %v4852 = vld [vmem:[#allocation2 + $0x30] sm:$0xff]
    %v4853 = vld [vmem:[#allocation2 + $0x38] sm:$0xff]
    %v4854 = vld [vmem:[#allocation2 + $0x50] sm:$0xff]
    %v4855 = vld [vmem:[#allocation2 + $0x58] sm:$0xff]
    %v4856 = vld [vmem:[#allocation2 + $0x60] sm:$0xff]
    %v4857 = vld [vmem:[#allocation2 + $0x68] sm:$0xff]
    %v4858 = vld [vmem:[#allocation2 + $0x70] sm:$0xff]
    %v4859 = vld [vmem:[#allocation2 + $0x78] sm:$0xff]
    %v4860 = vld [vmem:[#allocation2 + $0x80] sm:$0xff]
    %v4861 = vld [vmem:[#allocation2 + $0x88] sm:$0xff]
    %v4862 = vld [vmem:[#allocation2 + $0xa0] sm:$0xff]
    %v4863 = vld [vmem:[#allocation2 + $0xa8] sm:$0xff]
    %v4864 = vld [vmem:[#allocation2 + $0xb0] sm:$0xff]
    %v4865 = vld [vmem:[#allocation2 + $0xb8] sm:$0xff]
    %v4866 = vld [vmem:[#allocation2 + $0xc0] sm:$0xff]
    %v4867 = vld [vmem:[#allocation2 + $0xc8] sm:$0xff]
    %v4868 = vld [vmem:[#allocation2 + $0xd0] sm:$0xff]
    %v4869 = vld [vmem:[#allocation2 + $0xd8] sm:$0xff]
    %v4870 = vld [vmem:[#allocation2 + $0xf0] sm:$0xff]
    %v4871 = vld [vmem:[#allocation2 + $0xf8] sm:$0xff]
    %v4872 = vld [vmem:[#allocation2 + $0x100] sm:$0xff]
    %v4873 = vld [vmem:[#allocation2 + $0x108] sm:$0xff]
    %v4874 = vld [vmem:[#allocation2 + $0x110] sm:$0xff]
    %v4875 = vld [vmem:[#allocation2 + $0x118] sm:$0xff]
    %v4876 = vld [vmem:[#allocation2 + $0x120] sm:$0xff]
    %v4877 = vld [vmem:[#allocation2 + $0x128] sm:$0xff]
    %v4878 = vld [vmem:[#allocation2 + $0x140] sm:$0xff]
    %v4879 = vld [vmem:[#allocation2 + $0x148] sm:$0xff]
    %v4880 = vld [vmem:[#allocation2 + $0x150] sm:$0xff]
    %v4881 = vld [vmem:[#allocation2 + $0x158] sm:$0xff]
    %v4882 = vld [vmem:[#allocation2 + $0x160] sm:$0xff]
    %v4883 = vld [vmem:[#allocation2 + $0x168] sm:$0xff]
    %v4884 = vld [vmem:[#allocation2 + $0x170] sm:$0xff]
    %v4885 = vld [vmem:[#allocation2 + $0x178] sm:$0xff]
    %v4886 = vld [vmem:[#allocation2 + $0x190] sm:$0xff]
    %v4887 = vld [vmem:[#allocation2 + $0x198] sm:$0xff]
    %v4888 = vld [vmem:[#allocation2 + $0x1a0] sm:$0xff]
    %v4889 = vld [vmem:[#allocation2 + $0x1a8] sm:$0xff]
    %v4890 = vld [vmem:[#allocation2 + $0x1b0] sm:$0xff]
    %v4891 = vld [vmem:[#allocation2 + $0x1b8] sm:$0xff]
    %v4892 = vld [vmem:[#allocation2 + $0x1c0] sm:$0xff]
    %v4893 = vld [vmem:[#allocation2 + $0x1c8] sm:$0xff]
    %v4894 = vld [vmem:[#allocation2 + $0x1e0] sm:$0xff]
    %v4895 = vld [vmem:[#allocation2 + $0x1e8] sm:$0xff]
    %v4896 = vld [vmem:[#allocation2 + $0x1f0] sm:$0xff]
    %v4897 = vld [vmem:[#allocation2 + $0x1f8] sm:$0xff]
    %v4898 = vld [vmem:[#allocation2 + $0x200] sm:$0xff]
    %v4899 = vld [vmem:[#allocation2 + $0x208] sm:$0xff]
    %v4900 = vld [vmem:[#allocation2 + $0x210] sm:$0xff]
    %v4901 = vld [vmem:[#allocation2 + $0x218] sm:$0xff]
    %v4902 = vld [vmem:[#allocation2 + $0x230] sm:$0xff]
    %v4903 = vld [vmem:[#allocation2 + $0x238] sm:$0xff]
    %v4904 = vld [vmem:[#allocation2 + $0x240] sm:$0xff]
    %v4905 = vld [vmem:[#allocation2 + $0x248] sm:$0xff]
    %v4906 = vld [vmem:[#allocation2 + $0x250] sm:$0xff]
    %v4907 = vld [vmem:[#allocation2 + $0x258] sm:$0xff]
    %v4908 = vld [vmem:[#allocation2 + $0x260] sm:$0xff]
    %v4909 = vld [vmem:[#allocation2 + $0x268] sm:$0xff]
    %v4910 = vld [vmem:[%s2] sm:$0xff]
    %v4911 = vld [vmem:[%s2 + $0x8] sm:$0xff]
    %v4912 = vld [vmem:[%s2 + $0x10] sm:$0xff]
    %v4913 = vld [vmem:[%s2 + $0x18] sm:$0xff]
    %v4914 = vld [vmem:[#allocation2 + $0x40] sm:$0xff]
    %v4915 = vld [vmem:[#allocation2 + $0x90] sm:$0xff]
    %v4916 = vld [vmem:[#allocation2 + $0xe0] sm:$0xff]
    %v4917 = vld [vmem:[#allocation2 + $0x130] sm:$0xff]
    %v4918 = vld [vmem:[#allocation2 + $0x180] sm:$0xff]
    %v4919 = vld [vmem:[#allocation2 + $0x1d0] sm:$0xff]
    %v4920 = vld [vmem:[#allocation2 + $0x220] sm:$0xff]
    %v4921 = vld [vmem:[#allocation2 + $0x270] sm:$0xff]
    %v4922 = vld [vmem:[%s2 + $0x20] sm:$0xff]
    %v4923 = vld [vmem:[%s2 + $0x28] sm:$0xff]
    %v4924 = vld [vmem:[%s2 + $0x30] sm:$0xff]
    %v4925 = vld [vmem:[%s2 + $0x38] sm:$0xff]
    %v4927 = vsel %vm27, %v4847, 0
    %v4930 = vsel %vm27, %v4848, 0
    %v4933 = vsel %vm27, %v4849, 0
    %v4936 = vsel %vm27, %v4850, 0
    %v4939 = vsel %vm27, %v4851, 0
    %v4942 = vsel %vm27, %v4852, 0
    %v4945 = vsel %vm27, %v4853, 0
    %v4948 = vsel %vm27, %v4914, 0
    %v4951 = vsel %vm27, %v4855, 0
    %v4954 = vsel %vm27, %v4856, 0
    %v4957 = vsel %vm27, %v4857, 0
    %v4960 = vsel %vm27, %v4858, 0
    %v4963 = vsel %vm27, %v4859, 0
    %v4966 = vsel %vm27, %v4860, 0
    %v4969 = vsel %vm27, %v4861, 0
    %v4972 = vsel %vm27, %v4915, 0
    %v4975 = vsel %vm27, %v4863, 0
    %v4978 = vsel %vm27, %v4864, 0
    %v4981 = vsel %vm27, %v4865, 0
    %v4984 = vsel %vm27, %v4866, 0
    %v4987 = vsel %vm27, %v4867, 0
    %v4990 = vsel %vm27, %v4868, 0
    %v4993 = vsel %vm27, %v4869, 0
    %v4996 = vsel %vm27, %v4916, 0
    %v4999 = vsel %vm27, %v4871, 0
    %v5002 = vsel %vm27, %v4872, 0
    %v5005 = vsel %vm27, %v4873, 0
    %v5008 = vsel %vm27, %v4874, 0
    %v5011 = vsel %vm27, %v4875, 0
    %v5014 = vsel %vm27, %v4876, 0
    %v5017 = vsel %vm27, %v4877, 0
    %v5020 = vsel %vm27, %v4917, 0
    %v5023 = vsel %vm27, %v4879, 0
    %v5026 = vsel %vm27, %v4880, 0
    %v5029 = vsel %vm27, %v4881, 0
    %v5032 = vsel %vm27, %v4882, 0
    %v5035 = vsel %vm27, %v4883, 0
    %v5038 = vsel %vm27, %v4884, 0
    %v5041 = vsel %vm27, %v4885, 0
    %v5044 = vsel %vm27, %v4918, 0
    %v5047 = vsel %vm27, %v4887, 0
    %v5050 = vsel %vm27, %v4888, 0
    %v5053 = vsel %vm27, %v4889, 0
    %v5056 = vsel %vm27, %v4890, 0
    %v5059 = vsel %vm27, %v4891, 0
    %v5062 = vsel %vm27, %v4892, 0
    %v5065 = vsel %vm27, %v4893, 0
    %v5068 = vsel %vm27, %v4919, 0
    %v5071 = vsel %vm27, %v4895, 0
    %v5074 = vsel %vm27, %v4896, 0
    %v5077 = vsel %vm27, %v4897, 0
    %v5080 = vsel %vm27, %v4898, 0
    %v5083 = vsel %vm27, %v4899, 0
    %v5086 = vsel %vm27, %v4900, 0
    %v5089 = vsel %vm27, %v4901, 0
    %v5092 = vsel %vm27, %v4920, 0
    %v5095 = vsel %vm27, %v4903, 0
    %v5098 = vsel %vm27, %v4904, 0
    %v5101 = vsel %vm27, %v4905, 0
    %v5104 = vsel %vm27, %v4906, 0
    %v5107 = vsel %vm27, %v4907, 0
    %v5110 = vsel %vm27, %v4908, 0
    %v5113 = vsel %vm27, %v4909, 0
    %v5116 = vsel %vm27, %v4921, 0
    %5118 = vmatpush.msra.mxu0 0.0
    %5119 = vmatpush.msra.mxu0 0.0
    %5120 = vmatpush.msra.mxu0 0.0
    %5121 = vmatpush.msra.mxu0 0.0
    %5122 = vmatpush.msra.mxu0 0.0
    %5123 = vmatpush.msra.mxu0 0.0
    %5124 = vmatpush.msra.mxu0 0.0
    %5125 = vmatpush.msra.mxu0 0.0
    %5126 = vmatpush.msra.mxu0 0.0
    %5127 = vmatpush.msra.mxu0 0.0
    %5128 = vmatpush.msra.mxu0 0.0
    %5129 = vmatpush.msra.mxu0 0.0
    %5130 = vmatpush.msra.mxu0 %v4925
    %5131 = vmatpush.msra.mxu0 %v4924
    %5132 = vmatpush.msra.mxu0 %v4923
    %5133 = vmatpush.msra.mxu0 %v4922
    %5134 = vmatmul.f32.gmra.mxu0 %v4927
    %v5135 = vpop.f32.mrf.mxu0
    %v5136 = vadd.f32 0.0, %v5135
    %5137 = vmatmul.f32.gmra.mxu0 %v4930
    %v5138 = vpop.f32.mrf.mxu0
    %v5139 = vadd.f32 0.0, %v5138
    %5140 = vmatmul.f32.gmra.mxu0 %v4933
    %v5141 = vpop.f32.mrf.mxu0
    %v5142 = vadd.f32 0.0, %v5141
    %5143 = vmatmul.f32.gmra.mxu0 %v4936
    %v5144 = vpop.f32.mrf.mxu0
    %v5145 = vadd.f32 0.0, %v5144
    %5146 = vmatmul.f32.gmra.mxu0 %v4939
    %v5147 = vpop.f32.mrf.mxu0
    %v5148 = vadd.f32 0.0, %v5147
    %5149 = vmatmul.f32.gmra.mxu0 %v4942
    %v5150 = vpop.f32.mrf.mxu0
    %v5151 = vadd.f32 0.0, %v5150
    %5152 = vmatmul.f32.gmra.mxu0 %v4945
    %v5153 = vpop.f32.mrf.mxu0
    %v5154 = vadd.f32 0.0, %v5153
    %5155 = vmatmul.f32.gmra.mxu0 %v4948
    %v5156 = vpop.f32.mrf.mxu0
    %v5157 = vadd.f32 0.0, %v5156
    %5158 = vmatmul.f32.gmra.mxu0 %v4951
    %v5159 = vpop.f32.mrf.mxu0
    %v5160 = vadd.f32 0.0, %v5159
    %5161 = vmatmul.f32.gmra.mxu0 %v4954
    %v5162 = vpop.f32.mrf.mxu0
    %v5163 = vadd.f32 0.0, %v5162
    %5164 = vmatmul.f32.gmra.mxu0 %v4957
    %v5165 = vpop.f32.mrf.mxu0
    %v5166 = vadd.f32 0.0, %v5165
    %5167 = vmatmul.f32.gmra.mxu0 %v4960
    %v5168 = vpop.f32.mrf.mxu0
    %v5169 = vadd.f32 0.0, %v5168
    %5170 = vmatmul.f32.gmra.mxu0 %v4963
    %v5171 = vpop.f32.mrf.mxu0
    %v5172 = vadd.f32 0.0, %v5171
    %5173 = vmatmul.f32.gmra.mxu0 %v4966
    %v5174 = vpop.f32.mrf.mxu0
    %v5175 = vadd.f32 0.0, %v5174
    %5176 = vmatmul.f32.gmra.mxu0 %v4969
    %v5177 = vpop.f32.mrf.mxu0
    %v5178 = vadd.f32 0.0, %v5177
    %5179 = vmatmul.f32.gmra.mxu0 %v4972
    %v5180 = vpop.f32.mrf.mxu0
    %v5181 = vadd.f32 0.0, %v5180
    %5182 = vmatmul.f32.gmra.mxu0 %v4975
    %v5183 = vpop.f32.mrf.mxu0
    %v5184 = vadd.f32 0.0, %v5183
    %5185 = vmatmul.f32.gmra.mxu0 %v4978
    %v5186 = vpop.f32.mrf.mxu0
    %v5187 = vadd.f32 0.0, %v5186
    %5188 = vmatmul.f32.gmra.mxu0 %v4981
    %v5189 = vpop.f32.mrf.mxu0
    %v5190 = vadd.f32 0.0, %v5189
    %5191 = vmatmul.f32.gmra.mxu0 %v4984
    %v5192 = vpop.f32.mrf.mxu0
    %v5193 = vadd.f32 0.0, %v5192
    %5194 = vmatmul.f32.gmra.mxu0 %v4987
    %v5195 = vpop.f32.mrf.mxu0
    %v5196 = vadd.f32 0.0, %v5195
    %5197 = vmatmul.f32.gmra.mxu0 %v4990
    %v5198 = vpop.f32.mrf.mxu0
    %v5199 = vadd.f32 0.0, %v5198
    %5200 = vmatmul.f32.gmra.mxu0 %v4993
    %v5201 = vpop.f32.mrf.mxu0
    %v5202 = vadd.f32 0.0, %v5201
    %5203 = vmatmul.f32.gmra.mxu0 %v4996
    %v5204 = vpop.f32.mrf.mxu0
    %v5205 = vadd.f32 0.0, %v5204
    %5206 = vmatmul.f32.gmra.mxu0 %v4999
    %v5207 = vpop.f32.mrf.mxu0
    %v5208 = vadd.f32 0.0, %v5207
    %5209 = vmatmul.f32.gmra.mxu0 %v5002
    %v5210 = vpop.f32.mrf.mxu0
    %v5211 = vadd.f32 0.0, %v5210
    %5212 = vmatmul.f32.gmra.mxu0 %v5005
    %v5213 = vpop.f32.mrf.mxu0
    %v5214 = vadd.f32 0.0, %v5213
    %5215 = vmatmul.f32.gmra.mxu0 %v5008
    %v5216 = vpop.f32.mrf.mxu0
    %v5217 = vadd.f32 0.0, %v5216
    %5218 = vmatmul.f32.gmra.mxu0 %v5011
    %v5219 = vpop.f32.mrf.mxu0
    %v5220 = vadd.f32 0.0, %v5219
    %5221 = vmatmul.f32.gmra.mxu0 %v5014
    %v5222 = vpop.f32.mrf.mxu0
    %v5223 = vadd.f32 0.0, %v5222
    %5224 = vmatmul.f32.gmra.mxu0 %v5017
    %v5225 = vpop.f32.mrf.mxu0
    %v5226 = vadd.f32 0.0, %v5225
    %5227 = vmatmul.f32.gmra.mxu0 %v5020
    %v5228 = vpop.f32.mrf.mxu0
    %v5229 = vadd.f32 0.0, %v5228
    %5230 = vmatmul.f32.gmra.mxu0 %v5023
    %v5231 = vpop.f32.mrf.mxu0
    %v5232 = vadd.f32 0.0, %v5231
    %5233 = vmatmul.f32.gmra.mxu0 %v5026
    %v5234 = vpop.f32.mrf.mxu0
    %v5235 = vadd.f32 0.0, %v5234
    %5236 = vmatmul.f32.gmra.mxu0 %v5029
    %v5237 = vpop.f32.mrf.mxu0
    %v5238 = vadd.f32 0.0, %v5237
    %5239 = vmatmul.f32.gmra.mxu0 %v5032
    %v5240 = vpop.f32.mrf.mxu0
    %v5241 = vadd.f32 0.0, %v5240
    %5242 = vmatmul.f32.gmra.mxu0 %v5035
    %v5243 = vpop.f32.mrf.mxu0
    %v5244 = vadd.f32 0.0, %v5243
    %5245 = vmatmul.f32.gmra.mxu0 %v5038
    %v5246 = vpop.f32.mrf.mxu0
    %v5247 = vadd.f32 0.0, %v5246
    %5248 = vmatmul.f32.gmra.mxu0 %v5041
    %v5249 = vpop.f32.mrf.mxu0
    %v5250 = vadd.f32 0.0, %v5249
    %5251 = vmatmul.f32.gmra.mxu0 %v5044
    %v5252 = vpop.f32.mrf.mxu0
    %v5253 = vadd.f32 0.0, %v5252
    %5254 = vmatmul.f32.gmra.mxu0 %v5047
    %v5255 = vpop.f32.mrf.mxu0
    %v5256 = vadd.f32 0.0, %v5255
    %5257 = vmatmul.f32.gmra.mxu0 %v5050
    %v5258 = vpop.f32.mrf.mxu0
    %v5259 = vadd.f32 0.0, %v5258
    %5260 = vmatmul.f32.gmra.mxu0 %v5053
    %v5261 = vpop.f32.mrf.mxu0
    %v5262 = vadd.f32 0.0, %v5261
    %5263 = vmatmul.f32.gmra.mxu0 %v5056
    %v5264 = vpop.f32.mrf.mxu0
    %v5265 = vadd.f32 0.0, %v5264
    %5266 = vmatmul.f32.gmra.mxu0 %v5059
    %v5267 = vpop.f32.mrf.mxu0
    %v5268 = vadd.f32 0.0, %v5267
    %5269 = vmatmul.f32.gmra.mxu0 %v5062
    %v5270 = vpop.f32.mrf.mxu0
    %v5271 = vadd.f32 0.0, %v5270
    %5272 = vmatmul.f32.gmra.mxu0 %v5065
    %v5273 = vpop.f32.mrf.mxu0
    %v5274 = vadd.f32 0.0, %v5273
    %5275 = vmatmul.f32.gmra.mxu0 %v5068
    %v5276 = vpop.f32.mrf.mxu0
    %v5277 = vadd.f32 0.0, %v5276
    %5278 = vmatmul.f32.gmra.mxu0 %v5071
    %v5279 = vpop.f32.mrf.mxu0
    %v5280 = vadd.f32 0.0, %v5279
    %5281 = vmatmul.f32.gmra.mxu0 %v5074
    %v5282 = vpop.f32.mrf.mxu0
    %v5283 = vadd.f32 0.0, %v5282
    %5284 = vmatmul.f32.gmra.mxu0 %v5077
    %v5285 = vpop.f32.mrf.mxu0
    %v5286 = vadd.f32 0.0, %v5285
    %5287 = vmatmul.f32.gmra.mxu0 %v5080
    %v5288 = vpop.f32.mrf.mxu0
    %v5289 = vadd.f32 0.0, %v5288
    %5290 = vmatmul.f32.gmra.mxu0 %v5083
    %v5291 = vpop.f32.mrf.mxu0
    %v5292 = vadd.f32 0.0, %v5291
    %5293 = vmatmul.f32.gmra.mxu0 %v5086
    %v5294 = vpop.f32.mrf.mxu0
    %v5295 = vadd.f32 0.0, %v5294
    %5296 = vmatmul.f32.gmra.mxu0 %v5089
    %v5297 = vpop.f32.mrf.mxu0
    %v5298 = vadd.f32 0.0, %v5297
    %5299 = vmatmul.f32.gmra.mxu0 %v5092
    %v5300 = vpop.f32.mrf.mxu0
    %v5301 = vadd.f32 0.0, %v5300
    %5302 = vmatmul.f32.gmra.mxu0 %v5095
    %v5303 = vpop.f32.mrf.mxu0
    %v5304 = vadd.f32 0.0, %v5303
    %5305 = vmatmul.f32.gmra.mxu0 %v5098
    %v5306 = vpop.f32.mrf.mxu0
    %v5307 = vadd.f32 0.0, %v5306
    %5308 = vmatmul.f32.gmra.mxu0 %v5101
    %v5309 = vpop.f32.mrf.mxu0
    %v5310 = vadd.f32 0.0, %v5309
    %5311 = vmatmul.f32.gmra.mxu0 %v5104
    %v5312 = vpop.f32.mrf.mxu0
    %v5313 = vadd.f32 0.0, %v5312
    %5314 = vmatmul.f32.gmra.mxu0 %v5107
    %v5315 = vpop.f32.mrf.mxu0
    %v5316 = vadd.f32 0.0, %v5315
    %5317 = vmatmul.f32.gmra.mxu0 %v5110
    %v5318 = vpop.f32.mrf.mxu0
    %v5319 = vadd.f32 0.0, %v5318
    %5320 = vmatmul.f32.gmra.mxu0 %v5113
    %v5321 = vpop.f32.mrf.mxu0
    %v5322 = vadd.f32 0.0, %v5321
    %5323 = vmatmul.f32.gmra.mxu0 %v5116
    %v5324 = vpop.f32.mrf.mxu0
    %v5325 = vadd.f32 0.0, %v5324
    %5326 = vdwg.mxu0
    %v5328 = vsel %vm27, %v4846, 0
    %v5331 = vsel %vm27, %v4854, 0
    %v5334 = vsel %vm27, %v4862, 0
    %v5337 = vsel %vm27, %v4870, 0
    %v5340 = vsel %vm27, %v4878, 0
    %v5343 = vsel %vm27, %v4886, 0
    %v5346 = vsel %vm27, %v4894, 0
    %v5349 = vsel %vm27, %v4902, 0
    %5351 = vmatpush.msra.mxu0 0.0
    %5352 = vmatpush.msra.mxu0 0.0
    %5353 = vmatpush.msra.mxu0 0.0
    %5354 = vmatpush.msra.mxu0 0.0
    %5355 = vmatpush.msra.mxu0 0.0
    %5356 = vmatpush.msra.mxu0 0.0
    %5357 = vmatpush.msra.mxu0 0.0
    %5358 = vmatpush.msra.mxu0 0.0
    %5359 = vmatpush.msra.mxu0 0.0
    %5360 = vmatpush.msra.mxu0 0.0
    %5361 = vmatpush.msra.mxu0 0.0
    %5362 = vmatpush.msra.mxu0 0.0
    %5363 = vmatpush.msra.mxu0 %v4913
    %5364 = vmatpush.msra.mxu0 %v4912
    %5365 = vmatpush.msra.mxu0 %v4911
    %5366 = vmatpush.msra.mxu0 %v4910
    %5367 = vmatmul.f32.gmra.mxu0 %v5328
    %v5368 = vpop.f32.mrf.mxu0
    %v5369 = vadd.f32 %v5136, %v5368
    %5370 = vmatmul.f32.gmra.mxu0 %v4927
    %v5371 = vpop.f32.mrf.mxu0
    %v5372 = vadd.f32 %v5139, %v5371
    %5373 = vmatmul.f32.gmra.mxu0 %v4930
    %v5374 = vpop.f32.mrf.mxu0
    %v5375 = vadd.f32 %v5142, %v5374
    %5376 = vmatmul.f32.gmra.mxu0 %v4933
    %v5377 = vpop.f32.mrf.mxu0
    %v5378 = vadd.f32 %v5145, %v5377
    %5379 = vmatmul.f32.gmra.mxu0 %v4936
    %v5380 = vpop.f32.mrf.mxu0
    %v5381 = vadd.f32 %v5148, %v5380
    %5382 = vmatmul.f32.gmra.mxu0 %v4939
    %v5383 = vpop.f32.mrf.mxu0
    %v5384 = vadd.f32 %v5151, %v5383
    %5385 = vmatmul.f32.gmra.mxu0 %v4942
    %v5386 = vpop.f32.mrf.mxu0
    %v5387 = vadd.f32 %v5154, %v5386
    %5388 = vmatmul.f32.gmra.mxu0 %v4945
    %v5389 = vpop.f32.mrf.mxu0
    %v5390 = vadd.f32 %v5157, %v5389
    %5391 = vmatmul.f32.gmra.mxu0 %v5331
    %v5392 = vpop.f32.mrf.mxu0
    %v5393 = vadd.f32 %v5160, %v5392
    %5394 = vmatmul.f32.gmra.mxu0 %v4951
    %v5395 = vpop.f32.mrf.mxu0
    %v5396 = vadd.f32 %v5163, %v5395
    %5397 = vmatmul.f32.gmra.mxu0 %v4954
    %v5398 = vpop.f32.mrf.mxu0
    %v5399 = vadd.f32 %v5166, %v5398
    %5400 = vmatmul.f32.gmra.mxu0 %v4957
    %v5401 = vpop.f32.mrf.mxu0
    %v5402 = vadd.f32 %v5169, %v5401
    %5403 = vmatmul.f32.gmra.mxu0 %v4960
    %v5404 = vpop.f32.mrf.mxu0
    %v5405 = vadd.f32 %v5172, %v5404
    %5406 = vmatmul.f32.gmra.mxu0 %v4963
    %v5407 = vpop.f32.mrf.mxu0
    %v5408 = vadd.f32 %v5175, %v5407
    %5409 = vmatmul.f32.gmra.mxu0 %v4966
    %v5410 = vpop.f32.mrf.mxu0
    %v5411 = vadd.f32 %v5178, %v5410
    %5412 = vmatmul.f32.gmra.mxu0 %v4969
    %v5413 = vpop.f32.mrf.mxu0
    %v5414 = vadd.f32 %v5181, %v5413
    %5415 = vmatmul.f32.gmra.mxu0 %v5334
    %v5416 = vpop.f32.mrf.mxu0
    %v5417 = vadd.f32 %v5184, %v5416
    %5418 = vmatmul.f32.gmra.mxu0 %v4975
    %v5419 = vpop.f32.mrf.mxu0
    %v5420 = vadd.f32 %v5187, %v5419
    %5421 = vmatmul.f32.gmra.mxu0 %v4978
    %v5422 = vpop.f32.mrf.mxu0
    %v5423 = vadd.f32 %v5190, %v5422
    %5424 = vmatmul.f32.gmra.mxu0 %v4981
    %v5425 = vpop.f32.mrf.mxu0
    %v5426 = vadd.f32 %v5193, %v5425
    %5427 = vmatmul.f32.gmra.mxu0 %v4984
    %v5428 = vpop.f32.mrf.mxu0
    %v5429 = vadd.f32 %v5196, %v5428
    %5430 = vmatmul.f32.gmra.mxu0 %v4987
    %v5431 = vpop.f32.mrf.mxu0
    %v5432 = vadd.f32 %v5199, %v5431
    %5433 = vmatmul.f32.gmra.mxu0 %v4990
    %v5434 = vpop.f32.mrf.mxu0
    %v5435 = vadd.f32 %v5202, %v5434
    %5436 = vmatmul.f32.gmra.mxu0 %v4993
    %v5437 = vpop.f32.mrf.mxu0
    %v5438 = vadd.f32 %v5205, %v5437
    %5439 = vmatmul.f32.gmra.mxu0 %v5337
    %v5440 = vpop.f32.mrf.mxu0
    %v5441 = vadd.f32 %v5208, %v5440
    %5442 = vmatmul.f32.gmra.mxu0 %v4999
    %v5443 = vpop.f32.mrf.mxu0
    %v5444 = vadd.f32 %v5211, %v5443
    %5445 = vmatmul.f32.gmra.mxu0 %v5002
    %v5446 = vpop.f32.mrf.mxu0
    %v5447 = vadd.f32 %v5214, %v5446
    %5448 = vmatmul.f32.gmra.mxu0 %v5005
    %v5449 = vpop.f32.mrf.mxu0
    %v5450 = vadd.f32 %v5217, %v5449
    %5451 = vmatmul.f32.gmra.mxu0 %v5008
    %v5452 = vpop.f32.mrf.mxu0
    %v5453 = vadd.f32 %v5220, %v5452
    %5454 = vmatmul.f32.gmra.mxu0 %v5011
    %v5455 = vpop.f32.mrf.mxu0
    %v5456 = vadd.f32 %v5223, %v5455
    %5457 = vmatmul.f32.gmra.mxu0 %v5014
    %v5458 = vpop.f32.mrf.mxu0
    %v5459 = vadd.f32 %v5226, %v5458
    %5460 = vmatmul.f32.gmra.mxu0 %v5017
    %v5461 = vpop.f32.mrf.mxu0
    %v5462 = vadd.f32 %v5229, %v5461
    %5463 = vmatmul.f32.gmra.mxu0 %v5340
    %v5464 = vpop.f32.mrf.mxu0
    %v5465 = vadd.f32 %v5232, %v5464
    %5466 = vmatmul.f32.gmra.mxu0 %v5023
    %v5467 = vpop.f32.mrf.mxu0
    %v5468 = vadd.f32 %v5235, %v5467
    %5469 = vmatmul.f32.gmra.mxu0 %v5026
    %v5470 = vpop.f32.mrf.mxu0
    %v5471 = vadd.f32 %v5238, %v5470
    %5472 = vmatmul.f32.gmra.mxu0 %v5029
    %v5473 = vpop.f32.mrf.mxu0
    %v5474 = vadd.f32 %v5241, %v5473
    %5475 = vmatmul.f32.gmra.mxu0 %v5032
    %v5476 = vpop.f32.mrf.mxu0
    %v5477 = vadd.f32 %v5244, %v5476
    %5478 = vmatmul.f32.gmra.mxu0 %v5035
    %v5479 = vpop.f32.mrf.mxu0
    %v5480 = vadd.f32 %v5247, %v5479
    %5481 = vmatmul.f32.gmra.mxu0 %v5038
    %v5482 = vpop.f32.mrf.mxu0
    %v5483 = vadd.f32 %v5250, %v5482
    %5484 = vmatmul.f32.gmra.mxu0 %v5041
    %v5485 = vpop.f32.mrf.mxu0
    %v5486 = vadd.f32 %v5253, %v5485
    %5487 = vmatmul.f32.gmra.mxu0 %v5343
    %v5488 = vpop.f32.mrf.mxu0
    %v5489 = vadd.f32 %v5256, %v5488
    %5490 = vmatmul.f32.gmra.mxu0 %v5047
    %v5491 = vpop.f32.mrf.mxu0
    %v5492 = vadd.f32 %v5259, %v5491
    %5493 = vmatmul.f32.gmra.mxu0 %v5050
    %v5494 = vpop.f32.mrf.mxu0
    %v5495 = vadd.f32 %v5262, %v5494
    %5496 = vmatmul.f32.gmra.mxu0 %v5053
    %v5497 = vpop.f32.mrf.mxu0
    %v5498 = vadd.f32 %v5265, %v5497
    %5499 = vmatmul.f32.gmra.mxu0 %v5056
    %v5500 = vpop.f32.mrf.mxu0
    %v5501 = vadd.f32 %v5268, %v5500
    %5502 = vmatmul.f32.gmra.mxu0 %v5059
    %v5503 = vpop.f32.mrf.mxu0
    %v5504 = vadd.f32 %v5271, %v5503
    %5505 = vmatmul.f32.gmra.mxu0 %v5062
    %v5506 = vpop.f32.mrf.mxu0
    %v5507 = vadd.f32 %v5274, %v5506
    %5508 = vmatmul.f32.gmra.mxu0 %v5065
    %v5509 = vpop.f32.mrf.mxu0
    %v5510 = vadd.f32 %v5277, %v5509
    %5511 = vmatmul.f32.gmra.mxu0 %v5346
    %v5512 = vpop.f32.mrf.mxu0
    %v5513 = vadd.f32 %v5280, %v5512
    %5514 = vmatmul.f32.gmra.mxu0 %v5071
    %v5515 = vpop.f32.mrf.mxu0
    %v5516 = vadd.f32 %v5283, %v5515
    %5517 = vmatmul.f32.gmra.mxu0 %v5074
    %v5518 = vpop.f32.mrf.mxu0
    %v5519 = vadd.f32 %v5286, %v5518
    %5520 = vmatmul.f32.gmra.mxu0 %v5077
    %v5521 = vpop.f32.mrf.mxu0
    %v5522 = vadd.f32 %v5289, %v5521
    %5523 = vmatmul.f32.gmra.mxu0 %v5080
    %v5524 = vpop.f32.mrf.mxu0
    %v5525 = vadd.f32 %v5292, %v5524
    %5526 = vmatmul.f32.gmra.mxu0 %v5083
    %v5527 = vpop.f32.mrf.mxu0
    %v5528 = vadd.f32 %v5295, %v5527
    %5529 = vmatmul.f32.gmra.mxu0 %v5086
    %v5530 = vpop.f32.mrf.mxu0
    %v5531 = vadd.f32 %v5298, %v5530
    %5532 = vmatmul.f32.gmra.mxu0 %v5089
    %v5533 = vpop.f32.mrf.mxu0
    %v5534 = vadd.f32 %v5301, %v5533
    %5535 = vmatmul.f32.gmra.mxu0 %v5349
    %v5536 = vpop.f32.mrf.mxu0
    %v5537 = vadd.f32 %v5304, %v5536
    %5538 = vmatmul.f32.gmra.mxu0 %v5095
    %v5539 = vpop.f32.mrf.mxu0
    %v5540 = vadd.f32 %v5307, %v5539
    %5541 = vmatmul.f32.gmra.mxu0 %v5098
    %v5542 = vpop.f32.mrf.mxu0
    %v5543 = vadd.f32 %v5310, %v5542
    %5544 = vmatmul.f32.gmra.mxu0 %v5101
    %v5545 = vpop.f32.mrf.mxu0
    %v5546 = vadd.f32 %v5313, %v5545
    %5547 = vmatmul.f32.gmra.mxu0 %v5104
    %v5548 = vpop.f32.mrf.mxu0
    %v5549 = vadd.f32 %v5316, %v5548
    %5550 = vmatmul.f32.gmra.mxu0 %v5107
    %v5551 = vpop.f32.mrf.mxu0
    %v5552 = vadd.f32 %v5319, %v5551
    %5553 = vmatmul.f32.gmra.mxu0 %v5110
    %v5554 = vpop.f32.mrf.mxu0
    %v5555 = vadd.f32 %v5322, %v5554
    %5556 = vmatmul.f32.gmra.mxu0 %v5113
    %v5557 = vpop.f32.mrf.mxu0
    %v5558 = vadd.f32 %v5325, %v5557
    %5559 = vdwg.mxu0
    %v5560 = vld [vmem:[#allocation2 + $0x10] sm:$0xff]
    %v5561 = vld [vmem:[#allocation2 + $0x18] sm:$0xff]
    %v5562 = vld [vmem:[#allocation2 + $0x20] sm:$0xff]
    %v5563 = vld [vmem:[#allocation2 + $0x28] sm:$0xff]
    %v5564 = vld [vmem:[#allocation2 + $0x30] sm:$0xff]
    %v5565 = vld [vmem:[#allocation2 + $0x38] sm:$0xff]
    %v5566 = vld [vmem:[#allocation2 + $0x40] sm:$0xff]
    %v5567 = vld [vmem:[#allocation2 + $0x48] sm:$0xff]
    %v5568 = vld [vmem:[#allocation2 + $0x60] sm:$0xff]
    %v5569 = vld [vmem:[#allocation2 + $0x68] sm:$0xff]
    %v5570 = vld [vmem:[#allocation2 + $0x70] sm:$0xff]
    %v5571 = vld [vmem:[#allocation2 + $0x78] sm:$0xff]
    %v5572 = vld [vmem:[#allocation2 + $0x80] sm:$0xff]
    %v5573 = vld [vmem:[#allocation2 + $0x88] sm:$0xff]
    %v5574 = vld [vmem:[#allocation2 + $0x90] sm:$0xff]
    %v5575 = vld [vmem:[#allocation2 + $0x98] sm:$0xff]
    %v5576 = vld [vmem:[#allocation2 + $0xb0] sm:$0xff]
    %v5577 = vld [vmem:[#allocation2 + $0xb8] sm:$0xff]
    %v5578 = vld [vmem:[#allocation2 + $0xc0] sm:$0xff]
    %v5579 = vld [vmem:[#allocation2 + $0xc8] sm:$0xff]
    %v5580 = vld [vmem:[#allocation2 + $0xd0] sm:$0xff]
    %v5581 = vld [vmem:[#allocation2 + $0xd8] sm:$0xff]
    %v5582 = vld [vmem:[#allocation2 + $0xe0] sm:$0xff]
    %v5583 = vld [vmem:[#allocation2 + $0xe8] sm:$0xff]
    %v5584 = vld [vmem:[#allocation2 + $0x100] sm:$0xff]
    %v5585 = vld [vmem:[#allocation2 + $0x108] sm:$0xff]
    %v5586 = vld [vmem:[#allocation2 + $0x110] sm:$0xff]
    %v5587 = vld [vmem:[#allocation2 + $0x118] sm:$0xff]
    %v5588 = vld [vmem:[#allocation2 + $0x120] sm:$0xff]
    %v5589 = vld [vmem:[#allocation2 + $0x128] sm:$0xff]
    %v5590 = vld [vmem:[#allocation2 + $0x130] sm:$0xff]
    %v5591 = vld [vmem:[#allocation2 + $0x138] sm:$0xff]
    %v5592 = vld [vmem:[#allocation2 + $0x150] sm:$0xff]
    %v5593 = vld [vmem:[#allocation2 + $0x158] sm:$0xff]
    %v5594 = vld [vmem:[#allocation2 + $0x160] sm:$0xff]
    %v5595 = vld [vmem:[#allocation2 + $0x168] sm:$0xff]
    %v5596 = vld [vmem:[#allocation2 + $0x170] sm:$0xff]
    %v5597 = vld [vmem:[#allocation2 + $0x178] sm:$0xff]
    %v5598 = vld [vmem:[#allocation2 + $0x180] sm:$0xff]
    %v5599 = vld [vmem:[#allocation2 + $0x188] sm:$0xff]
    %v5600 = vld [vmem:[#allocation2 + $0x1a0] sm:$0xff]
    %v5601 = vld [vmem:[#allocation2 + $0x1a8] sm:$0xff]
    %v5602 = vld [vmem:[#allocation2 + $0x1b0] sm:$0xff]
    %v5603 = vld [vmem:[#allocation2 + $0x1b8] sm:$0xff]
    %v5604 = vld [vmem:[#allocation2 + $0x1c0] sm:$0xff]
    %v5605 = vld [vmem:[#allocation2 + $0x1c8] sm:$0xff]
    %v5606 = vld [vmem:[#allocation2 + $0x1d0] sm:$0xff]
    %v5607 = vld [vmem:[#allocation2 + $0x1d8] sm:$0xff]
    %v5608 = vld [vmem:[#allocation2 + $0x1f0] sm:$0xff]
    %v5609 = vld [vmem:[#allocation2 + $0x1f8] sm:$0xff]
    %v5610 = vld [vmem:[#allocation2 + $0x200] sm:$0xff]
    %v5611 = vld [vmem:[#allocation2 + $0x208] sm:$0xff]
    %v5612 = vld [vmem:[#allocation2 + $0x210] sm:$0xff]
    %v5613 = vld [vmem:[#allocation2 + $0x218] sm:$0xff]
    %v5614 = vld [vmem:[#allocation2 + $0x220] sm:$0xff]
    %v5615 = vld [vmem:[#allocation2 + $0x228] sm:$0xff]
    %v5616 = vld [vmem:[#allocation2 + $0x240] sm:$0xff]
    %v5617 = vld [vmem:[#allocation2 + $0x248] sm:$0xff]
    %v5618 = vld [vmem:[#allocation2 + $0x250] sm:$0xff]
    %v5619 = vld [vmem:[#allocation2 + $0x258] sm:$0xff]
    %v5620 = vld [vmem:[#allocation2 + $0x260] sm:$0xff]
    %v5621 = vld [vmem:[#allocation2 + $0x268] sm:$0xff]
    %v5622 = vld [vmem:[#allocation2 + $0x270] sm:$0xff]
    %v5623 = vld [vmem:[#allocation2 + $0x278] sm:$0xff]
    %v5624 = vld [vmem:[%s2 + $0x40] sm:$0xff]
    %v5625 = vld [vmem:[%s2 + $0x48] sm:$0xff]
    %v5626 = vld [vmem:[%s2 + $0x50] sm:$0xff]
    %v5627 = vld [vmem:[%s2 + $0x58] sm:$0xff]
    %v5629 = vsel %vm27, %v5560, 0
    %v5632 = vsel %vm27, %v5561, 0
    %v5635 = vsel %vm27, %v5562, 0
    %v5638 = vsel %vm27, %v5563, 0
    %v5641 = vsel %vm27, %v5564, 0
    %v5644 = vsel %vm27, %v5565, 0
    %v5647 = vsel %vm27, %v5566, 0
    %v5650 = vsel %vm27, %v5567, 0
    %v5653 = vsel %vm27, %v5568, 0
    %v5656 = vsel %vm27, %v5569, 0
    %v5659 = vsel %vm27, %v5570, 0
    %v5662 = vsel %vm27, %v5571, 0
    %v5665 = vsel %vm27, %v5572, 0
    %v5668 = vsel %vm27, %v5573, 0
    %v5671 = vsel %vm27, %v5574, 0
    %v5674 = vsel %vm27, %v5575, 0
    %v5677 = vsel %vm27, %v5576, 0
    %v5680 = vsel %vm27, %v5577, 0
    %v5683 = vsel %vm27, %v5578, 0
    %v5686 = vsel %vm27, %v5579, 0
    %v5689 = vsel %vm27, %v5580, 0
    %v5692 = vsel %vm27, %v5581, 0
    %v5695 = vsel %vm27, %v5582, 0
    %v5698 = vsel %vm27, %v5583, 0
    %v5701 = vsel %vm27, %v5584, 0
    %v5704 = vsel %vm27, %v5585, 0
    %v5707 = vsel %vm27, %v5586, 0
    %v5710 = vsel %vm27, %v5587, 0
    %v5713 = vsel %vm27, %v5588, 0
    %v5716 = vsel %vm27, %v5589, 0
    %v5719 = vsel %vm27, %v5590, 0
    %v5722 = vsel %vm27, %v5591, 0
    %v5725 = vsel %vm27, %v5592, 0
    %v5728 = vsel %vm27, %v5593, 0
    %v5731 = vsel %vm27, %v5594, 0
    %v5734 = vsel %vm27, %v5595, 0
    %v5737 = vsel %vm27, %v5596, 0
    %v5740 = vsel %vm27, %v5597, 0
    %v5743 = vsel %vm27, %v5598, 0
    %v5746 = vsel %vm27, %v5599, 0
    %v5749 = vsel %vm27, %v5600, 0
    %v5752 = vsel %vm27, %v5601, 0
    %v5755 = vsel %vm27, %v5602, 0
    %v5758 = vsel %vm27, %v5603, 0
    %v5761 = vsel %vm27, %v5604, 0
    %v5764 = vsel %vm27, %v5605, 0
    %v5767 = vsel %vm27, %v5606, 0
    %v5770 = vsel %vm27, %v5607, 0
    %v5773 = vsel %vm27, %v5608, 0
    %v5776 = vsel %vm27, %v5609, 0
    %v5779 = vsel %vm27, %v5610, 0
    %v5782 = vsel %vm27, %v5611, 0
    %v5785 = vsel %vm27, %v5612, 0
    %v5788 = vsel %vm27, %v5613, 0
    %v5791 = vsel %vm27, %v5614, 0
    %v5794 = vsel %vm27, %v5615, 0
    %v5797 = vsel %vm27, %v5616, 0
    %v5800 = vsel %vm27, %v5617, 0
    %v5803 = vsel %vm27, %v5618, 0
    %v5806 = vsel %vm27, %v5619, 0
    %v5809 = vsel %vm27, %v5620, 0
    %v5812 = vsel %vm27, %v5621, 0
    %v5815 = vsel %vm27, %v5622, 0
    %v5818 = vsel %vm27, %v5623, 0
    %5820 = vmatpush.msra.mxu0 0.0
    %5821 = vmatpush.msra.mxu0 0.0
    %5822 = vmatpush.msra.mxu0 0.0
    %5823 = vmatpush.msra.mxu0 0.0
    %5824 = vmatpush.msra.mxu0 0.0
    %5825 = vmatpush.msra.mxu0 0.0
    %5826 = vmatpush.msra.mxu0 0.0
    %5827 = vmatpush.msra.mxu0 0.0
    %5828 = vmatpush.msra.mxu0 0.0
    %5829 = vmatpush.msra.mxu0 0.0
    %5830 = vmatpush.msra.mxu0 0.0
    %5831 = vmatpush.msra.mxu0 0.0
    %5832 = vmatpush.msra.mxu0 %v5627
    %5833 = vmatpush.msra.mxu0 %v5626
    %5834 = vmatpush.msra.mxu0 %v5625
    %5835 = vmatpush.msra.mxu0 %v5624
    %5836 = vmatmul.f32.gmra.mxu0 %v5629
    %v5837 = vpop.f32.mrf.mxu0
    %v5838 = vadd.f32 0.0, %v5837
    %5839 = vmatmul.f32.gmra.mxu0 %v5632
    %v5840 = vpop.f32.mrf.mxu0
    %v5841 = vadd.f32 0.0, %v5840
    %5842 = vmatmul.f32.gmra.mxu0 %v5635
    %v5843 = vpop.f32.mrf.mxu0
    %v5844 = vadd.f32 0.0, %v5843
    %5845 = vmatmul.f32.gmra.mxu0 %v5638
    %v5846 = vpop.f32.mrf.mxu0
    %v5847 = vadd.f32 0.0, %v5846
    %5848 = vmatmul.f32.gmra.mxu0 %v5641
    %v5849 = vpop.f32.mrf.mxu0
    %v5850 = vadd.f32 0.0, %v5849
    %5851 = vmatmul.f32.gmra.mxu0 %v5644
    %v5852 = vpop.f32.mrf.mxu0
    %v5853 = vadd.f32 0.0, %v5852
    %5854 = vmatmul.f32.gmra.mxu0 %v5647
    %v5855 = vpop.f32.mrf.mxu0
    %v5856 = vadd.f32 0.0, %v5855
    %5857 = vmatmul.f32.gmra.mxu0 %v5650
    %v5858 = vpop.f32.mrf.mxu0
    %v5859 = vadd.f32 0.0, %v5858
    %5860 = vmatmul.f32.gmra.mxu0 %v5653
    %v5861 = vpop.f32.mrf.mxu0
    %v5862 = vadd.f32 0.0, %v5861
    %5863 = vmatmul.f32.gmra.mxu0 %v5656
    %v5864 = vpop.f32.mrf.mxu0
    %v5865 = vadd.f32 0.0, %v5864
    %5866 = vmatmul.f32.gmra.mxu0 %v5659
    %v5867 = vpop.f32.mrf.mxu0
    %v5868 = vadd.f32 0.0, %v5867
    %5869 = vmatmul.f32.gmra.mxu0 %v5662
    %v5870 = vpop.f32.mrf.mxu0
    %v5871 = vadd.f32 0.0, %v5870
    %5872 = vmatmul.f32.gmra.mxu0 %v5665
    %v5873 = vpop.f32.mrf.mxu0
    %v5874 = vadd.f32 0.0, %v5873
    %5875 = vmatmul.f32.gmra.mxu0 %v5668
    %v5876 = vpop.f32.mrf.mxu0
    %v5877 = vadd.f32 0.0, %v5876
    %5878 = vmatmul.f32.gmra.mxu0 %v5671
    %v5879 = vpop.f32.mrf.mxu0
    %v5880 = vadd.f32 0.0, %v5879
    %5881 = vmatmul.f32.gmra.mxu0 %v5674
    %v5882 = vpop.f32.mrf.mxu0
    %v5883 = vadd.f32 0.0, %v5882
    %5884 = vmatmul.f32.gmra.mxu0 %v5677
    %v5885 = vpop.f32.mrf.mxu0
    %v5886 = vadd.f32 0.0, %v5885
    %5887 = vmatmul.f32.gmra.mxu0 %v5680
    %v5888 = vpop.f32.mrf.mxu0
    %v5889 = vadd.f32 0.0, %v5888
    %5890 = vmatmul.f32.gmra.mxu0 %v5683
    %v5891 = vpop.f32.mrf.mxu0
    %v5892 = vadd.f32 0.0, %v5891
    %5893 = vmatmul.f32.gmra.mxu0 %v5686
    %v5894 = vpop.f32.mrf.mxu0
    %v5895 = vadd.f32 0.0, %v5894
    %5896 = vmatmul.f32.gmra.mxu0 %v5689
    %v5897 = vpop.f32.mrf.mxu0
    %v5898 = vadd.f32 0.0, %v5897
    %5899 = vmatmul.f32.gmra.mxu0 %v5692
    %v5900 = vpop.f32.mrf.mxu0
    %v5901 = vadd.f32 0.0, %v5900
    %5902 = vmatmul.f32.gmra.mxu0 %v5695
    %v5903 = vpop.f32.mrf.mxu0
    %v5904 = vadd.f32 0.0, %v5903
    %5905 = vmatmul.f32.gmra.mxu0 %v5698
    %v5906 = vpop.f32.mrf.mxu0
    %v5907 = vadd.f32 0.0, %v5906
    %5908 = vmatmul.f32.gmra.mxu0 %v5701
    %v5909 = vpop.f32.mrf.mxu0
    %v5910 = vadd.f32 0.0, %v5909
    %5911 = vmatmul.f32.gmra.mxu0 %v5704
    %v5912 = vpop.f32.mrf.mxu0
    %v5913 = vadd.f32 0.0, %v5912
    %5914 = vmatmul.f32.gmra.mxu0 %v5707
    %v5915 = vpop.f32.mrf.mxu0
    %v5916 = vadd.f32 0.0, %v5915
    %5917 = vmatmul.f32.gmra.mxu0 %v5710
    %v5918 = vpop.f32.mrf.mxu0
    %v5919 = vadd.f32 0.0, %v5918
    %5920 = vmatmul.f32.gmra.mxu0 %v5713
    %v5921 = vpop.f32.mrf.mxu0
    %v5922 = vadd.f32 0.0, %v5921
    %5923 = vmatmul.f32.gmra.mxu0 %v5716
    %v5924 = vpop.f32.mrf.mxu0
    %v5925 = vadd.f32 0.0, %v5924
    %5926 = vmatmul.f32.gmra.mxu0 %v5719
    %v5927 = vpop.f32.mrf.mxu0
    %v5928 = vadd.f32 0.0, %v5927
    %5929 = vmatmul.f32.gmra.mxu0 %v5722
    %v5930 = vpop.f32.mrf.mxu0
    %v5931 = vadd.f32 0.0, %v5930
    %5932 = vmatmul.f32.gmra.mxu0 %v5725
    %v5933 = vpop.f32.mrf.mxu0
    %v5934 = vadd.f32 0.0, %v5933
    %5935 = vmatmul.f32.gmra.mxu0 %v5728
    %v5936 = vpop.f32.mrf.mxu0
    %v5937 = vadd.f32 0.0, %v5936
    %5938 = vmatmul.f32.gmra.mxu0 %v5731
    %v5939 = vpop.f32.mrf.mxu0
    %v5940 = vadd.f32 0.0, %v5939
    %5941 = vmatmul.f32.gmra.mxu0 %v5734
    %v5942 = vpop.f32.mrf.mxu0
    %v5943 = vadd.f32 0.0, %v5942
    %5944 = vmatmul.f32.gmra.mxu0 %v5737
    %v5945 = vpop.f32.mrf.mxu0
    %v5946 = vadd.f32 0.0, %v5945
    %5947 = vmatmul.f32.gmra.mxu0 %v5740
    %v5948 = vpop.f32.mrf.mxu0
    %v5949 = vadd.f32 0.0, %v5948
    %5950 = vmatmul.f32.gmra.mxu0 %v5743
    %v5951 = vpop.f32.mrf.mxu0
    %v5952 = vadd.f32 0.0, %v5951
    %5953 = vmatmul.f32.gmra.mxu0 %v5746
    %v5954 = vpop.f32.mrf.mxu0
    %v5955 = vadd.f32 0.0, %v5954
    %5956 = vmatmul.f32.gmra.mxu0 %v5749
    %v5957 = vpop.f32.mrf.mxu0
    %v5958 = vadd.f32 0.0, %v5957
    %5959 = vmatmul.f32.gmra.mxu0 %v5752
    %v5960 = vpop.f32.mrf.mxu0
    %v5961 = vadd.f32 0.0, %v5960
    %5962 = vmatmul.f32.gmra.mxu0 %v5755
    %v5963 = vpop.f32.mrf.mxu0
    %v5964 = vadd.f32 0.0, %v5963
    %5965 = vmatmul.f32.gmra.mxu0 %v5758
    %v5966 = vpop.f32.mrf.mxu0
    %v5967 = vadd.f32 0.0, %v5966
    %5968 = vmatmul.f32.gmra.mxu0 %v5761
    %v5969 = vpop.f32.mrf.mxu0
    %v5970 = vadd.f32 0.0, %v5969
    %5971 = vmatmul.f32.gmra.mxu0 %v5764
    %v5972 = vpop.f32.mrf.mxu0
    %v5973 = vadd.f32 0.0, %v5972
    %5974 = vmatmul.f32.gmra.mxu0 %v5767
    %v5975 = vpop.f32.mrf.mxu0
    %v5976 = vadd.f32 0.0, %v5975
    %5977 = vmatmul.f32.gmra.mxu0 %v5770
    %v5978 = vpop.f32.mrf.mxu0
    %v5979 = vadd.f32 0.0, %v5978
    %5980 = vmatmul.f32.gmra.mxu0 %v5773
    %v5981 = vpop.f32.mrf.mxu0
    %v5982 = vadd.f32 0.0, %v5981
    %5983 = vmatmul.f32.gmra.mxu0 %v5776
    %v5984 = vpop.f32.mrf.mxu0
    %v5985 = vadd.f32 0.0, %v5984
    %5986 = vmatmul.f32.gmra.mxu0 %v5779
    %v5987 = vpop.f32.mrf.mxu0
    %v5988 = vadd.f32 0.0, %v5987
    %5989 = vmatmul.f32.gmra.mxu0 %v5782
    %v5990 = vpop.f32.mrf.mxu0
    %v5991 = vadd.f32 0.0, %v5990
    %5992 = vmatmul.f32.gmra.mxu0 %v5785
    %v5993 = vpop.f32.mrf.mxu0
    %v5994 = vadd.f32 0.0, %v5993
    %5995 = vmatmul.f32.gmra.mxu0 %v5788
    %v5996 = vpop.f32.mrf.mxu0
    %v5997 = vadd.f32 0.0, %v5996
    %5998 = vmatmul.f32.gmra.mxu0 %v5791
    %v5999 = vpop.f32.mrf.mxu0
    %v6000 = vadd.f32 0.0, %v5999
    %6001 = vmatmul.f32.gmra.mxu0 %v5794
    %v6002 = vpop.f32.mrf.mxu0
    %v6003 = vadd.f32 0.0, %v6002
    %6004 = vmatmul.f32.gmra.mxu0 %v5797
    %v6005 = vpop.f32.mrf.mxu0
    %v6006 = vadd.f32 0.0, %v6005
    %6007 = vmatmul.f32.gmra.mxu0 %v5800
    %v6008 = vpop.f32.mrf.mxu0
    %v6009 = vadd.f32 0.0, %v6008
    %6010 = vmatmul.f32.gmra.mxu0 %v5803
    %v6011 = vpop.f32.mrf.mxu0
    %v6012 = vadd.f32 0.0, %v6011
    %6013 = vmatmul.f32.gmra.mxu0 %v5806
    %v6014 = vpop.f32.mrf.mxu0
    %v6015 = vadd.f32 0.0, %v6014
    %6016 = vmatmul.f32.gmra.mxu0 %v5809
    %v6017 = vpop.f32.mrf.mxu0
    %v6018 = vadd.f32 0.0, %v6017
    %6019 = vmatmul.f32.gmra.mxu0 %v5812
    %v6020 = vpop.f32.mrf.mxu0
    %v6021 = vadd.f32 0.0, %v6020
    %6022 = vmatmul.f32.gmra.mxu0 %v5815
    %v6023 = vpop.f32.mrf.mxu0
    %v6024 = vadd.f32 0.0, %v6023
    %6025 = vmatmul.f32.gmra.mxu0 %v5818
    %v6026 = vpop.f32.mrf.mxu0
    %v6027 = vadd.f32 0.0, %v6026
    %6028 = vdwg.mxu0
    %v6029 = vadd.f32 %v5369, %v5838
    %v6030 = vadd.f32 %v5372, %v5841
    %v6031 = vadd.f32 %v5375, %v5844
    %v6032 = vadd.f32 %v5378, %v5847
    %v6033 = vadd.f32 %v5381, %v5850
    %v6034 = vadd.f32 %v5384, %v5853
    %v6035 = vadd.f32 %v5387, %v5856
    %v6036 = vadd.f32 %v5390, %v5859
    %v6037 = vadd.f32 %v5393, %v5862
    %v6038 = vadd.f32 %v5396, %v5865
    %v6039 = vadd.f32 %v5399, %v5868
    %v6040 = vadd.f32 %v5402, %v5871
    %v6041 = vadd.f32 %v5405, %v5874
    %v6042 = vadd.f32 %v5408, %v5877
    %v6043 = vadd.f32 %v5411, %v5880
    %v6044 = vadd.f32 %v5414, %v5883
    %v6045 = vadd.f32 %v5417, %v5886
    %v6046 = vadd.f32 %v5420, %v5889
    %v6047 = vadd.f32 %v5423, %v5892
    %v6048 = vadd.f32 %v5426, %v5895
    %v6049 = vadd.f32 %v5429, %v5898
    %v6050 = vadd.f32 %v5432, %v5901
    %v6051 = vadd.f32 %v5435, %v5904
    %v6052 = vadd.f32 %v5438, %v5907
    %v6053 = vadd.f32 %v5441, %v5910
    %v6054 = vadd.f32 %v5444, %v5913
    %v6055 = vadd.f32 %v5447, %v5916
    %v6056 = vadd.f32 %v5450, %v5919
    %v6057 = vadd.f32 %v5453, %v5922
    %v6058 = vadd.f32 %v5456, %v5925
    %v6059 = vadd.f32 %v5459, %v5928
    %v6060 = vadd.f32 %v5462, %v5931
    %v6061 = vadd.f32 %v5465, %v5934
    %v6062 = vadd.f32 %v5468, %v5937
    %v6063 = vadd.f32 %v5471, %v5940
    %v6064 = vadd.f32 %v5474, %v5943
    %v6065 = vadd.f32 %v5477, %v5946
    %v6066 = vadd.f32 %v5480, %v5949
    %v6067 = vadd.f32 %v5483, %v5952
    %v6068 = vadd.f32 %v5486, %v5955
    %v6069 = vadd.f32 %v5489, %v5958
    %v6070 = vadd.f32 %v5492, %v5961
    %v6071 = vadd.f32 %v5495, %v5964
    %v6072 = vadd.f32 %v5498, %v5967
    %v6073 = vadd.f32 %v5501, %v5970
    %v6074 = vadd.f32 %v5504, %v5973
    %v6075 = vadd.f32 %v5507, %v5976
    %v6076 = vadd.f32 %v5510, %v5979
    %v6077 = vadd.f32 %v5513, %v5982
    %v6078 = vadd.f32 %v5516, %v5985
    %v6079 = vadd.f32 %v5519, %v5988
    %v6080 = vadd.f32 %v5522, %v5991
    %v6081 = vadd.f32 %v5525, %v5994
    %v6082 = vadd.f32 %v5528, %v5997
    %v6083 = vadd.f32 %v5531, %v6000
    %v6084 = vadd.f32 %v5534, %v6003
    %v6085 = vadd.f32 %v5537, %v6006
    %v6086 = vadd.f32 %v5540, %v6009
    %v6087 = vadd.f32 %v5543, %v6012
    %v6088 = vadd.f32 %v5546, %v6015
    %v6089 = vadd.f32 %v5549, %v6018
    %v6090 = vadd.f32 %v5552, %v6021
    %v6091 = vadd.f32 %v5555, %v6024
    %v6092 = vadd.f32 %v5558, %v6027
    %v6093 = vld [vmem:[%s4781] sm:$0xff]
    %v6094 = vld [vmem:[%s4781 + $0x8] sm:$0xff]
    %v6095 = vld [vmem:[%s4781 + $0x10] sm:$0xff]
    %v6096 = vld [vmem:[%s4781 + $0x18] sm:$0xff]
    %v6097 = vld [vmem:[%s4781 + $0x20] sm:$0xff]
    %v6098 = vld [vmem:[%s4781 + $0x28] sm:$0xff]
    %v6099 = vld [vmem:[%s4781 + $0x30] sm:$0xff]
    %v6100 = vld [vmem:[%s4781 + $0x38] sm:$0xff]
    %v6101 = vld [vmem:[%s4781 + $0x50] sm:$0xff]
    %v6102 = vld [vmem:[%s4781 + $0x58] sm:$0xff]
    %v6103 = vld [vmem:[%s4781 + $0x60] sm:$0xff]
    %v6104 = vld [vmem:[%s4781 + $0x68] sm:$0xff]
    %v6105 = vld [vmem:[%s4781 + $0x70] sm:$0xff]
    %v6106 = vld [vmem:[%s4781 + $0x78] sm:$0xff]
    %v6107 = vld [vmem:[%s4781 + $0x80] sm:$0xff]
    %v6108 = vld [vmem:[%s4781 + $0x88] sm:$0xff]
    %v6109 = vld [vmem:[%s4781 + $0xa0] sm:$0xff]
    %v6110 = vld [vmem:[%s4781 + $0xa8] sm:$0xff]
    %v6111 = vld [vmem:[%s4781 + $0xb0] sm:$0xff]
    %v6112 = vld [vmem:[%s4781 + $0xb8] sm:$0xff]
    %v6113 = vld [vmem:[%s4781 + $0xc0] sm:$0xff]
    %v6114 = vld [vmem:[%s4781 + $0xc8] sm:$0xff]
    %v6115 = vld [vmem:[%s4781 + $0xd0] sm:$0xff]
    %v6116 = vld [vmem:[%s4781 + $0xd8] sm:$0xff]
    %v6117 = vld [vmem:[%s4781 + $0xf0] sm:$0xff]
    %v6118 = vld [vmem:[%s4781 + $0xf8] sm:$0xff]
    %v6119 = vld [vmem:[%s4781 + $0x100] sm:$0xff]
    %v6120 = vld [vmem:[%s4781 + $0x108] sm:$0xff]
    %v6121 = vld [vmem:[%s4781 + $0x110] sm:$0xff]
    %v6122 = vld [vmem:[%s4781 + $0x118] sm:$0xff]
    %v6123 = vld [vmem:[%s4781 + $0x120] sm:$0xff]
    %v6124 = vld [vmem:[%s4781 + $0x128] sm:$0xff]
    %v6125 = vld [vmem:[%s4781 + $0x140] sm:$0xff]
    %v6126 = vld [vmem:[%s4781 + $0x148] sm:$0xff]
    %v6127 = vld [vmem:[%s4781 + $0x150] sm:$0xff]
    %v6128 = vld [vmem:[%s4781 + $0x158] sm:$0xff]
    %v6129 = vld [vmem:[%s4781 + $0x160] sm:$0xff]
    %v6130 = vld [vmem:[%s4781 + $0x168] sm:$0xff]
    %v6131 = vld [vmem:[%s4781 + $0x170] sm:$0xff]
    %v6132 = vld [vmem:[%s4781 + $0x178] sm:$0xff]
    %v6133 = vld [vmem:[%s4781 + $0x190] sm:$0xff]
    %v6134 = vld [vmem:[%s4781 + $0x198] sm:$0xff]
    %v6135 = vld [vmem:[%s4781 + $0x1a0] sm:$0xff]
    %v6136 = vld [vmem:[%s4781 + $0x1a8] sm:$0xff]
    %v6137 = vld [vmem:[%s4781 + $0x1b0] sm:$0xff]
    %v6138 = vld [vmem:[%s4781 + $0x1b8] sm:$0xff]
    %v6139 = vld [vmem:[%s4781 + $0x1c0] sm:$0xff]
    %v6140 = vld [vmem:[%s4781 + $0x1c8] sm:$0xff]
    %v6141 = vld [vmem:[%s4781 + $0x1e0] sm:$0xff]
    %v6142 = vld [vmem:[%s4781 + $0x1e8] sm:$0xff]
    %v6143 = vld [vmem:[%s4781 + $0x1f0] sm:$0xff]
    %v6144 = vld [vmem:[%s4781 + $0x1f8] sm:$0xff]
    %v6145 = vld [vmem:[%s4781 + $0x200] sm:$0xff]
    %v6146 = vld [vmem:[%s4781 + $0x208] sm:$0xff]
    %v6147 = vld [vmem:[%s4781 + $0x210] sm:$0xff]
    %v6148 = vld [vmem:[%s4781 + $0x218] sm:$0xff]
    %v6149 = vld [vmem:[%s4781 + $0x230] sm:$0xff]
    %v6150 = vld [vmem:[%s4781 + $0x238] sm:$0xff]
    %v6151 = vld [vmem:[%s4781 + $0x240] sm:$0xff]
    %v6152 = vld [vmem:[%s4781 + $0x248] sm:$0xff]
    %v6153 = vld [vmem:[%s4781 + $0x250] sm:$0xff]
    %v6154 = vld [vmem:[%s4781 + $0x258] sm:$0xff]
    %v6155 = vld [vmem:[%s4781 + $0x260] sm:$0xff]
    %v6156 = vld [vmem:[%s4781 + $0x268] sm:$0xff]
    %v6157 = vld [vmem:[%s2 + $0x60] sm:$0xff]
    %v6158 = vld [vmem:[%s2 + $0x68] sm:$0xff]
    %v6159 = vld [vmem:[%s2 + $0x70] sm:$0xff]
    %v6160 = vld [vmem:[%s2 + $0x78] sm:$0xff]
    %v6162 = vsel %vm27, %v6093, 0
    %v6165 = vsel %vm27, %v6094, 0
    %v6168 = vsel %vm27, %v6095, 0
    %v6171 = vsel %vm27, %v6096, 0
    %v6174 = vsel %vm27, %v6097, 0
    %v6177 = vsel %vm27, %v6098, 0
    %v6180 = vsel %vm27, %v6099, 0
    %v6183 = vsel %vm27, %v6100, 0
    %v6186 = vsel %vm27, %v6101, 0
    %v6189 = vsel %vm27, %v6102, 0
    %v6192 = vsel %vm27, %v6103, 0
    %v6195 = vsel %vm27, %v6104, 0
    %v6198 = vsel %vm27, %v6105, 0
    %v6201 = vsel %vm27, %v6106, 0
    %v6204 = vsel %vm27, %v6107, 0
    %v6207 = vsel %vm27, %v6108, 0
    %v6210 = vsel %vm27, %v6109, 0
    %v6213 = vsel %vm27, %v6110, 0
    %v6216 = vsel %vm27, %v6111, 0
    %v6219 = vsel %vm27, %v6112, 0
    %v6222 = vsel %vm27, %v6113, 0
    %v6225 = vsel %vm27, %v6114, 0
    %v6228 = vsel %vm27, %v6115, 0
    %v6231 = vsel %vm27, %v6116, 0
    %v6234 = vsel %vm27, %v6117, 0
    %v6237 = vsel %vm27, %v6118, 0
    %v6240 = vsel %vm27, %v6119, 0
    %v6243 = vsel %vm27, %v6120, 0
    %v6246 = vsel %vm27, %v6121, 0
    %v6249 = vsel %vm27, %v6122, 0
    %v6252 = vsel %vm27, %v6123, 0
    %v6255 = vsel %vm27, %v6124, 0
    %v6258 = vsel %vm27, %v6125, 0
    %v6261 = vsel %vm27, %v6126, 0
    %v6264 = vsel %vm27, %v6127, 0
    %v6267 = vsel %vm27, %v6128, 0
    %v6270 = vsel %vm27, %v6129, 0
    %v6273 = vsel %vm27, %v6130, 0
    %v6276 = vsel %vm27, %v6131, 0
    %v6279 = vsel %vm27, %v6132, 0
    %v6282 = vsel %vm27, %v6133, 0
    %v6285 = vsel %vm27, %v6134, 0
    %v6288 = vsel %vm27, %v6135, 0
    %v6291 = vsel %vm27, %v6136, 0
    %v6294 = vsel %vm27, %v6137, 0
    %v6297 = vsel %vm27, %v6138, 0
    %v6300 = vsel %vm27, %v6139, 0
    %v6303 = vsel %vm27, %v6140, 0
    %v6306 = vsel %vm27, %v6141, 0
    %v6309 = vsel %vm27, %v6142, 0
    %v6312 = vsel %vm27, %v6143, 0
    %v6315 = vsel %vm27, %v6144, 0
    %v6318 = vsel %vm27, %v6145, 0
    %v6321 = vsel %vm27, %v6146, 0
    %v6324 = vsel %vm27, %v6147, 0
    %v6327 = vsel %vm27, %v6148, 0
    %v6330 = vsel %vm27, %v6149, 0
    %v6333 = vsel %vm27, %v6150, 0
    %v6336 = vsel %vm27, %v6151, 0
    %v6339 = vsel %vm27, %v6152, 0
    %v6342 = vsel %vm27, %v6153, 0
    %v6345 = vsel %vm27, %v6154, 0
    %v6348 = vsel %vm27, %v6155, 0
    %v6351 = vsel %vm27, %v6156, 0
    %6353 = vmatpush.msra.mxu0 0.0
    %6354 = vmatpush.msra.mxu0 0.0
    %6355 = vmatpush.msra.mxu0 0.0
    %6356 = vmatpush.msra.mxu0 0.0
    %6357 = vmatpush.msra.mxu0 0.0
    %6358 = vmatpush.msra.mxu0 0.0
    %6359 = vmatpush.msra.mxu0 0.0
    %6360 = vmatpush.msra.mxu0 0.0
    %6361 = vmatpush.msra.mxu0 0.0
    %6362 = vmatpush.msra.mxu0 0.0
    %6363 = vmatpush.msra.mxu0 0.0
    %6364 = vmatpush.msra.mxu0 0.0
    %6365 = vmatpush.msra.mxu0 %v6160
    %6366 = vmatpush.msra.mxu0 %v6159
    %6367 = vmatpush.msra.mxu0 %v6158
    %6368 = vmatpush.msra.mxu0 %v6157
    %6369 = vmatmul.f32.gmra.mxu0 %v6162
    %v6370 = vpop.f32.mrf.mxu0
    %v6371 = vadd.f32 0.0, %v6370
    %6372 = vmatmul.f32.gmra.mxu0 %v6165
    %v6373 = vpop.f32.mrf.mxu0
    %v6374 = vadd.f32 0.0, %v6373
    %6375 = vmatmul.f32.gmra.mxu0 %v6168
    %v6376 = vpop.f32.mrf.mxu0
    %v6377 = vadd.f32 0.0, %v6376
    %6378 = vmatmul.f32.gmra.mxu0 %v6171
    %v6379 = vpop.f32.mrf.mxu0
    %v6380 = vadd.f32 0.0, %v6379
    %6381 = vmatmul.f32.gmra.mxu0 %v6174
    %v6382 = vpop.f32.mrf.mxu0
    %v6383 = vadd.f32 0.0, %v6382
    %6384 = vmatmul.f32.gmra.mxu0 %v6177
    %v6385 = vpop.f32.mrf.mxu0
    %v6386 = vadd.f32 0.0, %v6385
    %6387 = vmatmul.f32.gmra.mxu0 %v6180
    %v6388 = vpop.f32.mrf.mxu0
    %v6389 = vadd.f32 0.0, %v6388
    %6390 = vmatmul.f32.gmra.mxu0 %v6183
    %v6391 = vpop.f32.mrf.mxu0
    %v6392 = vadd.f32 0.0, %v6391
    %6393 = vmatmul.f32.gmra.mxu0 %v6186
    %v6394 = vpop.f32.mrf.mxu0
    %v6395 = vadd.f32 0.0, %v6394
    %6396 = vmatmul.f32.gmra.mxu0 %v6189
    %v6397 = vpop.f32.mrf.mxu0
    %v6398 = vadd.f32 0.0, %v6397
    %6399 = vmatmul.f32.gmra.mxu0 %v6192
    %v6400 = vpop.f32.mrf.mxu0
    %v6401 = vadd.f32 0.0, %v6400
    %6402 = vmatmul.f32.gmra.mxu0 %v6195
    %v6403 = vpop.f32.mrf.mxu0
    %v6404 = vadd.f32 0.0, %v6403
    %6405 = vmatmul.f32.gmra.mxu0 %v6198
    %v6406 = vpop.f32.mrf.mxu0
    %v6407 = vadd.f32 0.0, %v6406
    %6408 = vmatmul.f32.gmra.mxu0 %v6201
    %v6409 = vpop.f32.mrf.mxu0
    %v6410 = vadd.f32 0.0, %v6409
    %6411 = vmatmul.f32.gmra.mxu0 %v6204
    %v6412 = vpop.f32.mrf.mxu0
    %v6413 = vadd.f32 0.0, %v6412
    %6414 = vmatmul.f32.gmra.mxu0 %v6207
    %v6415 = vpop.f32.mrf.mxu0
    %v6416 = vadd.f32 0.0, %v6415
    %6417 = vmatmul.f32.gmra.mxu0 %v6210
    %v6418 = vpop.f32.mrf.mxu0
    %v6419 = vadd.f32 0.0, %v6418
    %6420 = vmatmul.f32.gmra.mxu0 %v6213
    %v6421 = vpop.f32.mrf.mxu0
    %v6422 = vadd.f32 0.0, %v6421
    %6423 = vmatmul.f32.gmra.mxu0 %v6216
    %v6424 = vpop.f32.mrf.mxu0
    %v6425 = vadd.f32 0.0, %v6424
    %6426 = vmatmul.f32.gmra.mxu0 %v6219
    %v6427 = vpop.f32.mrf.mxu0
    %v6428 = vadd.f32 0.0, %v6427
    %6429 = vmatmul.f32.gmra.mxu0 %v6222
    %v6430 = vpop.f32.mrf.mxu0
    %v6431 = vadd.f32 0.0, %v6430
    %6432 = vmatmul.f32.gmra.mxu0 %v6225
    %v6433 = vpop.f32.mrf.mxu0
    %v6434 = vadd.f32 0.0, %v6433
    %6435 = vmatmul.f32.gmra.mxu0 %v6228
    %v6436 = vpop.f32.mrf.mxu0
    %v6437 = vadd.f32 0.0, %v6436
    %6438 = vmatmul.f32.gmra.mxu0 %v6231
    %v6439 = vpop.f32.mrf.mxu0
    %v6440 = vadd.f32 0.0, %v6439
    %6441 = vmatmul.f32.gmra.mxu0 %v6234
    %v6442 = vpop.f32.mrf.mxu0
    %v6443 = vadd.f32 0.0, %v6442
    %6444 = vmatmul.f32.gmra.mxu0 %v6237
    %v6445 = vpop.f32.mrf.mxu0
    %v6446 = vadd.f32 0.0, %v6445
    %6447 = vmatmul.f32.gmra.mxu0 %v6240
    %v6448 = vpop.f32.mrf.mxu0
    %v6449 = vadd.f32 0.0, %v6448
    %6450 = vmatmul.f32.gmra.mxu0 %v6243
    %v6451 = vpop.f32.mrf.mxu0
    %v6452 = vadd.f32 0.0, %v6451
    %6453 = vmatmul.f32.gmra.mxu0 %v6246
    %v6454 = vpop.f32.mrf.mxu0
    %v6455 = vadd.f32 0.0, %v6454
    %6456 = vmatmul.f32.gmra.mxu0 %v6249
    %v6457 = vpop.f32.mrf.mxu0
    %v6458 = vadd.f32 0.0, %v6457
    %6459 = vmatmul.f32.gmra.mxu0 %v6252
    %v6460 = vpop.f32.mrf.mxu0
    %v6461 = vadd.f32 0.0, %v6460
    %6462 = vmatmul.f32.gmra.mxu0 %v6255
    %v6463 = vpop.f32.mrf.mxu0
    %v6464 = vadd.f32 0.0, %v6463
    %6465 = vmatmul.f32.gmra.mxu0 %v6258
    %v6466 = vpop.f32.mrf.mxu0
    %v6467 = vadd.f32 0.0, %v6466
    %6468 = vmatmul.f32.gmra.mxu0 %v6261
    %v6469 = vpop.f32.mrf.mxu0
    %v6470 = vadd.f32 0.0, %v6469
    %6471 = vmatmul.f32.gmra.mxu0 %v6264
    %v6472 = vpop.f32.mrf.mxu0
    %v6473 = vadd.f32 0.0, %v6472
    %6474 = vmatmul.f32.gmra.mxu0 %v6267
    %v6475 = vpop.f32.mrf.mxu0
    %v6476 = vadd.f32 0.0, %v6475
    %6477 = vmatmul.f32.gmra.mxu0 %v6270
    %v6478 = vpop.f32.mrf.mxu0
    %v6479 = vadd.f32 0.0, %v6478
    %6480 = vmatmul.f32.gmra.mxu0 %v6273
    %v6481 = vpop.f32.mrf.mxu0
    %v6482 = vadd.f32 0.0, %v6481
    %6483 = vmatmul.f32.gmra.mxu0 %v6276
    %v6484 = vpop.f32.mrf.mxu0
    %v6485 = vadd.f32 0.0, %v6484
    %6486 = vmatmul.f32.gmra.mxu0 %v6279
    %v6487 = vpop.f32.mrf.mxu0
    %v6488 = vadd.f32 0.0, %v6487
    %6489 = vmatmul.f32.gmra.mxu0 %v6282
    %v6490 = vpop.f32.mrf.mxu0
    %v6491 = vadd.f32 0.0, %v6490
    %6492 = vmatmul.f32.gmra.mxu0 %v6285
    %v6493 = vpop.f32.mrf.mxu0
    %v6494 = vadd.f32 0.0, %v6493
    %6495 = vmatmul.f32.gmra.mxu0 %v6288
    %v6496 = vpop.f32.mrf.mxu0
    %v6497 = vadd.f32 0.0, %v6496
    %6498 = vmatmul.f32.gmra.mxu0 %v6291
    %v6499 = vpop.f32.mrf.mxu0
    %v6500 = vadd.f32 0.0, %v6499
    %6501 = vmatmul.f32.gmra.mxu0 %v6294
    %v6502 = vpop.f32.mrf.mxu0
    %v6503 = vadd.f32 0.0, %v6502
    %6504 = vmatmul.f32.gmra.mxu0 %v6297
    %v6505 = vpop.f32.mrf.mxu0
    %v6506 = vadd.f32 0.0, %v6505
    %6507 = vmatmul.f32.gmra.mxu0 %v6300
    %v6508 = vpop.f32.mrf.mxu0
    %v6509 = vadd.f32 0.0, %v6508
    %6510 = vmatmul.f32.gmra.mxu0 %v6303
    %v6511 = vpop.f32.mrf.mxu0
    %v6512 = vadd.f32 0.0, %v6511
    %6513 = vmatmul.f32.gmra.mxu0 %v6306
    %v6514 = vpop.f32.mrf.mxu0
    %v6515 = vadd.f32 0.0, %v6514
    %6516 = vmatmul.f32.gmra.mxu0 %v6309
    %v6517 = vpop.f32.mrf.mxu0
    %v6518 = vadd.f32 0.0, %v6517
    %6519 = vmatmul.f32.gmra.mxu0 %v6312
    %v6520 = vpop.f32.mrf.mxu0
    %v6521 = vadd.f32 0.0, %v6520
    %6522 = vmatmul.f32.gmra.mxu0 %v6315
    %v6523 = vpop.f32.mrf.mxu0
    %v6524 = vadd.f32 0.0, %v6523
    %6525 = vmatmul.f32.gmra.mxu0 %v6318
    %v6526 = vpop.f32.mrf.mxu0
    %v6527 = vadd.f32 0.0, %v6526
    %6528 = vmatmul.f32.gmra.mxu0 %v6321
    %v6529 = vpop.f32.mrf.mxu0
    %v6530 = vadd.f32 0.0, %v6529
    %6531 = vmatmul.f32.gmra.mxu0 %v6324
    %v6532 = vpop.f32.mrf.mxu0
    %v6533 = vadd.f32 0.0, %v6532
    %6534 = vmatmul.f32.gmra.mxu0 %v6327
    %v6535 = vpop.f32.mrf.mxu0
    %v6536 = vadd.f32 0.0, %v6535
    %6537 = vmatmul.f32.gmra.mxu0 %v6330
    %v6538 = vpop.f32.mrf.mxu0
    %v6539 = vadd.f32 0.0, %v6538
    %6540 = vmatmul.f32.gmra.mxu0 %v6333
    %v6541 = vpop.f32.mrf.mxu0
    %v6542 = vadd.f32 0.0, %v6541
    %6543 = vmatmul.f32.gmra.mxu0 %v6336
    %v6544 = vpop.f32.mrf.mxu0
    %v6545 = vadd.f32 0.0, %v6544
    %6546 = vmatmul.f32.gmra.mxu0 %v6339
    %v6547 = vpop.f32.mrf.mxu0
    %v6548 = vadd.f32 0.0, %v6547
    %6549 = vmatmul.f32.gmra.mxu0 %v6342
    %v6550 = vpop.f32.mrf.mxu0
    %v6551 = vadd.f32 0.0, %v6550
    %6552 = vmatmul.f32.gmra.mxu0 %v6345
    %v6553 = vpop.f32.mrf.mxu0
    %v6554 = vadd.f32 0.0, %v6553
    %6555 = vmatmul.f32.gmra.mxu0 %v6348
    %v6556 = vpop.f32.mrf.mxu0
    %v6557 = vadd.f32 0.0, %v6556
    %6558 = vmatmul.f32.gmra.mxu0 %v6351
    %v6559 = vpop.f32.mrf.mxu0
    %v6560 = vadd.f32 0.0, %v6559
    %6561 = vdwg.mxu0
    %v6562 = vadd.f32 %v6029, %v6371
    %v6563 = vadd.f32 %v6030, %v6374
    %v6564 = vadd.f32 %v6031, %v6377
    %v6565 = vadd.f32 %v6032, %v6380
    %v6566 = vadd.f32 %v6033, %v6383
    %v6567 = vadd.f32 %v6034, %v6386
    %v6568 = vadd.f32 %v6035, %v6389
    %v6569 = vadd.f32 %v6036, %v6392
    %v6570 = vadd.f32 %v6037, %v6395
    %v6571 = vadd.f32 %v6038, %v6398
    %v6572 = vadd.f32 %v6039, %v6401
    %v6573 = vadd.f32 %v6040, %v6404
    %v6574 = vadd.f32 %v6041, %v6407
    %v6575 = vadd.f32 %v6042, %v6410
    %v6576 = vadd.f32 %v6043, %v6413
    %v6577 = vadd.f32 %v6044, %v6416
    %v6578 = vadd.f32 %v6045, %v6419
    %v6579 = vadd.f32 %v6046, %v6422
    %v6580 = vadd.f32 %v6047, %v6425
    %v6581 = vadd.f32 %v6048, %v6428
    %v6582 = vadd.f32 %v6049, %v6431
    %v6583 = vadd.f32 %v6050, %v6434
    %v6584 = vadd.f32 %v6051, %v6437
    %v6585 = vadd.f32 %v6052, %v6440
    %v6586 = vadd.f32 %v6053, %v6443
    %v6587 = vadd.f32 %v6054, %v6446
    %v6588 = vadd.f32 %v6055, %v6449
    %v6589 = vadd.f32 %v6056, %v6452
    %v6590 = vadd.f32 %v6057, %v6455
    %v6591 = vadd.f32 %v6058, %v6458
    %v6592 = vadd.f32 %v6059, %v6461
    %v6593 = vadd.f32 %v6060, %v6464
    %v6594 = vadd.f32 %v6061, %v6467
    %v6595 = vadd.f32 %v6062, %v6470
    %v6596 = vadd.f32 %v6063, %v6473
    %v6597 = vadd.f32 %v6064, %v6476
    %v6598 = vadd.f32 %v6065, %v6479
    %v6599 = vadd.f32 %v6066, %v6482
    %v6600 = vadd.f32 %v6067, %v6485
    %v6601 = vadd.f32 %v6068, %v6488
    %v6602 = vadd.f32 %v6069, %v6491
    %v6603 = vadd.f32 %v6070, %v6494
    %v6604 = vadd.f32 %v6071, %v6497
    %v6605 = vadd.f32 %v6072, %v6500
    %v6606 = vadd.f32 %v6073, %v6503
    %v6607 = vadd.f32 %v6074, %v6506
    %v6608 = vadd.f32 %v6075, %v6509
    %v6609 = vadd.f32 %v6076, %v6512
    %v6610 = vadd.f32 %v6077, %v6515
    %v6611 = vadd.f32 %v6078, %v6518
    %v6612 = vadd.f32 %v6079, %v6521
    %v6613 = vadd.f32 %v6080, %v6524
    %v6614 = vadd.f32 %v6081, %v6527
    %v6615 = vadd.f32 %v6082, %v6530
    %v6616 = vadd.f32 %v6083, %v6533
    %v6617 = vadd.f32 %v6084, %v6536
    %v6618 = vadd.f32 %v6085, %v6539
    %v6619 = vadd.f32 %v6086, %v6542
    %v6620 = vadd.f32 %v6087, %v6545
    %v6621 = vadd.f32 %v6088, %v6548
    %v6622 = vadd.f32 %v6089, %v6551
    %v6623 = vadd.f32 %v6090, %v6554
    %v6624 = vadd.f32 %v6091, %v6557
    %v6625 = vadd.f32 %v6092, %v6560
    %v6626 = vld [vmem:[%s4781 + $0x8] sm:$0xff]
    %v6627 = vld [vmem:[%s4781 + $0x10] sm:$0xff]
    %v6628 = vld [vmem:[%s4781 + $0x18] sm:$0xff]
    %v6629 = vld [vmem:[%s4781 + $0x20] sm:$0xff]
    %v6630 = vld [vmem:[%s4781 + $0x28] sm:$0xff]
    %v6631 = vld [vmem:[%s4781 + $0x30] sm:$0xff]
    %v6632 = vld [vmem:[%s4781 + $0x38] sm:$0xff]
    %v6633 = vld [vmem:[%s4781 + $0x40] sm:$0xff]
    %v6634 = vld [vmem:[%s4781 + $0x58] sm:$0xff]
    %v6635 = vld [vmem:[%s4781 + $0x60] sm:$0xff]
    %v6636 = vld [vmem:[%s4781 + $0x68] sm:$0xff]
    %v6637 = vld [vmem:[%s4781 + $0x70] sm:$0xff]
    %v6638 = vld [vmem:[%s4781 + $0x78] sm:$0xff]
    %v6639 = vld [vmem:[%s4781 + $0x80] sm:$0xff]
    %v6640 = vld [vmem:[%s4781 + $0x88] sm:$0xff]
    %v6641 = vld [vmem:[%s4781 + $0x90] sm:$0xff]
    %v6642 = vld [vmem:[%s4781 + $0xa8] sm:$0xff]
    %v6643 = vld [vmem:[%s4781 + $0xb0] sm:$0xff]
    %v6644 = vld [vmem:[%s4781 + $0xb8] sm:$0xff]
    %v6645 = vld [vmem:[%s4781 + $0xc0] sm:$0xff]
    %v6646 = vld [vmem:[%s4781 + $0xc8] sm:$0xff]
    %v6647 = vld [vmem:[%s4781 + $0xd0] sm:$0xff]
    %v6648 = vld [vmem:[%s4781 + $0xd8] sm:$0xff]
    %v6649 = vld [vmem:[%s4781 + $0xe0] sm:$0xff]
    %v6650 = vld [vmem:[%s4781 + $0xf8] sm:$0xff]
    %v6651 = vld [vmem:[%s4781 + $0x100] sm:$0xff]
    %v6652 = vld [vmem:[%s4781 + $0x108] sm:$0xff]
    %v6653 = vld [vmem:[%s4781 + $0x110] sm:$0xff]
    %v6654 = vld [vmem:[%s4781 + $0x118] sm:$0xff]
    %v6655 = vld [vmem:[%s4781 + $0x120] sm:$0xff]
    %v6656 = vld [vmem:[%s4781 + $0x128] sm:$0xff]
    %v6657 = vld [vmem:[%s4781 + $0x130] sm:$0xff]
    %v6658 = vld [vmem:[%s4781 + $0x148] sm:$0xff]
    %v6659 = vld [vmem:[%s4781 + $0x150] sm:$0xff]
    %v6660 = vld [vmem:[%s4781 + $0x158] sm:$0xff]
    %v6661 = vld [vmem:[%s4781 + $0x160] sm:$0xff]
    %v6662 = vld [vmem:[%s4781 + $0x168] sm:$0xff]
    %v6663 = vld [vmem:[%s4781 + $0x170] sm:$0xff]
    %v6664 = vld [vmem:[%s4781 + $0x178] sm:$0xff]
    %v6665 = vld [vmem:[%s4781 + $0x180] sm:$0xff]
    %v6666 = vld [vmem:[%s4781 + $0x198] sm:$0xff]
    %v6667 = vld [vmem:[%s4781 + $0x1a0] sm:$0xff]
    %v6668 = vld [vmem:[%s4781 + $0x1a8] sm:$0xff]
    %v6669 = vld [vmem:[%s4781 + $0x1b0] sm:$0xff]
    %v6670 = vld [vmem:[%s4781 + $0x1b8] sm:$0xff]
    %v6671 = vld [vmem:[%s4781 + $0x1c0] sm:$0xff]
    %v6672 = vld [vmem:[%s4781 + $0x1c8] sm:$0xff]
    %v6673 = vld [vmem:[%s4781 + $0x1d0] sm:$0xff]
    %v6674 = vld [vmem:[%s4781 + $0x1e8] sm:$0xff]
    %v6675 = vld [vmem:[%s4781 + $0x1f0] sm:$0xff]
    %v6676 = vld [vmem:[%s4781 + $0x1f8] sm:$0xff]
    %v6677 = vld [vmem:[%s4781 + $0x200] sm:$0xff]
    %v6678 = vld [vmem:[%s4781 + $0x208] sm:$0xff]
    %v6679 = vld [vmem:[%s4781 + $0x210] sm:$0xff]
    %v6680 = vld [vmem:[%s4781 + $0x218] sm:$0xff]
    %v6681 = vld [vmem:[%s4781 + $0x220] sm:$0xff]
    %v6682 = vld [vmem:[%s4781 + $0x238] sm:$0xff]
    %v6683 = vld [vmem:[%s4781 + $0x240] sm:$0xff]
    %v6684 = vld [vmem:[%s4781 + $0x248] sm:$0xff]
    %v6685 = vld [vmem:[%s4781 + $0x250] sm:$0xff]
    %v6686 = vld [vmem:[%s4781 + $0x258] sm:$0xff]
    %v6687 = vld [vmem:[%s4781 + $0x260] sm:$0xff]
    %v6688 = vld [vmem:[%s4781 + $0x268] sm:$0xff]
    %v6689 = vld [vmem:[%s4781 + $0x270] sm:$0xff]
    %v6690 = vld [vmem:[%s2 + $0x80] sm:$0xff]
    %v6691 = vld [vmem:[%s2 + $0x88] sm:$0xff]
    %v6692 = vld [vmem:[%s2 + $0x90] sm:$0xff]
    %v6693 = vld [vmem:[%s2 + $0x98] sm:$0xff]
    %v6695 = vsel %vm27, %v6626, 0
    %v6698 = vsel %vm27, %v6627, 0
    %v6701 = vsel %vm27, %v6628, 0
    %v6704 = vsel %vm27, %v6629, 0
    %v6707 = vsel %vm27, %v6630, 0
    %v6710 = vsel %vm27, %v6631, 0
    %v6713 = vsel %vm27, %v6632, 0
    %v6716 = vsel %vm27, %v6633, 0
    %v6719 = vsel %vm27, %v6634, 0
    %v6722 = vsel %vm27, %v6635, 0
    %v6725 = vsel %vm27, %v6636, 0
    %v6728 = vsel %vm27, %v6637, 0
    %v6731 = vsel %vm27, %v6638, 0
    %v6734 = vsel %vm27, %v6639, 0
    %v6737 = vsel %vm27, %v6640, 0
    %v6740 = vsel %vm27, %v6641, 0
    %v6743 = vsel %vm27, %v6642, 0
    %v6746 = vsel %vm27, %v6643, 0
    %v6749 = vsel %vm27, %v6644, 0
    %v6752 = vsel %vm27, %v6645, 0
    %v6755 = vsel %vm27, %v6646, 0
    %v6758 = vsel %vm27, %v6647, 0
    %v6761 = vsel %vm27, %v6648, 0
    %v6764 = vsel %vm27, %v6649, 0
    %v6767 = vsel %vm27, %v6650, 0
    %v6770 = vsel %vm27, %v6651, 0
    %v6773 = vsel %vm27, %v6652, 0
    %v6776 = vsel %vm27, %v6653, 0
    %v6779 = vsel %vm27, %v6654, 0
    %v6782 = vsel %vm27, %v6655, 0
    %v6785 = vsel %vm27, %v6656, 0
    %v6788 = vsel %vm27, %v6657, 0
    %v6791 = vsel %vm27, %v6658, 0
    %v6794 = vsel %vm27, %v6659, 0
    %v6797 = vsel %vm27, %v6660, 0
    %v6800 = vsel %vm27, %v6661, 0
    %v6803 = vsel %vm27, %v6662, 0
    %v6806 = vsel %vm27, %v6663, 0
    %v6809 = vsel %vm27, %v6664, 0
    %v6812 = vsel %vm27, %v6665, 0
    %v6815 = vsel %vm27, %v6666, 0
    %v6818 = vsel %vm27, %v6667, 0
    %v6821 = vsel %vm27, %v6668, 0
    %v6824 = vsel %vm27, %v6669, 0
    %v6827 = vsel %vm27, %v6670, 0
    %v6830 = vsel %vm27, %v6671, 0
    %v6833 = vsel %vm27, %v6672, 0
    %v6836 = vsel %vm27, %v6673, 0
    %v6839 = vsel %vm27, %v6674, 0
    %v6842 = vsel %vm27, %v6675, 0
    %v6845 = vsel %vm27, %v6676, 0
    %v6848 = vsel %vm27, %v6677, 0
    %v6851 = vsel %vm27, %v6678, 0
    %v6854 = vsel %vm27, %v6679, 0
    %v6857 = vsel %vm27, %v6680, 0
    %v6860 = vsel %vm27, %v6681, 0
    %v6863 = vsel %vm27, %v6682, 0
    %v6866 = vsel %vm27, %v6683, 0
    %v6869 = vsel %vm27, %v6684, 0
    %v6872 = vsel %vm27, %v6685, 0
    %v6875 = vsel %vm27, %v6686, 0
    %v6878 = vsel %vm27, %v6687, 0
    %v6881 = vsel %vm27, %v6688, 0
    %v6884 = vsel %vm27, %v6689, 0
    %6886 = vmatpush.msra.mxu0 0.0
    %6887 = vmatpush.msra.mxu0 0.0
    %6888 = vmatpush.msra.mxu0 0.0
    %6889 = vmatpush.msra.mxu0 0.0
    %6890 = vmatpush.msra.mxu0 0.0
    %6891 = vmatpush.msra.mxu0 0.0
    %6892 = vmatpush.msra.mxu0 0.0
    %6893 = vmatpush.msra.mxu0 0.0
    %6894 = vmatpush.msra.mxu0 0.0
    %6895 = vmatpush.msra.mxu0 0.0
    %6896 = vmatpush.msra.mxu0 0.0
    %6897 = vmatpush.msra.mxu0 0.0
    %6898 = vmatpush.msra.mxu0 %v6693
    %6899 = vmatpush.msra.mxu0 %v6692
    %6900 = vmatpush.msra.mxu0 %v6691
    %6901 = vmatpush.msra.mxu0 %v6690
    %6902 = vmatmul.f32.gmra.mxu0 %v6695
    %v6903 = vpop.f32.mrf.mxu0
    %v6904 = vadd.f32 0.0, %v6903
    %6905 = vmatmul.f32.gmra.mxu0 %v6698
    %v6906 = vpop.f32.mrf.mxu0
    %v6907 = vadd.f32 0.0, %v6906
    %6908 = vmatmul.f32.gmra.mxu0 %v6701
    %v6909 = vpop.f32.mrf.mxu0
    %v6910 = vadd.f32 0.0, %v6909
    %6911 = vmatmul.f32.gmra.mxu0 %v6704
    %v6912 = vpop.f32.mrf.mxu0
    %v6913 = vadd.f32 0.0, %v6912
    %6914 = vmatmul.f32.gmra.mxu0 %v6707
    %v6915 = vpop.f32.mrf.mxu0
    %v6916 = vadd.f32 0.0, %v6915
    %6917 = vmatmul.f32.gmra.mxu0 %v6710
    %v6918 = vpop.f32.mrf.mxu0
    %v6919 = vadd.f32 0.0, %v6918
    %6920 = vmatmul.f32.gmra.mxu0 %v6713
    %v6921 = vpop.f32.mrf.mxu0
    %v6922 = vadd.f32 0.0, %v6921
    %6923 = vmatmul.f32.gmra.mxu0 %v6716
    %v6924 = vpop.f32.mrf.mxu0
    %v6925 = vadd.f32 0.0, %v6924
    %6926 = vmatmul.f32.gmra.mxu0 %v6719
    %v6927 = vpop.f32.mrf.mxu0
    %v6928 = vadd.f32 0.0, %v6927
    %6929 = vmatmul.f32.gmra.mxu0 %v6722
    %v6930 = vpop.f32.mrf.mxu0
    %v6931 = vadd.f32 0.0, %v6930
    %6932 = vmatmul.f32.gmra.mxu0 %v6725
    %v6933 = vpop.f32.mrf.mxu0
    %v6934 = vadd.f32 0.0, %v6933
    %6935 = vmatmul.f32.gmra.mxu0 %v6728
    %v6936 = vpop.f32.mrf.mxu0
    %v6937 = vadd.f32 0.0, %v6936
    %6938 = vmatmul.f32.gmra.mxu0 %v6731
    %v6939 = vpop.f32.mrf.mxu0
    %v6940 = vadd.f32 0.0, %v6939
    %6941 = vmatmul.f32.gmra.mxu0 %v6734
    %v6942 = vpop.f32.mrf.mxu0
    %v6943 = vadd.f32 0.0, %v6942
    %6944 = vmatmul.f32.gmra.mxu0 %v6737
    %v6945 = vpop.f32.mrf.mxu0
    %v6946 = vadd.f32 0.0, %v6945
    %6947 = vmatmul.f32.gmra.mxu0 %v6740
    %v6948 = vpop.f32.mrf.mxu0
    %v6949 = vadd.f32 0.0, %v6948
    %6950 = vmatmul.f32.gmra.mxu0 %v6743
    %v6951 = vpop.f32.mrf.mxu0
    %v6952 = vadd.f32 0.0, %v6951
    %6953 = vmatmul.f32.gmra.mxu0 %v6746
    %v6954 = vpop.f32.mrf.mxu0
    %v6955 = vadd.f32 0.0, %v6954
    %6956 = vmatmul.f32.gmra.mxu0 %v6749
    %v6957 = vpop.f32.mrf.mxu0
    %v6958 = vadd.f32 0.0, %v6957
    %6959 = vmatmul.f32.gmra.mxu0 %v6752
    %v6960 = vpop.f32.mrf.mxu0
    %v6961 = vadd.f32 0.0, %v6960
    %6962 = vmatmul.f32.gmra.mxu0 %v6755
    %v6963 = vpop.f32.mrf.mxu0
    %v6964 = vadd.f32 0.0, %v6963
    %6965 = vmatmul.f32.gmra.mxu0 %v6758
    %v6966 = vpop.f32.mrf.mxu0
    %v6967 = vadd.f32 0.0, %v6966
    %6968 = vmatmul.f32.gmra.mxu0 %v6761
    %v6969 = vpop.f32.mrf.mxu0
    %v6970 = vadd.f32 0.0, %v6969
    %6971 = vmatmul.f32.gmra.mxu0 %v6764
    %v6972 = vpop.f32.mrf.mxu0
    %v6973 = vadd.f32 0.0, %v6972
    %6974 = vmatmul.f32.gmra.mxu0 %v6767
    %v6975 = vpop.f32.mrf.mxu0
    %v6976 = vadd.f32 0.0, %v6975
    %6977 = vmatmul.f32.gmra.mxu0 %v6770
    %v6978 = vpop.f32.mrf.mxu0
    %v6979 = vadd.f32 0.0, %v6978
    %6980 = vmatmul.f32.gmra.mxu0 %v6773
    %v6981 = vpop.f32.mrf.mxu0
    %v6982 = vadd.f32 0.0, %v6981
    %6983 = vmatmul.f32.gmra.mxu0 %v6776
    %v6984 = vpop.f32.mrf.mxu0
    %v6985 = vadd.f32 0.0, %v6984
    %6986 = vmatmul.f32.gmra.mxu0 %v6779
    %v6987 = vpop.f32.mrf.mxu0
    %v6988 = vadd.f32 0.0, %v6987
    %6989 = vmatmul.f32.gmra.mxu0 %v6782
    %v6990 = vpop.f32.mrf.mxu0
    %v6991 = vadd.f32 0.0, %v6990
    %6992 = vmatmul.f32.gmra.mxu0 %v6785
    %v6993 = vpop.f32.mrf.mxu0
    %v6994 = vadd.f32 0.0, %v6993
    %6995 = vmatmul.f32.gmra.mxu0 %v6788
    %v6996 = vpop.f32.mrf.mxu0
    %v6997 = vadd.f32 0.0, %v6996
    %6998 = vmatmul.f32.gmra.mxu0 %v6791
    %v6999 = vpop.f32.mrf.mxu0
    %v7000 = vadd.f32 0.0, %v6999
    %7001 = vmatmul.f32.gmra.mxu0 %v6794
    %v7002 = vpop.f32.mrf.mxu0
    %v7003 = vadd.f32 0.0, %v7002
    %7004 = vmatmul.f32.gmra.mxu0 %v6797
    %v7005 = vpop.f32.mrf.mxu0
    %v7006 = vadd.f32 0.0, %v7005
    %7007 = vmatmul.f32.gmra.mxu0 %v6800
    %v7008 = vpop.f32.mrf.mxu0
    %v7009 = vadd.f32 0.0, %v7008
    %7010 = vmatmul.f32.gmra.mxu0 %v6803
    %v7011 = vpop.f32.mrf.mxu0
    %v7012 = vadd.f32 0.0, %v7011
    %7013 = vmatmul.f32.gmra.mxu0 %v6806
    %v7014 = vpop.f32.mrf.mxu0
    %v7015 = vadd.f32 0.0, %v7014
    %7016 = vmatmul.f32.gmra.mxu0 %v6809
    %v7017 = vpop.f32.mrf.mxu0
    %v7018 = vadd.f32 0.0, %v7017
    %7019 = vmatmul.f32.gmra.mxu0 %v6812
    %v7020 = vpop.f32.mrf.mxu0
    %v7021 = vadd.f32 0.0, %v7020
    %7022 = vmatmul.f32.gmra.mxu0 %v6815
    %v7023 = vpop.f32.mrf.mxu0
    %v7024 = vadd.f32 0.0, %v7023
    %7025 = vmatmul.f32.gmra.mxu0 %v6818
    %v7026 = vpop.f32.mrf.mxu0
    %v7027 = vadd.f32 0.0, %v7026
    %7028 = vmatmul.f32.gmra.mxu0 %v6821
    %v7029 = vpop.f32.mrf.mxu0
    %v7030 = vadd.f32 0.0, %v7029
    %7031 = vmatmul.f32.gmra.mxu0 %v6824
    %v7032 = vpop.f32.mrf.mxu0
    %v7033 = vadd.f32 0.0, %v7032
    %7034 = vmatmul.f32.gmra.mxu0 %v6827
    %v7035 = vpop.f32.mrf.mxu0
    %v7036 = vadd.f32 0.0, %v7035
    %7037 = vmatmul.f32.gmra.mxu0 %v6830
    %v7038 = vpop.f32.mrf.mxu0
    %v7039 = vadd.f32 0.0, %v7038
    %7040 = vmatmul.f32.gmra.mxu0 %v6833
    %v7041 = vpop.f32.mrf.mxu0
    %v7042 = vadd.f32 0.0, %v7041
    %7043 = vmatmul.f32.gmra.mxu0 %v6836
    %v7044 = vpop.f32.mrf.mxu0
    %v7045 = vadd.f32 0.0, %v7044
    %7046 = vmatmul.f32.gmra.mxu0 %v6839
    %v7047 = vpop.f32.mrf.mxu0
    %v7048 = vadd.f32 0.0, %v7047
    %7049 = vmatmul.f32.gmra.mxu0 %v6842
    %v7050 = vpop.f32.mrf.mxu0
    %v7051 = vadd.f32 0.0, %v7050
    %7052 = vmatmul.f32.gmra.mxu0 %v6845
    %v7053 = vpop.f32.mrf.mxu0
    %v7054 = vadd.f32 0.0, %v7053
    %7055 = vmatmul.f32.gmra.mxu0 %v6848
    %v7056 = vpop.f32.mrf.mxu0
    %v7057 = vadd.f32 0.0, %v7056
    %7058 = vmatmul.f32.gmra.mxu0 %v6851
    %v7059 = vpop.f32.mrf.mxu0
    %v7060 = vadd.f32 0.0, %v7059
    %7061 = vmatmul.f32.gmra.mxu0 %v6854
    %v7062 = vpop.f32.mrf.mxu0
    %v7063 = vadd.f32 0.0, %v7062
    %7064 = vmatmul.f32.gmra.mxu0 %v6857
    %v7065 = vpop.f32.mrf.mxu0
    %v7066 = vadd.f32 0.0, %v7065
    %7067 = vmatmul.f32.gmra.mxu0 %v6860
    %v7068 = vpop.f32.mrf.mxu0
    %v7069 = vadd.f32 0.0, %v7068
    %7070 = vmatmul.f32.gmra.mxu0 %v6863
    %v7071 = vpop.f32.mrf.mxu0
    %v7072 = vadd.f32 0.0, %v7071
    %7073 = vmatmul.f32.gmra.mxu0 %v6866
    %v7074 = vpop.f32.mrf.mxu0
    %v7075 = vadd.f32 0.0, %v7074
    %7076 = vmatmul.f32.gmra.mxu0 %v6869
    %v7077 = vpop.f32.mrf.mxu0
    %v7078 = vadd.f32 0.0, %v7077
    %7079 = vmatmul.f32.gmra.mxu0 %v6872
    %v7080 = vpop.f32.mrf.mxu0
    %v7081 = vadd.f32 0.0, %v7080
    %7082 = vmatmul.f32.gmra.mxu0 %v6875
    %v7083 = vpop.f32.mrf.mxu0
    %v7084 = vadd.f32 0.0, %v7083
    %7085 = vmatmul.f32.gmra.mxu0 %v6878
    %v7086 = vpop.f32.mrf.mxu0
    %v7087 = vadd.f32 0.0, %v7086
    %7088 = vmatmul.f32.gmra.mxu0 %v6881
    %v7089 = vpop.f32.mrf.mxu0
    %v7090 = vadd.f32 0.0, %v7089
    %7091 = vmatmul.f32.gmra.mxu0 %v6884
    %v7092 = vpop.f32.mrf.mxu0
    %v7093 = vadd.f32 0.0, %v7092
    %7094 = vdwg.mxu0
    %v7095 = vadd.f32 %v6562, %v6904
    %v7096 = vadd.f32 %v6563, %v6907
    %v7097 = vadd.f32 %v6564, %v6910
    %v7098 = vadd.f32 %v6565, %v6913
    %v7099 = vadd.f32 %v6566, %v6916
    %v7100 = vadd.f32 %v6567, %v6919
    %v7101 = vadd.f32 %v6568, %v6922
    %v7102 = vadd.f32 %v6569, %v6925
    %v7103 = vadd.f32 %v6570, %v6928
    %v7104 = vadd.f32 %v6571, %v6931
    %v7105 = vadd.f32 %v6572, %v6934
    %v7106 = vadd.f32 %v6573, %v6937
    %v7107 = vadd.f32 %v6574, %v6940
    %v7108 = vadd.f32 %v6575, %v6943
    %v7109 = vadd.f32 %v6576, %v6946
    %v7110 = vadd.f32 %v6577, %v6949
    %v7111 = vadd.f32 %v6578, %v6952
    %v7112 = vadd.f32 %v6579, %v6955
    %v7113 = vadd.f32 %v6580, %v6958
    %v7114 = vadd.f32 %v6581, %v6961
    %v7115 = vadd.f32 %v6582, %v6964
    %v7116 = vadd.f32 %v6583, %v6967
    %v7117 = vadd.f32 %v6584, %v6970
    %v7118 = vadd.f32 %v6585, %v6973
    %v7119 = vadd.f32 %v6586, %v6976
    %v7120 = vadd.f32 %v6587, %v6979
    %v7121 = vadd.f32 %v6588, %v6982
    %v7122 = vadd.f32 %v6589, %v6985
    %v7123 = vadd.f32 %v6590, %v6988
    %v7124 = vadd.f32 %v6591, %v6991
    %v7125 = vadd.f32 %v6592, %v6994
    %v7126 = vadd.f32 %v6593, %v6997
    %v7127 = vadd.f32 %v6594, %v7000
    %v7128 = vadd.f32 %v6595, %v7003
    %v7129 = vadd.f32 %v6596, %v7006
    %v7130 = vadd.f32 %v6597, %v7009
    %v7131 = vadd.f32 %v6598, %v7012
    %v7132 = vadd.f32 %v6599, %v7015
    %v7133 = vadd.f32 %v6600, %v7018
    %v7134 = vadd.f32 %v6601, %v7021
    %v7135 = vadd.f32 %v6602, %v7024
    %v7136 = vadd.f32 %v6603, %v7027
    %v7137 = vadd.f32 %v6604, %v7030
    %v7138 = vadd.f32 %v6605, %v7033
    %v7139 = vadd.f32 %v6606, %v7036
    %v7140 = vadd.f32 %v6607, %v7039
    %v7141 = vadd.f32 %v6608, %v7042
    %v7142 = vadd.f32 %v6609, %v7045
    %v7143 = vadd.f32 %v6610, %v7048
    %v7144 = vadd.f32 %v6611, %v7051
    %v7145 = vadd.f32 %v6612, %v7054
    %v7146 = vadd.f32 %v6613, %v7057
    %v7147 = vadd.f32 %v6614, %v7060
    %v7148 = vadd.f32 %v6615, %v7063
    %v7149 = vadd.f32 %v6616, %v7066
    %v7150 = vadd.f32 %v6617, %v7069
    %v7151 = vadd.f32 %v6618, %v7072
    %v7152 = vadd.f32 %v6619, %v7075
    %v7153 = vadd.f32 %v6620, %v7078
    %v7154 = vadd.f32 %v6621, %v7081
    %v7155 = vadd.f32 %v6622, %v7084
    %v7156 = vadd.f32 %v6623, %v7087
    %v7157 = vadd.f32 %v6624, %v7090
    %v7158 = vadd.f32 %v6625, %v7093
    %v7159 = vld [vmem:[%s4781 + $0x10] sm:$0xff]
    %v7160 = vld [vmem:[%s4781 + $0x18] sm:$0xff]
    %v7161 = vld [vmem:[%s4781 + $0x20] sm:$0xff]
    %v7162 = vld [vmem:[%s4781 + $0x28] sm:$0xff]
    %v7163 = vld [vmem:[%s4781 + $0x30] sm:$0xff]
    %v7164 = vld [vmem:[%s4781 + $0x38] sm:$0xff]
    %v7165 = vld [vmem:[%s4781 + $0x40] sm:$0xff]
    %v7166 = vld [vmem:[%s4781 + $0x48] sm:$0xff]
    %v7167 = vld [vmem:[%s4781 + $0x60] sm:$0xff]
    %v7168 = vld [vmem:[%s4781 + $0x68] sm:$0xff]
    %v7169 = vld [vmem:[%s4781 + $0x70] sm:$0xff]
    %v7170 = vld [vmem:[%s4781 + $0x78] sm:$0xff]
    %v7171 = vld [vmem:[%s4781 + $0x80] sm:$0xff]
    %v7172 = vld [vmem:[%s4781 + $0x88] sm:$0xff]
    %v7173 = vld [vmem:[%s4781 + $0x90] sm:$0xff]
    %v7174 = vld [vmem:[%s4781 + $0x98] sm:$0xff]
    %v7175 = vld [vmem:[%s4781 + $0xb0] sm:$0xff]
    %v7176 = vld [vmem:[%s4781 + $0xb8] sm:$0xff]
    %v7177 = vld [vmem:[%s4781 + $0xc0] sm:$0xff]
    %v7178 = vld [vmem:[%s4781 + $0xc8] sm:$0xff]
    %v7179 = vld [vmem:[%s4781 + $0xd0] sm:$0xff]
    %v7180 = vld [vmem:[%s4781 + $0xd8] sm:$0xff]
    %v7181 = vld [vmem:[%s4781 + $0xe0] sm:$0xff]
    %v7182 = vld [vmem:[%s4781 + $0xe8] sm:$0xff]
    %v7183 = vld [vmem:[%s4781 + $0x100] sm:$0xff]
    %v7184 = vld [vmem:[%s4781 + $0x108] sm:$0xff]
    %v7185 = vld [vmem:[%s4781 + $0x110] sm:$0xff]
    %v7186 = vld [vmem:[%s4781 + $0x118] sm:$0xff]
    %v7187 = vld [vmem:[%s4781 + $0x120] sm:$0xff]
    %v7188 = vld [vmem:[%s4781 + $0x128] sm:$0xff]
    %v7189 = vld [vmem:[%s4781 + $0x130] sm:$0xff]
    %v7190 = vld [vmem:[%s4781 + $0x138] sm:$0xff]
    %v7191 = vld [vmem:[%s4781 + $0x150] sm:$0xff]
    %v7192 = vld [vmem:[%s4781 + $0x158] sm:$0xff]
    %v7193 = vld [vmem:[%s4781 + $0x160] sm:$0xff]
    %v7194 = vld [vmem:[%s4781 + $0x168] sm:$0xff]
    %v7195 = vld [vmem:[%s4781 + $0x170] sm:$0xff]
    %v7196 = vld [vmem:[%s4781 + $0x178] sm:$0xff]
    %v7197 = vld [vmem:[%s4781 + $0x180] sm:$0xff]
    %v7198 = vld [vmem:[%s4781 + $0x188] sm:$0xff]
    %v7199 = vld [vmem:[%s4781 + $0x1a0] sm:$0xff]
    %v7200 = vld [vmem:[%s4781 + $0x1a8] sm:$0xff]
    %v7201 = vld [vmem:[%s4781 + $0x1b0] sm:$0xff]
    %v7202 = vld [vmem:[%s4781 + $0x1b8] sm:$0xff]
    %v7203 = vld [vmem:[%s4781 + $0x1c0] sm:$0xff]
    %v7204 = vld [vmem:[%s4781 + $0x1c8] sm:$0xff]
    %v7205 = vld [vmem:[%s4781 + $0x1d0] sm:$0xff]
    %v7206 = vld [vmem:[%s4781 + $0x1d8] sm:$0xff]
    %v7207 = vld [vmem:[%s4781 + $0x1f0] sm:$0xff]
    %v7208 = vld [vmem:[%s4781 + $0x1f8] sm:$0xff]
    %v7209 = vld [vmem:[%s4781 + $0x200] sm:$0xff]
    %v7210 = vld [vmem:[%s4781 + $0x208] sm:$0xff]
    %v7211 = vld [vmem:[%s4781 + $0x210] sm:$0xff]
    %v7212 = vld [vmem:[%s4781 + $0x218] sm:$0xff]
    %v7213 = vld [vmem:[%s4781 + $0x220] sm:$0xff]
    %v7214 = vld [vmem:[%s4781 + $0x228] sm:$0xff]
    %v7215 = vld [vmem:[%s4781 + $0x240] sm:$0xff]
    %v7216 = vld [vmem:[%s4781 + $0x248] sm:$0xff]
    %v7217 = vld [vmem:[%s4781 + $0x250] sm:$0xff]
    %v7218 = vld [vmem:[%s4781 + $0x258] sm:$0xff]
    %v7219 = vld [vmem:[%s4781 + $0x260] sm:$0xff]
    %v7220 = vld [vmem:[%s4781 + $0x268] sm:$0xff]
    %v7221 = vld [vmem:[%s4781 + $0x270] sm:$0xff]
    %v7222 = vld [vmem:[%s4781 + $0x278] sm:$0xff]
    %v7223 = vld [vmem:[%s2 + $0xa0] sm:$0xff]
    %v7224 = vld [vmem:[%s2 + $0xa8] sm:$0xff]
    %v7225 = vld [vmem:[%s2 + $0xb0] sm:$0xff]
    %v7226 = vld [vmem:[%s2 + $0xb8] sm:$0xff]
    %v7228 = vsel %vm27, %v7159, 0
    %v7231 = vsel %vm27, %v7160, 0
    %v7234 = vsel %vm27, %v7161, 0
    %v7237 = vsel %vm27, %v7162, 0
    %v7240 = vsel %vm27, %v7163, 0
    %v7243 = vsel %vm27, %v7164, 0
    %v7246 = vsel %vm27, %v7165, 0
    %v7249 = vsel %vm27, %v7166, 0
    %v7252 = vsel %vm27, %v7167, 0
    %v7255 = vsel %vm27, %v7168, 0
    %v7258 = vsel %vm27, %v7169, 0
    %v7261 = vsel %vm27, %v7170, 0
    %v7264 = vsel %vm27, %v7171, 0
    %v7267 = vsel %vm27, %v7172, 0
    %v7270 = vsel %vm27, %v7173, 0
    %v7273 = vsel %vm27, %v7174, 0
    %v7276 = vsel %vm27, %v7175, 0
    %v7279 = vsel %vm27, %v7176, 0
    %v7282 = vsel %vm27, %v7177, 0
    %v7285 = vsel %vm27, %v7178, 0
    %v7288 = vsel %vm27, %v7179, 0
    %v7291 = vsel %vm27, %v7180, 0
    %v7294 = vsel %vm27, %v7181, 0
    %v7297 = vsel %vm27, %v7182, 0
    %v7300 = vsel %vm27, %v7183, 0
    %v7303 = vsel %vm27, %v7184, 0
    %v7306 = vsel %vm27, %v7185, 0
    %v7309 = vsel %vm27, %v7186, 0
    %v7312 = vsel %vm27, %v7187, 0
    %v7315 = vsel %vm27, %v7188, 0
    %v7318 = vsel %vm27, %v7189, 0
    %v7321 = vsel %vm27, %v7190, 0
    %v7324 = vsel %vm27, %v7191, 0
    %v7327 = vsel %vm27, %v7192, 0
    %v7330 = vsel %vm27, %v7193, 0
    %v7333 = vsel %vm27, %v7194, 0
    %v7336 = vsel %vm27, %v7195, 0
    %v7339 = vsel %vm27, %v7196, 0
    %v7342 = vsel %vm27, %v7197, 0
    %v7345 = vsel %vm27, %v7198, 0
    %v7348 = vsel %vm27, %v7199, 0
    %v7351 = vsel %vm27, %v7200, 0
    %v7354 = vsel %vm27, %v7201, 0
    %v7357 = vsel %vm27, %v7202, 0
    %v7360 = vsel %vm27, %v7203, 0
    %v7363 = vsel %vm27, %v7204, 0
    %v7366 = vsel %vm27, %v7205, 0
    %v7369 = vsel %vm27, %v7206, 0
    %v7372 = vsel %vm27, %v7207, 0
    %v7375 = vsel %vm27, %v7208, 0
    %v7378 = vsel %vm27, %v7209, 0
    %v7381 = vsel %vm27, %v7210, 0
    %v7384 = vsel %vm27, %v7211, 0
    %v7387 = vsel %vm27, %v7212, 0
    %v7390 = vsel %vm27, %v7213, 0
    %v7393 = vsel %vm27, %v7214, 0
    %v7396 = vsel %vm27, %v7215, 0
    %v7399 = vsel %vm27, %v7216, 0
    %v7402 = vsel %vm27, %v7217, 0
    %v7405 = vsel %vm27, %v7218, 0
    %v7408 = vsel %vm27, %v7219, 0
    %v7411 = vsel %vm27, %v7220, 0
    %v7414 = vsel %vm27, %v7221, 0
    %v7417 = vsel %vm27, %v7222, 0
    %7419 = vmatpush.msra.mxu0 0.0
    %7420 = vmatpush.msra.mxu0 0.0
    %7421 = vmatpush.msra.mxu0 0.0
    %7422 = vmatpush.msra.mxu0 0.0
    %7423 = vmatpush.msra.mxu0 0.0
    %7424 = vmatpush.msra.mxu0 0.0
    %7425 = vmatpush.msra.mxu0 0.0
    %7426 = vmatpush.msra.mxu0 0.0
    %7427 = vmatpush.msra.mxu0 0.0
    %7428 = vmatpush.msra.mxu0 0.0
    %7429 = vmatpush.msra.mxu0 0.0
    %7430 = vmatpush.msra.mxu0 0.0
    %7431 = vmatpush.msra.mxu0 %v7226
    %7432 = vmatpush.msra.mxu0 %v7225
    %7433 = vmatpush.msra.mxu0 %v7224
    %7434 = vmatpush.msra.mxu0 %v7223
    %7435 = vmatmul.f32.gmra.mxu0 %v7228
    %v7436 = vpop.f32.mrf.mxu0
    %v7437 = vadd.f32 0.0, %v7436
    %7438 = vmatmul.f32.gmra.mxu0 %v7231
    %v7439 = vpop.f32.mrf.mxu0
    %v7440 = vadd.f32 0.0, %v7439
    %7441 = vmatmul.f32.gmra.mxu0 %v7234
    %v7442 = vpop.f32.mrf.mxu0
    %v7443 = vadd.f32 0.0, %v7442
    %7444 = vmatmul.f32.gmra.mxu0 %v7237
    %v7445 = vpop.f32.mrf.mxu0
    %v7446 = vadd.f32 0.0, %v7445
    %7447 = vmatmul.f32.gmra.mxu0 %v7240
    %v7448 = vpop.f32.mrf.mxu0
    %v7449 = vadd.f32 0.0, %v7448
    %7450 = vmatmul.f32.gmra.mxu0 %v7243
    %v7451 = vpop.f32.mrf.mxu0
    %v7452 = vadd.f32 0.0, %v7451
    %7453 = vmatmul.f32.gmra.mxu0 %v7246
    %v7454 = vpop.f32.mrf.mxu0
    %v7455 = vadd.f32 0.0, %v7454
    %7456 = vmatmul.f32.gmra.mxu0 %v7249
    %v7457 = vpop.f32.mrf.mxu0
    %v7458 = vadd.f32 0.0, %v7457
    %7459 = vmatmul.f32.gmra.mxu0 %v7252
    %v7460 = vpop.f32.mrf.mxu0
    %v7461 = vadd.f32 0.0, %v7460
    %7462 = vmatmul.f32.gmra.mxu0 %v7255
    %v7463 = vpop.f32.mrf.mxu0
    %v7464 = vadd.f32 0.0, %v7463
    %7465 = vmatmul.f32.gmra.mxu0 %v7258
    %v7466 = vpop.f32.mrf.mxu0
    %v7467 = vadd.f32 0.0, %v7466
    %7468 = vmatmul.f32.gmra.mxu0 %v7261
    %v7469 = vpop.f32.mrf.mxu0
    %v7470 = vadd.f32 0.0, %v7469
    %7471 = vmatmul.f32.gmra.mxu0 %v7264
    %v7472 = vpop.f32.mrf.mxu0
    %v7473 = vadd.f32 0.0, %v7472
    %7474 = vmatmul.f32.gmra.mxu0 %v7267
    %v7475 = vpop.f32.mrf.mxu0
    %v7476 = vadd.f32 0.0, %v7475
    %7477 = vmatmul.f32.gmra.mxu0 %v7270
    %v7478 = vpop.f32.mrf.mxu0
    %v7479 = vadd.f32 0.0, %v7478
    %7480 = vmatmul.f32.gmra.mxu0 %v7273
    %v7481 = vpop.f32.mrf.mxu0
    %v7482 = vadd.f32 0.0, %v7481
    %7483 = vmatmul.f32.gmra.mxu0 %v7276
    %v7484 = vpop.f32.mrf.mxu0
    %v7485 = vadd.f32 0.0, %v7484
    %7486 = vmatmul.f32.gmra.mxu0 %v7279
    %v7487 = vpop.f32.mrf.mxu0
    %v7488 = vadd.f32 0.0, %v7487
    %7489 = vmatmul.f32.gmra.mxu0 %v7282
    %v7490 = vpop.f32.mrf.mxu0
    %v7491 = vadd.f32 0.0, %v7490
    %7492 = vmatmul.f32.gmra.mxu0 %v7285
    %v7493 = vpop.f32.mrf.mxu0
    %v7494 = vadd.f32 0.0, %v7493
    %7495 = vmatmul.f32.gmra.mxu0 %v7288
    %v7496 = vpop.f32.mrf.mxu0
    %v7497 = vadd.f32 0.0, %v7496
    %7498 = vmatmul.f32.gmra.mxu0 %v7291
    %v7499 = vpop.f32.mrf.mxu0
    %v7500 = vadd.f32 0.0, %v7499
    %7501 = vmatmul.f32.gmra.mxu0 %v7294
    %v7502 = vpop.f32.mrf.mxu0
    %v7503 = vadd.f32 0.0, %v7502
    %7504 = vmatmul.f32.gmra.mxu0 %v7297
    %v7505 = vpop.f32.mrf.mxu0
    %v7506 = vadd.f32 0.0, %v7505
    %7507 = vmatmul.f32.gmra.mxu0 %v7300
    %v7508 = vpop.f32.mrf.mxu0
    %v7509 = vadd.f32 0.0, %v7508
    %7510 = vmatmul.f32.gmra.mxu0 %v7303
    %v7511 = vpop.f32.mrf.mxu0
    %v7512 = vadd.f32 0.0, %v7511
    %7513 = vmatmul.f32.gmra.mxu0 %v7306
    %v7514 = vpop.f32.mrf.mxu0
    %v7515 = vadd.f32 0.0, %v7514
    %7516 = vmatmul.f32.gmra.mxu0 %v7309
    %v7517 = vpop.f32.mrf.mxu0
    %v7518 = vadd.f32 0.0, %v7517
    %7519 = vmatmul.f32.gmra.mxu0 %v7312
    %v7520 = vpop.f32.mrf.mxu0
    %v7521 = vadd.f32 0.0, %v7520
    %7522 = vmatmul.f32.gmra.mxu0 %v7315
    %v7523 = vpop.f32.mrf.mxu0
    %v7524 = vadd.f32 0.0, %v7523
    %7525 = vmatmul.f32.gmra.mxu0 %v7318
    %v7526 = vpop.f32.mrf.mxu0
    %v7527 = vadd.f32 0.0, %v7526
    %7528 = vmatmul.f32.gmra.mxu0 %v7321
    %v7529 = vpop.f32.mrf.mxu0
    %v7530 = vadd.f32 0.0, %v7529
    %7531 = vmatmul.f32.gmra.mxu0 %v7324
    %v7532 = vpop.f32.mrf.mxu0
    %v7533 = vadd.f32 0.0, %v7532
    %7534 = vmatmul.f32.gmra.mxu0 %v7327
    %v7535 = vpop.f32.mrf.mxu0
    %v7536 = vadd.f32 0.0, %v7535
    %7537 = vmatmul.f32.gmra.mxu0 %v7330
    %v7538 = vpop.f32.mrf.mxu0
    %v7539 = vadd.f32 0.0, %v7538
    %7540 = vmatmul.f32.gmra.mxu0 %v7333
    %v7541 = vpop.f32.mrf.mxu0
    %v7542 = vadd.f32 0.0, %v7541
    %7543 = vmatmul.f32.gmra.mxu0 %v7336
    %v7544 = vpop.f32.mrf.mxu0
    %v7545 = vadd.f32 0.0, %v7544
    %7546 = vmatmul.f32.gmra.mxu0 %v7339
    %v7547 = vpop.f32.mrf.mxu0
    %v7548 = vadd.f32 0.0, %v7547
    %7549 = vmatmul.f32.gmra.mxu0 %v7342
    %v7550 = vpop.f32.mrf.mxu0
    %v7551 = vadd.f32 0.0, %v7550
    %7552 = vmatmul.f32.gmra.mxu0 %v7345
    %v7553 = vpop.f32.mrf.mxu0
    %v7554 = vadd.f32 0.0, %v7553
    %7555 = vmatmul.f32.gmra.mxu0 %v7348
    %v7556 = vpop.f32.mrf.mxu0
    %v7557 = vadd.f32 0.0, %v7556
    %7558 = vmatmul.f32.gmra.mxu0 %v7351
    %v7559 = vpop.f32.mrf.mxu0
    %v7560 = vadd.f32 0.0, %v7559
    %7561 = vmatmul.f32.gmra.mxu0 %v7354
    %v7562 = vpop.f32.mrf.mxu0
    %v7563 = vadd.f32 0.0, %v7562
    %7564 = vmatmul.f32.gmra.mxu0 %v7357
    %v7565 = vpop.f32.mrf.mxu0
    %v7566 = vadd.f32 0.0, %v7565
    %7567 = vmatmul.f32.gmra.mxu0 %v7360
    %v7568 = vpop.f32.mrf.mxu0
    %v7569 = vadd.f32 0.0, %v7568
    %7570 = vmatmul.f32.gmra.mxu0 %v7363
    %v7571 = vpop.f32.mrf.mxu0
    %v7572 = vadd.f32 0.0, %v7571
    %7573 = vmatmul.f32.gmra.mxu0 %v7366
    %v7574 = vpop.f32.mrf.mxu0
    %v7575 = vadd.f32 0.0, %v7574
    %7576 = vmatmul.f32.gmra.mxu0 %v7369
    %v7577 = vpop.f32.mrf.mxu0
    %v7578 = vadd.f32 0.0, %v7577
    %7579 = vmatmul.f32.gmra.mxu0 %v7372
    %v7580 = vpop.f32.mrf.mxu0
    %v7581 = vadd.f32 0.0, %v7580
    %7582 = vmatmul.f32.gmra.mxu0 %v7375
    %v7583 = vpop.f32.mrf.mxu0
    %v7584 = vadd.f32 0.0, %v7583
    %7585 = vmatmul.f32.gmra.mxu0 %v7378
    %v7586 = vpop.f32.mrf.mxu0
    %v7587 = vadd.f32 0.0, %v7586
    %7588 = vmatmul.f32.gmra.mxu0 %v7381
    %v7589 = vpop.f32.mrf.mxu0
    %v7590 = vadd.f32 0.0, %v7589
    %7591 = vmatmul.f32.gmra.mxu0 %v7384
    %v7592 = vpop.f32.mrf.mxu0
    %v7593 = vadd.f32 0.0, %v7592
    %7594 = vmatmul.f32.gmra.mxu0 %v7387
    %v7595 = vpop.f32.mrf.mxu0
    %v7596 = vadd.f32 0.0, %v7595
    %7597 = vmatmul.f32.gmra.mxu0 %v7390
    %v7598 = vpop.f32.mrf.mxu0
    %v7599 = vadd.f32 0.0, %v7598
    %7600 = vmatmul.f32.gmra.mxu0 %v7393
    %v7601 = vpop.f32.mrf.mxu0
    %v7602 = vadd.f32 0.0, %v7601
    %7603 = vmatmul.f32.gmra.mxu0 %v7396
    %v7604 = vpop.f32.mrf.mxu0
    %v7605 = vadd.f32 0.0, %v7604
    %7606 = vmatmul.f32.gmra.mxu0 %v7399
    %v7607 = vpop.f32.mrf.mxu0
    %v7608 = vadd.f32 0.0, %v7607
    %7609 = vmatmul.f32.gmra.mxu0 %v7402
    %v7610 = vpop.f32.mrf.mxu0
    %v7611 = vadd.f32 0.0, %v7610
    %7612 = vmatmul.f32.gmra.mxu0 %v7405
    %v7613 = vpop.f32.mrf.mxu0
    %v7614 = vadd.f32 0.0, %v7613
    %7615 = vmatmul.f32.gmra.mxu0 %v7408
    %v7616 = vpop.f32.mrf.mxu0
    %v7617 = vadd.f32 0.0, %v7616
    %7618 = vmatmul.f32.gmra.mxu0 %v7411
    %v7619 = vpop.f32.mrf.mxu0
    %v7620 = vadd.f32 0.0, %v7619
    %7621 = vmatmul.f32.gmra.mxu0 %v7414
    %v7622 = vpop.f32.mrf.mxu0
    %v7623 = vadd.f32 0.0, %v7622
    %7624 = vmatmul.f32.gmra.mxu0 %v7417
    %v7625 = vpop.f32.mrf.mxu0
    %v7626 = vadd.f32 0.0, %v7625
    %7627 = vdwg.mxu0
    %v7628 = vadd.f32 %v7095, %v7437
    %v7629 = vadd.f32 %v7096, %v7440
    %v7630 = vadd.f32 %v7097, %v7443
    %v7631 = vadd.f32 %v7098, %v7446
    %v7632 = vadd.f32 %v7099, %v7449
    %v7633 = vadd.f32 %v7100, %v7452
    %v7634 = vadd.f32 %v7101, %v7455
    %v7635 = vadd.f32 %v7102, %v7458
    %v7636 = vadd.f32 %v7103, %v7461
    %v7637 = vadd.f32 %v7104, %v7464
    %v7638 = vadd.f32 %v7105, %v7467
    %v7639 = vadd.f32 %v7106, %v7470
    %v7640 = vadd.f32 %v7107, %v7473
    %v7641 = vadd.f32 %v7108, %v7476
    %v7642 = vadd.f32 %v7109, %v7479
    %v7643 = vadd.f32 %v7110, %v7482
    %v7644 = vadd.f32 %v7111, %v7485
    %v7645 = vadd.f32 %v7112, %v7488
    %v7646 = vadd.f32 %v7113, %v7491
    %v7647 = vadd.f32 %v7114, %v7494
    %v7648 = vadd.f32 %v7115, %v7497
    %v7649 = vadd.f32 %v7116, %v7500
    %v7650 = vadd.f32 %v7117, %v7503
    %v7651 = vadd.f32 %v7118, %v7506
    %v7652 = vadd.f32 %v7119, %v7509
    %v7653 = vadd.f32 %v7120, %v7512
    %v7654 = vadd.f32 %v7121, %v7515
    %v7655 = vadd.f32 %v7122, %v7518
    %v7656 = vadd.f32 %v7123, %v7521
    %v7657 = vadd.f32 %v7124, %v7524
    %v7658 = vadd.f32 %v7125, %v7527
    %v7659 = vadd.f32 %v7126, %v7530
    %v7660 = vadd.f32 %v7127, %v7533
    %v7661 = vadd.f32 %v7128, %v7536
    %v7662 = vadd.f32 %v7129, %v7539
    %v7663 = vadd.f32 %v7130, %v7542
    %v7664 = vadd.f32 %v7131, %v7545
    %v7665 = vadd.f32 %v7132, %v7548
    %v7666 = vadd.f32 %v7133, %v7551
    %v7667 = vadd.f32 %v7134, %v7554
    %v7668 = vadd.f32 %v7135, %v7557
    %v7669 = vadd.f32 %v7136, %v7560
    %v7670 = vadd.f32 %v7137, %v7563
    %v7671 = vadd.f32 %v7138, %v7566
    %v7672 = vadd.f32 %v7139, %v7569
    %v7673 = vadd.f32 %v7140, %v7572
    %v7674 = vadd.f32 %v7141, %v7575
    %v7675 = vadd.f32 %v7142, %v7578
    %v7676 = vadd.f32 %v7143, %v7581
    %v7677 = vadd.f32 %v7144, %v7584
    %v7678 = vadd.f32 %v7145, %v7587
    %v7679 = vadd.f32 %v7146, %v7590
    %v7680 = vadd.f32 %v7147, %v7593
    %v7681 = vadd.f32 %v7148, %v7596
    %v7682 = vadd.f32 %v7149, %v7599
    %v7683 = vadd.f32 %v7150, %v7602
    %v7684 = vadd.f32 %v7151, %v7605
    %v7685 = vadd.f32 %v7152, %v7608
    %v7686 = vadd.f32 %v7153, %v7611
    %v7687 = vadd.f32 %v7154, %v7614
    %v7688 = vadd.f32 %v7155, %v7617
    %v7689 = vadd.f32 %v7156, %v7620
    %v7690 = vadd.f32 %v7157, %v7623
    %v7691 = vadd.f32 %v7158, %v7626
    %s7692 = scalar_lea.vmem [#allocation2], 160
    %v7693 = vld [vmem:[%s7692] sm:$0xff]
    %v7694 = vld [vmem:[%s7692 + $0x8] sm:$0xff]
    %v7695 = vld [vmem:[%s7692 + $0x10] sm:$0xff]
    %v7696 = vld [vmem:[%s7692 + $0x18] sm:$0xff]
    %v7697 = vld [vmem:[%s7692 + $0x20] sm:$0xff]
    %v7698 = vld [vmem:[%s7692 + $0x28] sm:$0xff]
    %v7699 = vld [vmem:[%s7692 + $0x30] sm:$0xff]
    %v7700 = vld [vmem:[%s7692 + $0x38] sm:$0xff]
    %v7701 = vld [vmem:[%s7692 + $0x50] sm:$0xff]
    %v7702 = vld [vmem:[%s7692 + $0x58] sm:$0xff]
    %v7703 = vld [vmem:[%s7692 + $0x60] sm:$0xff]
    %v7704 = vld [vmem:[%s7692 + $0x68] sm:$0xff]
    %v7705 = vld [vmem:[%s7692 + $0x70] sm:$0xff]
    %v7706 = vld [vmem:[%s7692 + $0x78] sm:$0xff]
    %v7707 = vld [vmem:[%s7692 + $0x80] sm:$0xff]
    %v7708 = vld [vmem:[%s7692 + $0x88] sm:$0xff]
    %v7709 = vld [vmem:[%s7692 + $0xa0] sm:$0xff]
    %v7710 = vld [vmem:[%s7692 + $0xa8] sm:$0xff]
    %v7711 = vld [vmem:[%s7692 + $0xb0] sm:$0xff]
    %v7712 = vld [vmem:[%s7692 + $0xb8] sm:$0xff]
    %v7713 = vld [vmem:[%s7692 + $0xc0] sm:$0xff]
    %v7714 = vld [vmem:[%s7692 + $0xc8] sm:$0xff]
    %v7715 = vld [vmem:[%s7692 + $0xd0] sm:$0xff]
    %v7716 = vld [vmem:[%s7692 + $0xd8] sm:$0xff]
    %v7717 = vld [vmem:[%s7692 + $0xf0] sm:$0xff]
    %v7718 = vld [vmem:[%s7692 + $0xf8] sm:$0xff]
    %v7719 = vld [vmem:[%s7692 + $0x100] sm:$0xff]
    %v7720 = vld [vmem:[%s7692 + $0x108] sm:$0xff]
    %v7721 = vld [vmem:[%s7692 + $0x110] sm:$0xff]
    %v7722 = vld [vmem:[%s7692 + $0x118] sm:$0xff]
    %v7723 = vld [vmem:[%s7692 + $0x120] sm:$0xff]
    %v7724 = vld [vmem:[%s7692 + $0x128] sm:$0xff]
    %v7725 = vld [vmem:[%s7692 + $0x140] sm:$0xff]
    %v7726 = vld [vmem:[%s7692 + $0x148] sm:$0xff]
    %v7727 = vld [vmem:[%s7692 + $0x150] sm:$0xff]
    %v7728 = vld [vmem:[%s7692 + $0x158] sm:$0xff]
    %v7729 = vld [vmem:[%s7692 + $0x160] sm:$0xff]
    %v7730 = vld [vmem:[%s7692 + $0x168] sm:$0xff]
    %v7731 = vld [vmem:[%s7692 + $0x170] sm:$0xff]
    %v7732 = vld [vmem:[%s7692 + $0x178] sm:$0xff]
    %v7733 = vld [vmem:[%s7692 + $0x190] sm:$0xff]
    %v7734 = vld [vmem:[%s7692 + $0x198] sm:$0xff]
    %v7735 = vld [vmem:[%s7692 + $0x1a0] sm:$0xff]
    %v7736 = vld [vmem:[%s7692 + $0x1a8] sm:$0xff]
    %v7737 = vld [vmem:[%s7692 + $0x1b0] sm:$0xff]
    %v7738 = vld [vmem:[%s7692 + $0x1b8] sm:$0xff]
    %v7739 = vld [vmem:[%s7692 + $0x1c0] sm:$0xff]
    %v7740 = vld [vmem:[%s7692 + $0x1c8] sm:$0xff]
    %v7741 = vld [vmem:[%s7692 + $0x1e0] sm:$0xff]
    %v7742 = vld [vmem:[%s7692 + $0x1e8] sm:$0xff]
    %v7743 = vld [vmem:[%s7692 + $0x1f0] sm:$0xff]
    %v7744 = vld [vmem:[%s7692 + $0x1f8] sm:$0xff]
    %v7745 = vld [vmem:[%s7692 + $0x200] sm:$0xff]
    %v7746 = vld [vmem:[%s7692 + $0x208] sm:$0xff]
    %v7747 = vld [vmem:[%s7692 + $0x210] sm:$0xff]
    %v7748 = vld [vmem:[%s7692 + $0x218] sm:$0xff]
    %v7749 = vld [vmem:[%s7692 + $0x230] sm:$0xff]
    %v7750 = vld [vmem:[%s7692 + $0x238] sm:$0xff]
    %v7751 = vld [vmem:[%s7692 + $0x240] sm:$0xff]
    %v7752 = vld [vmem:[%s7692 + $0x248] sm:$0xff]
    %v7753 = vld [vmem:[%s7692 + $0x250] sm:$0xff]
    %v7754 = vld [vmem:[%s7692 + $0x258] sm:$0xff]
    %v7755 = vld [vmem:[%s7692 + $0x260] sm:$0xff]
    %v7756 = vld [vmem:[%s7692 + $0x268] sm:$0xff]
    %v7757 = vld [vmem:[%s2 + $0xc0] sm:$0xff]
    %v7758 = vld [vmem:[%s2 + $0xc8] sm:$0xff]
    %v7759 = vld [vmem:[%s2 + $0xd0] sm:$0xff]
    %v7760 = vld [vmem:[%s2 + $0xd8] sm:$0xff]
    %v7762 = vsel %vm27, %v7693, 0
    %v7765 = vsel %vm27, %v7694, 0
    %v7768 = vsel %vm27, %v7695, 0
    %v7771 = vsel %vm27, %v7696, 0
    %v7774 = vsel %vm27, %v7697, 0
    %v7777 = vsel %vm27, %v7698, 0
    %v7780 = vsel %vm27, %v7699, 0
    %v7783 = vsel %vm27, %v7700, 0
    %v7786 = vsel %vm27, %v7701, 0
    %v7789 = vsel %vm27, %v7702, 0
    %v7792 = vsel %vm27, %v7703, 0
    %v7795 = vsel %vm27, %v7704, 0
    %v7798 = vsel %vm27, %v7705, 0
    %v7801 = vsel %vm27, %v7706, 0
    %v7804 = vsel %vm27, %v7707, 0
    %v7807 = vsel %vm27, %v7708, 0
    %v7810 = vsel %vm27, %v7709, 0
    %v7813 = vsel %vm27, %v7710, 0
    %v7816 = vsel %vm27, %v7711, 0
    %v7819 = vsel %vm27, %v7712, 0
    %v7822 = vsel %vm27, %v7713, 0
    %v7825 = vsel %vm27, %v7714, 0
    %v7828 = vsel %vm27, %v7715, 0
    %v7831 = vsel %vm27, %v7716, 0
    %v7834 = vsel %vm27, %v7717, 0
    %v7837 = vsel %vm27, %v7718, 0
    %v7840 = vsel %vm27, %v7719, 0
    %v7843 = vsel %vm27, %v7720, 0
    %v7846 = vsel %vm27, %v7721, 0
    %v7849 = vsel %vm27, %v7722, 0
    %v7852 = vsel %vm27, %v7723, 0
    %v7855 = vsel %vm27, %v7724, 0
    %v7858 = vsel %vm27, %v7725, 0
    %v7861 = vsel %vm27, %v7726, 0
    %v7864 = vsel %vm27, %v7727, 0
    %v7867 = vsel %vm27, %v7728, 0
    %v7870 = vsel %vm27, %v7729, 0
    %v7873 = vsel %vm27, %v7730, 0
    %v7876 = vsel %vm27, %v7731, 0
    %v7879 = vsel %vm27, %v7732, 0
    %v7882 = vsel %vm27, %v7733, 0
    %v7885 = vsel %vm27, %v7734, 0
    %v7888 = vsel %vm27, %v7735, 0
    %v7891 = vsel %vm27, %v7736, 0
    %v7894 = vsel %vm27, %v7737, 0
    %v7897 = vsel %vm27, %v7738, 0
    %v7900 = vsel %vm27, %v7739, 0
    %v7903 = vsel %vm27, %v7740, 0
    %v7906 = vsel %vm27, %v7741, 0
    %v7909 = vsel %vm27, %v7742, 0
    %v7912 = vsel %vm27, %v7743, 0
    %v7915 = vsel %vm27, %v7744, 0
    %v7918 = vsel %vm27, %v7745, 0
    %v7921 = vsel %vm27, %v7746, 0
    %v7924 = vsel %vm27, %v7747, 0
    %v7927 = vsel %vm27, %v7748, 0
    %v7930 = vsel %vm27, %v7749, 0
    %v7933 = vsel %vm27, %v7750, 0
    %v7936 = vsel %vm27, %v7751, 0
    %v7939 = vsel %vm27, %v7752, 0
    %v7942 = vsel %vm27, %v7753, 0
    %v7945 = vsel %vm27, %v7754, 0
    %v7948 = vsel %vm27, %v7755, 0
    %v7951 = vsel %vm27, %v7756, 0
    %7953 = vmatpush.msra.mxu0 0.0
    %7954 = vmatpush.msra.mxu0 0.0
    %7955 = vmatpush.msra.mxu0 0.0
    %7956 = vmatpush.msra.mxu0 0.0
    %7957 = vmatpush.msra.mxu0 0.0
    %7958 = vmatpush.msra.mxu0 0.0
    %7959 = vmatpush.msra.mxu0 0.0
    %7960 = vmatpush.msra.mxu0 0.0
    %7961 = vmatpush.msra.mxu0 0.0
    %7962 = vmatpush.msra.mxu0 0.0
    %7963 = vmatpush.msra.mxu0 0.0
    %7964 = vmatpush.msra.mxu0 0.0
    %7965 = vmatpush.msra.mxu0 %v7760
    %7966 = vmatpush.msra.mxu0 %v7759
    %7967 = vmatpush.msra.mxu0 %v7758
    %7968 = vmatpush.msra.mxu0 %v7757
    %7969 = vmatmul.f32.gmra.mxu0 %v7762
    %v7970 = vpop.f32.mrf.mxu0
    %v7971 = vadd.f32 0.0, %v7970
    %7972 = vmatmul.f32.gmra.mxu0 %v7765
    %v7973 = vpop.f32.mrf.mxu0
    %v7974 = vadd.f32 0.0, %v7973
    %7975 = vmatmul.f32.gmra.mxu0 %v7768
    %v7976 = vpop.f32.mrf.mxu0
    %v7977 = vadd.f32 0.0, %v7976
    %7978 = vmatmul.f32.gmra.mxu0 %v7771
    %v7979 = vpop.f32.mrf.mxu0
    %v7980 = vadd.f32 0.0, %v7979
    %7981 = vmatmul.f32.gmra.mxu0 %v7774
    %v7982 = vpop.f32.mrf.mxu0
    %v7983 = vadd.f32 0.0, %v7982
    %7984 = vmatmul.f32.gmra.mxu0 %v7777
    %v7985 = vpop.f32.mrf.mxu0
    %v7986 = vadd.f32 0.0, %v7985
    %7987 = vmatmul.f32.gmra.mxu0 %v7780
    %v7988 = vpop.f32.mrf.mxu0
    %v7989 = vadd.f32 0.0, %v7988
    %7990 = vmatmul.f32.gmra.mxu0 %v7783
    %v7991 = vpop.f32.mrf.mxu0
    %v7992 = vadd.f32 0.0, %v7991
    %7993 = vmatmul.f32.gmra.mxu0 %v7786
    %v7994 = vpop.f32.mrf.mxu0
    %v7995 = vadd.f32 0.0, %v7994
    %7996 = vmatmul.f32.gmra.mxu0 %v7789
    %v7997 = vpop.f32.mrf.mxu0
    %v7998 = vadd.f32 0.0, %v7997
    %7999 = vmatmul.f32.gmra.mxu0 %v7792
    %v8000 = vpop.f32.mrf.mxu0
    %v8001 = vadd.f32 0.0, %v8000
    %8002 = vmatmul.f32.gmra.mxu0 %v7795
    %v8003 = vpop.f32.mrf.mxu0
    %v8004 = vadd.f32 0.0, %v8003
    %8005 = vmatmul.f32.gmra.mxu0 %v7798
    %v8006 = vpop.f32.mrf.mxu0
    %v8007 = vadd.f32 0.0, %v8006
    %8008 = vmatmul.f32.gmra.mxu0 %v7801
    %v8009 = vpop.f32.mrf.mxu0
    %v8010 = vadd.f32 0.0, %v8009
    %8011 = vmatmul.f32.gmra.mxu0 %v7804
    %v8012 = vpop.f32.mrf.mxu0
    %v8013 = vadd.f32 0.0, %v8012
    %8014 = vmatmul.f32.gmra.mxu0 %v7807
    %v8015 = vpop.f32.mrf.mxu0
    %v8016 = vadd.f32 0.0, %v8015
    %8017 = vmatmul.f32.gmra.mxu0 %v7810
    %v8018 = vpop.f32.mrf.mxu0
    %v8019 = vadd.f32 0.0, %v8018
    %8020 = vmatmul.f32.gmra.mxu0 %v7813
    %v8021 = vpop.f32.mrf.mxu0
    %v8022 = vadd.f32 0.0, %v8021
    %8023 = vmatmul.f32.gmra.mxu0 %v7816
    %v8024 = vpop.f32.mrf.mxu0
    %v8025 = vadd.f32 0.0, %v8024
    %8026 = vmatmul.f32.gmra.mxu0 %v7819
    %v8027 = vpop.f32.mrf.mxu0
    %v8028 = vadd.f32 0.0, %v8027
    %8029 = vmatmul.f32.gmra.mxu0 %v7822
    %v8030 = vpop.f32.mrf.mxu0
    %v8031 = vadd.f32 0.0, %v8030
    %8032 = vmatmul.f32.gmra.mxu0 %v7825
    %v8033 = vpop.f32.mrf.mxu0
    %v8034 = vadd.f32 0.0, %v8033
    %8035 = vmatmul.f32.gmra.mxu0 %v7828
    %v8036 = vpop.f32.mrf.mxu0
    %v8037 = vadd.f32 0.0, %v8036
    %8038 = vmatmul.f32.gmra.mxu0 %v7831
    %v8039 = vpop.f32.mrf.mxu0
    %v8040 = vadd.f32 0.0, %v8039
    %8041 = vmatmul.f32.gmra.mxu0 %v7834
    %v8042 = vpop.f32.mrf.mxu0
    %v8043 = vadd.f32 0.0, %v8042
    %8044 = vmatmul.f32.gmra.mxu0 %v7837
    %v8045 = vpop.f32.mrf.mxu0
    %v8046 = vadd.f32 0.0, %v8045
    %8047 = vmatmul.f32.gmra.mxu0 %v7840
    %v8048 = vpop.f32.mrf.mxu0
    %v8049 = vadd.f32 0.0, %v8048
    %8050 = vmatmul.f32.gmra.mxu0 %v7843
    %v8051 = vpop.f32.mrf.mxu0
    %v8052 = vadd.f32 0.0, %v8051
    %8053 = vmatmul.f32.gmra.mxu0 %v7846
    %v8054 = vpop.f32.mrf.mxu0
    %v8055 = vadd.f32 0.0, %v8054
    %8056 = vmatmul.f32.gmra.mxu0 %v7849
    %v8057 = vpop.f32.mrf.mxu0
    %v8058 = vadd.f32 0.0, %v8057
    %8059 = vmatmul.f32.gmra.mxu0 %v7852
    %v8060 = vpop.f32.mrf.mxu0
    %v8061 = vadd.f32 0.0, %v8060
    %8062 = vmatmul.f32.gmra.mxu0 %v7855
    %v8063 = vpop.f32.mrf.mxu0
    %v8064 = vadd.f32 0.0, %v8063
    %8065 = vmatmul.f32.gmra.mxu0 %v7858
    %v8066 = vpop.f32.mrf.mxu0
    %v8067 = vadd.f32 0.0, %v8066
    %8068 = vmatmul.f32.gmra.mxu0 %v7861
    %v8069 = vpop.f32.mrf.mxu0
    %v8070 = vadd.f32 0.0, %v8069
    %8071 = vmatmul.f32.gmra.mxu0 %v7864
    %v8072 = vpop.f32.mrf.mxu0
    %v8073 = vadd.f32 0.0, %v8072
    %8074 = vmatmul.f32.gmra.mxu0 %v7867
    %v8075 = vpop.f32.mrf.mxu0
    %v8076 = vadd.f32 0.0, %v8075
    %8077 = vmatmul.f32.gmra.mxu0 %v7870
    %v8078 = vpop.f32.mrf.mxu0
    %v8079 = vadd.f32 0.0, %v8078
    %8080 = vmatmul.f32.gmra.mxu0 %v7873
    %v8081 = vpop.f32.mrf.mxu0
    %v8082 = vadd.f32 0.0, %v8081
    %8083 = vmatmul.f32.gmra.mxu0 %v7876
    %v8084 = vpop.f32.mrf.mxu0
    %v8085 = vadd.f32 0.0, %v8084
    %8086 = vmatmul.f32.gmra.mxu0 %v7879
    %v8087 = vpop.f32.mrf.mxu0
    %v8088 = vadd.f32 0.0, %v8087
    %8089 = vmatmul.f32.gmra.mxu0 %v7882
    %v8090 = vpop.f32.mrf.mxu0
    %v8091 = vadd.f32 0.0, %v8090
    %8092 = vmatmul.f32.gmra.mxu0 %v7885
    %v8093 = vpop.f32.mrf.mxu0
    %v8094 = vadd.f32 0.0, %v8093
    %8095 = vmatmul.f32.gmra.mxu0 %v7888
    %v8096 = vpop.f32.mrf.mxu0
    %v8097 = vadd.f32 0.0, %v8096
    %8098 = vmatmul.f32.gmra.mxu0 %v7891
    %v8099 = vpop.f32.mrf.mxu0
    %v8100 = vadd.f32 0.0, %v8099
    %8101 = vmatmul.f32.gmra.mxu0 %v7894
    %v8102 = vpop.f32.mrf.mxu0
    %v8103 = vadd.f32 0.0, %v8102
    %8104 = vmatmul.f32.gmra.mxu0 %v7897
    %v8105 = vpop.f32.mrf.mxu0
    %v8106 = vadd.f32 0.0, %v8105
    %8107 = vmatmul.f32.gmra.mxu0 %v7900
    %v8108 = vpop.f32.mrf.mxu0
    %v8109 = vadd.f32 0.0, %v8108
    %8110 = vmatmul.f32.gmra.mxu0 %v7903
    %v8111 = vpop.f32.mrf.mxu0
    %v8112 = vadd.f32 0.0, %v8111
    %8113 = vmatmul.f32.gmra.mxu0 %v7906
    %v8114 = vpop.f32.mrf.mxu0
    %v8115 = vadd.f32 0.0, %v8114
    %8116 = vmatmul.f32.gmra.mxu0 %v7909
    %v8117 = vpop.f32.mrf.mxu0
    %v8118 = vadd.f32 0.0, %v8117
    %8119 = vmatmul.f32.gmra.mxu0 %v7912
    %v8120 = vpop.f32.mrf.mxu0
    %v8121 = vadd.f32 0.0, %v8120
    %8122 = vmatmul.f32.gmra.mxu0 %v7915
    %v8123 = vpop.f32.mrf.mxu0
    %v8124 = vadd.f32 0.0, %v8123
    %8125 = vmatmul.f32.gmra.mxu0 %v7918
    %v8126 = vpop.f32.mrf.mxu0
    %v8127 = vadd.f32 0.0, %v8126
    %8128 = vmatmul.f32.gmra.mxu0 %v7921
    %v8129 = vpop.f32.mrf.mxu0
    %v8130 = vadd.f32 0.0, %v8129
    %8131 = vmatmul.f32.gmra.mxu0 %v7924
    %v8132 = vpop.f32.mrf.mxu0
    %v8133 = vadd.f32 0.0, %v8132
    %8134 = vmatmul.f32.gmra.mxu0 %v7927
    %v8135 = vpop.f32.mrf.mxu0
    %v8136 = vadd.f32 0.0, %v8135
    %8137 = vmatmul.f32.gmra.mxu0 %v7930
    %v8138 = vpop.f32.mrf.mxu0
    %v8139 = vadd.f32 0.0, %v8138
    %8140 = vmatmul.f32.gmra.mxu0 %v7933
    %v8141 = vpop.f32.mrf.mxu0
    %v8142 = vadd.f32 0.0, %v8141
    %8143 = vmatmul.f32.gmra.mxu0 %v7936
    %v8144 = vpop.f32.mrf.mxu0
    %v8145 = vadd.f32 0.0, %v8144
    %8146 = vmatmul.f32.gmra.mxu0 %v7939
    %v8147 = vpop.f32.mrf.mxu0
    %v8148 = vadd.f32 0.0, %v8147
    %8149 = vmatmul.f32.gmra.mxu0 %v7942
    %v8150 = vpop.f32.mrf.mxu0
    %v8151 = vadd.f32 0.0, %v8150
    %8152 = vmatmul.f32.gmra.mxu0 %v7945
    %v8153 = vpop.f32.mrf.mxu0
    %v8154 = vadd.f32 0.0, %v8153
    %8155 = vmatmul.f32.gmra.mxu0 %v7948
    %v8156 = vpop.f32.mrf.mxu0
    %v8157 = vadd.f32 0.0, %v8156
    %8158 = vmatmul.f32.gmra.mxu0 %v7951
    %v8159 = vpop.f32.mrf.mxu0
    %v8160 = vadd.f32 0.0, %v8159
    %8161 = vdwg.mxu0
    %v8162 = vadd.f32 %v7628, %v7971
    %v8163 = vadd.f32 %v7629, %v7974
    %v8164 = vadd.f32 %v7630, %v7977
    %v8165 = vadd.f32 %v7631, %v7980
    %v8166 = vadd.f32 %v7632, %v7983
    %v8167 = vadd.f32 %v7633, %v7986
    %v8168 = vadd.f32 %v7634, %v7989
    %v8169 = vadd.f32 %v7635, %v7992
    %v8170 = vadd.f32 %v7636, %v7995
    %v8171 = vadd.f32 %v7637, %v7998
    %v8172 = vadd.f32 %v7638, %v8001
    %v8173 = vadd.f32 %v7639, %v8004
    %v8174 = vadd.f32 %v7640, %v8007
    %v8175 = vadd.f32 %v7641, %v8010
    %v8176 = vadd.f32 %v7642, %v8013
    %v8177 = vadd.f32 %v7643, %v8016
    %v8178 = vadd.f32 %v7644, %v8019
    %v8179 = vadd.f32 %v7645, %v8022
    %v8180 = vadd.f32 %v7646, %v8025
    %v8181 = vadd.f32 %v7647, %v8028
    %v8182 = vadd.f32 %v7648, %v8031
    %v8183 = vadd.f32 %v7649, %v8034
    %v8184 = vadd.f32 %v7650, %v8037
    %v8185 = vadd.f32 %v7651, %v8040
    %v8186 = vadd.f32 %v7652, %v8043
    %v8187 = vadd.f32 %v7653, %v8046
    %v8188 = vadd.f32 %v7654, %v8049
    %v8189 = vadd.f32 %v7655, %v8052
    %v8190 = vadd.f32 %v7656, %v8055
    %v8191 = vadd.f32 %v7657, %v8058
    %v8192 = vadd.f32 %v7658, %v8061
    %v8193 = vadd.f32 %v7659, %v8064
    %v8194 = vadd.f32 %v7660, %v8067
    %v8195 = vadd.f32 %v7661, %v8070
    %v8196 = vadd.f32 %v7662, %v8073
    %v8197 = vadd.f32 %v7663, %v8076
    %v8198 = vadd.f32 %v7664, %v8079
    %v8199 = vadd.f32 %v7665, %v8082
    %v8200 = vadd.f32 %v7666, %v8085
    %v8201 = vadd.f32 %v7667, %v8088
    %v8202 = vadd.f32 %v7668, %v8091
    %v8203 = vadd.f32 %v7669, %v8094
    %v8204 = vadd.f32 %v7670, %v8097
    %v8205 = vadd.f32 %v7671, %v8100
    %v8206 = vadd.f32 %v7672, %v8103
    %v8207 = vadd.f32 %v7673, %v8106
    %v8208 = vadd.f32 %v7674, %v8109
    %v8209 = vadd.f32 %v7675, %v8112
    %v8210 = vadd.f32 %v7676, %v8115
    %v8211 = vadd.f32 %v7677, %v8118
    %v8212 = vadd.f32 %v7678, %v8121
    %v8213 = vadd.f32 %v7679, %v8124
    %v8214 = vadd.f32 %v7680, %v8127
    %v8215 = vadd.f32 %v7681, %v8130
    %v8216 = vadd.f32 %v7682, %v8133
    %v8217 = vadd.f32 %v7683, %v8136
    %v8218 = vadd.f32 %v7684, %v8139
    %v8219 = vadd.f32 %v7685, %v8142
    %v8220 = vadd.f32 %v7686, %v8145
    %v8221 = vadd.f32 %v7687, %v8148
    %v8222 = vadd.f32 %v7688, %v8151
    %v8223 = vadd.f32 %v7689, %v8154
    %v8224 = vadd.f32 %v7690, %v8157
    %v8225 = vadd.f32 %v7691, %v8160
    %v8226 = vld [vmem:[%s7692 + $0x8] sm:$0xff]
    %v8227 = vld [vmem:[%s7692 + $0x10] sm:$0xff]
    %v8228 = vld [vmem:[%s7692 + $0x18] sm:$0xff]
    %v8229 = vld [vmem:[%s7692 + $0x20] sm:$0xff]
    %v8230 = vld [vmem:[%s7692 + $0x28] sm:$0xff]
    %v8231 = vld [vmem:[%s7692 + $0x30] sm:$0xff]
    %v8232 = vld [vmem:[%s7692 + $0x38] sm:$0xff]
    %v8233 = vld [vmem:[%s7692 + $0x40] sm:$0xff]
    %v8234 = vld [vmem:[%s7692 + $0x58] sm:$0xff]
    %v8235 = vld [vmem:[%s7692 + $0x60] sm:$0xff]
    %v8236 = vld [vmem:[%s7692 + $0x68] sm:$0xff]
    %v8237 = vld [vmem:[%s7692 + $0x70] sm:$0xff]
    %v8238 = vld [vmem:[%s7692 + $0x78] sm:$0xff]
    %v8239 = vld [vmem:[%s7692 + $0x80] sm:$0xff]
    %v8240 = vld [vmem:[%s7692 + $0x88] sm:$0xff]
    %v8241 = vld [vmem:[%s7692 + $0x90] sm:$0xff]
    %v8242 = vld [vmem:[%s7692 + $0xa8] sm:$0xff]
    %v8243 = vld [vmem:[%s7692 + $0xb0] sm:$0xff]
    %v8244 = vld [vmem:[%s7692 + $0xb8] sm:$0xff]
    %v8245 = vld [vmem:[%s7692 + $0xc0] sm:$0xff]
    %v8246 = vld [vmem:[%s7692 + $0xc8] sm:$0xff]
    %v8247 = vld [vmem:[%s7692 + $0xd0] sm:$0xff]
    %v8248 = vld [vmem:[%s7692 + $0xd8] sm:$0xff]
    %v8249 = vld [vmem:[%s7692 + $0xe0] sm:$0xff]
    %v8250 = vld [vmem:[%s7692 + $0xf8] sm:$0xff]
    %v8251 = vld [vmem:[%s7692 + $0x100] sm:$0xff]
    %v8252 = vld [vmem:[%s7692 + $0x108] sm:$0xff]
    %v8253 = vld [vmem:[%s7692 + $0x110] sm:$0xff]
    %v8254 = vld [vmem:[%s7692 + $0x118] sm:$0xff]
    %v8255 = vld [vmem:[%s7692 + $0x120] sm:$0xff]
    %v8256 = vld [vmem:[%s7692 + $0x128] sm:$0xff]
    %v8257 = vld [vmem:[%s7692 + $0x130] sm:$0xff]
    %v8258 = vld [vmem:[%s7692 + $0x148] sm:$0xff]
    %v8259 = vld [vmem:[%s7692 + $0x150] sm:$0xff]
    %v8260 = vld [vmem:[%s7692 + $0x158] sm:$0xff]
    %v8261 = vld [vmem:[%s7692 + $0x160] sm:$0xff]
    %v8262 = vld [vmem:[%s7692 + $0x168] sm:$0xff]
    %v8263 = vld [vmem:[%s7692 + $0x170] sm:$0xff]
    %v8264 = vld [vmem:[%s7692 + $0x178] sm:$0xff]
    %v8265 = vld [vmem:[%s7692 + $0x180] sm:$0xff]
    %v8266 = vld [vmem:[%s7692 + $0x198] sm:$0xff]
    %v8267 = vld [vmem:[%s7692 + $0x1a0] sm:$0xff]
    %v8268 = vld [vmem:[%s7692 + $0x1a8] sm:$0xff]
    %v8269 = vld [vmem:[%s7692 + $0x1b0] sm:$0xff]
    %v8270 = vld [vmem:[%s7692 + $0x1b8] sm:$0xff]
    %v8271 = vld [vmem:[%s7692 + $0x1c0] sm:$0xff]
    %v8272 = vld [vmem:[%s7692 + $0x1c8] sm:$0xff]
    %v8273 = vld [vmem:[%s7692 + $0x1d0] sm:$0xff]
    %v8274 = vld [vmem:[%s7692 + $0x1e8] sm:$0xff]
    %v8275 = vld [vmem:[%s7692 + $0x1f0] sm:$0xff]
    %v8276 = vld [vmem:[%s7692 + $0x1f8] sm:$0xff]
    %v8277 = vld [vmem:[%s7692 + $0x200] sm:$0xff]
    %v8278 = vld [vmem:[%s7692 + $0x208] sm:$0xff]
    %v8279 = vld [vmem:[%s7692 + $0x210] sm:$0xff]
    %v8280 = vld [vmem:[%s7692 + $0x218] sm:$0xff]
    %v8281 = vld [vmem:[%s7692 + $0x220] sm:$0xff]
    %v8282 = vld [vmem:[%s7692 + $0x238] sm:$0xff]
    %v8283 = vld [vmem:[%s7692 + $0x240] sm:$0xff]
    %v8284 = vld [vmem:[%s7692 + $0x248] sm:$0xff]
    %v8285 = vld [vmem:[%s7692 + $0x250] sm:$0xff]
    %v8286 = vld [vmem:[%s7692 + $0x258] sm:$0xff]
    %v8287 = vld [vmem:[%s7692 + $0x260] sm:$0xff]
    %v8288 = vld [vmem:[%s7692 + $0x268] sm:$0xff]
    %v8289 = vld [vmem:[%s7692 + $0x270] sm:$0xff]
    %v8290 = vld [vmem:[%s2 + $0xe0] sm:$0xff]
    %v8291 = vld [vmem:[%s2 + $0xe8] sm:$0xff]
    %v8292 = vld [vmem:[%s2 + $0xf0] sm:$0xff]
    %v8293 = vld [vmem:[%s2 + $0xf8] sm:$0xff]
    %v8295 = vsel %vm27, %v8226, 0
    %v8298 = vsel %vm27, %v8227, 0
    %v8301 = vsel %vm27, %v8228, 0
    %v8304 = vsel %vm27, %v8229, 0
    %v8307 = vsel %vm27, %v8230, 0
    %v8310 = vsel %vm27, %v8231, 0
    %v8313 = vsel %vm27, %v8232, 0
    %v8316 = vsel %vm27, %v8233, 0
    %v8319 = vsel %vm27, %v8234, 0
    %v8322 = vsel %vm27, %v8235, 0
    %v8325 = vsel %vm27, %v8236, 0
    %v8328 = vsel %vm27, %v8237, 0
    %v8331 = vsel %vm27, %v8238, 0
    %v8334 = vsel %vm27, %v8239, 0
    %v8337 = vsel %vm27, %v8240, 0
    %v8340 = vsel %vm27, %v8241, 0
    %v8343 = vsel %vm27, %v8242, 0
    %v8346 = vsel %vm27, %v8243, 0
    %v8349 = vsel %vm27, %v8244, 0
    %v8352 = vsel %vm27, %v8245, 0
    %v8355 = vsel %vm27, %v8246, 0
    %v8358 = vsel %vm27, %v8247, 0
    %v8361 = vsel %vm27, %v8248, 0
    %v8364 = vsel %vm27, %v8249, 0
    %v8367 = vsel %vm27, %v8250, 0
    %v8370 = vsel %vm27, %v8251, 0
    %v8373 = vsel %vm27, %v8252, 0
    %v8376 = vsel %vm27, %v8253, 0
    %v8379 = vsel %vm27, %v8254, 0
    %v8382 = vsel %vm27, %v8255, 0
    %v8385 = vsel %vm27, %v8256, 0
    %v8388 = vsel %vm27, %v8257, 0
    %v8391 = vsel %vm27, %v8258, 0
    %v8394 = vsel %vm27, %v8259, 0
    %v8397 = vsel %vm27, %v8260, 0
    %v8400 = vsel %vm27, %v8261, 0
    %v8403 = vsel %vm27, %v8262, 0
    %v8406 = vsel %vm27, %v8263, 0
    %v8409 = vsel %vm27, %v8264, 0
    %v8412 = vsel %vm27, %v8265, 0
    %v8415 = vsel %vm27, %v8266, 0
    %v8418 = vsel %vm27, %v8267, 0
    %v8421 = vsel %vm27, %v8268, 0
    %v8424 = vsel %vm27, %v8269, 0
    %v8427 = vsel %vm27, %v8270, 0
    %v8430 = vsel %vm27, %v8271, 0
    %v8433 = vsel %vm27, %v8272, 0
    %v8436 = vsel %vm27, %v8273, 0
    %v8439 = vsel %vm27, %v8274, 0
    %v8442 = vsel %vm27, %v8275, 0
    %v8445 = vsel %vm27, %v8276, 0
    %v8448 = vsel %vm27, %v8277, 0
    %v8451 = vsel %vm27, %v8278, 0
    %v8454 = vsel %vm27, %v8279, 0
    %v8457 = vsel %vm27, %v8280, 0
    %v8460 = vsel %vm27, %v8281, 0
    %v8463 = vsel %vm27, %v8282, 0
    %v8466 = vsel %vm27, %v8283, 0
    %v8469 = vsel %vm27, %v8284, 0
    %v8472 = vsel %vm27, %v8285, 0
    %v8475 = vsel %vm27, %v8286, 0
    %v8478 = vsel %vm27, %v8287, 0
    %v8481 = vsel %vm27, %v8288, 0
    %v8484 = vsel %vm27, %v8289, 0
    %8486 = vmatpush.msra.mxu0 0.0
    %8487 = vmatpush.msra.mxu0 0.0
    %8488 = vmatpush.msra.mxu0 0.0
    %8489 = vmatpush.msra.mxu0 0.0
    %8490 = vmatpush.msra.mxu0 0.0
    %8491 = vmatpush.msra.mxu0 0.0
    %8492 = vmatpush.msra.mxu0 0.0
    %8493 = vmatpush.msra.mxu0 0.0
    %8494 = vmatpush.msra.mxu0 0.0
    %8495 = vmatpush.msra.mxu0 0.0
    %8496 = vmatpush.msra.mxu0 0.0
    %8497 = vmatpush.msra.mxu0 0.0
    %8498 = vmatpush.msra.mxu0 %v8293
    %8499 = vmatpush.msra.mxu0 %v8292
    %8500 = vmatpush.msra.mxu0 %v8291
    %8501 = vmatpush.msra.mxu0 %v8290
    %8502 = vmatmul.f32.gmra.mxu0 %v8295
    %v8503 = vpop.f32.mrf.mxu0
    %v8504 = vadd.f32 0.0, %v8503
    %8505 = vmatmul.f32.gmra.mxu0 %v8298
    %v8506 = vpop.f32.mrf.mxu0
    %v8507 = vadd.f32 0.0, %v8506
    %8508 = vmatmul.f32.gmra.mxu0 %v8301
    %v8509 = vpop.f32.mrf.mxu0
    %v8510 = vadd.f32 0.0, %v8509
    %8511 = vmatmul.f32.gmra.mxu0 %v8304
    %v8512 = vpop.f32.mrf.mxu0
    %v8513 = vadd.f32 0.0, %v8512
    %8514 = vmatmul.f32.gmra.mxu0 %v8307
    %v8515 = vpop.f32.mrf.mxu0
    %v8516 = vadd.f32 0.0, %v8515
    %8517 = vmatmul.f32.gmra.mxu0 %v8310
    %v8518 = vpop.f32.mrf.mxu0
    %v8519 = vadd.f32 0.0, %v8518
    %8520 = vmatmul.f32.gmra.mxu0 %v8313
    %v8521 = vpop.f32.mrf.mxu0
    %v8522 = vadd.f32 0.0, %v8521
    %8523 = vmatmul.f32.gmra.mxu0 %v8316
    %v8524 = vpop.f32.mrf.mxu0
    %v8525 = vadd.f32 0.0, %v8524
    %8526 = vmatmul.f32.gmra.mxu0 %v8319
    %v8527 = vpop.f32.mrf.mxu0
    %v8528 = vadd.f32 0.0, %v8527
    %8529 = vmatmul.f32.gmra.mxu0 %v8322
    %v8530 = vpop.f32.mrf.mxu0
    %v8531 = vadd.f32 0.0, %v8530
    %8532 = vmatmul.f32.gmra.mxu0 %v8325
    %v8533 = vpop.f32.mrf.mxu0
    %v8534 = vadd.f32 0.0, %v8533
    %8535 = vmatmul.f32.gmra.mxu0 %v8328
    %v8536 = vpop.f32.mrf.mxu0
    %v8537 = vadd.f32 0.0, %v8536
    %8538 = vmatmul.f32.gmra.mxu0 %v8331
    %v8539 = vpop.f32.mrf.mxu0
    %v8540 = vadd.f32 0.0, %v8539
    %8541 = vmatmul.f32.gmra.mxu0 %v8334
    %v8542 = vpop.f32.mrf.mxu0
    %v8543 = vadd.f32 0.0, %v8542
    %8544 = vmatmul.f32.gmra.mxu0 %v8337
    %v8545 = vpop.f32.mrf.mxu0
    %v8546 = vadd.f32 0.0, %v8545
    %8547 = vmatmul.f32.gmra.mxu0 %v8340
    %v8548 = vpop.f32.mrf.mxu0
    %v8549 = vadd.f32 0.0, %v8548
    %8550 = vmatmul.f32.gmra.mxu0 %v8343
    %v8551 = vpop.f32.mrf.mxu0
    %v8552 = vadd.f32 0.0, %v8551
    %8553 = vmatmul.f32.gmra.mxu0 %v8346
    %v8554 = vpop.f32.mrf.mxu0
    %v8555 = vadd.f32 0.0, %v8554
    %8556 = vmatmul.f32.gmra.mxu0 %v8349
    %v8557 = vpop.f32.mrf.mxu0
    %v8558 = vadd.f32 0.0, %v8557
    %8559 = vmatmul.f32.gmra.mxu0 %v8352
    %v8560 = vpop.f32.mrf.mxu0
    %v8561 = vadd.f32 0.0, %v8560
    %8562 = vmatmul.f32.gmra.mxu0 %v8355
    %v8563 = vpop.f32.mrf.mxu0
    %v8564 = vadd.f32 0.0, %v8563
    %8565 = vmatmul.f32.gmra.mxu0 %v8358
    %v8566 = vpop.f32.mrf.mxu0
    %v8567 = vadd.f32 0.0, %v8566
    %8568 = vmatmul.f32.gmra.mxu0 %v8361
    %v8569 = vpop.f32.mrf.mxu0
    %v8570 = vadd.f32 0.0, %v8569
    %8571 = vmatmul.f32.gmra.mxu0 %v8364
    %v8572 = vpop.f32.mrf.mxu0
    %v8573 = vadd.f32 0.0, %v8572
    %8574 = vmatmul.f32.gmra.mxu0 %v8367
    %v8575 = vpop.f32.mrf.mxu0
    %v8576 = vadd.f32 0.0, %v8575
    %8577 = vmatmul.f32.gmra.mxu0 %v8370
    %v8578 = vpop.f32.mrf.mxu0
    %v8579 = vadd.f32 0.0, %v8578
    %8580 = vmatmul.f32.gmra.mxu0 %v8373
    %v8581 = vpop.f32.mrf.mxu0
    %v8582 = vadd.f32 0.0, %v8581
    %8583 = vmatmul.f32.gmra.mxu0 %v8376
    %v8584 = vpop.f32.mrf.mxu0
    %v8585 = vadd.f32 0.0, %v8584
    %8586 = vmatmul.f32.gmra.mxu0 %v8379
    %v8587 = vpop.f32.mrf.mxu0
    %v8588 = vadd.f32 0.0, %v8587
    %8589 = vmatmul.f32.gmra.mxu0 %v8382
    %v8590 = vpop.f32.mrf.mxu0
    %v8591 = vadd.f32 0.0, %v8590
    %8592 = vmatmul.f32.gmra.mxu0 %v8385
    %v8593 = vpop.f32.mrf.mxu0
    %v8594 = vadd.f32 0.0, %v8593
    %8595 = vmatmul.f32.gmra.mxu0 %v8388
    %v8596 = vpop.f32.mrf.mxu0
    %v8597 = vadd.f32 0.0, %v8596
    %8598 = vmatmul.f32.gmra.mxu0 %v8391
    %v8599 = vpop.f32.mrf.mxu0
    %v8600 = vadd.f32 0.0, %v8599
    %8601 = vmatmul.f32.gmra.mxu0 %v8394
    %v8602 = vpop.f32.mrf.mxu0
    %v8603 = vadd.f32 0.0, %v8602
    %8604 = vmatmul.f32.gmra.mxu0 %v8397
    %v8605 = vpop.f32.mrf.mxu0
    %v8606 = vadd.f32 0.0, %v8605
    %8607 = vmatmul.f32.gmra.mxu0 %v8400
    %v8608 = vpop.f32.mrf.mxu0
    %v8609 = vadd.f32 0.0, %v8608
    %8610 = vmatmul.f32.gmra.mxu0 %v8403
    %v8611 = vpop.f32.mrf.mxu0
    %v8612 = vadd.f32 0.0, %v8611
    %8613 = vmatmul.f32.gmra.mxu0 %v8406
    %v8614 = vpop.f32.mrf.mxu0
    %v8615 = vadd.f32 0.0, %v8614
    %8616 = vmatmul.f32.gmra.mxu0 %v8409
    %v8617 = vpop.f32.mrf.mxu0
    %v8618 = vadd.f32 0.0, %v8617
    %8619 = vmatmul.f32.gmra.mxu0 %v8412
    %v8620 = vpop.f32.mrf.mxu0
    %v8621 = vadd.f32 0.0, %v8620
    %8622 = vmatmul.f32.gmra.mxu0 %v8415
    %v8623 = vpop.f32.mrf.mxu0
    %v8624 = vadd.f32 0.0, %v8623
    %8625 = vmatmul.f32.gmra.mxu0 %v8418
    %v8626 = vpop.f32.mrf.mxu0
    %v8627 = vadd.f32 0.0, %v8626
    %8628 = vmatmul.f32.gmra.mxu0 %v8421
    %v8629 = vpop.f32.mrf.mxu0
    %v8630 = vadd.f32 0.0, %v8629
    %8631 = vmatmul.f32.gmra.mxu0 %v8424
    %v8632 = vpop.f32.mrf.mxu0
    %v8633 = vadd.f32 0.0, %v8632
    %8634 = vmatmul.f32.gmra.mxu0 %v8427
    %v8635 = vpop.f32.mrf.mxu0
    %v8636 = vadd.f32 0.0, %v8635
    %8637 = vmatmul.f32.gmra.mxu0 %v8430
    %v8638 = vpop.f32.mrf.mxu0
    %v8639 = vadd.f32 0.0, %v8638
    %8640 = vmatmul.f32.gmra.mxu0 %v8433
    %v8641 = vpop.f32.mrf.mxu0
    %v8642 = vadd.f32 0.0, %v8641
    %8643 = vmatmul.f32.gmra.mxu0 %v8436
    %v8644 = vpop.f32.mrf.mxu0
    %v8645 = vadd.f32 0.0, %v8644
    %8646 = vmatmul.f32.gmra.mxu0 %v8439
    %v8647 = vpop.f32.mrf.mxu0
    %v8648 = vadd.f32 0.0, %v8647
    %8649 = vmatmul.f32.gmra.mxu0 %v8442
    %v8650 = vpop.f32.mrf.mxu0
    %v8651 = vadd.f32 0.0, %v8650
    %8652 = vmatmul.f32.gmra.mxu0 %v8445
    %v8653 = vpop.f32.mrf.mxu0
    %v8654 = vadd.f32 0.0, %v8653
    %8655 = vmatmul.f32.gmra.mxu0 %v8448
    %v8656 = vpop.f32.mrf.mxu0
    %v8657 = vadd.f32 0.0, %v8656
    %8658 = vmatmul.f32.gmra.mxu0 %v8451
    %v8659 = vpop.f32.mrf.mxu0
    %v8660 = vadd.f32 0.0, %v8659
    %8661 = vmatmul.f32.gmra.mxu0 %v8454
    %v8662 = vpop.f32.mrf.mxu0
    %v8663 = vadd.f32 0.0, %v8662
    %8664 = vmatmul.f32.gmra.mxu0 %v8457
    %v8665 = vpop.f32.mrf.mxu0
    %v8666 = vadd.f32 0.0, %v8665
    %8667 = vmatmul.f32.gmra.mxu0 %v8460
    %v8668 = vpop.f32.mrf.mxu0
    %v8669 = vadd.f32 0.0, %v8668
    %8670 = vmatmul.f32.gmra.mxu0 %v8463
    %v8671 = vpop.f32.mrf.mxu0
    %v8672 = vadd.f32 0.0, %v8671
    %8673 = vmatmul.f32.gmra.mxu0 %v8466
    %v8674 = vpop.f32.mrf.mxu0
    %v8675 = vadd.f32 0.0, %v8674
    %8676 = vmatmul.f32.gmra.mxu0 %v8469
    %v8677 = vpop.f32.mrf.mxu0
    %v8678 = vadd.f32 0.0, %v8677
    %8679 = vmatmul.f32.gmra.mxu0 %v8472
    %v8680 = vpop.f32.mrf.mxu0
    %v8681 = vadd.f32 0.0, %v8680
    %8682 = vmatmul.f32.gmra.mxu0 %v8475
    %v8683 = vpop.f32.mrf.mxu0
    %v8684 = vadd.f32 0.0, %v8683
    %8685 = vmatmul.f32.gmra.mxu0 %v8478
    %v8686 = vpop.f32.mrf.mxu0
    %v8687 = vadd.f32 0.0, %v8686
    %8688 = vmatmul.f32.gmra.mxu0 %v8481
    %v8689 = vpop.f32.mrf.mxu0
    %v8690 = vadd.f32 0.0, %v8689
    %8691 = vmatmul.f32.gmra.mxu0 %v8484
    %v8692 = vpop.f32.mrf.mxu0
    %v8693 = vadd.f32 0.0, %v8692
    %8694 = vdwg.mxu0
    %v8695 = vadd.f32 %v8162, %v8504
    %v8696 = vadd.f32 %v8163, %v8507
    %v8697 = vadd.f32 %v8164, %v8510
    %v8698 = vadd.f32 %v8165, %v8513
    %v8699 = vadd.f32 %v8166, %v8516
    %v8700 = vadd.f32 %v8167, %v8519
    %v8701 = vadd.f32 %v8168, %v8522
    %v8702 = vadd.f32 %v8169, %v8525
    %v8703 = vadd.f32 %v8170, %v8528
    %v8704 = vadd.f32 %v8171, %v8531
    %v8705 = vadd.f32 %v8172, %v8534
    %v8706 = vadd.f32 %v8173, %v8537
    %v8707 = vadd.f32 %v8174, %v8540
    %v8708 = vadd.f32 %v8175, %v8543
    %v8709 = vadd.f32 %v8176, %v8546
    %v8710 = vadd.f32 %v8177, %v8549
    %v8711 = vadd.f32 %v8178, %v8552
    %v8712 = vadd.f32 %v8179, %v8555
    %v8713 = vadd.f32 %v8180, %v8558
    %v8714 = vadd.f32 %v8181, %v8561
    %v8715 = vadd.f32 %v8182, %v8564
    %v8716 = vadd.f32 %v8183, %v8567
    %v8717 = vadd.f32 %v8184, %v8570
    %v8718 = vadd.f32 %v8185, %v8573
    %v8719 = vadd.f32 %v8186, %v8576
    %v8720 = vadd.f32 %v8187, %v8579
    %v8721 = vadd.f32 %v8188, %v8582
    %v8722 = vadd.f32 %v8189, %v8585
    %v8723 = vadd.f32 %v8190, %v8588
    %v8724 = vadd.f32 %v8191, %v8591
    %v8725 = vadd.f32 %v8192, %v8594
    %v8726 = vadd.f32 %v8193, %v8597
    %v8727 = vadd.f32 %v8194, %v8600
    %v8728 = vadd.f32 %v8195, %v8603
    %v8729 = vadd.f32 %v8196, %v8606
    %v8730 = vadd.f32 %v8197, %v8609
    %v8731 = vadd.f32 %v8198, %v8612
    %v8732 = vadd.f32 %v8199, %v8615
    %v8733 = vadd.f32 %v8200, %v8618
    %v8734 = vadd.f32 %v8201, %v8621
    %v8735 = vadd.f32 %v8202, %v8624
    %v8736 = vadd.f32 %v8203, %v8627
    %v8737 = vadd.f32 %v8204, %v8630
    %v8738 = vadd.f32 %v8205, %v8633
    %v8739 = vadd.f32 %v8206, %v8636
    %v8740 = vadd.f32 %v8207, %v8639
    %v8741 = vadd.f32 %v8208, %v8642
    %v8742 = vadd.f32 %v8209, %v8645
    %v8743 = vadd.f32 %v8210, %v8648
    %v8744 = vadd.f32 %v8211, %v8651
    %v8745 = vadd.f32 %v8212, %v8654
    %v8746 = vadd.f32 %v8213, %v8657
    %v8747 = vadd.f32 %v8214, %v8660
    %v8748 = vadd.f32 %v8215, %v8663
    %v8749 = vadd.f32 %v8216, %v8666
    %v8750 = vadd.f32 %v8217, %v8669
    %v8751 = vadd.f32 %v8218, %v8672
    %v8752 = vadd.f32 %v8219, %v8675
    %v8753 = vadd.f32 %v8220, %v8678
    %v8754 = vadd.f32 %v8221, %v8681
    %v8755 = vadd.f32 %v8222, %v8684
    %v8756 = vadd.f32 %v8223, %v8687
    %v8757 = vadd.f32 %v8224, %v8690
    %v8758 = vadd.f32 %v8225, %v8693
    %v8759 = vld [vmem:[%s7692 + $0x10] sm:$0xff]
    %v8760 = vld [vmem:[%s7692 + $0x18] sm:$0xff]
    %v8761 = vld [vmem:[%s7692 + $0x20] sm:$0xff]
    %v8762 = vld [vmem:[%s7692 + $0x28] sm:$0xff]
    %v8763 = vld [vmem:[%s7692 + $0x30] sm:$0xff]
    %v8764 = vld [vmem:[%s7692 + $0x38] sm:$0xff]
    %v8765 = vld [vmem:[%s7692 + $0x40] sm:$0xff]
    %v8766 = vld [vmem:[%s7692 + $0x48] sm:$0xff]
    %v8767 = vld [vmem:[%s7692 + $0x60] sm:$0xff]
    %v8768 = vld [vmem:[%s7692 + $0x68] sm:$0xff]
    %v8769 = vld [vmem:[%s7692 + $0x70] sm:$0xff]
    %v8770 = vld [vmem:[%s7692 + $0x78] sm:$0xff]
    %v8771 = vld [vmem:[%s7692 + $0x80] sm:$0xff]
    %v8772 = vld [vmem:[%s7692 + $0x88] sm:$0xff]
    %v8773 = vld [vmem:[%s7692 + $0x90] sm:$0xff]
    %v8774 = vld [vmem:[%s7692 + $0x98] sm:$0xff]
    %v8775 = vld [vmem:[%s7692 + $0xb0] sm:$0xff]
    %v8776 = vld [vmem:[%s7692 + $0xb8] sm:$0xff]
    %v8777 = vld [vmem:[%s7692 + $0xc0] sm:$0xff]
    %v8778 = vld [vmem:[%s7692 + $0xc8] sm:$0xff]
    %v8779 = vld [vmem:[%s7692 + $0xd0] sm:$0xff]
    %v8780 = vld [vmem:[%s7692 + $0xd8] sm:$0xff]
    %v8781 = vld [vmem:[%s7692 + $0xe0] sm:$0xff]
    %v8782 = vld [vmem:[%s7692 + $0xe8] sm:$0xff]
    %v8783 = vld [vmem:[%s7692 + $0x100] sm:$0xff]
    %v8784 = vld [vmem:[%s7692 + $0x108] sm:$0xff]
    %v8785 = vld [vmem:[%s7692 + $0x110] sm:$0xff]
    %v8786 = vld [vmem:[%s7692 + $0x118] sm:$0xff]
    %v8787 = vld [vmem:[%s7692 + $0x120] sm:$0xff]
    %v8788 = vld [vmem:[%s7692 + $0x128] sm:$0xff]
    %v8789 = vld [vmem:[%s7692 + $0x130] sm:$0xff]
    %v8790 = vld [vmem:[%s7692 + $0x138] sm:$0xff]
    %v8791 = vld [vmem:[%s7692 + $0x150] sm:$0xff]
    %v8792 = vld [vmem:[%s7692 + $0x158] sm:$0xff]
    %v8793 = vld [vmem:[%s7692 + $0x160] sm:$0xff]
    %v8794 = vld [vmem:[%s7692 + $0x168] sm:$0xff]
    %v8795 = vld [vmem:[%s7692 + $0x170] sm:$0xff]
    %v8796 = vld [vmem:[%s7692 + $0x178] sm:$0xff]
    %v8797 = vld [vmem:[%s7692 + $0x180] sm:$0xff]
    %v8798 = vld [vmem:[%s7692 + $0x188] sm:$0xff]
    %v8799 = vld [vmem:[%s7692 + $0x1a0] sm:$0xff]
    %v8800 = vld [vmem:[%s7692 + $0x1a8] sm:$0xff]
    %v8801 = vld [vmem:[%s7692 + $0x1b0] sm:$0xff]
    %v8802 = vld [vmem:[%s7692 + $0x1b8] sm:$0xff]
    %v8803 = vld [vmem:[%s7692 + $0x1c0] sm:$0xff]
    %v8804 = vld [vmem:[%s7692 + $0x1c8] sm:$0xff]
    %v8805 = vld [vmem:[%s7692 + $0x1d0] sm:$0xff]
    %v8806 = vld [vmem:[%s7692 + $0x1d8] sm:$0xff]
    %v8807 = vld [vmem:[%s7692 + $0x1f0] sm:$0xff]
    %v8808 = vld [vmem:[%s7692 + $0x1f8] sm:$0xff]
    %v8809 = vld [vmem:[%s7692 + $0x200] sm:$0xff]
    %v8810 = vld [vmem:[%s7692 + $0x208] sm:$0xff]
    %v8811 = vld [vmem:[%s7692 + $0x210] sm:$0xff]
    %v8812 = vld [vmem:[%s7692 + $0x218] sm:$0xff]
    %v8813 = vld [vmem:[%s7692 + $0x220] sm:$0xff]
    %v8814 = vld [vmem:[%s7692 + $0x228] sm:$0xff]
    %v8815 = vld [vmem:[%s7692 + $0x240] sm:$0xff]
    %v8816 = vld [vmem:[%s7692 + $0x248] sm:$0xff]
    %v8817 = vld [vmem:[%s7692 + $0x250] sm:$0xff]
    %v8818 = vld [vmem:[%s7692 + $0x258] sm:$0xff]
    %v8819 = vld [vmem:[%s7692 + $0x260] sm:$0xff]
    %v8820 = vld [vmem:[%s7692 + $0x268] sm:$0xff]
    %v8821 = vld [vmem:[%s7692 + $0x270] sm:$0xff]
    %v8822 = vld [vmem:[%s7692 + $0x278] sm:$0xff]
    %v8823 = vld [vmem:[%s2 + $0x100] sm:$0xff]
    %v8824 = vld [vmem:[%s2 + $0x108] sm:$0xff]
    %v8825 = vld [vmem:[%s2 + $0x110] sm:$0xff]
    %v8826 = vld [vmem:[%s2 + $0x118] sm:$0xff]
    %v8828 = vsel %vm27, %v8759, 0
    %v8831 = vsel %vm27, %v8760, 0
    %v8834 = vsel %vm27, %v8761, 0
    %v8837 = vsel %vm27, %v8762, 0
    %v8840 = vsel %vm27, %v8763, 0
    %v8843 = vsel %vm27, %v8764, 0
    %v8846 = vsel %vm27, %v8765, 0
    %v8849 = vsel %vm27, %v8766, 0
    %v8852 = vsel %vm27, %v8767, 0
    %v8855 = vsel %vm27, %v8768, 0
    %v8858 = vsel %vm27, %v8769, 0
    %v8861 = vsel %vm27, %v8770, 0
    %v8864 = vsel %vm27, %v8771, 0
    %v8867 = vsel %vm27, %v8772, 0
    %v8870 = vsel %vm27, %v8773, 0
    %v8873 = vsel %vm27, %v8774, 0
    %v8876 = vsel %vm27, %v8775, 0
    %v8879 = vsel %vm27, %v8776, 0
    %v8882 = vsel %vm27, %v8777, 0
    %v8885 = vsel %vm27, %v8778, 0
    %v8888 = vsel %vm27, %v8779, 0
    %v8891 = vsel %vm27, %v8780, 0
    %v8894 = vsel %vm27, %v8781, 0
    %v8897 = vsel %vm27, %v8782, 0
    %v8900 = vsel %vm27, %v8783, 0
    %v8903 = vsel %vm27, %v8784, 0
    %v8906 = vsel %vm27, %v8785, 0
    %v8909 = vsel %vm27, %v8786, 0
    %v8912 = vsel %vm27, %v8787, 0
    %v8915 = vsel %vm27, %v8788, 0
    %v8918 = vsel %vm27, %v8789, 0
    %v8921 = vsel %vm27, %v8790, 0
    %v8924 = vsel %vm27, %v8791, 0
    %v8927 = vsel %vm27, %v8792, 0
    %v8930 = vsel %vm27, %v8793, 0
    %v8933 = vsel %vm27, %v8794, 0
    %v8936 = vsel %vm27, %v8795, 0
    %v8939 = vsel %vm27, %v8796, 0
    %v8942 = vsel %vm27, %v8797, 0
    %v8945 = vsel %vm27, %v8798, 0
    %v8948 = vsel %vm27, %v8799, 0
    %v8951 = vsel %vm27, %v8800, 0
    %v8954 = vsel %vm27, %v8801, 0
    %v8957 = vsel %vm27, %v8802, 0
    %v8960 = vsel %vm27, %v8803, 0
    %v8963 = vsel %vm27, %v8804, 0
    %v8966 = vsel %vm27, %v8805, 0
    %v8969 = vsel %vm27, %v8806, 0
    %v8972 = vsel %vm27, %v8807, 0
    %v8975 = vsel %vm27, %v8808, 0
    %v8978 = vsel %vm27, %v8809, 0
    %v8981 = vsel %vm27, %v8810, 0
    %v8984 = vsel %vm27, %v8811, 0
    %v8987 = vsel %vm27, %v8812, 0
    %v8990 = vsel %vm27, %v8813, 0
    %v8993 = vsel %vm27, %v8814, 0
    %v8996 = vsel %vm27, %v8815, 0
    %v8999 = vsel %vm27, %v8816, 0
    %v9002 = vsel %vm27, %v8817, 0
    %v9005 = vsel %vm27, %v8818, 0
    %v9008 = vsel %vm27, %v8819, 0
    %v9011 = vsel %vm27, %v8820, 0
    %v9014 = vsel %vm27, %v8821, 0
    %v9017 = vsel %vm27, %v8822, 0
    %9019 = vmatpush.msra.mxu0 0.0
    %9020 = vmatpush.msra.mxu0 0.0
    %9021 = vmatpush.msra.mxu0 0.0
    %9022 = vmatpush.msra.mxu0 0.0
    %9023 = vmatpush.msra.mxu0 0.0
    %9024 = vmatpush.msra.mxu0 0.0
    %9025 = vmatpush.msra.mxu0 0.0
    %9026 = vmatpush.msra.mxu0 0.0
    %9027 = vmatpush.msra.mxu0 0.0
    %9028 = vmatpush.msra.mxu0 0.0
    %9029 = vmatpush.msra.mxu0 0.0
    %9030 = vmatpush.msra.mxu0 0.0
    %9031 = vmatpush.msra.mxu0 %v8826
    %9032 = vmatpush.msra.mxu0 %v8825
    %9033 = vmatpush.msra.mxu0 %v8824
    %9034 = vmatpush.msra.mxu0 %v8823
    %9035 = vmatmul.f32.gmra.mxu0 %v8828
    %v9036 = vpop.f32.mrf.mxu0
    %v9037 = vadd.f32 0.0, %v9036
    %9038 = vmatmul.f32.gmra.mxu0 %v8831
    %v9039 = vpop.f32.mrf.mxu0
    %v9040 = vadd.f32 0.0, %v9039
    %9041 = vmatmul.f32.gmra.mxu0 %v8834
    %v9042 = vpop.f32.mrf.mxu0
    %v9043 = vadd.f32 0.0, %v9042
    %9044 = vmatmul.f32.gmra.mxu0 %v8837
    %v9045 = vpop.f32.mrf.mxu0
    %v9046 = vadd.f32 0.0, %v9045
    %9047 = vmatmul.f32.gmra.mxu0 %v8840
    %v9048 = vpop.f32.mrf.mxu0
    %v9049 = vadd.f32 0.0, %v9048
    %9050 = vmatmul.f32.gmra.mxu0 %v8843
    %v9051 = vpop.f32.mrf.mxu0
    %v9052 = vadd.f32 0.0, %v9051
    %9053 = vmatmul.f32.gmra.mxu0 %v8846
    %v9054 = vpop.f32.mrf.mxu0
    %v9055 = vadd.f32 0.0, %v9054
    %9056 = vmatmul.f32.gmra.mxu0 %v8849
    %v9057 = vpop.f32.mrf.mxu0
    %v9058 = vadd.f32 0.0, %v9057
    %9059 = vmatmul.f32.gmra.mxu0 %v8852
    %v9060 = vpop.f32.mrf.mxu0
    %v9061 = vadd.f32 0.0, %v9060
    %9062 = vmatmul.f32.gmra.mxu0 %v8855
    %v9063 = vpop.f32.mrf.mxu0
    %v9064 = vadd.f32 0.0, %v9063
    %9065 = vmatmul.f32.gmra.mxu0 %v8858
    %v9066 = vpop.f32.mrf.mxu0
    %v9067 = vadd.f32 0.0, %v9066
    %9068 = vmatmul.f32.gmra.mxu0 %v8861
    %v9069 = vpop.f32.mrf.mxu0
    %v9070 = vadd.f32 0.0, %v9069
    %9071 = vmatmul.f32.gmra.mxu0 %v8864
    %v9072 = vpop.f32.mrf.mxu0
    %v9073 = vadd.f32 0.0, %v9072
    %9074 = vmatmul.f32.gmra.mxu0 %v8867
    %v9075 = vpop.f32.mrf.mxu0
    %v9076 = vadd.f32 0.0, %v9075
    %9077 = vmatmul.f32.gmra.mxu0 %v8870
    %v9078 = vpop.f32.mrf.mxu0
    %v9079 = vadd.f32 0.0, %v9078
    %9080 = vmatmul.f32.gmra.mxu0 %v8873
    %v9081 = vpop.f32.mrf.mxu0
    %v9082 = vadd.f32 0.0, %v9081
    %9083 = vmatmul.f32.gmra.mxu0 %v8876
    %v9084 = vpop.f32.mrf.mxu0
    %v9085 = vadd.f32 0.0, %v9084
    %9086 = vmatmul.f32.gmra.mxu0 %v8879
    %v9087 = vpop.f32.mrf.mxu0
    %v9088 = vadd.f32 0.0, %v9087
    %9089 = vmatmul.f32.gmra.mxu0 %v8882
    %v9090 = vpop.f32.mrf.mxu0
    %v9091 = vadd.f32 0.0, %v9090
    %9092 = vmatmul.f32.gmra.mxu0 %v8885
    %v9093 = vpop.f32.mrf.mxu0
    %v9094 = vadd.f32 0.0, %v9093
    %9095 = vmatmul.f32.gmra.mxu0 %v8888
    %v9096 = vpop.f32.mrf.mxu0
    %v9097 = vadd.f32 0.0, %v9096
    %9098 = vmatmul.f32.gmra.mxu0 %v8891
    %v9099 = vpop.f32.mrf.mxu0
    %v9100 = vadd.f32 0.0, %v9099
    %9101 = vmatmul.f32.gmra.mxu0 %v8894
    %v9102 = vpop.f32.mrf.mxu0
    %v9103 = vadd.f32 0.0, %v9102
    %9104 = vmatmul.f32.gmra.mxu0 %v8897
    %v9105 = vpop.f32.mrf.mxu0
    %v9106 = vadd.f32 0.0, %v9105
    %9107 = vmatmul.f32.gmra.mxu0 %v8900
    %v9108 = vpop.f32.mrf.mxu0
    %v9109 = vadd.f32 0.0, %v9108
    %9110 = vmatmul.f32.gmra.mxu0 %v8903
    %v9111 = vpop.f32.mrf.mxu0
    %v9112 = vadd.f32 0.0, %v9111
    %9113 = vmatmul.f32.gmra.mxu0 %v8906
    %v9114 = vpop.f32.mrf.mxu0
    %v9115 = vadd.f32 0.0, %v9114
    %9116 = vmatmul.f32.gmra.mxu0 %v8909
    %v9117 = vpop.f32.mrf.mxu0
    %v9118 = vadd.f32 0.0, %v9117
    %9119 = vmatmul.f32.gmra.mxu0 %v8912
    %v9120 = vpop.f32.mrf.mxu0
    %v9121 = vadd.f32 0.0, %v9120
    %9122 = vmatmul.f32.gmra.mxu0 %v8915
    %v9123 = vpop.f32.mrf.mxu0
    %v9124 = vadd.f32 0.0, %v9123
    %9125 = vmatmul.f32.gmra.mxu0 %v8918
    %v9126 = vpop.f32.mrf.mxu0
    %v9127 = vadd.f32 0.0, %v9126
    %9128 = vmatmul.f32.gmra.mxu0 %v8921
    %v9129 = vpop.f32.mrf.mxu0
    %v9130 = vadd.f32 0.0, %v9129
    %9131 = vmatmul.f32.gmra.mxu0 %v8924
    %v9132 = vpop.f32.mrf.mxu0
    %v9133 = vadd.f32 0.0, %v9132
    %9134 = vmatmul.f32.gmra.mxu0 %v8927
    %v9135 = vpop.f32.mrf.mxu0
    %v9136 = vadd.f32 0.0, %v9135
    %9137 = vmatmul.f32.gmra.mxu0 %v8930
    %v9138 = vpop.f32.mrf.mxu0
    %v9139 = vadd.f32 0.0, %v9138
    %9140 = vmatmul.f32.gmra.mxu0 %v8933
    %v9141 = vpop.f32.mrf.mxu0
    %v9142 = vadd.f32 0.0, %v9141
    %9143 = vmatmul.f32.gmra.mxu0 %v8936
    %v9144 = vpop.f32.mrf.mxu0
    %v9145 = vadd.f32 0.0, %v9144
    %9146 = vmatmul.f32.gmra.mxu0 %v8939
    %v9147 = vpop.f32.mrf.mxu0
    %v9148 = vadd.f32 0.0, %v9147
    %9149 = vmatmul.f32.gmra.mxu0 %v8942
    %v9150 = vpop.f32.mrf.mxu0
    %v9151 = vadd.f32 0.0, %v9150
    %9152 = vmatmul.f32.gmra.mxu0 %v8945
    %v9153 = vpop.f32.mrf.mxu0
    %v9154 = vadd.f32 0.0, %v9153
    %9155 = vmatmul.f32.gmra.mxu0 %v8948
    %v9156 = vpop.f32.mrf.mxu0
    %v9157 = vadd.f32 0.0, %v9156
    %9158 = vmatmul.f32.gmra.mxu0 %v8951
    %v9159 = vpop.f32.mrf.mxu0
    %v9160 = vadd.f32 0.0, %v9159
    %9161 = vmatmul.f32.gmra.mxu0 %v8954
    %v9162 = vpop.f32.mrf.mxu0
    %v9163 = vadd.f32 0.0, %v9162
    %9164 = vmatmul.f32.gmra.mxu0 %v8957
    %v9165 = vpop.f32.mrf.mxu0
    %v9166 = vadd.f32 0.0, %v9165
    %9167 = vmatmul.f32.gmra.mxu0 %v8960
    %v9168 = vpop.f32.mrf.mxu0
    %v9169 = vadd.f32 0.0, %v9168
    %9170 = vmatmul.f32.gmra.mxu0 %v8963
    %v9171 = vpop.f32.mrf.mxu0
    %v9172 = vadd.f32 0.0, %v9171
    %9173 = vmatmul.f32.gmra.mxu0 %v8966
    %v9174 = vpop.f32.mrf.mxu0
    %v9175 = vadd.f32 0.0, %v9174
    %9176 = vmatmul.f32.gmra.mxu0 %v8969
    %v9177 = vpop.f32.mrf.mxu0
    %v9178 = vadd.f32 0.0, %v9177
    %9179 = vmatmul.f32.gmra.mxu0 %v8972
    %v9180 = vpop.f32.mrf.mxu0
    %v9181 = vadd.f32 0.0, %v9180
    %9182 = vmatmul.f32.gmra.mxu0 %v8975
    %v9183 = vpop.f32.mrf.mxu0
    %v9184 = vadd.f32 0.0, %v9183
    %9185 = vmatmul.f32.gmra.mxu0 %v8978
    %v9186 = vpop.f32.mrf.mxu0
    %v9187 = vadd.f32 0.0, %v9186
    %9188 = vmatmul.f32.gmra.mxu0 %v8981
    %v9189 = vpop.f32.mrf.mxu0
    %v9190 = vadd.f32 0.0, %v9189
    %9191 = vmatmul.f32.gmra.mxu0 %v8984
    %v9192 = vpop.f32.mrf.mxu0
    %v9193 = vadd.f32 0.0, %v9192
    %9194 = vmatmul.f32.gmra.mxu0 %v8987
    %v9195 = vpop.f32.mrf.mxu0
    %v9196 = vadd.f32 0.0, %v9195
    %9197 = vmatmul.f32.gmra.mxu0 %v8990
    %v9198 = vpop.f32.mrf.mxu0
    %v9199 = vadd.f32 0.0, %v9198
    %9200 = vmatmul.f32.gmra.mxu0 %v8993
    %v9201 = vpop.f32.mrf.mxu0
    %v9202 = vadd.f32 0.0, %v9201
    %9203 = vmatmul.f32.gmra.mxu0 %v8996
    %v9204 = vpop.f32.mrf.mxu0
    %v9205 = vadd.f32 0.0, %v9204
    %9206 = vmatmul.f32.gmra.mxu0 %v8999
    %v9207 = vpop.f32.mrf.mxu0
    %v9208 = vadd.f32 0.0, %v9207
    %9209 = vmatmul.f32.gmra.mxu0 %v9002
    %v9210 = vpop.f32.mrf.mxu0
    %v9211 = vadd.f32 0.0, %v9210
    %9212 = vmatmul.f32.gmra.mxu0 %v9005
    %v9213 = vpop.f32.mrf.mxu0
    %v9214 = vadd.f32 0.0, %v9213
    %9215 = vmatmul.f32.gmra.mxu0 %v9008
    %v9216 = vpop.f32.mrf.mxu0
    %v9217 = vadd.f32 0.0, %v9216
    %9218 = vmatmul.f32.gmra.mxu0 %v9011
    %v9219 = vpop.f32.mrf.mxu0
    %v9220 = vadd.f32 0.0, %v9219
    %9221 = vmatmul.f32.gmra.mxu0 %v9014
    %v9222 = vpop.f32.mrf.mxu0
    %v9223 = vadd.f32 0.0, %v9222
    %9224 = vmatmul.f32.gmra.mxu0 %v9017
    %v9225 = vpop.f32.mrf.mxu0
    %v9226 = vadd.f32 0.0, %v9225
    %9227 = vdwg.mxu0
    %v9228 = vadd.f32 %v8695, %v9037
    %v9229 = vadd.f32 %v8696, %v9040
    %v9230 = vadd.f32 %v8697, %v9043
    %v9231 = vadd.f32 %v8698, %v9046
    %v9232 = vadd.f32 %v8699, %v9049
    %v9233 = vadd.f32 %v8700, %v9052
    %v9234 = vadd.f32 %v8701, %v9055
    %v9235 = vadd.f32 %v8702, %v9058
    %v9236 = vadd.f32 %v8703, %v9061
    %v9237 = vadd.f32 %v8704, %v9064
    %v9238 = vadd.f32 %v8705, %v9067
    %v9239 = vadd.f32 %v8706, %v9070
    %v9240 = vadd.f32 %v8707, %v9073
    %v9241 = vadd.f32 %v8708, %v9076
    %v9242 = vadd.f32 %v8709, %v9079
    %v9243 = vadd.f32 %v8710, %v9082
    %v9244 = vadd.f32 %v8711, %v9085
    %v9245 = vadd.f32 %v8712, %v9088
    %v9246 = vadd.f32 %v8713, %v9091
    %v9247 = vadd.f32 %v8714, %v9094
    %v9248 = vadd.f32 %v8715, %v9097
    %v9249 = vadd.f32 %v8716, %v9100
    %v9250 = vadd.f32 %v8717, %v9103
    %v9251 = vadd.f32 %v8718, %v9106
    %v9252 = vadd.f32 %v8719, %v9109
    %v9253 = vadd.f32 %v8720, %v9112
    %v9254 = vadd.f32 %v8721, %v9115
    %v9255 = vadd.f32 %v8722, %v9118
    %v9256 = vadd.f32 %v8723, %v9121
    %v9257 = vadd.f32 %v8724, %v9124
    %v9258 = vadd.f32 %v8725, %v9127
    %v9259 = vadd.f32 %v8726, %v9130
    %v9260 = vadd.f32 %v8727, %v9133
    %v9261 = vadd.f32 %v8728, %v9136
    %v9262 = vadd.f32 %v8729, %v9139
    %v9263 = vadd.f32 %v8730, %v9142
    %v9264 = vadd.f32 %v8731, %v9145
    %v9265 = vadd.f32 %v8732, %v9148
    %v9266 = vadd.f32 %v8733, %v9151
    %v9267 = vadd.f32 %v8734, %v9154
    %v9268 = vadd.f32 %v8735, %v9157
    %v9269 = vadd.f32 %v8736, %v9160
    %v9270 = vadd.f32 %v8737, %v9163
    %v9271 = vadd.f32 %v8738, %v9166
    %v9272 = vadd.f32 %v8739, %v9169
    %v9273 = vadd.f32 %v8740, %v9172
    %v9274 = vadd.f32 %v8741, %v9175
    %v9275 = vadd.f32 %v8742, %v9178
    %v9276 = vadd.f32 %v8743, %v9181
    %v9277 = vadd.f32 %v8744, %v9184
    %v9278 = vadd.f32 %v8745, %v9187
    %v9279 = vadd.f32 %v8746, %v9190
    %v9280 = vadd.f32 %v8747, %v9193
    %v9281 = vadd.f32 %v8748, %v9196
    %v9282 = vadd.f32 %v8749, %v9199
    %v9283 = vadd.f32 %v8750, %v9202
    %v9284 = vadd.f32 %v8751, %v9205
    %v9285 = vadd.f32 %v8752, %v9208
    %v9286 = vadd.f32 %v8753, %v9211
    %v9287 = vadd.f32 %v8754, %v9214
    %v9288 = vadd.f32 %v8755, %v9217
    %v9289 = vadd.f32 %v8756, %v9220
    %v9290 = vadd.f32 %v8757, %v9223
    %v9291 = vadd.f32 %v8758, %v9226
    %v9292 = vld [vmem:[%s3 + $0x4] sm:$0x1]
    %v9293 = vld [vmem:[%s3 + $0x5] sm:$0x1]
    %v9294 = vld [vmem:[%s3 + $0x6] sm:$0x1]
    %v9295 = vperm.slane %v9292, 0
    %v9296 = vadd.f32 %v9228, %v9295
    %v9297 = vadd.f32 %v9229, %v9295
    %v9298 = vadd.f32 %v9230, %v9295
    %v9299 = vadd.f32 %v9231, %v9295
    %v9300 = vadd.f32 %v9232, %v9295
    %v9301 = vadd.f32 %v9233, %v9295
    %v9302 = vadd.f32 %v9234, %v9295
    %v9303 = vadd.f32 %v9235, %v9295
    %v9304 = vadd.f32 %v9236, %v9295
    %v9305 = vadd.f32 %v9237, %v9295
    %v9306 = vadd.f32 %v9238, %v9295
    %v9307 = vadd.f32 %v9239, %v9295
    %v9308 = vadd.f32 %v9240, %v9295
    %v9309 = vadd.f32 %v9241, %v9295
    %v9310 = vadd.f32 %v9242, %v9295
    %v9311 = vadd.f32 %v9243, %v9295
    %v9312 = vadd.f32 %v9244, %v9295
    %v9313 = vadd.f32 %v9245, %v9295
    %v9314 = vadd.f32 %v9246, %v9295
    %v9315 = vadd.f32 %v9247, %v9295
    %v9316 = vadd.f32 %v9248, %v9295
    %v9317 = vadd.f32 %v9249, %v9295
    %v9318 = vadd.f32 %v9250, %v9295
    %v9319 = vadd.f32 %v9251, %v9295
    %v9320 = vadd.f32 %v9252, %v9295
    %v9321 = vadd.f32 %v9253, %v9295
    %v9322 = vadd.f32 %v9254, %v9295
    %v9323 = vadd.f32 %v9255, %v9295
    %v9324 = vadd.f32 %v9256, %v9295
    %v9325 = vadd.f32 %v9257, %v9295
    %v9326 = vadd.f32 %v9258, %v9295
    %v9327 = vadd.f32 %v9259, %v9295
    %v9328 = vadd.f32 %v9260, %v9295
    %v9329 = vadd.f32 %v9261, %v9295
    %v9330 = vadd.f32 %v9262, %v9295
    %v9331 = vadd.f32 %v9263, %v9295
    %v9332 = vadd.f32 %v9264, %v9295
    %v9333 = vadd.f32 %v9265, %v9295
    %v9334 = vadd.f32 %v9266, %v9295
    %v9335 = vadd.f32 %v9267, %v9295
    %v9336 = vadd.f32 %v9268, %v9295
    %v9337 = vadd.f32 %v9269, %v9295
    %v9338 = vadd.f32 %v9270, %v9295
    %v9339 = vadd.f32 %v9271, %v9295
    %v9340 = vadd.f32 %v9272, %v9295
    %v9341 = vadd.f32 %v9273, %v9295
    %v9342 = vadd.f32 %v9274, %v9295
    %v9343 = vadd.f32 %v9275, %v9295
    %v9344 = vadd.f32 %v9276, %v9295
    %v9345 = vadd.f32 %v9277, %v9295
    %v9346 = vadd.f32 %v9278, %v9295
    %v9347 = vadd.f32 %v9279, %v9295
    %v9348 = vadd.f32 %v9280, %v9295
    %v9349 = vadd.f32 %v9281, %v9295
    %v9350 = vadd.f32 %v9282, %v9295
    %v9351 = vadd.f32 %v9283, %v9295
    %v9352 = vadd.f32 %v9284, %v9295
    %v9353 = vadd.f32 %v9285, %v9295
    %v9354 = vadd.f32 %v9286, %v9295
    %v9355 = vadd.f32 %v9287, %v9295
    %v9356 = vadd.f32 %v9288, %v9295
    %v9357 = vadd.f32 %v9289, %v9295
    %v9358 = vadd.f32 %v9290, %v9295
    %v9359 = vadd.f32 %v9291, %v9295
    %v9360 = vsel %vm27, %v9296, 0.0
    %v9361 = vsel %vm27, %v9297, 0.0
    %v9362 = vadd.f32 %v9360, %v9361
    %v9363 = vsel %vm27, %v9298, 0.0
    %v9364 = vadd.f32 %v9362, %v9363
    %v9365 = vsel %vm27, %v9299, 0.0
    %v9366 = vadd.f32 %v9364, %v9365
    %v9367 = vsel %vm27, %v9300, 0.0
    %v9368 = vadd.f32 %v9366, %v9367
    %v9369 = vsel %vm27, %v9301, 0.0
    %v9370 = vadd.f32 %v9368, %v9369
    %v9371 = vsel %vm27, %v9302, 0.0
    %v9372 = vadd.f32 %v9370, %v9371
    %v9373 = vsel %vm27, %v9303, 0.0
    %v9374 = vadd.f32 %v9372, %v9373
    %v9375 = vsel %vm27, %v9304, 0.0
    %v9376 = vadd.f32 %v9374, %v9375
    %v9377 = vsel %vm27, %v9305, 0.0
    %v9378 = vadd.f32 %v9376, %v9377
    %v9379 = vsel %vm27, %v9306, 0.0
    %v9380 = vadd.f32 %v9378, %v9379
    %v9381 = vsel %vm27, %v9307, 0.0
    %v9382 = vadd.f32 %v9380, %v9381
    %v9383 = vsel %vm27, %v9308, 0.0
    %v9384 = vadd.f32 %v9382, %v9383
    %v9385 = vsel %vm27, %v9309, 0.0
    %v9386 = vadd.f32 %v9384, %v9385
    %v9387 = vsel %vm27, %v9310, 0.0
    %v9388 = vadd.f32 %v9386, %v9387
    %v9389 = vsel %vm27, %v9311, 0.0
    %v9390 = vadd.f32 %v9388, %v9389
    %v9391 = vsel %vm27, %v9312, 0.0
    %v9392 = vadd.f32 %v9390, %v9391
    %v9393 = vsel %vm27, %v9313, 0.0
    %v9394 = vadd.f32 %v9392, %v9393
    %v9395 = vsel %vm27, %v9314, 0.0
    %v9396 = vadd.f32 %v9394, %v9395
    %v9397 = vsel %vm27, %v9315, 0.0
    %v9398 = vadd.f32 %v9396, %v9397
    %v9399 = vsel %vm27, %v9316, 0.0
    %v9400 = vadd.f32 %v9398, %v9399
    %v9401 = vsel %vm27, %v9317, 0.0
    %v9402 = vadd.f32 %v9400, %v9401
    %v9403 = vsel %vm27, %v9318, 0.0
    %v9404 = vadd.f32 %v9402, %v9403
    %v9405 = vsel %vm27, %v9319, 0.0
    %v9406 = vadd.f32 %v9404, %v9405
    %v9407 = vsel %vm27, %v9320, 0.0
    %v9408 = vadd.f32 %v9406, %v9407
    %v9409 = vsel %vm27, %v9321, 0.0
    %v9410 = vadd.f32 %v9408, %v9409
    %v9411 = vsel %vm27, %v9322, 0.0
    %v9412 = vadd.f32 %v9410, %v9411
    %v9413 = vsel %vm27, %v9323, 0.0
    %v9414 = vadd.f32 %v9412, %v9413
    %v9415 = vsel %vm27, %v9324, 0.0
    %v9416 = vadd.f32 %v9414, %v9415
    %v9417 = vsel %vm27, %v9325, 0.0
    %v9418 = vadd.f32 %v9416, %v9417
    %v9419 = vsel %vm27, %v9326, 0.0
    %v9420 = vadd.f32 %v9418, %v9419
    %v9421 = vsel %vm27, %v9327, 0.0
    %v9422 = vadd.f32 %v9420, %v9421
    %v9423 = vsel %vm27, %v9328, 0.0
    %v9424 = vadd.f32 %v9422, %v9423
    %v9425 = vsel %vm27, %v9329, 0.0
    %v9426 = vadd.f32 %v9424, %v9425
    %v9427 = vsel %vm27, %v9330, 0.0
    %v9428 = vadd.f32 %v9426, %v9427
    %v9429 = vsel %vm27, %v9331, 0.0
    %v9430 = vadd.f32 %v9428, %v9429
    %v9431 = vsel %vm27, %v9332, 0.0
    %v9432 = vadd.f32 %v9430, %v9431
    %v9433 = vsel %vm27, %v9333, 0.0
    %v9434 = vadd.f32 %v9432, %v9433
    %v9435 = vsel %vm27, %v9334, 0.0
    %v9436 = vadd.f32 %v9434, %v9435
    %v9437 = vsel %vm27, %v9335, 0.0
    %v9438 = vadd.f32 %v9436, %v9437
    %v9439 = vsel %vm27, %v9336, 0.0
    %v9440 = vadd.f32 %v9438, %v9439
    %v9441 = vsel %vm27, %v9337, 0.0
    %v9442 = vadd.f32 %v9440, %v9441
    %v9443 = vsel %vm27, %v9338, 0.0
    %v9444 = vadd.f32 %v9442, %v9443
    %v9445 = vsel %vm27, %v9339, 0.0
    %v9446 = vadd.f32 %v9444, %v9445
    %v9447 = vsel %vm27, %v9340, 0.0
    %v9448 = vadd.f32 %v9446, %v9447
    %v9449 = vsel %vm27, %v9341, 0.0
    %v9450 = vadd.f32 %v9448, %v9449
    %v9451 = vsel %vm27, %v9342, 0.0
    %v9452 = vadd.f32 %v9450, %v9451
    %v9453 = vsel %vm27, %v9343, 0.0
    %v9454 = vadd.f32 %v9452, %v9453
    %v9455 = vsel %vm27, %v9344, 0.0
    %v9456 = vadd.f32 %v9454, %v9455
    %v9457 = vsel %vm27, %v9345, 0.0
    %v9458 = vadd.f32 %v9456, %v9457
    %v9459 = vsel %vm27, %v9346, 0.0
    %v9460 = vadd.f32 %v9458, %v9459
    %v9461 = vsel %vm27, %v9347, 0.0
    %v9462 = vadd.f32 %v9460, %v9461
    %v9463 = vsel %vm27, %v9348, 0.0
    %v9464 = vadd.f32 %v9462, %v9463
    %v9465 = vsel %vm27, %v9349, 0.0
    %v9466 = vadd.f32 %v9464, %v9465
    %v9467 = vsel %vm27, %v9350, 0.0
    %v9468 = vadd.f32 %v9466, %v9467
    %v9469 = vsel %vm27, %v9351, 0.0
    %v9470 = vadd.f32 %v9468, %v9469
    %v9471 = vsel %vm27, %v9352, 0.0
    %v9472 = vadd.f32 %v9470, %v9471
    %v9473 = vsel %vm27, %v9353, 0.0
    %v9474 = vadd.f32 %v9472, %v9473
    %v9475 = vsel %vm27, %v9354, 0.0
    %v9476 = vadd.f32 %v9474, %v9475
    %v9477 = vsel %vm27, %v9355, 0.0
    %v9478 = vadd.f32 %v9476, %v9477
    %v9479 = vsel %vm27, %v9356, 0.0
    %v9480 = vadd.f32 %v9478, %v9479
    %v9481 = vsel %vm27, %v9357, 0.0
    %v9482 = vadd.f32 %v9480, %v9481
    %v9483 = vsel %vm27, %v9358, 0.0
    %v9484 = vadd.f32 %v9482, %v9483
    %v9485 = vsel %vm27, %v9359, 0.0
    %v9486 = vadd.f32 %v9484, %v9485
    %v9487 = vrot.slane %v9486, 4
    %v9488 = vadd.f32 %v9486, %v9487
    %v9489 = vrot.slane %v9488, 2
    %v9490 = vadd.f32 %v9488, %v9489
    %v9491 = vrot.slane %v9490, 1
    %v9492 = vadd.f32 %v9490, %v9491
    %v9493 = vmul.f32 %v9296, %v9296
    %v9494 = vmul.f32 %v9297, %v9297
    %v9495 = vmul.f32 %v9298, %v9298
    %v9496 = vmul.f32 %v9299, %v9299
    %v9497 = vmul.f32 %v9300, %v9300
    %v9498 = vmul.f32 %v9301, %v9301
    %v9499 = vmul.f32 %v9302, %v9302
    %v9500 = vmul.f32 %v9303, %v9303
    %v9501 = vmul.f32 %v9304, %v9304
    %v9502 = vmul.f32 %v9305, %v9305
    %v9503 = vmul.f32 %v9306, %v9306
    %v9504 = vmul.f32 %v9307, %v9307
    %v9505 = vmul.f32 %v9308, %v9308
    %v9506 = vmul.f32 %v9309, %v9309
    %v9507 = vmul.f32 %v9310, %v9310
    %v9508 = vmul.f32 %v9311, %v9311
    %v9509 = vmul.f32 %v9312, %v9312
    %v9510 = vmul.f32 %v9313, %v9313
    %v9511 = vmul.f32 %v9314, %v9314
    %v9512 = vmul.f32 %v9315, %v9315
    %v9513 = vmul.f32 %v9316, %v9316
    %v9514 = vmul.f32 %v9317, %v9317
    %v9515 = vmul.f32 %v9318, %v9318
    %v9516 = vmul.f32 %v9319, %v9319
    %v9517 = vmul.f32 %v9320, %v9320
    %v9518 = vmul.f32 %v9321, %v9321
    %v9519 = vmul.f32 %v9322, %v9322
    %v9520 = vmul.f32 %v9323, %v9323
    %v9521 = vmul.f32 %v9324, %v9324
    %v9522 = vmul.f32 %v9325, %v9325
    %v9523 = vmul.f32 %v9326, %v9326
    %v9524 = vmul.f32 %v9327, %v9327
    %v9525 = vmul.f32 %v9328, %v9328
    %v9526 = vmul.f32 %v9329, %v9329
    %v9527 = vmul.f32 %v9330, %v9330
    %v9528 = vmul.f32 %v9331, %v9331
    %v9529 = vmul.f32 %v9332, %v9332
    %v9530 = vmul.f32 %v9333, %v9333
    %v9531 = vmul.f32 %v9334, %v9334
    %v9532 = vmul.f32 %v9335, %v9335
    %v9533 = vmul.f32 %v9336, %v9336
    %v9534 = vmul.f32 %v9337, %v9337
    %v9535 = vmul.f32 %v9338, %v9338
    %v9536 = vmul.f32 %v9339, %v9339
    %v9537 = vmul.f32 %v9340, %v9340
    %v9538 = vmul.f32 %v9341, %v9341
    %v9539 = vmul.f32 %v9342, %v9342
    %v9540 = vmul.f32 %v9343, %v9343
    %v9541 = vmul.f32 %v9344, %v9344
    %v9542 = vmul.f32 %v9345, %v9345
    %v9543 = vmul.f32 %v9346, %v9346
    %v9544 = vmul.f32 %v9347, %v9347
    %v9545 = vmul.f32 %v9348, %v9348
    %v9546 = vmul.f32 %v9349, %v9349
    %v9547 = vmul.f32 %v9350, %v9350
    %v9548 = vmul.f32 %v9351, %v9351
    %v9549 = vmul.f32 %v9352, %v9352
    %v9550 = vmul.f32 %v9353, %v9353
    %v9551 = vmul.f32 %v9354, %v9354
    %v9552 = vmul.f32 %v9355, %v9355
    %v9553 = vmul.f32 %v9356, %v9356
    %v9554 = vmul.f32 %v9357, %v9357
    %v9555 = vmul.f32 %v9358, %v9358
    %v9556 = vmul.f32 %v9359, %v9359
    %v9557 = vsel %vm27, %v9493, 0.0
    %v9558 = vsel %vm27, %v9494, 0.0
    %v9559 = vadd.f32 %v9557, %v9558
    %v9560 = vsel %vm27, %v9495, 0.0
    %v9561 = vadd.f32 %v9559, %v9560
    %v9562 = vsel %vm27, %v9496, 0.0
    %v9563 = vadd.f32 %v9561, %v9562
    %v9564 = vsel %vm27, %v9497, 0.0
    %v9565 = vadd.f32 %v9563, %v9564
    %v9566 = vsel %vm27, %v9498, 0.0
    %v9567 = vadd.f32 %v9565, %v9566
    %v9568 = vsel %vm27, %v9499, 0.0
    %v9569 = vadd.f32 %v9567, %v9568
    %v9570 = vsel %vm27, %v9500, 0.0
    %v9571 = vadd.f32 %v9569, %v9570
    %v9572 = vsel %vm27, %v9501, 0.0
    %v9573 = vadd.f32 %v9571, %v9572
    %v9574 = vsel %vm27, %v9502, 0.0
    %v9575 = vadd.f32 %v9573, %v9574
    %v9576 = vsel %vm27, %v9503, 0.0
    %v9577 = vadd.f32 %v9575, %v9576
    %v9578 = vsel %vm27, %v9504, 0.0
    %v9579 = vadd.f32 %v9577, %v9578
    %v9580 = vsel %vm27, %v9505, 0.0
    %v9581 = vadd.f32 %v9579, %v9580
    %v9582 = vsel %vm27, %v9506, 0.0
    %v9583 = vadd.f32 %v9581, %v9582
    %v9584 = vsel %vm27, %v9507, 0.0
    %v9585 = vadd.f32 %v9583, %v9584
    %v9586 = vsel %vm27, %v9508, 0.0
    %v9587 = vadd.f32 %v9585, %v9586
    %v9588 = vsel %vm27, %v9509, 0.0
    %v9589 = vadd.f32 %v9587, %v9588
    %v9590 = vsel %vm27, %v9510, 0.0
    %v9591 = vadd.f32 %v9589, %v9590
    %v9592 = vsel %vm27, %v9511, 0.0
    %v9593 = vadd.f32 %v9591, %v9592
    %v9594 = vsel %vm27, %v9512, 0.0
    %v9595 = vadd.f32 %v9593, %v9594
    %v9596 = vsel %vm27, %v9513, 0.0
    %v9597 = vadd.f32 %v9595, %v9596
    %v9598 = vsel %vm27, %v9514, 0.0
    %v9599 = vadd.f32 %v9597, %v9598
    %v9600 = vsel %vm27, %v9515, 0.0
    %v9601 = vadd.f32 %v9599, %v9600
    %v9602 = vsel %vm27, %v9516, 0.0
    %v9603 = vadd.f32 %v9601, %v9602
    %v9604 = vsel %vm27, %v9517, 0.0
    %v9605 = vadd.f32 %v9603, %v9604
    %v9606 = vsel %vm27, %v9518, 0.0
    %v9607 = vadd.f32 %v9605, %v9606
    %v9608 = vsel %vm27, %v9519, 0.0
    %v9609 = vadd.f32 %v9607, %v9608
    %v9610 = vsel %vm27, %v9520, 0.0
    %v9611 = vadd.f32 %v9609, %v9610
    %v9612 = vsel %vm27, %v9521, 0.0
    %v9613 = vadd.f32 %v9611, %v9612
    %v9614 = vsel %vm27, %v9522, 0.0
    %v9615 = vadd.f32 %v9613, %v9614
    %v9616 = vsel %vm27, %v9523, 0.0
    %v9617 = vadd.f32 %v9615, %v9616
    %v9618 = vsel %vm27, %v9524, 0.0
    %v9619 = vadd.f32 %v9617, %v9618
    %v9620 = vsel %vm27, %v9525, 0.0
    %v9621 = vadd.f32 %v9619, %v9620
    %v9622 = vsel %vm27, %v9526, 0.0
    %v9623 = vadd.f32 %v9621, %v9622
    %v9624 = vsel %vm27, %v9527, 0.0
    %v9625 = vadd.f32 %v9623, %v9624
    %v9626 = vsel %vm27, %v9528, 0.0
    %v9627 = vadd.f32 %v9625, %v9626
    %v9628 = vsel %vm27, %v9529, 0.0
    %v9629 = vadd.f32 %v9627, %v9628
    %v9630 = vsel %vm27, %v9530, 0.0
    %v9631 = vadd.f32 %v9629, %v9630
    %v9632 = vsel %vm27, %v9531, 0.0
    %v9633 = vadd.f32 %v9631, %v9632
    %v9634 = vsel %vm27, %v9532, 0.0
    %v9635 = vadd.f32 %v9633, %v9634
    %v9636 = vsel %vm27, %v9533, 0.0
    %v9637 = vadd.f32 %v9635, %v9636
    %v9638 = vsel %vm27, %v9534, 0.0
    %v9639 = vadd.f32 %v9637, %v9638
    %v9640 = vsel %vm27, %v9535, 0.0
    %v9641 = vadd.f32 %v9639, %v9640
    %v9642 = vsel %vm27, %v9536, 0.0
    %v9643 = vadd.f32 %v9641, %v9642
    %v9644 = vsel %vm27, %v9537, 0.0
    %v9645 = vadd.f32 %v9643, %v9644
    %v9646 = vsel %vm27, %v9538, 0.0
    %v9647 = vadd.f32 %v9645, %v9646
    %v9648 = vsel %vm27, %v9539, 0.0
    %v9649 = vadd.f32 %v9647, %v9648
    %v9650 = vsel %vm27, %v9540, 0.0
    %v9651 = vadd.f32 %v9649, %v9650
    %v9652 = vsel %vm27, %v9541, 0.0
    %v9653 = vadd.f32 %v9651, %v9652
    %v9654 = vsel %vm27, %v9542, 0.0
    %v9655 = vadd.f32 %v9653, %v9654
    %v9656 = vsel %vm27, %v9543, 0.0
    %v9657 = vadd.f32 %v9655, %v9656
    %v9658 = vsel %vm27, %v9544, 0.0
    %v9659 = vadd.f32 %v9657, %v9658
    %v9660 = vsel %vm27, %v9545, 0.0
    %v9661 = vadd.f32 %v9659, %v9660
    %v9662 = vsel %vm27, %v9546, 0.0
    %v9663 = vadd.f32 %v9661, %v9662
    %v9664 = vsel %vm27, %v9547, 0.0
    %v9665 = vadd.f32 %v9663, %v9664
    %v9666 = vsel %vm27, %v9548, 0.0
    %v9667 = vadd.f32 %v9665, %v9666
    %v9668 = vsel %vm27, %v9549, 0.0
    %v9669 = vadd.f32 %v9667, %v9668
    %v9670 = vsel %vm27, %v9550, 0.0
    %v9671 = vadd.f32 %v9669, %v9670
    %v9672 = vsel %vm27, %v9551, 0.0
    %v9673 = vadd.f32 %v9671, %v9672
    %v9674 = vsel %vm27, %v9552, 0.0
    %v9675 = vadd.f32 %v9673, %v9674
    %v9676 = vsel %vm27, %v9553, 0.0
    %v9677 = vadd.f32 %v9675, %v9676
    %v9678 = vsel %vm27, %v9554, 0.0
    %v9679 = vadd.f32 %v9677, %v9678
    %v9680 = vsel %vm27, %v9555, 0.0
    %v9681 = vadd.f32 %v9679, %v9680
    %v9682 = vsel %vm27, %v9556, 0.0
    %v9683 = vadd.f32 %v9681, %v9682
    %v9684 = vrot.slane %v9683, 4
    %v9685 = vadd.f32 %v9683, %v9684
    %v9686 = vrot.slane %v9685, 2
    %v9687 = vadd.f32 %v9685, %v9686
    %v9688 = vrot.slane %v9687, 1
    %v9689 = vadd.f32 %v9687, %v9688
    %v9690 = vmul.f32 %v9492, 0.001953125
    %v9691 = vmul.f32 %v9689, 0.001953125
    %v9692 = vmul.f32 %v9690, %v9690
    %v9693 = vsub.f32 %v9691, %v9692
    %v9694 = vsub.f32 %v9296, %v9690
    %v9695 = vsub.f32 %v9297, %v9690
    %v9696 = vsub.f32 %v9298, %v9690
    %v9697 = vsub.f32 %v9299, %v9690
    %v9698 = vsub.f32 %v9300, %v9690
    %v9699 = vsub.f32 %v9301, %v9690
    %v9700 = vsub.f32 %v9302, %v9690
    %v9701 = vsub.f32 %v9303, %v9690
    %v9702 = vsub.f32 %v9304, %v9690
    %v9703 = vsub.f32 %v9305, %v9690
    %v9704 = vsub.f32 %v9306, %v9690
    %v9705 = vsub.f32 %v9307, %v9690
    %v9706 = vsub.f32 %v9308, %v9690
    %v9707 = vsub.f32 %v9309, %v9690
    %v9708 = vsub.f32 %v9310, %v9690
    %v9709 = vsub.f32 %v9311, %v9690
    %v9710 = vsub.f32 %v9312, %v9690
    %v9711 = vsub.f32 %v9313, %v9690
    %v9712 = vsub.f32 %v9314, %v9690
    %v9713 = vsub.f32 %v9315, %v9690
    %v9714 = vsub.f32 %v9316, %v9690
    %v9715 = vsub.f32 %v9317, %v9690
    %v9716 = vsub.f32 %v9318, %v9690
    %v9717 = vsub.f32 %v9319, %v9690
    %v9718 = vsub.f32 %v9320, %v9690
    %v9719 = vsub.f32 %v9321, %v9690
    %v9720 = vsub.f32 %v9322, %v9690
    %v9721 = vsub.f32 %v9323, %v9690
    %v9722 = vsub.f32 %v9324, %v9690
    %v9723 = vsub.f32 %v9325, %v9690
    %v9724 = vsub.f32 %v9326, %v9690
    %v9725 = vsub.f32 %v9327, %v9690
    %v9726 = vsub.f32 %v9328, %v9690
    %v9727 = vsub.f32 %v9329, %v9690
    %v9728 = vsub.f32 %v9330, %v9690
    %v9729 = vsub.f32 %v9331, %v9690
    %v9730 = vsub.f32 %v9332, %v9690
    %v9731 = vsub.f32 %v9333, %v9690
    %v9732 = vsub.f32 %v9334, %v9690
    %v9733 = vsub.f32 %v9335, %v9690
    %v9734 = vsub.f32 %v9336, %v9690
    %v9735 = vsub.f32 %v9337, %v9690
    %v9736 = vsub.f32 %v9338, %v9690
    %v9737 = vsub.f32 %v9339, %v9690
    %v9738 = vsub.f32 %v9340, %v9690
    %v9739 = vsub.f32 %v9341, %v9690
    %v9740 = vsub.f32 %v9342, %v9690
    %v9741 = vsub.f32 %v9343, %v9690
    %v9742 = vsub.f32 %v9344, %v9690
    %v9743 = vsub.f32 %v9345, %v9690
    %v9744 = vsub.f32 %v9346, %v9690
    %v9745 = vsub.f32 %v9347, %v9690
    %v9746 = vsub.f32 %v9348, %v9690
    %v9747 = vsub.f32 %v9349, %v9690
    %v9748 = vsub.f32 %v9350, %v9690
    %v9749 = vsub.f32 %v9351, %v9690
    %v9750 = vsub.f32 %v9352, %v9690
    %v9751 = vsub.f32 %v9353, %v9690
    %v9752 = vsub.f32 %v9354, %v9690
    %v9753 = vsub.f32 %v9355, %v9690
    %v9754 = vsub.f32 %v9356, %v9690
    %v9755 = vsub.f32 %v9357, %v9690
    %v9756 = vsub.f32 %v9358, %v9690
    %v9757 = vsub.f32 %v9359, %v9690
    %v9758 = vadd.f32 %v9693, 1e-05
    %v9759 = vrsqrt.pop %v9758
    %v9760 = vmul.f32 %v9759, %v9758
    %v9761 = vmul.f32 %v9760, %v9759
    %v9762 = vmul.f32 0.5, %v9761
    %v9763 = vsub.f32 1.5, %v9762
    %v9764 = vmul.f32 %v9759, %v9763
    %vm9765 = vweird.f32 %v9758
    %vm9766 = vweird.f32 %v9759
    %vm9767 = vmor %vm9765, %vm9766
    %v9768 = vsel %vm9767, %v9759, %v9764
    %v9769 = vmul.f32 %v9694, %v9768
    %v9770 = vmul.f32 %v9695, %v9768
    %v9771 = vmul.f32 %v9696, %v9768
    %v9772 = vmul.f32 %v9697, %v9768
    %v9773 = vmul.f32 %v9698, %v9768
    %v9774 = vmul.f32 %v9699, %v9768
    %v9775 = vmul.f32 %v9700, %v9768
    %v9776 = vmul.f32 %v9701, %v9768
    %v9777 = vmul.f32 %v9702, %v9768
    %v9778 = vmul.f32 %v9703, %v9768
    %v9779 = vmul.f32 %v9704, %v9768
    %v9780 = vmul.f32 %v9705, %v9768
    %v9781 = vmul.f32 %v9706, %v9768
    %v9782 = vmul.f32 %v9707, %v9768
    %v9783 = vmul.f32 %v9708, %v9768
    %v9784 = vmul.f32 %v9709, %v9768
    %v9785 = vmul.f32 %v9710, %v9768
    %v9786 = vmul.f32 %v9711, %v9768
    %v9787 = vmul.f32 %v9712, %v9768
    %v9788 = vmul.f32 %v9713, %v9768
    %v9789 = vmul.f32 %v9714, %v9768
    %v9790 = vmul.f32 %v9715, %v9768
    %v9791 = vmul.f32 %v9716, %v9768
    %v9792 = vmul.f32 %v9717, %v9768
    %v9793 = vmul.f32 %v9718, %v9768
    %v9794 = vmul.f32 %v9719, %v9768
    %v9795 = vmul.f32 %v9720, %v9768
    %v9796 = vmul.f32 %v9721, %v9768
    %v9797 = vmul.f32 %v9722, %v9768
    %v9798 = vmul.f32 %v9723, %v9768
    %v9799 = vmul.f32 %v9724, %v9768
    %v9800 = vmul.f32 %v9725, %v9768
    %v9801 = vmul.f32 %v9726, %v9768
    %v9802 = vmul.f32 %v9727, %v9768
    %v9803 = vmul.f32 %v9728, %v9768
    %v9804 = vmul.f32 %v9729, %v9768
    %v9805 = vmul.f32 %v9730, %v9768
    %v9806 = vmul.f32 %v9731, %v9768
    %v9807 = vmul.f32 %v9732, %v9768
    %v9808 = vmul.f32 %v9733, %v9768
    %v9809 = vmul.f32 %v9734, %v9768
    %v9810 = vmul.f32 %v9735, %v9768
    %v9811 = vmul.f32 %v9736, %v9768
    %v9812 = vmul.f32 %v9737, %v9768
    %v9813 = vmul.f32 %v9738, %v9768
    %v9814 = vmul.f32 %v9739, %v9768
    %v9815 = vmul.f32 %v9740, %v9768
    %v9816 = vmul.f32 %v9741, %v9768
    %v9817 = vmul.f32 %v9742, %v9768
    %v9818 = vmul.f32 %v9743, %v9768
    %v9819 = vmul.f32 %v9744, %v9768
    %v9820 = vmul.f32 %v9745, %v9768
    %v9821 = vmul.f32 %v9746, %v9768
    %v9822 = vmul.f32 %v9747, %v9768
    %v9823 = vmul.f32 %v9748, %v9768
    %v9824 = vmul.f32 %v9749, %v9768
    %v9825 = vmul.f32 %v9750, %v9768
    %v9826 = vmul.f32 %v9751, %v9768
    %v9827 = vmul.f32 %v9752, %v9768
    %v9828 = vmul.f32 %v9753, %v9768
    %v9829 = vmul.f32 %v9754, %v9768
    %v9830 = vmul.f32 %v9755, %v9768
    %v9831 = vmul.f32 %v9756, %v9768
    %v9832 = vmul.f32 %v9757, %v9768
    %v9833 = vperm.slane %v9293, 0
    %v9834 = vmul.f32 %v9769, %v9833
    %v9835 = vmul.f32 %v9770, %v9833
    %v9836 = vmul.f32 %v9771, %v9833
    %v9837 = vmul.f32 %v9772, %v9833
    %v9838 = vmul.f32 %v9773, %v9833
    %v9839 = vmul.f32 %v9774, %v9833
    %v9840 = vmul.f32 %v9775, %v9833
    %v9841 = vmul.f32 %v9776, %v9833
    %v9842 = vmul.f32 %v9777, %v9833
    %v9843 = vmul.f32 %v9778, %v9833
    %v9844 = vmul.f32 %v9779, %v9833
    %v9845 = vmul.f32 %v9780, %v9833
    %v9846 = vmul.f32 %v9781, %v9833
    %v9847 = vmul.f32 %v9782, %v9833
    %v9848 = vmul.f32 %v9783, %v9833
    %v9849 = vmul.f32 %v9784, %v9833
    %v9850 = vmul.f32 %v9785, %v9833
    %v9851 = vmul.f32 %v9786, %v9833
    %v9852 = vmul.f32 %v9787, %v9833
    %v9853 = vmul.f32 %v9788, %v9833
    %v9854 = vmul.f32 %v9789, %v9833
    %v9855 = vmul.f32 %v9790, %v9833
    %v9856 = vmul.f32 %v9791, %v9833
    %v9857 = vmul.f32 %v9792, %v9833
    %v9858 = vmul.f32 %v9793, %v9833
    %v9859 = vmul.f32 %v9794, %v9833
    %v9860 = vmul.f32 %v9795, %v9833
    %v9861 = vmul.f32 %v9796, %v9833
    %v9862 = vmul.f32 %v9797, %v9833
    %v9863 = vmul.f32 %v9798, %v9833
    %v9864 = vmul.f32 %v9799, %v9833
    %v9865 = vmul.f32 %v9800, %v9833
    %v9866 = vmul.f32 %v9801, %v9833
    %v9867 = vmul.f32 %v9802, %v9833
    %v9868 = vmul.f32 %v9803, %v9833
    %v9869 = vmul.f32 %v9804, %v9833
    %v9870 = vmul.f32 %v9805, %v9833
    %v9871 = vmul.f32 %v9806, %v9833
    %v9872 = vmul.f32 %v9807, %v9833
    %v9873 = vmul.f32 %v9808, %v9833
    %v9874 = vmul.f32 %v9809, %v9833
    %v9875 = vmul.f32 %v9810, %v9833
    %v9876 = vmul.f32 %v9811, %v9833
    %v9877 = vmul.f32 %v9812, %v9833
    %v9878 = vmul.f32 %v9813, %v9833
    %v9879 = vmul.f32 %v9814, %v9833
    %v9880 = vmul.f32 %v9815, %v9833
    %v9881 = vmul.f32 %v9816, %v9833
    %v9882 = vmul.f32 %v9817, %v9833
    %v9883 = vmul.f32 %v9818, %v9833
    %v9884 = vmul.f32 %v9819, %v9833
    %v9885 = vmul.f32 %v9820, %v9833
    %v9886 = vmul.f32 %v9821, %v9833
    %v9887 = vmul.f32 %v9822, %v9833
    %v9888 = vmul.f32 %v9823, %v9833
    %v9889 = vmul.f32 %v9824, %v9833
    %v9890 = vmul.f32 %v9825, %v9833
    %v9891 = vmul.f32 %v9826, %v9833
    %v9892 = vmul.f32 %v9827, %v9833
    %v9893 = vmul.f32 %v9828, %v9833
    %v9894 = vmul.f32 %v9829, %v9833
    %v9895 = vmul.f32 %v9830, %v9833
    %v9896 = vmul.f32 %v9831, %v9833
    %v9897 = vmul.f32 %v9832, %v9833
    %v9898 = vperm.slane %v9294, 0
    %v9899 = vadd.f32 %v9834, %v9898
    %v9900 = vadd.f32 %v9835, %v9898
    %v9901 = vadd.f32 %v9836, %v9898
    %v9902 = vadd.f32 %v9837, %v9898
    %v9903 = vadd.f32 %v9838, %v9898
    %v9904 = vadd.f32 %v9839, %v9898
    %v9905 = vadd.f32 %v9840, %v9898
    %v9906 = vadd.f32 %v9841, %v9898
    %v9907 = vadd.f32 %v9842, %v9898
    %v9908 = vadd.f32 %v9843, %v9898
    %v9909 = vadd.f32 %v9844, %v9898
    %v9910 = vadd.f32 %v9845, %v9898
    %v9911 = vadd.f32 %v9846, %v9898
    %v9912 = vadd.f32 %v9847, %v9898
    %v9913 = vadd.f32 %v9848, %v9898
    %v9914 = vadd.f32 %v9849, %v9898
    %v9915 = vadd.f32 %v9850, %v9898
    %v9916 = vadd.f32 %v9851, %v9898
    %v9917 = vadd.f32 %v9852, %v9898
    %v9918 = vadd.f32 %v9853, %v9898
    %v9919 = vadd.f32 %v9854, %v9898
    %v9920 = vadd.f32 %v9855, %v9898
    %v9921 = vadd.f32 %v9856, %v9898
    %v9922 = vadd.f32 %v9857, %v9898
    %v9923 = vadd.f32 %v9858, %v9898
    %v9924 = vadd.f32 %v9859, %v9898
    %v9925 = vadd.f32 %v9860, %v9898
    %v9926 = vadd.f32 %v9861, %v9898
    %v9927 = vadd.f32 %v9862, %v9898
    %v9928 = vadd.f32 %v9863, %v9898
    %v9929 = vadd.f32 %v9864, %v9898
    %v9930 = vadd.f32 %v9865, %v9898
    %v9931 = vadd.f32 %v9866, %v9898
    %v9932 = vadd.f32 %v9867, %v9898
    %v9933 = vadd.f32 %v9868, %v9898
    %v9934 = vadd.f32 %v9869, %v9898
    %v9935 = vadd.f32 %v9870, %v9898
    %v9936 = vadd.f32 %v9871, %v9898
    %v9937 = vadd.f32 %v9872, %v9898
    %v9938 = vadd.f32 %v9873, %v9898
    %v9939 = vadd.f32 %v9874, %v9898
    %v9940 = vadd.f32 %v9875, %v9898
    %v9941 = vadd.f32 %v9876, %v9898
    %v9942 = vadd.f32 %v9877, %v9898
    %v9943 = vadd.f32 %v9878, %v9898
    %v9944 = vadd.f32 %v9879, %v9898
    %v9945 = vadd.f32 %v9880, %v9898
    %v9946 = vadd.f32 %v9881, %v9898
    %v9947 = vadd.f32 %v9882, %v9898
    %v9948 = vadd.f32 %v9883, %v9898
    %v9949 = vadd.f32 %v9884, %v9898
    %v9950 = vadd.f32 %v9885, %v9898
    %v9951 = vadd.f32 %v9886, %v9898
    %v9952 = vadd.f32 %v9887, %v9898
    %v9953 = vadd.f32 %v9888, %v9898
    %v9954 = vadd.f32 %v9889, %v9898
    %v9955 = vadd.f32 %v9890, %v9898
    %v9956 = vadd.f32 %v9891, %v9898
    %v9957 = vadd.f32 %v9892, %v9898
    %v9958 = vadd.f32 %v9893, %v9898
    %v9959 = vadd.f32 %v9894, %v9898
    %v9960 = vadd.f32 %v9895, %v9898
    %v9961 = vadd.f32 %v9896, %v9898
    %v9962 = vadd.f32 %v9897, %v9898
    %v9963 = vmax.f32 %v9899, 0.0
    %v9964 = vmax.f32 %v9900, 0.0
    %v9965 = vmax.f32 %v9901, 0.0
    %v9966 = vmax.f32 %v9902, 0.0
    %v9967 = vmax.f32 %v9903, 0.0
    %v9968 = vmax.f32 %v9904, 0.0
    %v9969 = vmax.f32 %v9905, 0.0
    %v9970 = vmax.f32 %v9906, 0.0
    %v9971 = vmax.f32 %v9907, 0.0
    %v9972 = vmax.f32 %v9908, 0.0
    %v9973 = vmax.f32 %v9909, 0.0
    %v9974 = vmax.f32 %v9910, 0.0
    %v9975 = vmax.f32 %v9911, 0.0
    %v9976 = vmax.f32 %v9912, 0.0
    %v9977 = vmax.f32 %v9913, 0.0
    %v9978 = vmax.f32 %v9914, 0.0
    %v9979 = vmax.f32 %v9915, 0.0
    %v9980 = vmax.f32 %v9916, 0.0
    %v9981 = vmax.f32 %v9917, 0.0
    %v9982 = vmax.f32 %v9918, 0.0
    %v9983 = vmax.f32 %v9919, 0.0
    %v9984 = vmax.f32 %v9920, 0.0
    %v9985 = vmax.f32 %v9921, 0.0
    %v9986 = vmax.f32 %v9922, 0.0
    %v9987 = vmax.f32 %v9923, 0.0
    %v9988 = vmax.f32 %v9924, 0.0
    %v9989 = vmax.f32 %v9925, 0.0
    %v9990 = vmax.f32 %v9926, 0.0
    %v9991 = vmax.f32 %v9927, 0.0
    %v9992 = vmax.f32 %v9928, 0.0
    %v9993 = vmax.f32 %v9929, 0.0
    %v9994 = vmax.f32 %v9930, 0.0
    %v9995 = vmax.f32 %v9931, 0.0
    %v9996 = vmax.f32 %v9932, 0.0
    %v9997 = vmax.f32 %v9933, 0.0
    %v9998 = vmax.f32 %v9934, 0.0
    %v9999 = vmax.f32 %v9935, 0.0
    %v10000 = vmax.f32 %v9936, 0.0
    %v10001 = vmax.f32 %v9937, 0.0
    %v10002 = vmax.f32 %v9938, 0.0
    %v10003 = vmax.f32 %v9939, 0.0
    %v10004 = vmax.f32 %v9940, 0.0
    %v10005 = vmax.f32 %v9941, 0.0
    %v10006 = vmax.f32 %v9942, 0.0
    %v10007 = vmax.f32 %v9943, 0.0
    %v10008 = vmax.f32 %v9944, 0.0
    %v10009 = vmax.f32 %v9945, 0.0
    %v10010 = vmax.f32 %v9946, 0.0
    %v10011 = vmax.f32 %v9947, 0.0
    %v10012 = vmax.f32 %v9948, 0.0
    %v10013 = vmax.f32 %v9949, 0.0
    %v10014 = vmax.f32 %v9950, 0.0
    %v10015 = vmax.f32 %v9951, 0.0
    %v10016 = vmax.f32 %v9952, 0.0
    %v10017 = vmax.f32 %v9953, 0.0
    %v10018 = vmax.f32 %v9954, 0.0
    %v10019 = vmax.f32 %v9955, 0.0
    %v10020 = vmax.f32 %v9956, 0.0
    %v10021 = vmax.f32 %v9957, 0.0
    %v10022 = vmax.f32 %v9958, 0.0
    %v10023 = vmax.f32 %v9959, 0.0
    %v10024 = vmax.f32 %v9960, 0.0
    %v10025 = vmax.f32 %v9961, 0.0
    %v10026 = vmax.f32 %v9962, 0.0
    %v10027 = vmax.f32 %v9963, %v9964
    %v10028 = vmax.f32 %v9965, %v9966
    %v10029 = vmax.f32 %v9967, %v9968
    %v10030 = vmax.f32 %v9969, %v9970
    %v10031 = vmax.f32 %v9979, %v9980
    %v10032 = vmax.f32 %v9981, %v9982
    %v10033 = vmax.f32 %v9983, %v9984
    %v10034 = vmax.f32 %v9985, %v9986
    %v10035 = vmax.f32 %v9995, %v9996
    %v10036 = vmax.f32 %v9997, %v9998
    %v10037 = vmax.f32 %v9999, %v10000
    %v10038 = vmax.f32 %v10001, %v10002
    %v10039 = vmax.f32 %v10011, %v10012
    %v10040 = vmax.f32 %v10013, %v10014
    %v10041 = vmax.f32 %v10015, %v10016
    %v10042 = vmax.f32 %v10017, %v10018
    %v10043 = vmax.f32 %v9971, %v9972
    %v10044 = vmax.f32 %v9973, %v9974
    %v10045 = vmax.f32 %v9975, %v9976
    %v10046 = vmax.f32 %v9977, %v9978
    %v10047 = vmax.f32 %v9987, %v9988
    %v10048 = vmax.f32 %v9989, %v9990
    %v10049 = vmax.f32 %v9991, %v9992
    %v10050 = vmax.f32 %v9993, %v9994
    %v10051 = vmax.f32 %v10003, %v10004
    %v10052 = vmax.f32 %v10005, %v10006
    %v10053 = vmax.f32 %v10007, %v10008
    %v10054 = vmax.f32 %v10009, %v10010
    %v10055 = vmax.f32 %v10019, %v10020
    %v10056 = vmax.f32 %v10021, %v10022
    %v10057 = vmax.f32 %v10023, %v10024
    %v10058 = vmax.f32 %v10025, %v10026
    %v10059 = vmax.f32 %v10027, %v10043
    %v10060 = vmax.f32 %v10028, %v10044
    %v10061 = vmax.f32 %v10029, %v10045
    %v10062 = vmax.f32 %v10030, %v10046
    %v10063 = vmax.f32 %v10031, %v10047
    %v10064 = vmax.f32 %v10032, %v10048
    %v10065 = vmax.f32 %v10033, %v10049
    %v10066 = vmax.f32 %v10034, %v10050
    %v10067 = vmax.f32 %v10035, %v10051
    %v10068 = vmax.f32 %v10036, %v10052
    %v10069 = vmax.f32 %v10037, %v10053
    %v10070 = vmax.f32 %v10038, %v10054
    %v10071 = vmax.f32 %v10039, %v10055
    %v10072 = vmax.f32 %v10040, %v10056
    %v10073 = vmax.f32 %v10041, %v10057
    %v10074 = vmax.f32 %v10042, %v10058
    %s10075 = scalar_lea.vmem [#allocation3], 48
    %10076 = vst.msk [vmem:[%s10075 + $0x8] sm:$0xff] %vm27, %v10059
    %10077 = vst.msk [vmem:[%s10075 + $0x10] sm:$0xff] %vm27, %v10060
    %10078 = vst.msk [vmem:[%s10075 + $0x18] sm:$0xff] %vm27, %v10061
    %10079 = vst.msk [vmem:[%s10075 + $0x20] sm:$0xff] %vm27, %v10062
    %10080 = vst.msk [vmem:[%s10075 + $0x38] sm:$0xff] %vm27, %v10063
    %10081 = vst.msk [vmem:[%s10075 + $0x40] sm:$0xff] %vm27, %v10064
    %10082 = vst.msk [vmem:[%s10075 + $0x48] sm:$0xff] %vm27, %v10065
    %10083 = vst.msk [vmem:[%s10075 + $0x50] sm:$0xff] %vm27, %v10066
    %10084 = vst.msk [vmem:[%s10075 + $0x68] sm:$0xff] %vm27, %v10067
    %10085 = vst.msk [vmem:[%s10075 + $0x70] sm:$0xff] %vm27, %v10068
    %10086 = vst.msk [vmem:[%s10075 + $0x78] sm:$0xff] %vm27, %v10069
    %10087 = vst.msk [vmem:[%s10075 + $0x80] sm:$0xff] %vm27, %v10070
    %10088 = vst.msk [vmem:[%s10075 + $0x98] sm:$0xff] %vm27, %v10071
    %10089 = vst.msk [vmem:[%s10075 + $0xa0] sm:$0xff] %vm27, %v10072
    %10090 = vst.msk [vmem:[%s10075 + $0xa8] sm:$0xff] %vm27, %v10073
    %10091 = vst.msk [vmem:[%s10075 + $0xb0] sm:$0xff] %vm27, %v10074
    %v10092 = vld [vmem:[#allocation3] sm:$0xff]
    %v10093 = vld [vmem:[#allocation3 + $0x8] sm:$0xff]
    %v10094 = vld [vmem:[#allocation3 + $0x10] sm:$0xff]
    %v10095 = vld [vmem:[#allocation3 + $0x18] sm:$0xff]
    %v10096 = vld [vmem:[#allocation3 + $0x30] sm:$0xff]
    %v10097 = vld [vmem:[#allocation3 + $0x38] sm:$0xff]
    %v10098 = vld [vmem:[#allocation3 + $0x40] sm:$0xff]
    %v10099 = vld [vmem:[#allocation3 + $0x48] sm:$0xff]
    %v10100 = vld [vmem:[#allocation3 + $0x60] sm:$0xff]
    %v10101 = vld [vmem:[#allocation3 + $0x68] sm:$0xff]
    %v10102 = vld [vmem:[#allocation3 + $0x70] sm:$0xff]
    %v10103 = vld [vmem:[#allocation3 + $0x78] sm:$0xff]
    %v10104 = vld [vmem:[#allocation3 + $0x90] sm:$0xff]
    %v10105 = vld [vmem:[#allocation3 + $0x98] sm:$0xff]
    %v10106 = vld [vmem:[#allocation3 + $0xa0] sm:$0xff]
    %v10107 = vld [vmem:[#allocation3 + $0xa8] sm:$0xff]
    %v10108 = vld [vmem:[%s2 + $0x120] sm:$0xff]
    %v10109 = vld [vmem:[%s2 + $0x128] sm:$0xff]
    %v10110 = vld [vmem:[%s2 + $0x130] sm:$0xff]
    %v10111 = vld [vmem:[%s2 + $0x138] sm:$0xff]
    %v10112 = vld [vmem:[#allocation3 + $0x20] sm:$0xff]
    %v10113 = vld [vmem:[#allocation3 + $0x50] sm:$0xff]
    %v10114 = vld [vmem:[#allocation3 + $0x80] sm:$0xff]
    %v10115 = vld [vmem:[#allocation3 + $0xb0] sm:$0xff]
    %v10116 = vld [vmem:[%s2 + $0x140] sm:$0xff]
    %v10117 = vld [vmem:[%s2 + $0x148] sm:$0xff]
    %v10118 = vld [vmem:[%s2 + $0x150] sm:$0xff]
    %v10119 = vld [vmem:[%s2 + $0x158] sm:$0xff]
    %v10121 = vsel %vm27, %v10093, 0
    %v10124 = vsel %vm27, %v10094, 0
    %v10127 = vsel %vm27, %v10095, 0
    %v10130 = vsel %vm27, %v10112, 0
    %v10133 = vsel %vm27, %v10097, 0
    %v10136 = vsel %vm27, %v10098, 0
    %v10139 = vsel %vm27, %v10099, 0
    %v10142 = vsel %vm27, %v10113, 0
    %v10145 = vsel %vm27, %v10101, 0
    %v10148 = vsel %vm27, %v10102, 0
    %v10151 = vsel %vm27, %v10103, 0
    %v10154 = vsel %vm27, %v10114, 0
    %v10157 = vsel %vm27, %v10105, 0
    %v10160 = vsel %vm27, %v10106, 0
    %v10163 = vsel %vm27, %v10107, 0
    %v10166 = vsel %vm27, %v10115, 0
    %10168 = vmatpush.msra.mxu0 0.0
    %10169 = vmatpush.msra.mxu0 0.0
    %10170 = vmatpush.msra.mxu0 0.0
    %10171 = vmatpush.msra.mxu0 0.0
    %10172 = vmatpush.msra.mxu0 0.0
    %10173 = vmatpush.msra.mxu0 0.0
    %10174 = vmatpush.msra.mxu0 0.0
    %10175 = vmatpush.msra.mxu0 0.0
    %10176 = vmatpush.msra.mxu0 0.0
    %10177 = vmatpush.msra.mxu0 0.0
    %10178 = vmatpush.msra.mxu0 0.0
    %10179 = vmatpush.msra.mxu0 0.0
    %10180 = vmatpush.msra.mxu0 %v10119
    %10181 = vmatpush.msra.mxu0 %v10118
    %10182 = vmatpush.msra.mxu0 %v10117
    %10183 = vmatpush.msra.mxu0 %v10116
    %10184 = vmatmul.f32.gmra.mxu0 %v10121
    %v10185 = vpop.f32.mrf.mxu0
    %v10186 = vadd.f32 0.0, %v10185
    %10187 = vmatmul.f32.gmra.mxu0 %v10124
    %v10188 = vpop.f32.mrf.mxu0
    %v10189 = vadd.f32 0.0, %v10188
    %10190 = vmatmul.f32.gmra.mxu0 %v10127
    %v10191 = vpop.f32.mrf.mxu0
    %v10192 = vadd.f32 0.0, %v10191
    %10193 = vmatmul.f32.gmra.mxu0 %v10130
    %v10194 = vpop.f32.mrf.mxu0
    %v10195 = vadd.f32 0.0, %v10194
    %10196 = vmatmul.f32.gmra.mxu0 %v10133
    %v10197 = vpop.f32.mrf.mxu0
    %v10198 = vadd.f32 0.0, %v10197
    %10199 = vmatmul.f32.gmra.mxu0 %v10136
    %v10200 = vpop.f32.mrf.mxu0
    %v10201 = vadd.f32 0.0, %v10200
    %10202 = vmatmul.f32.gmra.mxu0 %v10139
    %v10203 = vpop.f32.mrf.mxu0
    %v10204 = vadd.f32 0.0, %v10203
    %10205 = vmatmul.f32.gmra.mxu0 %v10142
    %v10206 = vpop.f32.mrf.mxu0
    %v10207 = vadd.f32 0.0, %v10206
    %10208 = vmatmul.f32.gmra.mxu0 %v10145
    %v10209 = vpop.f32.mrf.mxu0
    %v10210 = vadd.f32 0.0, %v10209
    %10211 = vmatmul.f32.gmra.mxu0 %v10148
    %v10212 = vpop.f32.mrf.mxu0
    %v10213 = vadd.f32 0.0, %v10212
    %10214 = vmatmul.f32.gmra.mxu0 %v10151
    %v10215 = vpop.f32.mrf.mxu0
    %v10216 = vadd.f32 0.0, %v10215
    %10217 = vmatmul.f32.gmra.mxu0 %v10154
    %v10218 = vpop.f32.mrf.mxu0
    %v10219 = vadd.f32 0.0, %v10218
    %10220 = vmatmul.f32.gmra.mxu0 %v10157
    %v10221 = vpop.f32.mrf.mxu0
    %v10222 = vadd.f32 0.0, %v10221
    %10223 = vmatmul.f32.gmra.mxu0 %v10160
    %v10224 = vpop.f32.mrf.mxu0
    %v10225 = vadd.f32 0.0, %v10224
    %10226 = vmatmul.f32.gmra.mxu0 %v10163
    %v10227 = vpop.f32.mrf.mxu0
    %v10228 = vadd.f32 0.0, %v10227
    %10229 = vmatmul.f32.gmra.mxu0 %v10166
    %v10230 = vpop.f32.mrf.mxu0
    %v10231 = vadd.f32 0.0, %v10230
    %10232 = vdwg.mxu0
    %v10234 = vsel %vm27, %v10092, 0
    %v10237 = vsel %vm27, %v10096, 0
    %v10240 = vsel %vm27, %v10100, 0
    %v10243 = vsel %vm27, %v10104, 0
    %10245 = vmatpush.msra.mxu0 0.0
    %10246 = vmatpush.msra.mxu0 0.0
    %10247 = vmatpush.msra.mxu0 0.0
    %10248 = vmatpush.msra.mxu0 0.0
    %10249 = vmatpush.msra.mxu0 0.0
    %10250 = vmatpush.msra.mxu0 0.0
    %10251 = vmatpush.msra.mxu0 0.0
    %10252 = vmatpush.msra.mxu0 0.0
    %10253 = vmatpush.msra.mxu0 0.0
    %10254 = vmatpush.msra.mxu0 0.0
    %10255 = vmatpush.msra.mxu0 0.0
    %10256 = vmatpush.msra.mxu0 0.0
    %10257 = vmatpush.msra.mxu0 %v10111
    %10258 = vmatpush.msra.mxu0 %v10110
    %10259 = vmatpush.msra.mxu0 %v10109
    %10260 = vmatpush.msra.mxu0 %v10108
    %10261 = vmatmul.f32.gmra.mxu0 %v10234
    %v10262 = vpop.f32.mrf.mxu0
    %v10263 = vadd.f32 %v10186, %v10262
    %10264 = vmatmul.f32.gmra.mxu0 %v10121
    %v10265 = vpop.f32.mrf.mxu0
    %v10266 = vadd.f32 %v10189, %v10265
    %10267 = vmatmul.f32.gmra.mxu0 %v10124
    %v10268 = vpop.f32.mrf.mxu0
    %v10269 = vadd.f32 %v10192, %v10268
    %10270 = vmatmul.f32.gmra.mxu0 %v10127
    %v10271 = vpop.f32.mrf.mxu0
    %v10272 = vadd.f32 %v10195, %v10271
    %10273 = vmatmul.f32.gmra.mxu0 %v10237
    %v10274 = vpop.f32.mrf.mxu0
    %v10275 = vadd.f32 %v10198, %v10274
    %10276 = vmatmul.f32.gmra.mxu0 %v10133
    %v10277 = vpop.f32.mrf.mxu0
    %v10278 = vadd.f32 %v10201, %v10277
    %10279 = vmatmul.f32.gmra.mxu0 %v10136
    %v10280 = vpop.f32.mrf.mxu0
    %v10281 = vadd.f32 %v10204, %v10280
    %10282 = vmatmul.f32.gmra.mxu0 %v10139
    %v10283 = vpop.f32.mrf.mxu0
    %v10284 = vadd.f32 %v10207, %v10283
    %10285 = vmatmul.f32.gmra.mxu0 %v10240
    %v10286 = vpop.f32.mrf.mxu0
    %v10287 = vadd.f32 %v10210, %v10286
    %10288 = vmatmul.f32.gmra.mxu0 %v10145
    %v10289 = vpop.f32.mrf.mxu0
    %v10290 = vadd.f32 %v10213, %v10289
    %10291 = vmatmul.f32.gmra.mxu0 %v10148
    %v10292 = vpop.f32.mrf.mxu0
    %v10293 = vadd.f32 %v10216, %v10292
    %10294 = vmatmul.f32.gmra.mxu0 %v10151
    %v10295 = vpop.f32.mrf.mxu0
    %v10296 = vadd.f32 %v10219, %v10295
    %10297 = vmatmul.f32.gmra.mxu0 %v10243
    %v10298 = vpop.f32.mrf.mxu0
    %v10299 = vadd.f32 %v10222, %v10298
    %10300 = vmatmul.f32.gmra.mxu0 %v10157
    %v10301 = vpop.f32.mrf.mxu0
    %v10302 = vadd.f32 %v10225, %v10301
    %10303 = vmatmul.f32.gmra.mxu0 %v10160
    %v10304 = vpop.f32.mrf.mxu0
    %v10305 = vadd.f32 %v10228, %v10304
    %10306 = vmatmul.f32.gmra.mxu0 %v10163
    %v10307 = vpop.f32.mrf.mxu0
    %v10308 = vadd.f32 %v10231, %v10307
    %10309 = vdwg.mxu0
    %v10310 = vld [vmem:[#allocation3 + $0x10] sm:$0xff]
    %v10311 = vld [vmem:[#allocation3 + $0x18] sm:$0xff]
    %v10312 = vld [vmem:[#allocation3 + $0x20] sm:$0xff]
    %v10313 = vld [vmem:[#allocation3 + $0x28] sm:$0xff]
    %v10314 = vld [vmem:[#allocation3 + $0x40] sm:$0xff]
    %v10315 = vld [vmem:[#allocation3 + $0x48] sm:$0xff]
    %v10316 = vld [vmem:[#allocation3 + $0x50] sm:$0xff]
    %v10317 = vld [vmem:[#allocation3 + $0x58] sm:$0xff]
    %v10318 = vld [vmem:[#allocation3 + $0x70] sm:$0xff]
    %v10319 = vld [vmem:[#allocation3 + $0x78] sm:$0xff]
    %v10320 = vld [vmem:[#allocation3 + $0x80] sm:$0xff]
    %v10321 = vld [vmem:[#allocation3 + $0x88] sm:$0xff]
    %v10322 = vld [vmem:[#allocation3 + $0xa0] sm:$0xff]
    %v10323 = vld [vmem:[#allocation3 + $0xa8] sm:$0xff]
    %v10324 = vld [vmem:[#allocation3 + $0xb0] sm:$0xff]
    %v10325 = vld [vmem:[#allocation3 + $0xb8] sm:$0xff]
    %v10326 = vld [vmem:[%s2 + $0x160] sm:$0xff]
    %v10327 = vld [vmem:[%s2 + $0x168] sm:$0xff]
    %v10328 = vld [vmem:[%s2 + $0x170] sm:$0xff]
    %v10329 = vld [vmem:[%s2 + $0x178] sm:$0xff]
    %v10331 = vsel %vm27, %v10310, 0
    %v10334 = vsel %vm27, %v10311, 0
    %v10337 = vsel %vm27, %v10312, 0
    %v10340 = vsel %vm27, %v10313, 0
    %v10343 = vsel %vm27, %v10314, 0
    %v10346 = vsel %vm27, %v10315, 0
    %v10349 = vsel %vm27, %v10316, 0
    %v10352 = vsel %vm27, %v10317, 0
    %v10355 = vsel %vm27, %v10318, 0
    %v10358 = vsel %vm27, %v10319, 0
    %v10361 = vsel %vm27, %v10320, 0
    %v10364 = vsel %vm27, %v10321, 0
    %v10367 = vsel %vm27, %v10322, 0
    %v10370 = vsel %vm27, %v10323, 0
    %v10373 = vsel %vm27, %v10324, 0
    %v10376 = vsel %vm27, %v10325, 0
    %10378 = vmatpush.msra.mxu0 0.0
    %10379 = vmatpush.msra.mxu0 0.0
    %10380 = vmatpush.msra.mxu0 0.0
    %10381 = vmatpush.msra.mxu0 0.0
    %10382 = vmatpush.msra.mxu0 0.0
    %10383 = vmatpush.msra.mxu0 0.0
    %10384 = vmatpush.msra.mxu0 0.0
    %10385 = vmatpush.msra.mxu0 0.0
    %10386 = vmatpush.msra.mxu0 0.0
    %10387 = vmatpush.msra.mxu0 0.0
    %10388 = vmatpush.msra.mxu0 0.0
    %10389 = vmatpush.msra.mxu0 0.0
    %10390 = vmatpush.msra.mxu0 %v10329
    %10391 = vmatpush.msra.mxu0 %v10328
    %10392 = vmatpush.msra.mxu0 %v10327
    %10393 = vmatpush.msra.mxu0 %v10326
    %10394 = vmatmul.f32.gmra.mxu0 %v10331
    %v10395 = vpop.f32.mrf.mxu0
    %v10396 = vadd.f32 0.0, %v10395
    %10397 = vmatmul.f32.gmra.mxu0 %v10334
    %v10398 = vpop.f32.mrf.mxu0
    %v10399 = vadd.f32 0.0, %v10398
    %10400 = vmatmul.f32.gmra.mxu0 %v10337
    %v10401 = vpop.f32.mrf.mxu0
    %v10402 = vadd.f32 0.0, %v10401
    %10403 = vmatmul.f32.gmra.mxu0 %v10340
    %v10404 = vpop.f32.mrf.mxu0
    %v10405 = vadd.f32 0.0, %v10404
    %10406 = vmatmul.f32.gmra.mxu0 %v10343
    %v10407 = vpop.f32.mrf.mxu0
    %v10408 = vadd.f32 0.0, %v10407
    %10409 = vmatmul.f32.gmra.mxu0 %v10346
    %v10410 = vpop.f32.mrf.mxu0
    %v10411 = vadd.f32 0.0, %v10410
    %10412 = vmatmul.f32.gmra.mxu0 %v10349
    %v10413 = vpop.f32.mrf.mxu0
    %v10414 = vadd.f32 0.0, %v10413
    %10415 = vmatmul.f32.gmra.mxu0 %v10352
    %v10416 = vpop.f32.mrf.mxu0
    %v10417 = vadd.f32 0.0, %v10416
    %10418 = vmatmul.f32.gmra.mxu0 %v10355
    %v10419 = vpop.f32.mrf.mxu0
    %v10420 = vadd.f32 0.0, %v10419
    %10421 = vmatmul.f32.gmra.mxu0 %v10358
    %v10422 = vpop.f32.mrf.mxu0
    %v10423 = vadd.f32 0.0, %v10422
    %10424 = vmatmul.f32.gmra.mxu0 %v10361
    %v10425 = vpop.f32.mrf.mxu0
    %v10426 = vadd.f32 0.0, %v10425
    %10427 = vmatmul.f32.gmra.mxu0 %v10364
    %v10428 = vpop.f32.mrf.mxu0
    %v10429 = vadd.f32 0.0, %v10428
    %10430 = vmatmul.f32.gmra.mxu0 %v10367
    %v10431 = vpop.f32.mrf.mxu0
    %v10432 = vadd.f32 0.0, %v10431
    %10433 = vmatmul.f32.gmra.mxu0 %v10370
    %v10434 = vpop.f32.mrf.mxu0
    %v10435 = vadd.f32 0.0, %v10434
    %10436 = vmatmul.f32.gmra.mxu0 %v10373
    %v10437 = vpop.f32.mrf.mxu0
    %v10438 = vadd.f32 0.0, %v10437
    %10439 = vmatmul.f32.gmra.mxu0 %v10376
    %v10440 = vpop.f32.mrf.mxu0
    %v10441 = vadd.f32 0.0, %v10440
    %10442 = vdwg.mxu0
    %v10443 = vadd.f32 %v10263, %v10396
    %v10444 = vadd.f32 %v10266, %v10399
    %v10445 = vadd.f32 %v10269, %v10402
    %v10446 = vadd.f32 %v10272, %v10405
    %v10447 = vadd.f32 %v10275, %v10408
    %v10448 = vadd.f32 %v10278, %v10411
    %v10449 = vadd.f32 %v10281, %v10414
    %v10450 = vadd.f32 %v10284, %v10417
    %v10451 = vadd.f32 %v10287, %v10420
    %v10452 = vadd.f32 %v10290, %v10423
    %v10453 = vadd.f32 %v10293, %v10426
    %v10454 = vadd.f32 %v10296, %v10429
    %v10455 = vadd.f32 %v10299, %v10432
    %v10456 = vadd.f32 %v10302, %v10435
    %v10457 = vadd.f32 %v10305, %v10438
    %v10458 = vadd.f32 %v10308, %v10441
    %v10459 = vld [vmem:[%s10075] sm:$0xff]
    %v10460 = vld [vmem:[%s10075 + $0x8] sm:$0xff]
    %v10461 = vld [vmem:[%s10075 + $0x10] sm:$0xff]
    %v10462 = vld [vmem:[%s10075 + $0x18] sm:$0xff]
    %v10463 = vld [vmem:[%s10075 + $0x30] sm:$0xff]
    %v10464 = vld [vmem:[%s10075 + $0x38] sm:$0xff]
    %v10465 = vld [vmem:[%s10075 + $0x40] sm:$0xff]
    %v10466 = vld [vmem:[%s10075 + $0x48] sm:$0xff]
    %v10467 = vld [vmem:[%s10075 + $0x60] sm:$0xff]
    %v10468 = vld [vmem:[%s10075 + $0x68] sm:$0xff]
    %v10469 = vld [vmem:[%s10075 + $0x70] sm:$0xff]
    %v10470 = vld [vmem:[%s10075 + $0x78] sm:$0xff]
    %v10471 = vld [vmem:[%s10075 + $0x90] sm:$0xff]
    %v10472 = vld [vmem:[%s10075 + $0x98] sm:$0xff]
    %v10473 = vld [vmem:[%s10075 + $0xa0] sm:$0xff]
    %v10474 = vld [vmem:[%s10075 + $0xa8] sm:$0xff]
    %v10475 = vld [vmem:[%s2 + $0x180] sm:$0xff]
    %v10476 = vld [vmem:[%s2 + $0x188] sm:$0xff]
    %v10477 = vld [vmem:[%s2 + $0x190] sm:$0xff]
    %v10478 = vld [vmem:[%s2 + $0x198] sm:$0xff]
    %v10480 = vsel %vm27, %v10459, 0
    %v10483 = vsel %vm27, %v10460, 0
    %v10486 = vsel %vm27, %v10461, 0
    %v10489 = vsel %vm27, %v10462, 0
    %v10492 = vsel %vm27, %v10463, 0
    %v10495 = vsel %vm27, %v10464, 0
    %v10498 = vsel %vm27, %v10465, 0
    %v10501 = vsel %vm27, %v10466, 0
    %v10504 = vsel %vm27, %v10467, 0
    %v10507 = vsel %vm27, %v10468, 0
    %v10510 = vsel %vm27, %v10469, 0
    %v10513 = vsel %vm27, %v10470, 0
    %v10516 = vsel %vm27, %v10471, 0
    %v10519 = vsel %vm27, %v10472, 0
    %v10522 = vsel %vm27, %v10473, 0
    %v10525 = vsel %vm27, %v10474, 0
    %10527 = vmatpush.msra.mxu0 0.0
    %10528 = vmatpush.msra.mxu0 0.0
    %10529 = vmatpush.msra.mxu0 0.0
    %10530 = vmatpush.msra.mxu0 0.0
    %10531 = vmatpush.msra.mxu0 0.0
    %10532 = vmatpush.msra.mxu0 0.0
    %10533 = vmatpush.msra.mxu0 0.0
    %10534 = vmatpush.msra.mxu0 0.0
    %10535 = vmatpush.msra.mxu0 0.0
    %10536 = vmatpush.msra.mxu0 0.0
    %10537 = vmatpush.msra.mxu0 0.0
    %10538 = vmatpush.msra.mxu0 0.0
    %10539 = vmatpush.msra.mxu0 %v10478
    %10540 = vmatpush.msra.mxu0 %v10477
    %10541 = vmatpush.msra.mxu0 %v10476
    %10542 = vmatpush.msra.mxu0 %v10475
    %10543 = vmatmul.f32.gmra.mxu0 %v10480
    %v10544 = vpop.f32.mrf.mxu0
    %v10545 = vadd.f32 0.0, %v10544
    %10546 = vmatmul.f32.gmra.mxu0 %v10483
    %v10547 = vpop.f32.mrf.mxu0
    %v10548 = vadd.f32 0.0, %v10547
    %10549 = vmatmul.f32.gmra.mxu0 %v10486
    %v10550 = vpop.f32.mrf.mxu0
    %v10551 = vadd.f32 0.0, %v10550
    %10552 = vmatmul.f32.gmra.mxu0 %v10489
    %v10553 = vpop.f32.mrf.mxu0
    %v10554 = vadd.f32 0.0, %v10553
    %10555 = vmatmul.f32.gmra.mxu0 %v10492
    %v10556 = vpop.f32.mrf.mxu0
    %v10557 = vadd.f32 0.0, %v10556
    %10558 = vmatmul.f32.gmra.mxu0 %v10495
    %v10559 = vpop.f32.mrf.mxu0
    %v10560 = vadd.f32 0.0, %v10559
    %10561 = vmatmul.f32.gmra.mxu0 %v10498
    %v10562 = vpop.f32.mrf.mxu0
    %v10563 = vadd.f32 0.0, %v10562
    %10564 = vmatmul.f32.gmra.mxu0 %v10501
    %v10565 = vpop.f32.mrf.mxu0
    %v10566 = vadd.f32 0.0, %v10565
    %10567 = vmatmul.f32.gmra.mxu0 %v10504
    %v10568 = vpop.f32.mrf.mxu0
    %v10569 = vadd.f32 0.0, %v10568
    %10570 = vmatmul.f32.gmra.mxu0 %v10507
    %v10571 = vpop.f32.mrf.mxu0
    %v10572 = vadd.f32 0.0, %v10571
    %10573 = vmatmul.f32.gmra.mxu0 %v10510
    %v10574 = vpop.f32.mrf.mxu0
    %v10575 = vadd.f32 0.0, %v10574
    %10576 = vmatmul.f32.gmra.mxu0 %v10513
    %v10577 = vpop.f32.mrf.mxu0
    %v10578 = vadd.f32 0.0, %v10577
    %10579 = vmatmul.f32.gmra.mxu0 %v10516
    %v10580 = vpop.f32.mrf.mxu0
    %v10581 = vadd.f32 0.0, %v10580
    %10582 = vmatmul.f32.gmra.mxu0 %v10519
    %v10583 = vpop.f32.mrf.mxu0
    %v10584 = vadd.f32 0.0, %v10583
    %10585 = vmatmul.f32.gmra.mxu0 %v10522
    %v10586 = vpop.f32.mrf.mxu0
    %v10587 = vadd.f32 0.0, %v10586
    %10588 = vmatmul.f32.gmra.mxu0 %v10525
    %v10589 = vpop.f32.mrf.mxu0
    %v10590 = vadd.f32 0.0, %v10589
    %10591 = vdwg.mxu0
    %v10592 = vadd.f32 %v10443, %v10545
    %v10593 = vadd.f32 %v10444, %v10548
    %v10594 = vadd.f32 %v10445, %v10551
    %v10595 = vadd.f32 %v10446, %v10554
    %v10596 = vadd.f32 %v10447, %v10557
    %v10597 = vadd.f32 %v10448, %v10560
    %v10598 = vadd.f32 %v10449, %v10563
    %v10599 = vadd.f32 %v10450, %v10566
    %v10600 = vadd.f32 %v10451, %v10569
    %v10601 = vadd.f32 %v10452, %v10572
    %v10602 = vadd.f32 %v10453, %v10575
    %v10603 = vadd.f32 %v10454, %v10578
    %v10604 = vadd.f32 %v10455, %v10581
    %v10605 = vadd.f32 %v10456, %v10584
    %v10606 = vadd.f32 %v10457, %v10587
    %v10607 = vadd.f32 %v10458, %v10590
    %v10608 = vld [vmem:[%s10075 + $0x8] sm:$0xff]
    %v10609 = vld [vmem:[%s10075 + $0x10] sm:$0xff]
    %v10610 = vld [vmem:[%s10075 + $0x18] sm:$0xff]
    %v10611 = vld [vmem:[%s10075 + $0x20] sm:$0xff]
    %v10612 = vld [vmem:[%s10075 + $0x38] sm:$0xff]
    %v10613 = vld [vmem:[%s10075 + $0x40] sm:$0xff]
    %v10614 = vld [vmem:[%s10075 + $0x48] sm:$0xff]
    %v10615 = vld [vmem:[%s10075 + $0x50] sm:$0xff]
    %v10616 = vld [vmem:[%s10075 + $0x68] sm:$0xff]
    %v10617 = vld [vmem:[%s10075 + $0x70] sm:$0xff]
    %v10618 = vld [vmem:[%s10075 + $0x78] sm:$0xff]
    %v10619 = vld [vmem:[%s10075 + $0x80] sm:$0xff]
    %v10620 = vld [vmem:[%s10075 + $0x98] sm:$0xff]
    %v10621 = vld [vmem:[%s10075 + $0xa0] sm:$0xff]
    %v10622 = vld [vmem:[%s10075 + $0xa8] sm:$0xff]
    %v10623 = vld [vmem:[%s10075 + $0xb0] sm:$0xff]
    %v10624 = vld [vmem:[%s2 + $0x1a0] sm:$0xff]
    %v10625 = vld [vmem:[%s2 + $0x1a8] sm:$0xff]
    %v10626 = vld [vmem:[%s2 + $0x1b0] sm:$0xff]
    %v10627 = vld [vmem:[%s2 + $0x1b8] sm:$0xff]
    %v10629 = vsel %vm27, %v10608, 0
    %v10632 = vsel %vm27, %v10609, 0
    %v10635 = vsel %vm27, %v10610, 0
    %v10638 = vsel %vm27, %v10611, 0
    %v10641 = vsel %vm27, %v10612, 0
    %v10644 = vsel %vm27, %v10613, 0
    %v10647 = vsel %vm27, %v10614, 0
    %v10650 = vsel %vm27, %v10615, 0
    %v10653 = vsel %vm27, %v10616, 0
    %v10656 = vsel %vm27, %v10617, 0
    %v10659 = vsel %vm27, %v10618, 0
    %v10662 = vsel %vm27, %v10619, 0
    %v10665 = vsel %vm27, %v10620, 0
    %v10668 = vsel %vm27, %v10621, 0
    %v10671 = vsel %vm27, %v10622, 0
    %v10674 = vsel %vm27, %v10623, 0
    %10676 = vmatpush.msra.mxu0 0.0
    %10677 = vmatpush.msra.mxu0 0.0
    %10678 = vmatpush.msra.mxu0 0.0
    %10679 = vmatpush.msra.mxu0 0.0
    %10680 = vmatpush.msra.mxu0 0.0
    %10681 = vmatpush.msra.mxu0 0.0
    %10682 = vmatpush.msra.mxu0 0.0
    %10683 = vmatpush.msra.mxu0 0.0
    %10684 = vmatpush.msra.mxu0 0.0
    %10685 = vmatpush.msra.mxu0 0.0
    %10686 = vmatpush.msra.mxu0 0.0
    %10687 = vmatpush.msra.mxu0 0.0
    %10688 = vmatpush.msra.mxu0 %v10627
    %10689 = vmatpush.msra.mxu0 %v10626
    %10690 = vmatpush.msra.mxu0 %v10625
    %10691 = vmatpush.msra.mxu0 %v10624
    %10692 = vmatmul.f32.gmra.mxu0 %v10629
    %v10693 = vpop.f32.mrf.mxu0
    %v10694 = vadd.f32 0.0, %v10693
    %10695 = vmatmul.f32.gmra.mxu0 %v10632
    %v10696 = vpop.f32.mrf.mxu0
    %v10697 = vadd.f32 0.0, %v10696
    %10698 = vmatmul.f32.gmra.mxu0 %v10635
    %v10699 = vpop.f32.mrf.mxu0
    %v10700 = vadd.f32 0.0, %v10699
    %10701 = vmatmul.f32.gmra.mxu0 %v10638
    %v10702 = vpop.f32.mrf.mxu0
    %v10703 = vadd.f32 0.0, %v10702
    %10704 = vmatmul.f32.gmra.mxu0 %v10641
    %v10705 = vpop.f32.mrf.mxu0
    %v10706 = vadd.f32 0.0, %v10705
    %10707 = vmatmul.f32.gmra.mxu0 %v10644
    %v10708 = vpop.f32.mrf.mxu0
    %v10709 = vadd.f32 0.0, %v10708
    %10710 = vmatmul.f32.gmra.mxu0 %v10647
    %v10711 = vpop.f32.mrf.mxu0
    %v10712 = vadd.f32 0.0, %v10711
    %10713 = vmatmul.f32.gmra.mxu0 %v10650
    %v10714 = vpop.f32.mrf.mxu0
    %v10715 = vadd.f32 0.0, %v10714
    %10716 = vmatmul.f32.gmra.mxu0 %v10653
    %v10717 = vpop.f32.mrf.mxu0
    %v10718 = vadd.f32 0.0, %v10717
    %10719 = vmatmul.f32.gmra.mxu0 %v10656
    %v10720 = vpop.f32.mrf.mxu0
    %v10721 = vadd.f32 0.0, %v10720
    %10722 = vmatmul.f32.gmra.mxu0 %v10659
    %v10723 = vpop.f32.mrf.mxu0
    %v10724 = vadd.f32 0.0, %v10723
    %10725 = vmatmul.f32.gmra.mxu0 %v10662
    %v10726 = vpop.f32.mrf.mxu0
    %v10727 = vadd.f32 0.0, %v10726
    %10728 = vmatmul.f32.gmra.mxu0 %v10665
    %v10729 = vpop.f32.mrf.mxu0
    %v10730 = vadd.f32 0.0, %v10729
    %10731 = vmatmul.f32.gmra.mxu0 %v10668
    %v10732 = vpop.f32.mrf.mxu0
    %v10733 = vadd.f32 0.0, %v10732
    %10734 = vmatmul.f32.gmra.mxu0 %v10671
    %v10735 = vpop.f32.mrf.mxu0
    %v10736 = vadd.f32 0.0, %v10735
    %10737 = vmatmul.f32.gmra.mxu0 %v10674
    %v10738 = vpop.f32.mrf.mxu0
    %v10739 = vadd.f32 0.0, %v10738
    %10740 = vdwg.mxu0
    %v10741 = vadd.f32 %v10592, %v10694
    %v10742 = vadd.f32 %v10593, %v10697
    %v10743 = vadd.f32 %v10594, %v10700
    %v10744 = vadd.f32 %v10595, %v10703
    %v10745 = vadd.f32 %v10596, %v10706
    %v10746 = vadd.f32 %v10597, %v10709
    %v10747 = vadd.f32 %v10598, %v10712
    %v10748 = vadd.f32 %v10599, %v10715
    %v10749 = vadd.f32 %v10600, %v10718
    %v10750 = vadd.f32 %v10601, %v10721
    %v10751 = vadd.f32 %v10602, %v10724
    %v10752 = vadd.f32 %v10603, %v10727
    %v10753 = vadd.f32 %v10604, %v10730
    %v10754 = vadd.f32 %v10605, %v10733
    %v10755 = vadd.f32 %v10606, %v10736
    %v10756 = vadd.f32 %v10607, %v10739
    %v10757 = vld [vmem:[%s10075 + $0x10] sm:$0xff]
    %v10758 = vld [vmem:[%s10075 + $0x18] sm:$0xff]
    %v10759 = vld [vmem:[%s10075 + $0x20] sm:$0xff]
    %v10760 = vld [vmem:[%s10075 + $0x28] sm:$0xff]
    %v10761 = vld [vmem:[%s10075 + $0x40] sm:$0xff]
    %v10762 = vld [vmem:[%s10075 + $0x48] sm:$0xff]
    %v10763 = vld [vmem:[%s10075 + $0x50] sm:$0xff]
    %v10764 = vld [vmem:[%s10075 + $0x58] sm:$0xff]
    %v10765 = vld [vmem:[%s10075 + $0x70] sm:$0xff]
    %v10766 = vld [vmem:[%s10075 + $0x78] sm:$0xff]
    %v10767 = vld [vmem:[%s10075 + $0x80] sm:$0xff]
    %v10768 = vld [vmem:[%s10075 + $0x88] sm:$0xff]
    %v10769 = vld [vmem:[%s10075 + $0xa0] sm:$0xff]
    %v10770 = vld [vmem:[%s10075 + $0xa8] sm:$0xff]
    %v10771 = vld [vmem:[%s10075 + $0xb0] sm:$0xff]
    %v10772 = vld [vmem:[%s10075 + $0xb8] sm:$0xff]
    %v10773 = vld [vmem:[%s2 + $0x1c0] sm:$0xff]
    %v10774 = vld [vmem:[%s2 + $0x1c8] sm:$0xff]
    %v10775 = vld [vmem:[%s2 + $0x1d0] sm:$0xff]
    %v10776 = vld [vmem:[%s2 + $0x1d8] sm:$0xff]
    %v10778 = vsel %vm27, %v10757, 0
    %v10781 = vsel %vm27, %v10758, 0
    %v10784 = vsel %vm27, %v10759, 0
    %v10787 = vsel %vm27, %v10760, 0
    %v10790 = vsel %vm27, %v10761, 0
    %v10793 = vsel %vm27, %v10762, 0
    %v10796 = vsel %vm27, %v10763, 0
    %v10799 = vsel %vm27, %v10764, 0
    %v10802 = vsel %vm27, %v10765, 0
    %v10805 = vsel %vm27, %v10766, 0
    %v10808 = vsel %vm27, %v10767, 0
    %v10811 = vsel %vm27, %v10768, 0
    %v10814 = vsel %vm27, %v10769, 0
    %v10817 = vsel %vm27, %v10770, 0
    %v10820 = vsel %vm27, %v10771, 0
    %v10823 = vsel %vm27, %v10772, 0
    %10825 = vmatpush.msra.mxu0 0.0
    %10826 = vmatpush.msra.mxu0 0.0
    %10827 = vmatpush.msra.mxu0 0.0
    %10828 = vmatpush.msra.mxu0 0.0
    %10829 = vmatpush.msra.mxu0 0.0
    %10830 = vmatpush.msra.mxu0 0.0
    %10831 = vmatpush.msra.mxu0 0.0
    %10832 = vmatpush.msra.mxu0 0.0
    %10833 = vmatpush.msra.mxu0 0.0
    %10834 = vmatpush.msra.mxu0 0.0
    %10835 = vmatpush.msra.mxu0 0.0
    %10836 = vmatpush.msra.mxu0 0.0
    %10837 = vmatpush.msra.mxu0 %v10776
    %10838 = vmatpush.msra.mxu0 %v10775
    %10839 = vmatpush.msra.mxu0 %v10774
    %10840 = vmatpush.msra.mxu0 %v10773
    %10841 = vmatmul.f32.gmra.mxu0 %v10778
    %v10842 = vpop.f32.mrf.mxu0
    %v10843 = vadd.f32 0.0, %v10842
    %10844 = vmatmul.f32.gmra.mxu0 %v10781
    %v10845 = vpop.f32.mrf.mxu0
    %v10846 = vadd.f32 0.0, %v10845
    %10847 = vmatmul.f32.gmra.mxu0 %v10784
    %v10848 = vpop.f32.mrf.mxu0
    %v10849 = vadd.f32 0.0, %v10848
    %10850 = vmatmul.f32.gmra.mxu0 %v10787
    %v10851 = vpop.f32.mrf.mxu0
    %v10852 = vadd.f32 0.0, %v10851
    %10853 = vmatmul.f32.gmra.mxu0 %v10790
    %v10854 = vpop.f32.mrf.mxu0
    %v10855 = vadd.f32 0.0, %v10854
    %10856 = vmatmul.f32.gmra.mxu0 %v10793
    %v10857 = vpop.f32.mrf.mxu0
    %v10858 = vadd.f32 0.0, %v10857
    %10859 = vmatmul.f32.gmra.mxu0 %v10796
    %v10860 = vpop.f32.mrf.mxu0
    %v10861 = vadd.f32 0.0, %v10860
    %10862 = vmatmul.f32.gmra.mxu0 %v10799
    %v10863 = vpop.f32.mrf.mxu0
    %v10864 = vadd.f32 0.0, %v10863
    %10865 = vmatmul.f32.gmra.mxu0 %v10802
    %v10866 = vpop.f32.mrf.mxu0
    %v10867 = vadd.f32 0.0, %v10866
    %10868 = vmatmul.f32.gmra.mxu0 %v10805
    %v10869 = vpop.f32.mrf.mxu0
    %v10870 = vadd.f32 0.0, %v10869
    %10871 = vmatmul.f32.gmra.mxu0 %v10808
    %v10872 = vpop.f32.mrf.mxu0
    %v10873 = vadd.f32 0.0, %v10872
    %10874 = vmatmul.f32.gmra.mxu0 %v10811
    %v10875 = vpop.f32.mrf.mxu0
    %v10876 = vadd.f32 0.0, %v10875
    %10877 = vmatmul.f32.gmra.mxu0 %v10814
    %v10878 = vpop.f32.mrf.mxu0
    %v10879 = vadd.f32 0.0, %v10878
    %10880 = vmatmul.f32.gmra.mxu0 %v10817
    %v10881 = vpop.f32.mrf.mxu0
    %v10882 = vadd.f32 0.0, %v10881
    %10883 = vmatmul.f32.gmra.mxu0 %v10820
    %v10884 = vpop.f32.mrf.mxu0
    %v10885 = vadd.f32 0.0, %v10884
    %10886 = vmatmul.f32.gmra.mxu0 %v10823
    %v10887 = vpop.f32.mrf.mxu0
    %v10888 = vadd.f32 0.0, %v10887
    %10889 = vdwg.mxu0
    %v10890 = vadd.f32 %v10741, %v10843
    %v10891 = vadd.f32 %v10742, %v10846
    %v10892 = vadd.f32 %v10743, %v10849
    %v10893 = vadd.f32 %v10744, %v10852
    %v10894 = vadd.f32 %v10745, %v10855
    %v10895 = vadd.f32 %v10746, %v10858
    %v10896 = vadd.f32 %v10747, %v10861
    %v10897 = vadd.f32 %v10748, %v10864
    %v10898 = vadd.f32 %v10749, %v10867
    %v10899 = vadd.f32 %v10750, %v10870
    %v10900 = vadd.f32 %v10751, %v10873
    %v10901 = vadd.f32 %v10752, %v10876
    %v10902 = vadd.f32 %v10753, %v10879
    %v10903 = vadd.f32 %v10754, %v10882
    %v10904 = vadd.f32 %v10755, %v10885
    %v10905 = vadd.f32 %v10756, %v10888
    %s10906 = scalar_lea.vmem [#allocation3], 96
    %v10907 = vld [vmem:[%s10906] sm:$0xff]
    %v10908 = vld [vmem:[%s10906 + $0x8] sm:$0xff]
    %v10909 = vld [vmem:[%s10906 + $0x10] sm:$0xff]
    %v10910 = vld [vmem:[%s10906 + $0x18] sm:$0xff]
    %v10911 = vld [vmem:[%s10906 + $0x30] sm:$0xff]
    %v10912 = vld [vmem:[%s10906 + $0x38] sm:$0xff]
    %v10913 = vld [vmem:[%s10906 + $0x40] sm:$0xff]
    %v10914 = vld [vmem:[%s10906 + $0x48] sm:$0xff]
    %v10915 = vld [vmem:[%s10906 + $0x60] sm:$0xff]
    %v10916 = vld [vmem:[%s10906 + $0x68] sm:$0xff]
    %v10917 = vld [vmem:[%s10906 + $0x70] sm:$0xff]
    %v10918 = vld [vmem:[%s10906 + $0x78] sm:$0xff]
    %v10919 = vld [vmem:[%s10906 + $0x90] sm:$0xff]
    %v10920 = vld [vmem:[%s10906 + $0x98] sm:$0xff]
    %v10921 = vld [vmem:[%s10906 + $0xa0] sm:$0xff]
    %v10922 = vld [vmem:[%s10906 + $0xa8] sm:$0xff]
    %v10923 = vld [vmem:[%s2 + $0x1e0] sm:$0xff]
    %v10924 = vld [vmem:[%s2 + $0x1e8] sm:$0xff]
    %v10925 = vld [vmem:[%s2 + $0x1f0] sm:$0xff]
    %v10926 = vld [vmem:[%s2 + $0x1f8] sm:$0xff]
    %v10928 = vsel %vm27, %v10907, 0
    %v10931 = vsel %vm27, %v10908, 0
    %v10934 = vsel %vm27, %v10909, 0
    %v10937 = vsel %vm27, %v10910, 0
    %v10940 = vsel %vm27, %v10911, 0
    %v10943 = vsel %vm27, %v10912, 0
    %v10946 = vsel %vm27, %v10913, 0
    %v10949 = vsel %vm27, %v10914, 0
    %v10952 = vsel %vm27, %v10915, 0
    %v10955 = vsel %vm27, %v10916, 0
    %v10958 = vsel %vm27, %v10917, 0
    %v10961 = vsel %vm27, %v10918, 0
    %v10964 = vsel %vm27, %v10919, 0
    %v10967 = vsel %vm27, %v10920, 0
    %v10970 = vsel %vm27, %v10921, 0
    %v10973 = vsel %vm27, %v10922, 0
    %10975 = vmatpush.msra.mxu0 0.0
    %10976 = vmatpush.msra.mxu0 0.0
    %10977 = vmatpush.msra.mxu0 0.0
    %10978 = vmatpush.msra.mxu0 0.0
    %10979 = vmatpush.msra.mxu0 0.0
    %10980 = vmatpush.msra.mxu0 0.0
    %10981 = vmatpush.msra.mxu0 0.0
    %10982 = vmatpush.msra.mxu0 0.0
    %10983 = vmatpush.msra.mxu0 0.0
    %10984 = vmatpush.msra.mxu0 0.0
    %10985 = vmatpush.msra.mxu0 0.0
    %10986 = vmatpush.msra.mxu0 0.0
    %10987 = vmatpush.msra.mxu0 %v10926
    %10988 = vmatpush.msra.mxu0 %v10925
    %10989 = vmatpush.msra.mxu0 %v10924
    %10990 = vmatpush.msra.mxu0 %v10923
    %10991 = vmatmul.f32.gmra.mxu0 %v10928
    %v10992 = vpop.f32.mrf.mxu0
    %v10993 = vadd.f32 0.0, %v10992
    %10994 = vmatmul.f32.gmra.mxu0 %v10931
    %v10995 = vpop.f32.mrf.mxu0
    %v10996 = vadd.f32 0.0, %v10995
    %10997 = vmatmul.f32.gmra.mxu0 %v10934
    %v10998 = vpop.f32.mrf.mxu0
    %v10999 = vadd.f32 0.0, %v10998
    %11000 = vmatmul.f32.gmra.mxu0 %v10937
    %v11001 = vpop.f32.mrf.mxu0
    %v11002 = vadd.f32 0.0, %v11001
    %11003 = vmatmul.f32.gmra.mxu0 %v10940
    %v11004 = vpop.f32.mrf.mxu0
    %v11005 = vadd.f32 0.0, %v11004
    %11006 = vmatmul.f32.gmra.mxu0 %v10943
    %v11007 = vpop.f32.mrf.mxu0
    %v11008 = vadd.f32 0.0, %v11007
    %11009 = vmatmul.f32.gmra.mxu0 %v10946
    %v11010 = vpop.f32.mrf.mxu0
    %v11011 = vadd.f32 0.0, %v11010
    %11012 = vmatmul.f32.gmra.mxu0 %v10949
    %v11013 = vpop.f32.mrf.mxu0
    %v11014 = vadd.f32 0.0, %v11013
    %11015 = vmatmul.f32.gmra.mxu0 %v10952
    %v11016 = vpop.f32.mrf.mxu0
    %v11017 = vadd.f32 0.0, %v11016
    %11018 = vmatmul.f32.gmra.mxu0 %v10955
    %v11019 = vpop.f32.mrf.mxu0
    %v11020 = vadd.f32 0.0, %v11019
    %11021 = vmatmul.f32.gmra.mxu0 %v10958
    %v11022 = vpop.f32.mrf.mxu0
    %v11023 = vadd.f32 0.0, %v11022
    %11024 = vmatmul.f32.gmra.mxu0 %v10961
    %v11025 = vpop.f32.mrf.mxu0
    %v11026 = vadd.f32 0.0, %v11025
    %11027 = vmatmul.f32.gmra.mxu0 %v10964
    %v11028 = vpop.f32.mrf.mxu0
    %v11029 = vadd.f32 0.0, %v11028
    %11030 = vmatmul.f32.gmra.mxu0 %v10967
    %v11031 = vpop.f32.mrf.mxu0
    %v11032 = vadd.f32 0.0, %v11031
    %11033 = vmatmul.f32.gmra.mxu0 %v10970
    %v11034 = vpop.f32.mrf.mxu0
    %v11035 = vadd.f32 0.0, %v11034
    %11036 = vmatmul.f32.gmra.mxu0 %v10973
    %v11037 = vpop.f32.mrf.mxu0
    %v11038 = vadd.f32 0.0, %v11037
    %11039 = vdwg.mxu0
    %v11040 = vadd.f32 %v10890, %v10993
    %v11041 = vadd.f32 %v10891, %v10996
    %v11042 = vadd.f32 %v10892, %v10999
    %v11043 = vadd.f32 %v10893, %v11002
    %v11044 = vadd.f32 %v10894, %v11005
    %v11045 = vadd.f32 %v10895, %v11008
    %v11046 = vadd.f32 %v10896, %v11011
    %v11047 = vadd.f32 %v10897, %v11014
    %v11048 = vadd.f32 %v10898, %v11017
    %v11049 = vadd.f32 %v10899, %v11020
    %v11050 = vadd.f32 %v10900, %v11023
    %v11051 = vadd.f32 %v10901, %v11026
    %v11052 = vadd.f32 %v10902, %v11029
    %v11053 = vadd.f32 %v10903, %v11032
    %v11054 = vadd.f32 %v10904, %v11035
    %v11055 = vadd.f32 %v10905, %v11038
    %v11056 = vld [vmem:[%s10906 + $0x8] sm:$0xff]
    %v11057 = vld [vmem:[%s10906 + $0x10] sm:$0xff]
    %v11058 = vld [vmem:[%s10906 + $0x18] sm:$0xff]
    %v11059 = vld [vmem:[%s10906 + $0x20] sm:$0xff]
    %v11060 = vld [vmem:[%s10906 + $0x38] sm:$0xff]
    %v11061 = vld [vmem:[%s10906 + $0x40] sm:$0xff]
    %v11062 = vld [vmem:[%s10906 + $0x48] sm:$0xff]
    %v11063 = vld [vmem:[%s10906 + $0x50] sm:$0xff]
    %v11064 = vld [vmem:[%s10906 + $0x68] sm:$0xff]
    %v11065 = vld [vmem:[%s10906 + $0x70] sm:$0xff]
    %v11066 = vld [vmem:[%s10906 + $0x78] sm:$0xff]
    %v11067 = vld [vmem:[%s10906 + $0x80] sm:$0xff]
    %v11068 = vld [vmem:[%s10906 + $0x98] sm:$0xff]
    %v11069 = vld [vmem:[%s10906 + $0xa0] sm:$0xff]
    %v11070 = vld [vmem:[%s10906 + $0xa8] sm:$0xff]
    %v11071 = vld [vmem:[%s10906 + $0xb0] sm:$0xff]
    %v11072 = vld [vmem:[%s2 + $0x200] sm:$0xff]
    %v11073 = vld [vmem:[%s2 + $0x208] sm:$0xff]
    %v11074 = vld [vmem:[%s2 + $0x210] sm:$0xff]
    %v11075 = vld [vmem:[%s2 + $0x218] sm:$0xff]
    %v11077 = vsel %vm27, %v11056, 0
    %v11080 = vsel %vm27, %v11057, 0
    %v11083 = vsel %vm27, %v11058, 0
    %v11086 = vsel %vm27, %v11059, 0
    %v11089 = vsel %vm27, %v11060, 0
    %v11092 = vsel %vm27, %v11061, 0
    %v11095 = vsel %vm27, %v11062, 0
    %v11098 = vsel %vm27, %v11063, 0
    %v11101 = vsel %vm27, %v11064, 0
    %v11104 = vsel %vm27, %v11065, 0
    %v11107 = vsel %vm27, %v11066, 0
    %v11110 = vsel %vm27, %v11067, 0
    %v11113 = vsel %vm27, %v11068, 0
    %v11116 = vsel %vm27, %v11069, 0
    %v11119 = vsel %vm27, %v11070, 0
    %v11122 = vsel %vm27, %v11071, 0
    %11124 = vmatpush.msra.mxu0 0.0
    %11125 = vmatpush.msra.mxu0 0.0
    %11126 = vmatpush.msra.mxu0 0.0
    %11127 = vmatpush.msra.mxu0 0.0
    %11128 = vmatpush.msra.mxu0 0.0
    %11129 = vmatpush.msra.mxu0 0.0
    %11130 = vmatpush.msra.mxu0 0.0
    %11131 = vmatpush.msra.mxu0 0.0
    %11132 = vmatpush.msra.mxu0 0.0
    %11133 = vmatpush.msra.mxu0 0.0
    %11134 = vmatpush.msra.mxu0 0.0
    %11135 = vmatpush.msra.mxu0 0.0
    %11136 = vmatpush.msra.mxu0 %v11075
    %11137 = vmatpush.msra.mxu0 %v11074
    %11138 = vmatpush.msra.mxu0 %v11073
    %11139 = vmatpush.msra.mxu0 %v11072
    %11140 = vmatmul.f32.gmra.mxu0 %v11077
    %v11141 = vpop.f32.mrf.mxu0
    %v11142 = vadd.f32 0.0, %v11141
    %11143 = vmatmul.f32.gmra.mxu0 %v11080
    %v11144 = vpop.f32.mrf.mxu0
    %v11145 = vadd.f32 0.0, %v11144
    %11146 = vmatmul.f32.gmra.mxu0 %v11083
    %v11147 = vpop.f32.mrf.mxu0
    %v11148 = vadd.f32 0.0, %v11147
    %11149 = vmatmul.f32.gmra.mxu0 %v11086
    %v11150 = vpop.f32.mrf.mxu0
    %v11151 = vadd.f32 0.0, %v11150
    %11152 = vmatmul.f32.gmra.mxu0 %v11089
    %v11153 = vpop.f32.mrf.mxu0
    %v11154 = vadd.f32 0.0, %v11153
    %11155 = vmatmul.f32.gmra.mxu0 %v11092
    %v11156 = vpop.f32.mrf.mxu0
    %v11157 = vadd.f32 0.0, %v11156
    %11158 = vmatmul.f32.gmra.mxu0 %v11095
    %v11159 = vpop.f32.mrf.mxu0
    %v11160 = vadd.f32 0.0, %v11159
    %11161 = vmatmul.f32.gmra.mxu0 %v11098
    %v11162 = vpop.f32.mrf.mxu0
    %v11163 = vadd.f32 0.0, %v11162
    %11164 = vmatmul.f32.gmra.mxu0 %v11101
    %v11165 = vpop.f32.mrf.mxu0
    %v11166 = vadd.f32 0.0, %v11165
    %11167 = vmatmul.f32.gmra.mxu0 %v11104
    %v11168 = vpop.f32.mrf.mxu0
    %v11169 = vadd.f32 0.0, %v11168
    %11170 = vmatmul.f32.gmra.mxu0 %v11107
    %v11171 = vpop.f32.mrf.mxu0
    %v11172 = vadd.f32 0.0, %v11171
    %11173 = vmatmul.f32.gmra.mxu0 %v11110
    %v11174 = vpop.f32.mrf.mxu0
    %v11175 = vadd.f32 0.0, %v11174
    %11176 = vmatmul.f32.gmra.mxu0 %v11113
    %v11177 = vpop.f32.mrf.mxu0
    %v11178 = vadd.f32 0.0, %v11177
    %11179 = vmatmul.f32.gmra.mxu0 %v11116
    %v11180 = vpop.f32.mrf.mxu0
    %v11181 = vadd.f32 0.0, %v11180
    %11182 = vmatmul.f32.gmra.mxu0 %v11119
    %v11183 = vpop.f32.mrf.mxu0
    %v11184 = vadd.f32 0.0, %v11183
    %11185 = vmatmul.f32.gmra.mxu0 %v11122
    %v11186 = vpop.f32.mrf.mxu0
    %v11187 = vadd.f32 0.0, %v11186
    %11188 = vdwg.mxu0
    %v11189 = vadd.f32 %v11040, %v11142
    %v11190 = vadd.f32 %v11041, %v11145
    %v11191 = vadd.f32 %v11042, %v11148
    %v11192 = vadd.f32 %v11043, %v11151
    %v11193 = vadd.f32 %v11044, %v11154
    %v11194 = vadd.f32 %v11045, %v11157
    %v11195 = vadd.f32 %v11046, %v11160
    %v11196 = vadd.f32 %v11047, %v11163
    %v11197 = vadd.f32 %v11048, %v11166
    %v11198 = vadd.f32 %v11049, %v11169
    %v11199 = vadd.f32 %v11050, %v11172
    %v11200 = vadd.f32 %v11051, %v11175
    %v11201 = vadd.f32 %v11052, %v11178
    %v11202 = vadd.f32 %v11053, %v11181
    %v11203 = vadd.f32 %v11054, %v11184
    %v11204 = vadd.f32 %v11055, %v11187
    %v11205 = vld [vmem:[%s10906 + $0x10] sm:$0xff]
    %v11206 = vld [vmem:[%s10906 + $0x18] sm:$0xff]
    %v11207 = vld [vmem:[%s10906 + $0x20] sm:$0xff]
    %v11208 = vld [vmem:[%s10906 + $0x28] sm:$0xff]
    %v11209 = vld [vmem:[%s10906 + $0x40] sm:$0xff]
    %v11210 = vld [vmem:[%s10906 + $0x48] sm:$0xff]
    %v11211 = vld [vmem:[%s10906 + $0x50] sm:$0xff]
    %v11212 = vld [vmem:[%s10906 + $0x58] sm:$0xff]
    %v11213 = vld [vmem:[%s10906 + $0x70] sm:$0xff]
    %v11214 = vld [vmem:[%s10906 + $0x78] sm:$0xff]
    %v11215 = vld [vmem:[%s10906 + $0x80] sm:$0xff]
    %v11216 = vld [vmem:[%s10906 + $0x88] sm:$0xff]
    %v11217 = vld [vmem:[%s10906 + $0xa0] sm:$0xff]
    %v11218 = vld [vmem:[%s10906 + $0xa8] sm:$0xff]
    %v11219 = vld [vmem:[%s10906 + $0xb0] sm:$0xff]
    %v11220 = vld [vmem:[%s10906 + $0xb8] sm:$0xff]
    %v11221 = vld [vmem:[%s2 + $0x220] sm:$0xff]
    %v11222 = vld [vmem:[%s2 + $0x228] sm:$0xff]
    %v11223 = vld [vmem:[%s2 + $0x230] sm:$0xff]
    %v11224 = vld [vmem:[%s2 + $0x238] sm:$0xff]
    %v11226 = vsel %vm27, %v11205, 0
    %v11229 = vsel %vm27, %v11206, 0
    %v11232 = vsel %vm27, %v11207, 0
    %v11235 = vsel %vm27, %v11208, 0
    %v11238 = vsel %vm27, %v11209, 0
    %v11241 = vsel %vm27, %v11210, 0
    %v11244 = vsel %vm27, %v11211, 0
    %v11247 = vsel %vm27, %v11212, 0
    %v11250 = vsel %vm27, %v11213, 0
    %v11253 = vsel %vm27, %v11214, 0
    %v11256 = vsel %vm27, %v11215, 0
    %v11259 = vsel %vm27, %v11216, 0
    %v11262 = vsel %vm27, %v11217, 0
    %v11265 = vsel %vm27, %v11218, 0
    %v11268 = vsel %vm27, %v11219, 0
    %v11271 = vsel %vm27, %v11220, 0
    %11273 = vmatpush.msra.mxu0 0.0
    %11274 = vmatpush.msra.mxu0 0.0
    %11275 = vmatpush.msra.mxu0 0.0
    %11276 = vmatpush.msra.mxu0 0.0
    %11277 = vmatpush.msra.mxu0 0.0
    %11278 = vmatpush.msra.mxu0 0.0
    %11279 = vmatpush.msra.mxu0 0.0
    %11280 = vmatpush.msra.mxu0 0.0
    %11281 = vmatpush.msra.mxu0 0.0
    %11282 = vmatpush.msra.mxu0 0.0
    %11283 = vmatpush.msra.mxu0 0.0
    %11284 = vmatpush.msra.mxu0 0.0
    %11285 = vmatpush.msra.mxu0 %v11224
    %11286 = vmatpush.msra.mxu0 %v11223
    %11287 = vmatpush.msra.mxu0 %v11222
    %11288 = vmatpush.msra.mxu0 %v11221
    %11289 = vmatmul.f32.gmra.mxu0 %v11226
    %v11290 = vpop.f32.mrf.mxu0
    %v11291 = vadd.f32 0.0, %v11290
    %11292 = vmatmul.f32.gmra.mxu0 %v11229
    %v11293 = vpop.f32.mrf.mxu0
    %v11294 = vadd.f32 0.0, %v11293
    %11295 = vmatmul.f32.gmra.mxu0 %v11232
    %v11296 = vpop.f32.mrf.mxu0
    %v11297 = vadd.f32 0.0, %v11296
    %11298 = vmatmul.f32.gmra.mxu0 %v11235
    %v11299 = vpop.f32.mrf.mxu0
    %v11300 = vadd.f32 0.0, %v11299
    %11301 = vmatmul.f32.gmra.mxu0 %v11238
    %v11302 = vpop.f32.mrf.mxu0
    %v11303 = vadd.f32 0.0, %v11302
    %11304 = vmatmul.f32.gmra.mxu0 %v11241
    %v11305 = vpop.f32.mrf.mxu0
    %v11306 = vadd.f32 0.0, %v11305
    %11307 = vmatmul.f32.gmra.mxu0 %v11244
    %v11308 = vpop.f32.mrf.mxu0
    %v11309 = vadd.f32 0.0, %v11308
    %11310 = vmatmul.f32.gmra.mxu0 %v11247
    %v11311 = vpop.f32.mrf.mxu0
    %v11312 = vadd.f32 0.0, %v11311
    %11313 = vmatmul.f32.gmra.mxu0 %v11250
    %v11314 = vpop.f32.mrf.mxu0
    %v11315 = vadd.f32 0.0, %v11314
    %11316 = vmatmul.f32.gmra.mxu0 %v11253
    %v11317 = vpop.f32.mrf.mxu0
    %v11318 = vadd.f32 0.0, %v11317
    %11319 = vmatmul.f32.gmra.mxu0 %v11256
    %v11320 = vpop.f32.mrf.mxu0
    %v11321 = vadd.f32 0.0, %v11320
    %11322 = vmatmul.f32.gmra.mxu0 %v11259
    %v11323 = vpop.f32.mrf.mxu0
    %v11324 = vadd.f32 0.0, %v11323
    %11325 = vmatmul.f32.gmra.mxu0 %v11262
    %v11326 = vpop.f32.mrf.mxu0
    %v11327 = vadd.f32 0.0, %v11326
    %11328 = vmatmul.f32.gmra.mxu0 %v11265
    %v11329 = vpop.f32.mrf.mxu0
    %v11330 = vadd.f32 0.0, %v11329
    %11331 = vmatmul.f32.gmra.mxu0 %v11268
    %v11332 = vpop.f32.mrf.mxu0
    %v11333 = vadd.f32 0.0, %v11332
    %11334 = vmatmul.f32.gmra.mxu0 %v11271
    %v11335 = vpop.f32.mrf.mxu0
    %v11336 = vadd.f32 0.0, %v11335
    %11337 = vdwg.mxu0
    %v11338 = vadd.f32 %v11189, %v11291
    %v11339 = vadd.f32 %v11190, %v11294
    %v11340 = vadd.f32 %v11191, %v11297
    %v11341 = vadd.f32 %v11192, %v11300
    %v11342 = vadd.f32 %v11193, %v11303
    %v11343 = vadd.f32 %v11194, %v11306
    %v11344 = vadd.f32 %v11195, %v11309
    %v11345 = vadd.f32 %v11196, %v11312
    %v11346 = vadd.f32 %v11197, %v11315
    %v11347 = vadd.f32 %v11198, %v11318
    %v11348 = vadd.f32 %v11199, %v11321
    %v11349 = vadd.f32 %v11200, %v11324
    %v11350 = vadd.f32 %v11201, %v11327
    %v11351 = vadd.f32 %v11202, %v11330
    %v11352 = vadd.f32 %v11203, %v11333
    %v11353 = vadd.f32 %v11204, %v11336
    %v11354 = vld [vmem:[%s3 + $0x8] sm:$0x1]
    %v11355 = vld [vmem:[%s3 + $0x9] sm:$0x1]
    %v11356 = vld [vmem:[%s3 + $0xa] sm:$0x1]
    %v11357 = vperm.slane %v11354, 0
    %v11358 = vadd.f32 %v11338, %v11357
    %v11359 = vadd.f32 %v11339, %v11357
    %v11360 = vadd.f32 %v11340, %v11357
    %v11361 = vadd.f32 %v11341, %v11357
    %v11362 = vadd.f32 %v11342, %v11357
    %v11363 = vadd.f32 %v11343, %v11357
    %v11364 = vadd.f32 %v11344, %v11357
    %v11365 = vadd.f32 %v11345, %v11357
    %v11366 = vadd.f32 %v11346, %v11357
    %v11367 = vadd.f32 %v11347, %v11357
    %v11368 = vadd.f32 %v11348, %v11357
    %v11369 = vadd.f32 %v11349, %v11357
    %v11370 = vadd.f32 %v11350, %v11357
    %v11371 = vadd.f32 %v11351, %v11357
    %v11372 = vadd.f32 %v11352, %v11357
    %v11373 = vadd.f32 %v11353, %v11357
    %v11374 = vsel %vm27, %v11358, 0.0
    %v11375 = vsel %vm27, %v11359, 0.0
    %v11376 = vadd.f32 %v11374, %v11375
    %v11377 = vsel %vm27, %v11360, 0.0
    %v11378 = vadd.f32 %v11376, %v11377
    %v11379 = vsel %vm27, %v11361, 0.0
    %v11380 = vadd.f32 %v11378, %v11379
    %v11381 = vsel %vm27, %v11362, 0.0
    %v11382 = vadd.f32 %v11380, %v11381
    %v11383 = vsel %vm27, %v11363, 0.0
    %v11384 = vadd.f32 %v11382, %v11383
    %v11385 = vsel %vm27, %v11364, 0.0
    %v11386 = vadd.f32 %v11384, %v11385
    %v11387 = vsel %vm27, %v11365, 0.0
    %v11388 = vadd.f32 %v11386, %v11387
    %v11389 = vsel %vm27, %v11366, 0.0
    %v11390 = vadd.f32 %v11388, %v11389
    %v11391 = vsel %vm27, %v11367, 0.0
    %v11392 = vadd.f32 %v11390, %v11391
    %v11393 = vsel %vm27, %v11368, 0.0
    %v11394 = vadd.f32 %v11392, %v11393
    %v11395 = vsel %vm27, %v11369, 0.0
    %v11396 = vadd.f32 %v11394, %v11395
    %v11397 = vsel %vm27, %v11370, 0.0
    %v11398 = vadd.f32 %v11396, %v11397
    %v11399 = vsel %vm27, %v11371, 0.0
    %v11400 = vadd.f32 %v11398, %v11399
    %v11401 = vsel %vm27, %v11372, 0.0
    %v11402 = vadd.f32 %v11400, %v11401
    %v11403 = vsel %vm27, %v11373, 0.0
    %v11404 = vadd.f32 %v11402, %v11403
    %v11405 = vrot.slane %v11404, 4
    %v11406 = vadd.f32 %v11404, %v11405
    %v11407 = vrot.slane %v11406, 2
    %v11408 = vadd.f32 %v11406, %v11407
    %v11409 = vrot.slane %v11408, 1
    %v11410 = vadd.f32 %v11408, %v11409
    %v11411 = vmul.f32 %v11358, %v11358
    %v11412 = vmul.f32 %v11359, %v11359
    %v11413 = vmul.f32 %v11360, %v11360
    %v11414 = vmul.f32 %v11361, %v11361
    %v11415 = vmul.f32 %v11362, %v11362
    %v11416 = vmul.f32 %v11363, %v11363
    %v11417 = vmul.f32 %v11364, %v11364
    %v11418 = vmul.f32 %v11365, %v11365
    %v11419 = vmul.f32 %v11366, %v11366
    %v11420 = vmul.f32 %v11367, %v11367
    %v11421 = vmul.f32 %v11368, %v11368
    %v11422 = vmul.f32 %v11369, %v11369
    %v11423 = vmul.f32 %v11370, %v11370
    %v11424 = vmul.f32 %v11371, %v11371
    %v11425 = vmul.f32 %v11372, %v11372
    %v11426 = vmul.f32 %v11373, %v11373
    %v11427 = vsel %vm27, %v11411, 0.0
    %v11428 = vsel %vm27, %v11412, 0.0
    %v11429 = vadd.f32 %v11427, %v11428
    %v11430 = vsel %vm27, %v11413, 0.0
    %v11431 = vadd.f32 %v11429, %v11430
    %v11432 = vsel %vm27, %v11414, 0.0
    %v11433 = vadd.f32 %v11431, %v11432
    %v11434 = vsel %vm27, %v11415, 0.0
    %v11435 = vadd.f32 %v11433, %v11434
    %v11436 = vsel %vm27, %v11416, 0.0
    %v11437 = vadd.f32 %v11435, %v11436
    %v11438 = vsel %vm27, %v11417, 0.0
    %v11439 = vadd.f32 %v11437, %v11438
    %v11440 = vsel %vm27, %v11418, 0.0
    %v11441 = vadd.f32 %v11439, %v11440
    %v11442 = vsel %vm27, %v11419, 0.0
    %v11443 = vadd.f32 %v11441, %v11442
    %v11444 = vsel %vm27, %v11420, 0.0
    %v11445 = vadd.f32 %v11443, %v11444
    %v11446 = vsel %vm27, %v11421, 0.0
    %v11447 = vadd.f32 %v11445, %v11446
    %v11448 = vsel %vm27, %v11422, 0.0
    %v11449 = vadd.f32 %v11447, %v11448
    %v11450 = vsel %vm27, %v11423, 0.0
    %v11451 = vadd.f32 %v11449, %v11450
    %v11452 = vsel %vm27, %v11424, 0.0
    %v11453 = vadd.f32 %v11451, %v11452
    %v11454 = vsel %vm27, %v11425, 0.0
    %v11455 = vadd.f32 %v11453, %v11454
    %v11456 = vsel %vm27, %v11426, 0.0
    %v11457 = vadd.f32 %v11455, %v11456
    %v11458 = vrot.slane %v11457, 4
    %v11459 = vadd.f32 %v11457, %v11458
    %v11460 = vrot.slane %v11459, 2
    %v11461 = vadd.f32 %v11459, %v11460
    %v11462 = vrot.slane %v11461, 1
    %v11463 = vadd.f32 %v11461, %v11462
    %v11464 = vmul.f32 %v11410, 0.0078125
    %v11465 = vmul.f32 %v11463, 0.0078125
    %v11466 = vmul.f32 %v11464, %v11464
    %v11467 = vsub.f32 %v11465, %v11466
    %v11468 = vsub.f32 %v11358, %v11464
    %v11469 = vsub.f32 %v11359, %v11464
    %v11470 = vsub.f32 %v11360, %v11464
    %v11471 = vsub.f32 %v11361, %v11464
    %v11472 = vsub.f32 %v11362, %v11464
    %v11473 = vsub.f32 %v11363, %v11464
    %v11474 = vsub.f32 %v11364, %v11464
    %v11475 = vsub.f32 %v11365, %v11464
    %v11476 = vsub.f32 %v11366, %v11464
    %v11477 = vsub.f32 %v11367, %v11464
    %v11478 = vsub.f32 %v11368, %v11464
    %v11479 = vsub.f32 %v11369, %v11464
    %v11480 = vsub.f32 %v11370, %v11464
    %v11481 = vsub.f32 %v11371, %v11464
    %v11482 = vsub.f32 %v11372, %v11464
    %v11483 = vsub.f32 %v11373, %v11464
    %v11484 = vadd.f32 %v11467, 1e-05
    %v11485 = vrsqrt.pop %v11484
    %v11486 = vmul.f32 %v11485, %v11484
    %v11487 = vmul.f32 %v11486, %v11485
    %v11488 = vmul.f32 0.5, %v11487
    %v11489 = vsub.f32 1.5, %v11488
    %v11490 = vmul.f32 %v11485, %v11489
    %vm11491 = vweird.f32 %v11484
    %vm11492 = vweird.f32 %v11485
    %vm11493 = vmor %vm11491, %vm11492
    %v11494 = vsel %vm11493, %v11485, %v11490
    %v11495 = vmul.f32 %v11468, %v11494
    %v11496 = vmul.f32 %v11469, %v11494
    %v11497 = vmul.f32 %v11470, %v11494
    %v11498 = vmul.f32 %v11471, %v11494
    %v11499 = vmul.f32 %v11472, %v11494
    %v11500 = vmul.f32 %v11473, %v11494
    %v11501 = vmul.f32 %v11474, %v11494
    %v11502 = vmul.f32 %v11475, %v11494
    %v11503 = vmul.f32 %v11476, %v11494
    %v11504 = vmul.f32 %v11477, %v11494
    %v11505 = vmul.f32 %v11478, %v11494
    %v11506 = vmul.f32 %v11479, %v11494
    %v11507 = vmul.f32 %v11480, %v11494
    %v11508 = vmul.f32 %v11481, %v11494
    %v11509 = vmul.f32 %v11482, %v11494
    %v11510 = vmul.f32 %v11483, %v11494
    %v11511 = vperm.slane %v11355, 0
    %v11512 = vmul.f32 %v11495, %v11511
    %v11513 = vmul.f32 %v11496, %v11511
    %v11514 = vmul.f32 %v11497, %v11511
    %v11515 = vmul.f32 %v11498, %v11511
    %v11516 = vmul.f32 %v11499, %v11511
    %v11517 = vmul.f32 %v11500, %v11511
    %v11518 = vmul.f32 %v11501, %v11511
    %v11519 = vmul.f32 %v11502, %v11511
    %v11520 = vmul.f32 %v11503, %v11511
    %v11521 = vmul.f32 %v11504, %v11511
    %v11522 = vmul.f32 %v11505, %v11511
    %v11523 = vmul.f32 %v11506, %v11511
    %v11524 = vmul.f32 %v11507, %v11511
    %v11525 = vmul.f32 %v11508, %v11511
    %v11526 = vmul.f32 %v11509, %v11511
    %v11527 = vmul.f32 %v11510, %v11511
    %v11528 = vperm.slane %v11356, 0
    %v11529 = vadd.f32 %v11512, %v11528
    %v11530 = vadd.f32 %v11513, %v11528
    %v11531 = vadd.f32 %v11514, %v11528
    %v11532 = vadd.f32 %v11515, %v11528
    %v11533 = vadd.f32 %v11516, %v11528
    %v11534 = vadd.f32 %v11517, %v11528
    %v11535 = vadd.f32 %v11518, %v11528
    %v11536 = vadd.f32 %v11519, %v11528
    %v11537 = vadd.f32 %v11520, %v11528
    %v11538 = vadd.f32 %v11521, %v11528
    %v11539 = vadd.f32 %v11522, %v11528
    %v11540 = vadd.f32 %v11523, %v11528
    %v11541 = vadd.f32 %v11524, %v11528
    %v11542 = vadd.f32 %v11525, %v11528
    %v11543 = vadd.f32 %v11526, %v11528
    %v11544 = vadd.f32 %v11527, %v11528
    %v11545 = vmax.f32 %v11529, 0.0
    %v11546 = vmax.f32 %v11530, 0.0
    %v11547 = vmax.f32 %v11531, 0.0
    %v11548 = vmax.f32 %v11532, 0.0
    %v11549 = vmax.f32 %v11533, 0.0
    %v11550 = vmax.f32 %v11534, 0.0
    %v11551 = vmax.f32 %v11535, 0.0
    %v11552 = vmax.f32 %v11536, 0.0
    %v11553 = vmax.f32 %v11537, 0.0
    %v11554 = vmax.f32 %v11538, 0.0
    %v11555 = vmax.f32 %v11539, 0.0
    %v11556 = vmax.f32 %v11540, 0.0
    %v11557 = vmax.f32 %v11541, 0.0
    %v11558 = vmax.f32 %v11542, 0.0
    %v11559 = vmax.f32 %v11543, 0.0
    %v11560 = vmax.f32 %v11544, 0.0
    %v11561 = vmax.f32 %v11545, %v11546
    %v11562 = vmax.f32 %v11547, %v11548
    %v11563 = vmax.f32 %v11553, %v11554
    %v11564 = vmax.f32 %v11555, %v11556
    %v11565 = vmax.f32 %v11549, %v11550
    %v11566 = vmax.f32 %v11551, %v11552
    %v11567 = vmax.f32 %v11557, %v11558
    %v11568 = vmax.f32 %v11559, %v11560
    %v11569 = vmax.f32 %v11561, %v11565
    %v11570 = vmax.f32 %v11562, %v11566
    %v11571 = vmax.f32 %v11563, %v11567
    %v11572 = vmax.f32 %v11564, %v11568
    %v11573 = vld [vmem:[%s4] sm:$0x1]
    %v11574 = vperm.slane %v11573, 0
    %v11575 = vmul.f32 %v11569, %v11574
    %v11576 = vmul.f32 %v11570, %v11574
    %v11577 = vmul.f32 %v11571, %v11574
    %v11578 = vmul.f32 %v11572, %v11574
    %v11579 = vld [vmem:[%s4 + $0x1] sm:$0x1]
    %v11580 = vperm.slane %v11579, 0
    %v11581 = vadd.f32 %v11575, %v11580
    %v11582 = vadd.f32 %v11576, %v11580
    %v11583 = vadd.f32 %v11577, %v11580
    %v11584 = vadd.f32 %v11578, %v11580
    %s11585 = scalar_lea.vmem [#allocation4], 32
    %11586 = vst.msk [vmem:[%s11585 + $0x8] sm:$0xff] %vm27, %v11581
    %11587 = vst.msk [vmem:[%s11585 + $0x10] sm:$0xff] %vm27, %v11582
    %11588 = vst.msk [vmem:[%s11585 + $0x28] sm:$0xff] %vm27, %v11583
    %11589 = vst.msk [vmem:[%s11585 + $0x30] sm:$0xff] %vm27, %v11584
    %v11590 = vld [vmem:[#allocation4] sm:$0xff]
    %v11591 = vld [vmem:[#allocation4 + $0x8] sm:$0xff]
    %v11592 = vld [vmem:[#allocation4 + $0x20] sm:$0xff]
    %v11593 = vld [vmem:[#allocation4 + $0x28] sm:$0xff]
    %v11594 = vld [vmem:[%s2 + $0x240] sm:$0xff]
    %v11595 = vld [vmem:[%s2 + $0x248] sm:$0xff]
    %v11596 = vld [vmem:[%s2 + $0x250] sm:$0xff]
    %v11597 = vld [vmem:[%s2 + $0x258] sm:$0xff]
    %v11598 = vld [vmem:[#allocation4 + $0x10] sm:$0xff]
    %v11599 = vld [vmem:[#allocation4 + $0x30] sm:$0xff]
    %v11600 = vld [vmem:[%s2 + $0x260] sm:$0xff]
    %v11601 = vld [vmem:[%s2 + $0x268] sm:$0xff]
    %v11602 = vld [vmem:[%s2 + $0x270] sm:$0xff]
    %v11603 = vld [vmem:[%s2 + $0x278] sm:$0xff]
    %v11605 = vsel %vm27, %v11591, 0
    %v11608 = vsel %vm27, %v11598, 0
    %v11611 = vsel %vm27, %v11593, 0
    %v11614 = vsel %vm27, %v11599, 0
    %11616 = vmatpush.msra.mxu0 0.0
    %11617 = vmatpush.msra.mxu0 0.0
    %11618 = vmatpush.msra.mxu0 0.0
    %11619 = vmatpush.msra.mxu0 0.0
    %11620 = vmatpush.msra.mxu0 0.0
    %11621 = vmatpush.msra.mxu0 0.0
    %11622 = vmatpush.msra.mxu0 0.0
    %11623 = vmatpush.msra.mxu0 0.0
    %11624 = vmatpush.msra.mxu0 0.0
    %11625 = vmatpush.msra.mxu0 0.0
    %11626 = vmatpush.msra.mxu0 0.0
    %11627 = vmatpush.msra.mxu0 0.0
    %11628 = vmatpush.msra.mxu0 %v11603
    %11629 = vmatpush.msra.mxu0 %v11602
    %11630 = vmatpush.msra.mxu0 %v11601
    %11631 = vmatpush.msra.mxu0 %v11600
    %11632 = vmatmul.f32.gmra.mxu0 %v11605
    %v11633 = vpop.f32.mrf.mxu0
    %v11634 = vadd.f32 0.0, %v11633
    %11635 = vmatmul.f32.gmra.mxu0 %v11608
    %v11636 = vpop.f32.mrf.mxu0
    %v11637 = vadd.f32 0.0, %v11636
    %11638 = vmatmul.f32.gmra.mxu0 %v11611
    %v11639 = vpop.f32.mrf.mxu0
    %v11640 = vadd.f32 0.0, %v11639
    %11641 = vmatmul.f32.gmra.mxu0 %v11614
    %v11642 = vpop.f32.mrf.mxu0
    %v11643 = vadd.f32 0.0, %v11642
    %11644 = vdwg.mxu0
    %v11646 = vsel %vm27, %v11590, 0
    %v11649 = vsel %vm27, %v11592, 0
    %11651 = vmatpush.msra.mxu0 0.0
    %11652 = vmatpush.msra.mxu0 0.0
    %11653 = vmatpush.msra.mxu0 0.0
    %11654 = vmatpush.msra.mxu0 0.0
    %11655 = vmatpush.msra.mxu0 0.0
    %11656 = vmatpush.msra.mxu0 0.0
    %11657 = vmatpush.msra.mxu0 0.0
    %11658 = vmatpush.msra.mxu0 0.0
    %11659 = vmatpush.msra.mxu0 0.0
    %11660 = vmatpush.msra.mxu0 0.0
    %11661 = vmatpush.msra.mxu0 0.0
    %11662 = vmatpush.msra.mxu0 0.0
    %11663 = vmatpush.msra.mxu0 %v11597
    %11664 = vmatpush.msra.mxu0 %v11596
    %11665 = vmatpush.msra.mxu0 %v11595
    %11666 = vmatpush.msra.mxu0 %v11594
    %11667 = vmatmul.f32.gmra.mxu0 %v11646
    %v11668 = vpop.f32.mrf.mxu0
    %v11669 = vadd.f32 %v11634, %v11668
    %11670 = vmatmul.f32.gmra.mxu0 %v11605
    %v11671 = vpop.f32.mrf.mxu0
    %v11672 = vadd.f32 %v11637, %v11671
    %11673 = vmatmul.f32.gmra.mxu0 %v11649
    %v11674 = vpop.f32.mrf.mxu0
    %v11675 = vadd.f32 %v11640, %v11674
    %11676 = vmatmul.f32.gmra.mxu0 %v11611
    %v11677 = vpop.f32.mrf.mxu0
    %v11678 = vadd.f32 %v11643, %v11677
    %11679 = vdwg.mxu0
    %v11680 = vld [vmem:[#allocation4 + $0x10] sm:$0xff]
    %v11681 = vld [vmem:[#allocation4 + $0x18] sm:$0xff]
    %v11682 = vld [vmem:[#allocation4 + $0x30] sm:$0xff]
    %v11683 = vld [vmem:[#allocation4 + $0x38] sm:$0xff]
    %v11684 = vld [vmem:[%s2 + $0x280] sm:$0xff]
    %v11685 = vld [vmem:[%s2 + $0x288] sm:$0xff]
    %v11686 = vld [vmem:[%s2 + $0x290] sm:$0xff]
    %v11687 = vld [vmem:[%s2 + $0x298] sm:$0xff]
    %v11689 = vsel %vm27, %v11680, 0
    %v11692 = vsel %vm27, %v11681, 0
    %v11695 = vsel %vm27, %v11682, 0
    %v11698 = vsel %vm27, %v11683, 0
    %11700 = vmatpush.msra.mxu0 0.0
    %11701 = vmatpush.msra.mxu0 0.0
    %11702 = vmatpush.msra.mxu0 0.0
    %11703 = vmatpush.msra.mxu0 0.0
    %11704 = vmatpush.msra.mxu0 0.0
    %11705 = vmatpush.msra.mxu0 0.0
    %11706 = vmatpush.msra.mxu0 0.0
    %11707 = vmatpush.msra.mxu0 0.0
    %11708 = vmatpush.msra.mxu0 0.0
    %11709 = vmatpush.msra.mxu0 0.0
    %11710 = vmatpush.msra.mxu0 0.0
    %11711 = vmatpush.msra.mxu0 0.0
    %11712 = vmatpush.msra.mxu0 %v11687
    %11713 = vmatpush.msra.mxu0 %v11686
    %11714 = vmatpush.msra.mxu0 %v11685
    %11715 = vmatpush.msra.mxu0 %v11684
    %11716 = vmatmul.f32.gmra.mxu0 %v11689
    %v11717 = vpop.f32.mrf.mxu0
    %v11718 = vadd.f32 0.0, %v11717
    %11719 = vmatmul.f32.gmra.mxu0 %v11692
    %v11720 = vpop.f32.mrf.mxu0
    %v11721 = vadd.f32 0.0, %v11720
    %11722 = vmatmul.f32.gmra.mxu0 %v11695
    %v11723 = vpop.f32.mrf.mxu0
    %v11724 = vadd.f32 0.0, %v11723
    %11725 = vmatmul.f32.gmra.mxu0 %v11698
    %v11726 = vpop.f32.mrf.mxu0
    %v11727 = vadd.f32 0.0, %v11726
    %11728 = vdwg.mxu0
    %v11729 = vadd.f32 %v11669, %v11718
    %v11730 = vadd.f32 %v11672, %v11721
    %v11731 = vadd.f32 %v11675, %v11724
    %v11732 = vadd.f32 %v11678, %v11727
    %v11733 = vld [vmem:[%s11585] sm:$0xff]
    %v11734 = vld [vmem:[%s11585 + $0x8] sm:$0xff]
    %v11735 = vld [vmem:[%s11585 + $0x20] sm:$0xff]
    %v11736 = vld [vmem:[%s11585 + $0x28] sm:$0xff]
    %v11737 = vld [vmem:[%s2 + $0x2a0] sm:$0xff]
    %v11738 = vld [vmem:[%s2 + $0x2a8] sm:$0xff]
    %v11739 = vld [vmem:[%s2 + $0x2b0] sm:$0xff]
    %v11740 = vld [vmem:[%s2 + $0x2b8] sm:$0xff]
    %v11742 = vsel %vm27, %v11733, 0
    %v11745 = vsel %vm27, %v11734, 0
    %v11748 = vsel %vm27, %v11735, 0
    %v11751 = vsel %vm27, %v11736, 0
    %11753 = vmatpush.msra.mxu0 0.0
    %11754 = vmatpush.msra.mxu0 0.0
    %11755 = vmatpush.msra.mxu0 0.0
    %11756 = vmatpush.msra.mxu0 0.0
    %11757 = vmatpush.msra.mxu0 0.0
    %11758 = vmatpush.msra.mxu0 0.0
    %11759 = vmatpush.msra.mxu0 0.0
    %11760 = vmatpush.msra.mxu0 0.0
    %11761 = vmatpush.msra.mxu0 0.0
    %11762 = vmatpush.msra.mxu0 0.0
    %11763 = vmatpush.msra.mxu0 0.0
    %11764 = vmatpush.msra.mxu0 0.0
    %11765 = vmatpush.msra.mxu0 %v11740
    %11766 = vmatpush.msra.mxu0 %v11739
    %11767 = vmatpush.msra.mxu0 %v11738
    %11768 = vmatpush.msra.mxu0 %v11737
    %11769 = vmatmul.f32.gmra.mxu0 %v11742
    %v11770 = vpop.f32.mrf.mxu0
    %v11771 = vadd.f32 0.0, %v11770
    %11772 = vmatmul.f32.gmra.mxu0 %v11745
    %v11773 = vpop.f32.mrf.mxu0
    %v11774 = vadd.f32 0.0, %v11773
    %11775 = vmatmul.f32.gmra.mxu0 %v11748
    %v11776 = vpop.f32.mrf.mxu0
    %v11777 = vadd.f32 0.0, %v11776
    %11778 = vmatmul.f32.gmra.mxu0 %v11751
    %v11779 = vpop.f32.mrf.mxu0
    %v11780 = vadd.f32 0.0, %v11779
    %11781 = vdwg.mxu0
    %v11782 = vadd.f32 %v11729, %v11771
    %v11783 = vadd.f32 %v11730, %v11774
    %v11784 = vadd.f32 %v11731, %v11777
    %v11785 = vadd.f32 %v11732, %v11780
    %v11786 = vld [vmem:[%s11585 + $0x8] sm:$0xff]
    %v11787 = vld [vmem:[%s11585 + $0x10] sm:$0xff]
    %v11788 = vld [vmem:[%s11585 + $0x28] sm:$0xff]
    %v11789 = vld [vmem:[%s11585 + $0x30] sm:$0xff]
    %v11790 = vld [vmem:[%s2 + $0x2c0] sm:$0xff]
    %v11791 = vld [vmem:[%s2 + $0x2c8] sm:$0xff]
    %v11792 = vld [vmem:[%s2 + $0x2d0] sm:$0xff]
    %v11793 = vld [vmem:[%s2 + $0x2d8] sm:$0xff]
    %v11795 = vsel %vm27, %v11786, 0
    %v11798 = vsel %vm27, %v11787, 0
    %v11801 = vsel %vm27, %v11788, 0
    %v11804 = vsel %vm27, %v11789, 0
    %11806 = vmatpush.msra.mxu0 0.0
    %11807 = vmatpush.msra.mxu0 0.0
    %11808 = vmatpush.msra.mxu0 0.0
    %11809 = vmatpush.msra.mxu0 0.0
    %11810 = vmatpush.msra.mxu0 0.0
    %11811 = vmatpush.msra.mxu0 0.0
    %11812 = vmatpush.msra.mxu0 0.0
    %11813 = vmatpush.msra.mxu0 0.0
    %11814 = vmatpush.msra.mxu0 0.0
    %11815 = vmatpush.msra.mxu0 0.0
    %11816 = vmatpush.msra.mxu0 0.0
    %11817 = vmatpush.msra.mxu0 0.0
    %11818 = vmatpush.msra.mxu0 %v11793
    %11819 = vmatpush.msra.mxu0 %v11792
    %11820 = vmatpush.msra.mxu0 %v11791
    %11821 = vmatpush.msra.mxu0 %v11790
    %11822 = vmatmul.f32.gmra.mxu0 %v11795
    %v11823 = vpop.f32.mrf.mxu0
    %v11824 = vadd.f32 0.0, %v11823
    %11825 = vmatmul.f32.gmra.mxu0 %v11798
    %v11826 = vpop.f32.mrf.mxu0
    %v11827 = vadd.f32 0.0, %v11826
    %11828 = vmatmul.f32.gmra.mxu0 %v11801
    %v11829 = vpop.f32.mrf.mxu0
    %v11830 = vadd.f32 0.0, %v11829
    %11831 = vmatmul.f32.gmra.mxu0 %v11804
    %v11832 = vpop.f32.mrf.mxu0
    %v11833 = vadd.f32 0.0, %v11832
    %11834 = vdwg.mxu0
    %v11835 = vadd.f32 %v11782, %v11824
    %v11836 = vadd.f32 %v11783, %v11827
    %v11837 = vadd.f32 %v11784, %v11830
    %v11838 = vadd.f32 %v11785, %v11833
    %v11839 = vld [vmem:[%s11585 + $0x10] sm:$0xff]
    %v11840 = vld [vmem:[%s11585 + $0x18] sm:$0xff]
    %v11841 = vld [vmem:[%s11585 + $0x30] sm:$0xff]
    %v11842 = vld [vmem:[%s11585 + $0x38] sm:$0xff]
    %v11843 = vld [vmem:[%s2 + $0x2e0] sm:$0xff]
    %v11844 = vld [vmem:[%s2 + $0x2e8] sm:$0xff]
    %v11845 = vld [vmem:[%s2 + $0x2f0] sm:$0xff]
    %v11846 = vld [vmem:[%s2 + $0x2f8] sm:$0xff]
    %v11848 = vsel %vm27, %v11839, 0
    %v11851 = vsel %vm27, %v11840, 0
    %v11854 = vsel %vm27, %v11841, 0
    %v11857 = vsel %vm27, %v11842, 0
    %11859 = vmatpush.msra.mxu0 0.0
    %11860 = vmatpush.msra.mxu0 0.0
    %11861 = vmatpush.msra.mxu0 0.0
    %11862 = vmatpush.msra.mxu0 0.0
    %11863 = vmatpush.msra.mxu0 0.0
    %11864 = vmatpush.msra.mxu0 0.0
    %11865 = vmatpush.msra.mxu0 0.0
    %11866 = vmatpush.msra.mxu0 0.0
    %11867 = vmatpush.msra.mxu0 0.0
    %11868 = vmatpush.msra.mxu0 0.0
    %11869 = vmatpush.msra.mxu0 0.0
    %11870 = vmatpush.msra.mxu0 0.0
    %11871 = vmatpush.msra.mxu0 %v11846
    %11872 = vmatpush.msra.mxu0 %v11845
    %11873 = vmatpush.msra.mxu0 %v11844
    %11874 = vmatpush.msra.mxu0 %v11843
    %11875 = vmatmul.f32.gmra.mxu0 %v11848
    %v11876 = vpop.f32.mrf.mxu0
    %v11877 = vadd.f32 0.0, %v11876
    %11878 = vmatmul.f32.gmra.mxu0 %v11851
    %v11879 = vpop.f32.mrf.mxu0
    %v11880 = vadd.f32 0.0, %v11879
    %11881 = vmatmul.f32.gmra.mxu0 %v11854
    %v11882 = vpop.f32.mrf.mxu0
    %v11883 = vadd.f32 0.0, %v11882
    %11884 = vmatmul.f32.gmra.mxu0 %v11857
    %v11885 = vpop.f32.mrf.mxu0
    %v11886 = vadd.f32 0.0, %v11885
    %11887 = vdwg.mxu0
    %v11888 = vadd.f32 %v11835, %v11877
    %v11889 = vadd.f32 %v11836, %v11880
    %v11890 = vadd.f32 %v11837, %v11883
    %v11891 = vadd.f32 %v11838, %v11886
    %s11892 = scalar_lea.vmem [#allocation4], 64
    %v11893 = vld [vmem:[%s11892] sm:$0xff]
    %v11894 = vld [vmem:[%s11892 + $0x8] sm:$0xff]
    %v11895 = vld [vmem:[%s11892 + $0x20] sm:$0xff]
    %v11896 = vld [vmem:[%s11892 + $0x28] sm:$0xff]
    %v11897 = vld [vmem:[%s2 + $0x300] sm:$0xff]
    %v11898 = vld [vmem:[%s2 + $0x308] sm:$0xff]
    %v11899 = vld [vmem:[%s2 + $0x310] sm:$0xff]
    %v11900 = vld [vmem:[%s2 + $0x318] sm:$0xff]
    %v11902 = vsel %vm27, %v11893, 0
    %v11905 = vsel %vm27, %v11894, 0
    %v11908 = vsel %vm27, %v11895, 0
    %v11911 = vsel %vm27, %v11896, 0
    %11913 = vmatpush.msra.mxu0 0.0
    %11914 = vmatpush.msra.mxu0 0.0
    %11915 = vmatpush.msra.mxu0 0.0
    %11916 = vmatpush.msra.mxu0 0.0
    %11917 = vmatpush.msra.mxu0 0.0
    %11918 = vmatpush.msra.mxu0 0.0
    %11919 = vmatpush.msra.mxu0 0.0
    %11920 = vmatpush.msra.mxu0 0.0
    %11921 = vmatpush.msra.mxu0 0.0
    %11922 = vmatpush.msra.mxu0 0.0
    %11923 = vmatpush.msra.mxu0 0.0
    %11924 = vmatpush.msra.mxu0 0.0
    %11925 = vmatpush.msra.mxu0 %v11900
    %11926 = vmatpush.msra.mxu0 %v11899
    %11927 = vmatpush.msra.mxu0 %v11898
    %11928 = vmatpush.msra.mxu0 %v11897
    %11929 = vmatmul.f32.gmra.mxu0 %v11902
    %v11930 = vpop.f32.mrf.mxu0
    %v11931 = vadd.f32 0.0, %v11930
    %11932 = vmatmul.f32.gmra.mxu0 %v11905
    %v11933 = vpop.f32.mrf.mxu0
    %v11934 = vadd.f32 0.0, %v11933
    %11935 = vmatmul.f32.gmra.mxu0 %v11908
    %v11936 = vpop.f32.mrf.mxu0
    %v11937 = vadd.f32 0.0, %v11936
    %11938 = vmatmul.f32.gmra.mxu0 %v11911
    %v11939 = vpop.f32.mrf.mxu0
    %v11940 = vadd.f32 0.0, %v11939
    %11941 = vdwg.mxu0
    %v11942 = vadd.f32 %v11888, %v11931
    %v11943 = vadd.f32 %v11889, %v11934
    %v11944 = vadd.f32 %v11890, %v11937
    %v11945 = vadd.f32 %v11891, %v11940
    %v11946 = vld [vmem:[%s11892 + $0x8] sm:$0xff]
    %v11947 = vld [vmem:[%s11892 + $0x10] sm:$0xff]
    %v11948 = vld [vmem:[%s11892 + $0x28] sm:$0xff]
    %v11949 = vld [vmem:[%s11892 + $0x30] sm:$0xff]
    %v11950 = vld [vmem:[%s2 + $0x320] sm:$0xff]
    %v11951 = vld [vmem:[%s2 + $0x328] sm:$0xff]
    %v11952 = vld [vmem:[%s2 + $0x330] sm:$0xff]
    %v11953 = vld [vmem:[%s2 + $0x338] sm:$0xff]
    %v11955 = vsel %vm27, %v11946, 0
    %v11958 = vsel %vm27, %v11947, 0
    %v11961 = vsel %vm27, %v11948, 0
    %v11964 = vsel %vm27, %v11949, 0
    %11966 = vmatpush.msra.mxu0 0.0
    %11967 = vmatpush.msra.mxu0 0.0
    %11968 = vmatpush.msra.mxu0 0.0
    %11969 = vmatpush.msra.mxu0 0.0
    %11970 = vmatpush.msra.mxu0 0.0
    %11971 = vmatpush.msra.mxu0 0.0
    %11972 = vmatpush.msra.mxu0 0.0
    %11973 = vmatpush.msra.mxu0 0.0
    %11974 = vmatpush.msra.mxu0 0.0
    %11975 = vmatpush.msra.mxu0 0.0
    %11976 = vmatpush.msra.mxu0 0.0
    %11977 = vmatpush.msra.mxu0 0.0
    %11978 = vmatpush.msra.mxu0 %v11953
    %11979 = vmatpush.msra.mxu0 %v11952
    %11980 = vmatpush.msra.mxu0 %v11951
    %11981 = vmatpush.msra.mxu0 %v11950
    %11982 = vmatmul.f32.gmra.mxu0 %v11955
    %v11983 = vpop.f32.mrf.mxu0
    %v11984 = vadd.f32 0.0, %v11983
    %11985 = vmatmul.f32.gmra.mxu0 %v11958
    %v11986 = vpop.f32.mrf.mxu0
    %v11987 = vadd.f32 0.0, %v11986
    %11988 = vmatmul.f32.gmra.mxu0 %v11961
    %v11989 = vpop.f32.mrf.mxu0
    %v11990 = vadd.f32 0.0, %v11989
    %11991 = vmatmul.f32.gmra.mxu0 %v11964
    %v11992 = vpop.f32.mrf.mxu0
    %v11993 = vadd.f32 0.0, %v11992
    %11994 = vdwg.mxu0
    %v11995 = vadd.f32 %v11942, %v11984
    %v11996 = vadd.f32 %v11943, %v11987
    %v11997 = vadd.f32 %v11944, %v11990
    %v11998 = vadd.f32 %v11945, %v11993
    %v11999 = vld [vmem:[%s11892 + $0x10] sm:$0xff]
    %v12000 = vld [vmem:[%s11892 + $0x18] sm:$0xff]
    %v12001 = vld [vmem:[%s11892 + $0x30] sm:$0xff]
    %v12002 = vld [vmem:[%s11892 + $0x38] sm:$0xff]
    %v12003 = vld [vmem:[%s2 + $0x340] sm:$0xff]
    %v12004 = vld [vmem:[%s2 + $0x348] sm:$0xff]
    %v12005 = vld [vmem:[%s2 + $0x350] sm:$0xff]
    %v12006 = vld [vmem:[%s2 + $0x358] sm:$0xff]
    %v12008 = vsel %vm27, %v11999, 0
    %v12011 = vsel %vm27, %v12000, 0
    %v12014 = vsel %vm27, %v12001, 0
    %v12017 = vsel %vm27, %v12002, 0
    %12019 = vmatpush.msra.mxu0 0.0
    %12020 = vmatpush.msra.mxu0 0.0
    %12021 = vmatpush.msra.mxu0 0.0
    %12022 = vmatpush.msra.mxu0 0.0
    %12023 = vmatpush.msra.mxu0 0.0
    %12024 = vmatpush.msra.mxu0 0.0
    %12025 = vmatpush.msra.mxu0 0.0
    %12026 = vmatpush.msra.mxu0 0.0
    %12027 = vmatpush.msra.mxu0 0.0
    %12028 = vmatpush.msra.mxu0 0.0
    %12029 = vmatpush.msra.mxu0 0.0
    %12030 = vmatpush.msra.mxu0 0.0
    %12031 = vmatpush.msra.mxu0 %v12006
    %12032 = vmatpush.msra.mxu0 %v12005
    %12033 = vmatpush.msra.mxu0 %v12004
    %12034 = vmatpush.msra.mxu0 %v12003
    %12035 = vmatmul.f32.gmra.mxu0 %v12008
    %v12036 = vpop.f32.mrf.mxu0
    %v12037 = vadd.f32 0.0, %v12036
    %12038 = vmatmul.f32.gmra.mxu0 %v12011
    %v12039 = vpop.f32.mrf.mxu0
    %v12040 = vadd.f32 0.0, %v12039
    %12041 = vmatmul.f32.gmra.mxu0 %v12014
    %v12042 = vpop.f32.mrf.mxu0
    %v12043 = vadd.f32 0.0, %v12042
    %12044 = vmatmul.f32.gmra.mxu0 %v12017
    %v12045 = vpop.f32.mrf.mxu0
    %v12046 = vadd.f32 0.0, %v12045
    %12047 = vdwg.mxu0
    %v12048 = vadd.f32 %v11995, %v12037
    %v12049 = vadd.f32 %v11996, %v12040
    %v12050 = vadd.f32 %v11997, %v12043
    %v12051 = vadd.f32 %v11998, %v12046
    %v12052 = vld [vmem:[%s3 + $0xc] sm:$0x1]
    %v12053 = vld [vmem:[%s3 + $0xd] sm:$0x1]
    %v12054 = vld [vmem:[%s3 + $0xe] sm:$0x1]
    %v12055 = vperm.slane %v12052, 0
    %v12056 = vadd.f32 %v12048, %v12055
    %v12057 = vadd.f32 %v12049, %v12055
    %v12058 = vadd.f32 %v12050, %v12055
    %v12059 = vadd.f32 %v12051, %v12055
    %v12060 = vsel %vm27, %v12056, 0.0
    %v12061 = vsel %vm27, %v12057, 0.0
    %v12062 = vadd.f32 %v12060, %v12061
    %v12063 = vsel %vm27, %v12058, 0.0
    %v12064 = vadd.f32 %v12062, %v12063
    %v12065 = vsel %vm27, %v12059, 0.0
    %v12066 = vadd.f32 %v12064, %v12065
    %v12067 = vrot.slane %v12066, 4
    %v12068 = vadd.f32 %v12066, %v12067
    %v12069 = vrot.slane %v12068, 2
    %v12070 = vadd.f32 %v12068, %v12069
    %v12071 = vrot.slane %v12070, 1
    %v12072 = vadd.f32 %v12070, %v12071
    %v12073 = vmul.f32 %v12056, %v12056
    %v12074 = vmul.f32 %v12057, %v12057
    %v12075 = vmul.f32 %v12058, %v12058
    %v12076 = vmul.f32 %v12059, %v12059
    %v12077 = vsel %vm27, %v12073, 0.0
    %v12078 = vsel %vm27, %v12074, 0.0
    %v12079 = vadd.f32 %v12077, %v12078
    %v12080 = vsel %vm27, %v12075, 0.0
    %v12081 = vadd.f32 %v12079, %v12080
    %v12082 = vsel %vm27, %v12076, 0.0
    %v12083 = vadd.f32 %v12081, %v12082
    %v12084 = vrot.slane %v12083, 4
    %v12085 = vadd.f32 %v12083, %v12084
    %v12086 = vrot.slane %v12085, 2
    %v12087 = vadd.f32 %v12085, %v12086
    %v12088 = vrot.slane %v12087, 1
    %v12089 = vadd.f32 %v12087, %v12088
    %v12090 = vmul.f32 %v12072, 0.03125
    %v12091 = vmul.f32 %v12089, 0.03125
    %v12092 = vmul.f32 %v12090, %v12090
    %v12093 = vsub.f32 %v12091, %v12092
    %v12094 = vsub.f32 %v12056, %v12090
    %v12095 = vsub.f32 %v12057, %v12090
    %v12096 = vsub.f32 %v12058, %v12090
    %v12097 = vsub.f32 %v12059, %v12090
    %v12098 = vadd.f32 %v12093, 1e-05
    %v12099 = vrsqrt.pop %v12098
    %v12100 = vmul.f32 %v12099, %v12098
    %v12101 = vmul.f32 %v12100, %v12099
    %v12102 = vmul.f32 0.5, %v12101
    %v12103 = vsub.f32 1.5, %v12102
    %v12104 = vmul.f32 %v12099, %v12103
    %vm12105 = vweird.f32 %v12098
    %vm12106 = vweird.f32 %v12099
    %vm12107 = vmor %vm12105, %vm12106
    %v12108 = vsel %vm12107, %v12099, %v12104
    %v12109 = vmul.f32 %v12094, %v12108
    %v12110 = vmul.f32 %v12095, %v12108
    %v12111 = vmul.f32 %v12096, %v12108
    %v12112 = vmul.f32 %v12097, %v12108
    %v12113 = vperm.slane %v12053, 0
    %v12114 = vmul.f32 %v12109, %v12113
    %v12115 = vmul.f32 %v12110, %v12113
    %v12116 = vmul.f32 %v12111, %v12113
    %v12117 = vmul.f32 %v12112, %v12113
    %v12118 = vperm.slane %v12054, 0
    %v12119 = vadd.f32 %v12114, %v12118
    %v12120 = vadd.f32 %v12115, %v12118
    %v12121 = vadd.f32 %v12116, %v12118
    %v12122 = vadd.f32 %v12117, %v12118
    %v12123 = vmax.f32 %v12119, 0.0
    %v12124 = vmax.f32 %v12120, 0.0
    %v12125 = vmax.f32 %v12121, 0.0
    %v12126 = vmax.f32 %v12122, 0.0
    %v12127 = vmax.f32 %v12123, %v12124
    %v12128 = vmax.f32 %v12125, %v12126
    %v12129 = vmax.f32 %v12127, %v12128
    %v12130 = vld [vmem:[%s5] sm:$0xff]
    %v12131 = vld [vmem:[%s5 + $0x8] sm:$0xff]
    %v12132 = vld [vmem:[%s5 + $0x10] sm:$0xff]
    %v12133 = vld [vmem:[%s5 + $0x18] sm:$0xff]
    %v12134 = vld [vmem:[%s6] sm:$0x1]
    %v12136 = vperm.slane %v12134, 0
    %v12139 = vsel %vm27, %v12129, 0
    %12141 = vmatpush.msra.mxu0 0.0
    %12142 = vmatpush.msra.mxu0 0.0
    %12143 = vmatpush.msra.mxu0 0.0
    %12144 = vmatpush.msra.mxu0 0.0
    %12145 = vmatpush.msra.mxu0 0.0
    %12146 = vmatpush.msra.mxu0 0.0
    %12147 = vmatpush.msra.mxu0 0.0
    %12148 = vmatpush.msra.mxu0 0.0
    %12149 = vmatpush.msra.mxu0 0.0
    %12150 = vmatpush.msra.mxu0 0.0
    %12151 = vmatpush.msra.mxu0 0.0
    %12152 = vmatpush.msra.mxu0 0.0
    %12153 = vmatpush.msra.mxu0 %v12133
    %12154 = vmatpush.msra.mxu0 %v12132
    %12155 = vmatpush.msra.mxu0 %v12131
    %12156 = vmatpush.msra.mxu0 %v12130
    %12157 = vmatmul.f32.gmra.mxu0 %v12139
    %v12158 = vpop.f32.mrf.mxu0
    %v12159 = vadd.f32 %v12136, %v12158
    %12160 = vdwg.mxu0
    %vm12161 = vcmask 39936
    %12162 = vst.msk [vmem:[#allocation5] sm:$0xff] %vm12161, %v12159
    // Predicated region
    $region30: #{forward.1} parent=1 // pred_check
      _
    $region31: #{forward.1} parent=1 // pred_check_branch
      %12164 = sbr.rel (0) target = $region33
    $region32: #{forward.1} parent=1 // pred_region
      %12166 = vsyncadd [#allocation6], 0
      %s12168 = sshll.u32 [#allocation5], 4
      %s12169 = int_to_ptr.vmem [resolvable:$true] %s12168
      %s12170 = sshll.u32 %s7, 4
      %s12171 = int_to_ptr.hbm [resolvable:$true] %s12170
      %12173 = dma.vmem_to_hbm [thread:$0]  %s12169, 128, %s12171, [#allocation6]
    $region33: #{forward.1} parent=1 // pred_fallthru
      _
    // Predicated region
    $region34: #{forward.1} parent=1 // pred_check
      _
    $region35: #{forward.1} parent=1 // pred_check_branch
      %12175 = sbr.rel (0) target = $region37
    $region36: #{forward.1} parent=1 // pred_region
      %12177 = dma.done [#allocation6], 128
    $region37: #{forward.1} parent=1 // pred_fallthru
      _
    %12178 = vsyncpa [#allocation6], 1

</llo_original>
